<compile_context>
chip_gen: v7x
topology: tpu7x:2x2x1
jax: 0.10.0
libtpu: 0.0.40
codegen_flags: <defaults>
</compile_context>

<pallas_src>
import functools

import jax
import jax.numpy as jnp
from jax.experimental import pallas as pl
from jax.experimental.pallas import tpu as pltpu


def _conv_stage_kernel(x_ref, w1_ref, b1_ref, w2_ref, b2_ref,
                       w3f_ref, wp1f_ref, wp2f_ref, scal_ref,
                       y_ref, stats_ref,
                       xp_ref, x1p_ref, x2p_ref, yp_ref,
                       *, H, W):
    """Per-image: all convs through conv2, emits pre-BN map + BN partial sums.

    x_ref   : [1, H, W, 64] bf16  one image (NHWC)
    w1_ref  : [576, 32]     bf16  d_conv1 im2col weights (row = tap*64 + cin)
    b1_ref  : [1, 32]       f32
    w2_ref  : [288, 16]     bf16  d_conv2 im2col weights (row = tap*32 + cin)
    b2_ref  : [1, 16]       f32
    w3f_ref : [9, 16]       f32   d_conv3 taps * conv1[:,0]  (1x1 conv folded in)
    wp1f_ref: [9, 32]       f32   p_conv1 taps * conv1[:,1]
    wp2f_ref: [9, 16]       f32   p_conv2 taps * conv1[:,2]
    scal_ref: [11]          f32   SMEM: conv2 taps(9), folded pre-bias, conv2 bias
    y_ref   : [1, H, W]     f32   pre-BN map
    stats_ref:[1, 2, 128]   f32   row0 = sum(y2), row1 = sum(y2^2) (broadcast)
    xp/x1p/x2p/yp_ref       f32   per-image zero-padded VMEM scratch
    """
    P = H * W
    f32 = jnp.float32

    # ---- pad x by 1: zero only the 1-wide halo strips, then write interior --
    xp_ref[0:1, :, :] = jnp.zeros((1, W + 2, 64), f32)
    xp_ref[H + 1:H + 2, :, :] = jnp.zeros((1, W + 2, 64), f32)
    xp_ref[:, 0:1, :] = jnp.zeros((H + 2, 1, 64), f32)
    xp_ref[:, W + 1:W + 2, :] = jnp.zeros((H + 2, 1, 64), f32)
    xp_ref[1:H + 1, 1:W + 1, :] = x_ref[0].astype(f32)

    # ---- d_conv1: 64->32, 3x3, dil=1, pad=1 — one im2col MXU matmul, K=576 --
    p1 = jnp.concatenate(
        [xp_ref[ky:ky + H, kx:kx + W, :].reshape(P, 64)
         for ky in range(3) for kx in range(3)], axis=1)            # [P, 576]
    x1 = jnp.dot(p1.astype(jnp.bfloat16), w1_ref[...],
                 preferred_element_type=f32) + b1_ref[...]          # [P, 32]

    # ---- pad x1 by 2 ---------------------------------------------------------
    x1p_ref[0:2, :, :] = jnp.zeros((2, W + 4, 32), f32)
    x1p_ref[H + 2:H + 4, :, :] = jnp.zeros((2, W + 4, 32), f32)
    x1p_ref[:, 0:2, :] = jnp.zeros((H + 4, 2, 32), f32)
    x1p_ref[:, W + 2:W + 4, :] = jnp.zeros((H + 4, 2, 32), f32)
    x1p_ref[2:H + 2, 2:W + 2, :] = x1.reshape(H, W, 32)

    # ---- d_conv2: 32->16, 3x3, dil=2, pad=2 — one im2col MXU matmul, K=288 --
    p2 = jnp.concatenate(
        [x1p_ref[2 * ky:2 * ky + H, 2 * kx:2 * kx + W, :].reshape(P, 32)
         for ky in range(3) for kx in range(3)], axis=1)            # [P, 288]
    x2 = jnp.dot(p2.astype(jnp.bfloat16), w2_ref[...],
                 preferred_element_type=f32) + b2_ref[...]          # [P, 16]

    # ---- pad x2 by 5 ---------------------------------------------------------
    x2p_ref[0:5, :, :] = jnp.zeros((5, W + 10, 16), f32)
    x2p_ref[H + 5:H + 10, :, :] = jnp.zeros((5, W + 10, 16), f32)
    x2p_ref[:, 0:5, :] = jnp.zeros((H + 10, 5, 16), f32)
    x2p_ref[:, W + 5:W + 10, :] = jnp.zeros((H + 10, 5, 16), f32)
    x2p_ref[5:H + 5, 5:W + 5, :] = x2.reshape(H, W, 16)

    # ---- Cout=1 heads (1x1 conv1 folded in): per-tap VPU multiply + XLU lane
    #      reduce directly into one [H, W] scalar map --------------------------
    y = jnp.zeros((H, W), f32)
    for ky in range(3):
        for kx in range(3):
            t = ky * 3 + kx
            y = y + jnp.sum(x2p_ref[5 * ky:5 * ky + H, 5 * kx:5 * kx + W, :]
                            * w3f_ref[t:t + 1, :], axis=-1)         # d_conv3, dil=5
            y = y + jnp.sum(x2p_ref[4 + ky:4 + ky + H, 4 + kx:4 + kx + W, :]
                            * wp2f_ref[t:t + 1, :], axis=-1)        # p_conv2, dil=1
            y = y + jnp.sum(x1p_ref[1 + ky:1 + ky + H, 1 + kx:1 + kx + W, :]
                            * wp1f_ref[t:t + 1, :], axis=-1)        # p_conv1, dil=1
    y = y + scal_ref[9]                       # folded d_conv3/p_conv*/conv1 biases

    # ---- conv2: 3x3, 1->1, pad=1 with SMEM scalar taps ------------------------
    yp_ref[0:1, :] = jnp.zeros((1, W + 2), f32)
    yp_ref[H + 1:H + 2, :] = jnp.zeros((1, W + 2), f32)
    yp_ref[:, 0:1] = jnp.zeros((H + 2, 1), f32)
    yp_ref[:, W + 1:W + 2] = jnp.zeros((H + 2, 1), f32)
    yp_ref[1:H + 1, 1:W + 1] = y
    y2 = jnp.zeros((H, W), f32)
    for ky in range(3):
        for kx in range(3):
            y2 = y2 + yp_ref[ky:ky + H, kx:kx + W] * scal_ref[ky * 3 + kx]
    y2 = y2 + scal_ref[10]

    # ---- emit pre-BN map + per-image BN partial sums (single pass) -----------
    y_ref[0] = y2
    s = jnp.sum(y2)
    ss = jnp.sum(y2 * y2)
    stats_ref[0] = jnp.concatenate(
        [jnp.full((1, 128), s, f32), jnp.full((1, 128), ss, f32)], axis=0)


def _bn_sigmoid_kernel(y_ref, s_ref, o_ref):
    """Lane-dense affine BN + sigmoid: o = 1 / (1 + exp(-(y*scale + shift)))."""
    z = y_ref[...] * s_ref[0] + s_ref[1]
    o_ref[...] = pl.reciprocal(1.0 + jnp.exp(-z), approx=True)


def prepare_params(p):
    """One-time weight prep (outside jit): tap-major im2col weights, bf16 MXU
    operands, and algebraic folding of conv1 (1x1, 3->1) into the Cout=1 heads."""
    a = p['cw1'].reshape(3).astype(jnp.float32)          # conv1 channel weights

    def taps(w_oihw):                                    # [Co,Ci,3,3] -> [9,Ci,Co]
        co, ci = w_oihw.shape[0], w_oihw.shape[1]
        return jnp.transpose(w_oihw, (2, 3, 1, 0)).reshape(9, ci, co)

    pre_bias = (a[0] * p['db3'][0] + a[1] * p['pb1'][0]
                + a[2] * p['pb2'][0] + p['cb1'][0])
    scal = jnp.concatenate([
        p['cw2'].reshape(9).astype(jnp.float32),          # conv2 taps
        jnp.stack([pre_bias, p['cb2'][0]]).astype(jnp.float32),
    ])                                                    # [11]
    return {
        'w1': taps(p['dw1']).reshape(9 * 64, 32).astype(jnp.bfloat16),
        'b1': p['db1'].reshape(1, 32).astype(jnp.float32),
        'w2': taps(p['dw2']).reshape(9 * 32, 16).astype(jnp.bfloat16),
        'b2': p['db2'].reshape(1, 16).astype(jnp.float32),
        'w3f': (taps(p['dw3'])[:, :, 0] * a[0]).astype(jnp.float32),   # [9,16]
        'wp1f': (taps(p['pw1'])[:, :, 0] * a[1]).astype(jnp.float32),  # [9,32]
        'wp2f': (taps(p['pw2'])[:, :, 0] * a[2]).astype(jnp.float32),  # [9,16]
        'scal': scal,
        'gamma': p['gamma'][0].astype(jnp.float32),
        'beta': p['beta'][0].astype(jnp.float32),
    }


@jax.jit
def conf_block_forward(x_nchw, prep):
    N, _, H, W = x_nchw.shape
    # NCHW -> NHWC, bf16 (the only consumer is the bf16 MXU path): halves input DMA.
    x = jnp.transpose(x_nchw, (0, 2, 3, 1)).astype(jnp.bfloat16)

    # ---- pass 1: per-image conv stack, grid over N ("parallel" for v7x 2 TCs)
    y2, stats = pl.pallas_call(
        functools.partial(_conv_stage_kernel, H=H, W=W),
        out_shape=(jax.ShapeDtypeStruct((N, H, W), jnp.float32),
                   jax.ShapeDtypeStruct((N, 2, 128), jnp.float32)),
        grid=(N,),
        in_specs=[
            pl.BlockSpec((1, H, W, 64), lambda i: (i, 0, 0, 0)),
            pl.BlockSpec((9 * 64, 32), lambda i: (0, 0)),
            pl.BlockSpec((1, 32), lambda i: (0, 0)),
            pl.BlockSpec((9 * 32, 16), lambda i: (0, 0)),
            pl.BlockSpec((1, 16), lambda i: (0, 0)),
            pl.BlockSpec((9, 16), lambda i: (0, 0)),
            pl.BlockSpec((9, 32), lambda i: (0, 0)),
            pl.BlockSpec((9, 16), lambda i: (0, 0)),
            pl.BlockSpec((11,), lambda i: (0,),
                         memory_space=pltpu.MemorySpace.SMEM),
        ],
        out_specs=[
            pl.BlockSpec((1, H, W), lambda i: (i, 0, 0)),
            pl.BlockSpec((1, 2, 128), lambda i: (i, 0, 0)),
        ],
        scratch_shapes=[
            pltpu.VMEM((H + 2, W + 2, 64), jnp.float32),    # x  padded by 1
            pltpu.VMEM((H + 4, W + 4, 32), jnp.float32),    # x1 padded by 2
            pltpu.VMEM((H + 10, W + 10, 16), jnp.float32),  # x2 padded by 5
            pltpu.VMEM((H + 2, W + 2), jnp.float32),        # pre-conv2 map, pad 1
        ],
        # Per-image footprint (~a few hundred KiB) is far below the 32 MiB
        # scoped-VMEM default on every generation, so no explicit limit needed.
        compiler_params=pltpu.CompilerParams(
            dimension_semantics=("parallel",)),
    )(x, prep['w1'], prep['b1'], prep['w2'], prep['b2'],
      prep['w3f'], prep['wp1f'], prep['wp2f'], prep['scal'])

    # ---- BatchNorm batch statistics (train mode) from per-image partial sums -
    total = N * H * W
    mean = jnp.sum(stats[:, 0, 0]) / total
    var = jnp.maximum(jnp.sum(stats[:, 1, 0]) / total - mean * mean, 0.0)
    scale = prep['gamma'] * jax.lax.rsqrt(var + 1e-5)
    shift = prep['beta'] - mean * scale
    bn_scal = jnp.stack([scale, shift]).astype(jnp.float32)          # [2]

    # ---- pass 2: lane-dense [rows,128] affine BN + sigmoid -------------------
    pad = (-total) % 128
    y_flat = y2.reshape(total)
    if pad:
        y_flat = jnp.concatenate([y_flat, jnp.zeros((pad,), jnp.float32)])
    rows = (total + pad) // 128
    out_flat = pl.pallas_call(
        _bn_sigmoid_kernel,
        out_shape=jax.ShapeDtypeStruct((rows, 128), jnp.float32),
        in_specs=[pl.BlockSpec(memory_space=pltpu.MemorySpace.VMEM),
                  pl.BlockSpec(memory_space=pltpu.MemorySpace.SMEM)],
        out_specs=pl.BlockSpec(memory_space=pltpu.MemorySpace.VMEM),
    )(y_flat.reshape(rows, 128), bn_scal)

    return out_flat.reshape(-1)[:total].reshape(N, 1, H, W)


def init_params(key):
    """Deterministic synthetic parameters with PyTorch-default init scales."""
    def conv_init(k, cout, cin, ksz):
        fan_in = cin * ksz * ksz
        bound = 1.0 / (fan_in ** 0.5)
        kw, kb = jax.random.split(k)
        w = jax.random.uniform(kw, (cout, cin, ksz, ksz), jnp.float32, -bound, bound)
        b = jax.random.uniform(kb, (cout,), jnp.float32, -bound, bound)
        return w, b

    keys = jax.random.split(key, 7)
    p = {}
    p['dw1'], p['db1'] = conv_init(keys[0], 32, 64, 3)   # d_conv1
    p['dw2'], p['db2'] = conv_init(keys[1], 16, 32, 3)   # d_conv2
    p['dw3'], p['db3'] = conv_init(keys[2], 1, 16, 3)    # d_conv3
    p['pw1'], p['pb1'] = conv_init(keys[3], 1, 32, 3)    # p_conv1
    p['pw2'], p['pb2'] = conv_init(keys[4], 1, 16, 3)    # p_conv2
    p['cw1'], p['cb1'] = conv_init(keys[5], 1, 3, 1)     # conv1 (1x1)
    p['cw2'], p['cb2'] = conv_init(keys[6], 1, 1, 3)     # conv2
    p['gamma'] = jnp.ones((1,), jnp.float32)             # BatchNorm2d default affine
    p['beta'] = jnp.zeros((1,), jnp.float32)
    return p


# ----------------------------- pure-JAX reference ----------------------------
def _ref_conv(x, w, b, dilation, padding):
    y = jax.lax.conv_general_dilated(
        x, jnp.transpose(w, (2, 3, 1, 0)),
        window_strides=(1, 1),
        padding=((padding, padding), (padding, padding)),
        rhs_dilation=(dilation, dilation),
        dimension_numbers=('NHWC', 'HWIO', 'NHWC'),
        precision=jax.lax.Precision.HIGHEST)
    return y + b


def conf_block_reference(x_nchw, p):
    x = jnp.transpose(x_nchw, (0, 2, 3, 1)).astype(jnp.float32)
    x1 = _ref_conv(x,  p['dw1'], p['db1'], 1, 1)
    x2 = _ref_conv(x1, p['dw2'], p['db2'], 2, 2)
    x3 = _ref_conv(x2, p['dw3'], p['db3'], 5, 5)
    t1 = _ref_conv(x1, p['pw1'], p['pb1'], 1, 1)
    t2 = _ref_conv(x2, p['pw2'], p['pb2'], 1, 1)
    cat = jnp.concatenate([x3, t1, t2], axis=-1)
    y = _ref_conv(cat, p['cw1'], p['cb1'], 1, 0)
    y = _ref_conv(y,   p['cw2'], p['cb2'], 1, 1)
    mean = jnp.mean(y)
    var = jnp.mean((y - mean) ** 2)
    y = (y - mean) * jax.lax.rsqrt(var + 1e-5) * p['gamma'][0] + p['beta'][0]
    y = jax.nn.sigmoid(y)
    return jnp.transpose(y, (0, 3, 1, 2))


if __name__ == "__main__":
    key = jax.random.PRNGKey(0)
    k_x, k_p = jax.random.split(key)

    # PyTorch convention NCHW: d_conv1 expects 64 input channels.
    x = jax.random.normal(k_x, (2, 64, 16, 16), jnp.float32)
    params = init_params(k_p)
    prep = prepare_params(params)   # one-time weight fold/flatten, outside jit

    out = jax.block_until_ready(conf_block_forward(x, prep))
    ref = conf_block_reference(x, params)

    assert out.shape == (2, 1, 16, 16), out.shape
    max_err = float(jnp.max(jnp.abs(out - ref)))
    # bf16 MXU operands (f32 accumulation) vs the f32 HIGHEST reference.
    assert jnp.allclose(out, ref, atol=1e-2, rtol=1e-2), max_err

    print("KERNEL_OK")
</pallas_src>

<mosaic_0001>
module attributes {stable_mosaic.version = 11 : i64} {
  func.func @_conv_stage_kernel(%arg0: i32, %arg1: memref<1x16x16x64xbf16, #tpu.memory_space<vmem>>, %arg2: memref<576x32xbf16, #tpu.memory_space<vmem>>, %arg3: memref<1x32xf32, #tpu.memory_space<vmem>>, %arg4: memref<288x16xbf16, #tpu.memory_space<vmem>>, %arg5: memref<1x16xf32, #tpu.memory_space<vmem>>, %arg6: memref<9x16xf32, #tpu.memory_space<vmem>>, %arg7: memref<9x32xf32, #tpu.memory_space<vmem>>, %arg8: memref<9x16xf32, #tpu.memory_space<vmem>>, %arg9: memref<11xf32, #tpu.memory_space<smem>>, %arg10: memref<1x16x16xf32, #tpu.memory_space<vmem>>, %arg11: memref<1x2x128xf32, #tpu.memory_space<vmem>>, %arg12: memref<18x18x64xf32, #tpu.memory_space<vmem>>, %arg13: memref<20x20x32xf32, #tpu.memory_space<vmem>>, %arg14: memref<26x26x16xf32, #tpu.memory_space<vmem>>, %arg15: memref<18x18xf32, #tpu.memory_space<vmem>>) attributes {dimension_semantics = [#tpu.dimension_semantics<parallel>], iteration_bounds = array<i64: 2>, scalar_prefetch = 0 : i64, scratch_operands = 4 : i64, tpu.core_type = #tpu.core_type<tc>, window_params = [{transform_indices = @transform_0, window_bounds = array<i64: 1, 16, 16, 64>}, {pipeline_mode = #tpu.pipeline_mode<synchronous>, transform_indices = @transform_1, window_bounds = array<i64: 576, 32>}, {pipeline_mode = #tpu.pipeline_mode<synchronous>, transform_indices = @transform_2, window_bounds = array<i64: 1, 32>}, {pipeline_mode = #tpu.pipeline_mode<synchronous>, transform_indices = @transform_3, window_bounds = array<i64: 288, 16>}, {pipeline_mode = #tpu.pipeline_mode<synchronous>, transform_indices = @transform_4, window_bounds = array<i64: 1, 16>}, {pipeline_mode = #tpu.pipeline_mode<synchronous>, transform_indices = @transform_5, window_bounds = array<i64: 9, 16>}, {pipeline_mode = #tpu.pipeline_mode<synchronous>, transform_indices = @transform_6, window_bounds = array<i64: 9, 32>}, {pipeline_mode = #tpu.pipeline_mode<synchronous>, transform_indices = @transform_7, window_bounds = array<i64: 9, 16>}, {transform_indices = @transform_8, window_bounds = array<i64: 11>}, {transform_indices = @transform_9, window_bounds = array<i64: 1, 16, 16>}, {transform_indices = @transform_10, window_bounds = array<i64: 1, 2, 128>}]} {
    %cst = arith.constant 0.000000e+00 : f32
    %0 = vector.broadcast %cst : f32 to vector<1x18x64xf32>
    %c0 = arith.constant 0 : index
    %c0_0 = arith.constant 0 : index
    %c0_1 = arith.constant 0 : index
    %1 = vector.load %arg12[%c0, %c0_0, %c0_1] : memref<18x18x64xf32, #tpu.memory_space<vmem>>, vector<1x18x64xf32>
    tpu.vector_store %arg12[%c0, %c0_0, %c0_1], %0 {strides = array<i32>} : memref<18x18x64xf32, #tpu.memory_space<vmem>>, vector<1x18x64xf32>,
    %cst_2 = arith.constant 0.000000e+00 : f32
    %2 = vector.broadcast %cst_2 : f32 to vector<1x18x64xf32>
    %c17 = arith.constant 17 : index
    %c0_3 = arith.constant 0 : index
    %c0_4 = arith.constant 0 : index
    %3 = vector.load %arg12[%c17, %c0_3, %c0_4] : memref<18x18x64xf32, #tpu.memory_space<vmem>>, vector<1x18x64xf32>
    tpu.vector_store %arg12[%c17, %c0_3, %c0_4], %2 {strides = array<i32>} : memref<18x18x64xf32, #tpu.memory_space<vmem>>, vector<1x18x64xf32>,
    %cst_5 = arith.constant 0.000000e+00 : f32
    %4 = vector.broadcast %cst_5 : f32 to vector<18x1x64xf32>
    %c0_6 = arith.constant 0 : index
    %c0_7 = arith.constant 0 : index
    %c0_8 = arith.constant 0 : index
    %5 = vector.load %arg12[%c0_6, %c0_7, %c0_8] : memref<18x18x64xf32, #tpu.memory_space<vmem>>, vector<18x1x64xf32>
    tpu.vector_store %arg12[%c0_6, %c0_7, %c0_8], %4 {strides = array<i32>} : memref<18x18x64xf32, #tpu.memory_space<vmem>>, vector<18x1x64xf32>,
    %cst_9 = arith.constant 0.000000e+00 : f32
    %6 = vector.broadcast %cst_9 : f32 to vector<18x1x64xf32>
    %c0_10 = arith.constant 0 : index
    %c17_11 = arith.constant 17 : index
    %c0_12 = arith.constant 0 : index
    %7 = vector.load %arg12[%c0_10, %c17_11, %c0_12] : memref<18x18x64xf32, #tpu.memory_space<vmem>>, vector<18x1x64xf32>
    tpu.vector_store %arg12[%c0_10, %c17_11, %c0_12], %6 {strides = array<i32>} : memref<18x18x64xf32, #tpu.memory_space<vmem>>, vector<18x1x64xf32>,
    %c0_13 = arith.constant 0 : index
    %c0_14 = arith.constant 0 : index
    %c0_15 = arith.constant 0 : index
    %c0_16 = arith.constant 0 : index
    %8 = vector.load %arg1[%c0_13, %c0_14, %c0_15, %c0_16] : memref<1x16x16x64xbf16, #tpu.memory_space<vmem>>, vector<1x16x16x64xbf16>
    %9 = vector.shape_cast %8 : vector<1x16x16x64xbf16> to vector<16x16x64xbf16>
    %10 = arith.extf %9 : vector<16x16x64xbf16> to vector<16x16x64xf32>
    %c1 = arith.constant 1 : index
    %c1_17 = arith.constant 1 : index
    %c0_18 = arith.constant 0 : index
    %11 = vector.load %arg12[%c1, %c1_17, %c0_18] : memref<18x18x64xf32, #tpu.memory_space<vmem>>, vector<16x16x64xf32>
    tpu.vector_store %arg12[%c1, %c1_17, %c0_18], %10 {strides = array<i32>} : memref<18x18x64xf32, #tpu.memory_space<vmem>>, vector<16x16x64xf32>,
    %c0_19 = arith.constant 0 : index
    %c0_20 = arith.constant 0 : index
    %c0_21 = arith.constant 0 : index
    %12 = vector.load %arg12[%c0_19, %c0_20, %c0_21] : memref<18x18x64xf32, #tpu.memory_space<vmem>>, vector<16x16x64xf32>
    %13 = vector.shape_cast %12 : vector<16x16x64xf32> to vector<256x64xf32>
    %c0_22 = arith.constant 0 : index
    %c1_23 = arith.constant 1 : index
    %c0_24 = arith.constant 0 : index
    %14 = vector.load %arg12[%c0_22, %c1_23, %c0_24] : memref<18x18x64xf32, #tpu.memory_space<vmem>>, vector<16x16x64xf32>
    %15 = vector.shape_cast %14 : vector<16x16x64xf32> to vector<256x64xf32>
    %c0_25 = arith.constant 0 : index
    %c2 = arith.constant 2 : index
    %c0_26 = arith.constant 0 : index
    %16 = vector.load %arg12[%c0_25, %c2, %c0_26] : memref<18x18x64xf32, #tpu.memory_space<vmem>>, vector<16x16x64xf32>
    %17 = vector.shape_cast %16 : vector<16x16x64xf32> to vector<256x64xf32>
    %c1_27 = arith.constant 1 : index
    %c0_28 = arith.constant 0 : index
    %c0_29 = arith.constant 0 : index
    %18 = vector.load %arg12[%c1_27, %c0_28, %c0_29] : memref<18x18x64xf32, #tpu.memory_space<vmem>>, vector<16x16x64xf32>
    %19 = vector.shape_cast %18 : vector<16x16x64xf32> to vector<256x64xf32>
    %c1_30 = arith.constant 1 : index
    %c1_31 = arith.constant 1 : index
    %c0_32 = arith.constant 0 : index
    %20 = vector.load %arg12[%c1_30, %c1_31, %c0_32] : memref<18x18x64xf32, #tpu.memory_space<vmem>>, vector<16x16x64xf32>
    %21 = vector.shape_cast %20 : vector<16x16x64xf32> to vector<256x64xf32>
    %c1_33 = arith.constant 1 : index
    %c2_34 = arith.constant 2 : index
    %c0_35 = arith.constant 0 : index
    %22 = vector.load %arg12[%c1_33, %c2_34, %c0_35] : memref<18x18x64xf32, #tpu.memory_space<vmem>>, vector<16x16x64xf32>
    %23 = vector.shape_cast %22 : vector<16x16x64xf32> to vector<256x64xf32>
    %c2_36 = arith.constant 2 : index
    %c0_37 = arith.constant 0 : index
    %c0_38 = arith.constant 0 : index
    %24 = vector.load %arg12[%c2_36, %c0_37, %c0_38] : memref<18x18x64xf32, #tpu.memory_space<vmem>>, vector<16x16x64xf32>
    %25 = vector.shape_cast %24 : vector<16x16x64xf32> to vector<256x64xf32>
    %c2_39 = arith.constant 2 : index
    %c1_40 = arith.constant 1 : index
    %c0_41 = arith.constant 0 : index
    %26 = vector.load %arg12[%c2_39, %c1_40, %c0_41] : memref<18x18x64xf32, #tpu.memory_space<vmem>>, vector<16x16x64xf32>
    %27 = vector.shape_cast %26 : vector<16x16x64xf32> to vector<256x64xf32>
    %c2_42 = arith.constant 2 : index
    %c2_43 = arith.constant 2 : index
    %c0_44 = arith.constant 0 : index
    %28 = vector.load %arg12[%c2_42, %c2_43, %c0_44] : memref<18x18x64xf32, #tpu.memory_space<vmem>>, vector<16x16x64xf32>
    %29 = vector.shape_cast %28 : vector<16x16x64xf32> to vector<256x64xf32>
    %30 = tpu.concatenate %13, %15, %17, %19, %21, %23, %25, %27, %29 in 1 : vector<256x64xf32>, vector<256x64xf32>, vector<256x64xf32>, vector<256x64xf32>, vector<256x64xf32>, vector<256x64xf32>, vector<256x64xf32>, vector<256x64xf32>, vector<256x64xf32> -> vector<256x576xf32>
    %31 = arith.truncf %30 : vector<256x576xf32> to vector<256x576xbf16>
    %c0_45 = arith.constant 0 : index
    %c0_46 = arith.constant 0 : index
    %32 = vector.load %arg2[%c0_45, %c0_46] : memref<576x32xbf16, #tpu.memory_space<vmem>>, vector<576x32xbf16>
    %cst_47 = arith.constant dense<0.000000e+00> : vector<256x32xf32>
    %33 = tpu.matmul %31, %32, %cst_47 {dimension_numbers = #tpu.dot_dimension_numbers<[1], [0], [0], [1], [0, 0, 1, 1], [], []>} : vector<256x576xbf16>, vector<576x32xbf16>, vector<256x32xf32> -> vector<256x32xf32>
    %c0_48 = arith.constant 0 : index
    %c0_49 = arith.constant 0 : index
    %34 = vector.load %arg3[%c0_48, %c0_49] : memref<1x32xf32, #tpu.memory_space<vmem>>, vector<1x32xf32>
    %35 = vector.broadcast %34 : vector<1x32xf32> to vector<256x32xf32>
    %36 = arith.addf %33, %35 : vector<256x32xf32>
    %cst_50 = arith.constant 0.000000e+00 : f32
    %37 = vector.broadcast %cst_50 : f32 to vector<2x20x32xf32>
    %c0_51 = arith.constant 0 : index
    %c0_52 = arith.constant 0 : index
    %c0_53 = arith.constant 0 : index
    %38 = vector.load %arg13[%c0_51, %c0_52, %c0_53] : memref<20x20x32xf32, #tpu.memory_space<vmem>>, vector<2x20x32xf32>
    tpu.vector_store %arg13[%c0_51, %c0_52, %c0_53], %37 {strides = array<i32>} : memref<20x20x32xf32, #tpu.memory_space<vmem>>, vector<2x20x32xf32>,
    %cst_54 = arith.constant 0.000000e+00 : f32
    %39 = vector.broadcast %cst_54 : f32 to vector<2x20x32xf32>
    %c18 = arith.constant 18 : index
    %c0_55 = arith.constant 0 : index
    %c0_56 = arith.constant 0 : index
    %40 = vector.load %arg13[%c18, %c0_55, %c0_56] : memref<20x20x32xf32, #tpu.memory_space<vmem>>, vector<2x20x32xf32>
    tpu.vector_store %arg13[%c18, %c0_55, %c0_56], %39 {strides = array<i32>} : memref<20x20x32xf32, #tpu.memory_space<vmem>>, vector<2x20x32xf32>,
    %cst_57 = arith.constant 0.000000e+00 : f32
    %41 = vector.broadcast %cst_57 : f32 to vector<20x2x32xf32>
    %c0_58 = arith.constant 0 : index
    %c0_59 = arith.constant 0 : index
    %c0_60 = arith.constant 0 : index
    %42 = vector.load %arg13[%c0_58, %c0_59, %c0_60] : memref<20x20x32xf32, #tpu.memory_space<vmem>>, vector<20x2x32xf32>
    tpu.vector_store %arg13[%c0_58, %c0_59, %c0_60], %41 {strides = array<i32>} : memref<20x20x32xf32, #tpu.memory_space<vmem>>, vector<20x2x32xf32>,
    %cst_61 = arith.constant 0.000000e+00 : f32
    %43 = vector.broadcast %cst_61 : f32 to vector<20x2x32xf32>
    %c0_62 = arith.constant 0 : index
    %c18_63 = arith.constant 18 : index
    %c0_64 = arith.constant 0 : index
    %44 = vector.load %arg13[%c0_62, %c18_63, %c0_64] : memref<20x20x32xf32, #tpu.memory_space<vmem>>, vector<20x2x32xf32>
    tpu.vector_store %arg13[%c0_62, %c18_63, %c0_64], %43 {strides = array<i32>} : memref<20x20x32xf32, #tpu.memory_space<vmem>>, vector<20x2x32xf32>,
    %45 = vector.shape_cast %36 : vector<256x32xf32> to vector<16x16x32xf32>
    %c2_65 = arith.constant 2 : index
    %c2_66 = arith.constant 2 : index
    %c0_67 = arith.constant 0 : index
    %46 = vector.load %arg13[%c2_65, %c2_66, %c0_67] : memref<20x20x32xf32, #tpu.memory_space<vmem>>, vector<16x16x32xf32>
    tpu.vector_store %arg13[%c2_65, %c2_66, %c0_67], %45 {strides = array<i32>} : memref<20x20x32xf32, #tpu.memory_space<vmem>>, vector<16x16x32xf32>,
    %c0_68 = arith.constant 0 : index
    %c0_69 = arith.constant 0 : index
    %c0_70 = arith.constant 0 : index
    %47 = vector.load %arg13[%c0_68, %c0_69, %c0_70] : memref<20x20x32xf32, #tpu.memory_space<vmem>>, vector<16x16x32xf32>
    %48 = vector.shape_cast %47 : vector<16x16x32xf32> to vector<256x32xf32>
    %c0_71 = arith.constant 0 : index
    %c2_72 = arith.constant 2 : index
    %c0_73 = arith.constant 0 : index
    %49 = vector.load %arg13[%c0_71, %c2_72, %c0_73] : memref<20x20x32xf32, #tpu.memory_space<vmem>>, vector<16x16x32xf32>
    %50 = vector.shape_cast %49 : vector<16x16x32xf32> to vector<256x32xf32>
    %c0_74 = arith.constant 0 : index
    %c4 = arith.constant 4 : index
    %c0_75 = arith.constant 0 : index
    %51 = vector.load %arg13[%c0_74, %c4, %c0_75] : memref<20x20x32xf32, #tpu.memory_space<vmem>>, vector<16x16x32xf32>
    %52 = vector.shape_cast %51 : vector<16x16x32xf32> to vector<256x32xf32>
    %c2_76 = arith.constant 2 : index
    %c0_77 = arith.constant 0 : index
    %c0_78 = arith.constant 0 : index
    %53 = vector.load %arg13[%c2_76, %c0_77, %c0_78] : memref<20x20x32xf32, #tpu.memory_space<vmem>>, vector<16x16x32xf32>
    %54 = vector.shape_cast %53 : vector<16x16x32xf32> to vector<256x32xf32>
    %c2_79 = arith.constant 2 : index
    %c2_80 = arith.constant 2 : index
    %c0_81 = arith.constant 0 : index
    %55 = vector.load %arg13[%c2_79, %c2_80, %c0_81] : memref<20x20x32xf32, #tpu.memory_space<vmem>>, vector<16x16x32xf32>
    %56 = vector.shape_cast %55 : vector<16x16x32xf32> to vector<256x32xf32>
    %c2_82 = arith.constant 2 : index
    %c4_83 = arith.constant 4 : index
    %c0_84 = arith.constant 0 : index
    %57 = vector.load %arg13[%c2_82, %c4_83, %c0_84] : memref<20x20x32xf32, #tpu.memory_space<vmem>>, vector<16x16x32xf32>
    %58 = vector.shape_cast %57 : vector<16x16x32xf32> to vector<256x32xf32>
    %c4_85 = arith.constant 4 : index
    %c0_86 = arith.constant 0 : index
    %c0_87 = arith.constant 0 : index
    %59 = vector.load %arg13[%c4_85, %c0_86, %c0_87] : memref<20x20x32xf32, #tpu.memory_space<vmem>>, vector<16x16x32xf32>
    %60 = vector.shape_cast %59 : vector<16x16x32xf32> to vector<256x32xf32>
    %c4_88 = arith.constant 4 : index
    %c2_89 = arith.constant 2 : index
    %c0_90 = arith.constant 0 : index
    %61 = vector.load %arg13[%c4_88, %c2_89, %c0_90] : memref<20x20x32xf32, #tpu.memory_space<vmem>>, vector<16x16x32xf32>
    %62 = vector.shape_cast %61 : vector<16x16x32xf32> to vector<256x32xf32>
    %c4_91 = arith.constant 4 : index
    %c4_92 = arith.constant 4 : index
    %c0_93 = arith.constant 0 : index
    %63 = vector.load %arg13[%c4_91, %c4_92, %c0_93] : memref<20x20x32xf32, #tpu.memory_space<vmem>>, vector<16x16x32xf32>
    %64 = vector.shape_cast %63 : vector<16x16x32xf32> to vector<256x32xf32>
    %65 = tpu.concatenate %48, %50, %52, %54, %56, %58, %60, %62, %64 in 1 : vector<256x32xf32>, vector<256x32xf32>, vector<256x32xf32>, vector<256x32xf32>, vector<256x32xf32>, vector<256x32xf32>, vector<256x32xf32>, vector<256x32xf32>, vector<256x32xf32> -> vector<256x288xf32>
    %66 = arith.truncf %65 : vector<256x288xf32> to vector<256x288xbf16>
    %c0_94 = arith.constant 0 : index
    %c0_95 = arith.constant 0 : index
    %67 = vector.load %arg4[%c0_94, %c0_95] : memref<288x16xbf16, #tpu.memory_space<vmem>>, vector<288x16xbf16>
    %cst_96 = arith.constant dense<0.000000e+00> : vector<256x16xf32>
    %68 = tpu.matmul %66, %67, %cst_96 {dimension_numbers = #tpu.dot_dimension_numbers<[1], [0], [0], [1], [0, 0, 1, 1], [], []>} : vector<256x288xbf16>, vector<288x16xbf16>, vector<256x16xf32> -> vector<256x16xf32>
    %c0_97 = arith.constant 0 : index
    %c0_98 = arith.constant 0 : index
    %69 = vector.load %arg5[%c0_97, %c0_98] : memref<1x16xf32, #tpu.memory_space<vmem>>, vector<1x16xf32>
    %70 = vector.broadcast %69 : vector<1x16xf32> to vector<256x16xf32>
    %71 = arith.addf %68, %70 : vector<256x16xf32>
    %cst_99 = arith.constant 0.000000e+00 : f32
    %72 = vector.broadcast %cst_99 : f32 to vector<5x26x16xf32>
    %c0_100 = arith.constant 0 : index
    %c0_101 = arith.constant 0 : index
    %c0_102 = arith.constant 0 : index
    %73 = vector.load %arg14[%c0_100, %c0_101, %c0_102] : memref<26x26x16xf32, #tpu.memory_space<vmem>>, vector<5x26x16xf32>
    tpu.vector_store %arg14[%c0_100, %c0_101, %c0_102], %72 {strides = array<i32>} : memref<26x26x16xf32, #tpu.memory_space<vmem>>, vector<5x26x16xf32>,
    %cst_103 = arith.constant 0.000000e+00 : f32
    %74 = vector.broadcast %cst_103 : f32 to vector<5x26x16xf32>
    %c21 = arith.constant 21 : index
    %c0_104 = arith.constant 0 : index
    %c0_105 = arith.constant 0 : index
    %75 = vector.load %arg14[%c21, %c0_104, %c0_105] : memref<26x26x16xf32, #tpu.memory_space<vmem>>, vector<5x26x16xf32>
    tpu.vector_store %arg14[%c21, %c0_104, %c0_105], %74 {strides = array<i32>} : memref<26x26x16xf32, #tpu.memory_space<vmem>>, vector<5x26x16xf32>,
    %cst_106 = arith.constant 0.000000e+00 : f32
    %76 = vector.broadcast %cst_106 : f32 to vector<26x5x16xf32>
    %c0_107 = arith.constant 0 : index
    %c0_108 = arith.constant 0 : index
    %c0_109 = arith.constant 0 : index
    %77 = vector.load %arg14[%c0_107, %c0_108, %c0_109] : memref<26x26x16xf32, #tpu.memory_space<vmem>>, vector<26x5x16xf32>
    tpu.vector_store %arg14[%c0_107, %c0_108, %c0_109], %76 {strides = array<i32>} : memref<26x26x16xf32, #tpu.memory_space<vmem>>, vector<26x5x16xf32>,
    %cst_110 = arith.constant 0.000000e+00 : f32
    %78 = vector.broadcast %cst_110 : f32 to vector<26x5x16xf32>
    %c0_111 = arith.constant 0 : index
    %c21_112 = arith.constant 21 : index
    %c0_113 = arith.constant 0 : index
    %79 = vector.load %arg14[%c0_111, %c21_112, %c0_113] : memref<26x26x16xf32, #tpu.memory_space<vmem>>, vector<26x5x16xf32>
    tpu.vector_store %arg14[%c0_111, %c21_112, %c0_113], %78 {strides = array<i32>} : memref<26x26x16xf32, #tpu.memory_space<vmem>>, vector<26x5x16xf32>,
    %80 = vector.shape_cast %71 : vector<256x16xf32> to vector<16x16x16xf32>
    %c5 = arith.constant 5 : index
    %c5_114 = arith.constant 5 : index
    %c0_115 = arith.constant 0 : index
    %81 = vector.load %arg14[%c5, %c5_114, %c0_115] : memref<26x26x16xf32, #tpu.memory_space<vmem>>, vector<16x16x16xf32>
    tpu.vector_store %arg14[%c5, %c5_114, %c0_115], %80 {strides = array<i32>} : memref<26x26x16xf32, #tpu.memory_space<vmem>>, vector<16x16x16xf32>,
    %cst_116 = arith.constant 0.000000e+00 : f32
    %82 = vector.broadcast %cst_116 : f32 to vector<16x16xf32>
    %c0_117 = arith.constant 0 : index
    %c0_118 = arith.constant 0 : index
    %c0_119 = arith.constant 0 : index
    %83 = vector.load %arg14[%c0_117, %c0_118, %c0_119] : memref<26x26x16xf32, #tpu.memory_space<vmem>>, vector<16x16x16xf32>
    %c0_120 = arith.constant 0 : index
    %c0_121 = arith.constant 0 : index
    %84 = vector.load %arg6[%c0_120, %c0_121] : memref<9x16xf32, #tpu.memory_space<vmem>>, vector<1x16xf32>
    %85 = vector.shape_cast %84 : vector<1x16xf32> to vector<1x1x16xf32>
    %86 = vector.broadcast %85 : vector<1x1x16xf32> to vector<16x16x16xf32>
    %87 = arith.mulf %83, %86 : vector<16x16x16xf32>
    %cst_122 = arith.constant dense<0.000000e+00> : vector<16x16xf32>
    %88 = vector.multi_reduction <add>, %87, %cst_122 [2] : vector<16x16x16xf32> to vector<16x16xf32>
    %89 = arith.addf %82, %88 : vector<16x16xf32>
    %c4_123 = arith.constant 4 : index
    %c4_124 = arith.constant 4 : index
    %c0_125 = arith.constant 0 : index
    %90 = vector.load %arg14[%c4_123, %c4_124, %c0_125] : memref<26x26x16xf32, #tpu.memory_space<vmem>>, vector<16x16x16xf32>
    %c0_126 = arith.constant 0 : index
    %c0_127 = arith.constant 0 : index
    %91 = vector.load %arg8[%c0_126, %c0_127] : memref<9x16xf32, #tpu.memory_space<vmem>>, vector<1x16xf32>
    %92 = vector.shape_cast %91 : vector<1x16xf32> to vector<1x1x16xf32>
    %93 = vector.broadcast %92 : vector<1x1x16xf32> to vector<16x16x16xf32>
    %94 = arith.mulf %90, %93 : vector<16x16x16xf32>
    %cst_128 = arith.constant dense<0.000000e+00> : vector<16x16xf32>
    %95 = vector.multi_reduction <add>, %94, %cst_128 [2] : vector<16x16x16xf32> to vector<16x16xf32>
    %96 = arith.addf %89, %95 : vector<16x16xf32>
    %c1_129 = arith.constant 1 : index
    %c1_130 = arith.constant 1 : index
    %c0_131 = arith.constant 0 : index
    %97 = vector.load %arg13[%c1_129, %c1_130, %c0_131] : memref<20x20x32xf32, #tpu.memory_space<vmem>>, vector<16x16x32xf32>
    %c0_132 = arith.constant 0 : index
    %c0_133 = arith.constant 0 : index
    %98 = vector.load %arg7[%c0_132, %c0_133] : memref<9x32xf32, #tpu.memory_space<vmem>>, vector<1x32xf32>
    %99 = vector.shape_cast %98 : vector<1x32xf32> to vector<1x1x32xf32>
    %100 = vector.broadcast %99 : vector<1x1x32xf32> to vector<16x16x32xf32>
    %101 = arith.mulf %97, %100 : vector<16x16x32xf32>
    %cst_134 = arith.constant dense<0.000000e+00> : vector<16x16xf32>
    %102 = vector.multi_reduction <add>, %101, %cst_134 [2] : vector<16x16x32xf32> to vector<16x16xf32>
    %103 = arith.addf %96, %102 : vector<16x16xf32>
    %c0_135 = arith.constant 0 : index
    %c5_136 = arith.constant 5 : index
    %c0_137 = arith.constant 0 : index
    %104 = vector.load %arg14[%c0_135, %c5_136, %c0_137] : memref<26x26x16xf32, #tpu.memory_space<vmem>>, vector<16x16x16xf32>
    %c1_138 = arith.constant 1 : index
    %c0_139 = arith.constant 0 : index
    %105 = vector.load %arg6[%c1_138, %c0_139] : memref<9x16xf32, #tpu.memory_space<vmem>>, vector<1x16xf32>
    %106 = vector.shape_cast %105 : vector<1x16xf32> to vector<1x1x16xf32>
    %107 = vector.broadcast %106 : vector<1x1x16xf32> to vector<16x16x16xf32>
    %108 = arith.mulf %104, %107 : vector<16x16x16xf32>
    %cst_140 = arith.constant dense<0.000000e+00> : vector<16x16xf32>
    %109 = vector.multi_reduction <add>, %108, %cst_140 [2] : vector<16x16x16xf32> to vector<16x16xf32>
    %110 = arith.addf %103, %109 : vector<16x16xf32>
    %c4_141 = arith.constant 4 : index
    %c5_142 = arith.constant 5 : index
    %c0_143 = arith.constant 0 : index
    %111 = vector.load %arg14[%c4_141, %c5_142, %c0_143] : memref<26x26x16xf32, #tpu.memory_space<vmem>>, vector<16x16x16xf32>
    %c1_144 = arith.constant 1 : index
    %c0_145 = arith.constant 0 : index
    %112 = vector.load %arg8[%c1_144, %c0_145] : memref<9x16xf32, #tpu.memory_space<vmem>>, vector<1x16xf32>
    %113 = vector.shape_cast %112 : vector<1x16xf32> to vector<1x1x16xf32>
    %114 = vector.broadcast %113 : vector<1x1x16xf32> to vector<16x16x16xf32>
    %115 = arith.mulf %111, %114 : vector<16x16x16xf32>
    %cst_146 = arith.constant dense<0.000000e+00> : vector<16x16xf32>
    %116 = vector.multi_reduction <add>, %115, %cst_146 [2] : vector<16x16x16xf32> to vector<16x16xf32>
    %117 = arith.addf %110, %116 : vector<16x16xf32>
    %c1_147 = arith.constant 1 : index
    %c2_148 = arith.constant 2 : index
    %c0_149 = arith.constant 0 : index
    %118 = vector.load %arg13[%c1_147, %c2_148, %c0_149] : memref<20x20x32xf32, #tpu.memory_space<vmem>>, vector<16x16x32xf32>
    %c1_150 = arith.constant 1 : index
    %c0_151 = arith.constant 0 : index
    %119 = vector.load %arg7[%c1_150, %c0_151] : memref<9x32xf32, #tpu.memory_space<vmem>>, vector<1x32xf32>
    %120 = vector.shape_cast %119 : vector<1x32xf32> to vector<1x1x32xf32>
    %121 = vector.broadcast %120 : vector<1x1x32xf32> to vector<16x16x32xf32>
    %122 = arith.mulf %118, %121 : vector<16x16x32xf32>
    %cst_152 = arith.constant dense<0.000000e+00> : vector<16x16xf32>
    %123 = vector.multi_reduction <add>, %122, %cst_152 [2] : vector<16x16x32xf32> to vector<16x16xf32>
    %124 = arith.addf %117, %123 : vector<16x16xf32>
    %c0_153 = arith.constant 0 : index
    %c10 = arith.constant 10 : index
    %c0_154 = arith.constant 0 : index
    %125 = vector.load %arg14[%c0_153, %c10, %c0_154] : memref<26x26x16xf32, #tpu.memory_space<vmem>>, vector<16x16x16xf32>
    %c2_155 = arith.constant 2 : index
    %c0_156 = arith.constant 0 : index
    %126 = vector.load %arg6[%c2_155, %c0_156] : memref<9x16xf32, #tpu.memory_space<vmem>>, vector<1x16xf32>
    %127 = vector.shape_cast %126 : vector<1x16xf32> to vector<1x1x16xf32>
    %128 = vector.broadcast %127 : vector<1x1x16xf32> to vector<16x16x16xf32>
    %129 = arith.mulf %125, %128 : vector<16x16x16xf32>
    %cst_157 = arith.constant dense<0.000000e+00> : vector<16x16xf32>
    %130 = vector.multi_reduction <add>, %129, %cst_157 [2] : vector<16x16x16xf32> to vector<16x16xf32>
    %131 = arith.addf %124, %130 : vector<16x16xf32>
    %c4_158 = arith.constant 4 : index
    %c6 = arith.constant 6 : index
    %c0_159 = arith.constant 0 : index
    %132 = vector.load %arg14[%c4_158, %c6, %c0_159] : memref<26x26x16xf32, #tpu.memory_space<vmem>>, vector<16x16x16xf32>
    %c2_160 = arith.constant 2 : index
    %c0_161 = arith.constant 0 : index
    %133 = vector.load %arg8[%c2_160, %c0_161] : memref<9x16xf32, #tpu.memory_space<vmem>>, vector<1x16xf32>
    %134 = vector.shape_cast %133 : vector<1x16xf32> to vector<1x1x16xf32>
    %135 = vector.broadcast %134 : vector<1x1x16xf32> to vector<16x16x16xf32>
    %136 = arith.mulf %132, %135 : vector<16x16x16xf32>
    %cst_162 = arith.constant dense<0.000000e+00> : vector<16x16xf32>
    %137 = vector.multi_reduction <add>, %136, %cst_162 [2] : vector<16x16x16xf32> to vector<16x16xf32>
    %138 = arith.addf %131, %137 : vector<16x16xf32>
    %c1_163 = arith.constant 1 : index
    %c3 = arith.constant 3 : index
    %c0_164 = arith.constant 0 : index
    %139 = vector.load %arg13[%c1_163, %c3, %c0_164] : memref<20x20x32xf32, #tpu.memory_space<vmem>>, vector<16x16x32xf32>
    %c2_165 = arith.constant 2 : index
    %c0_166 = arith.constant 0 : index
    %140 = vector.load %arg7[%c2_165, %c0_166] : memref<9x32xf32, #tpu.memory_space<vmem>>, vector<1x32xf32>
    %141 = vector.shape_cast %140 : vector<1x32xf32> to vector<1x1x32xf32>
    %142 = vector.broadcast %141 : vector<1x1x32xf32> to vector<16x16x32xf32>
    %143 = arith.mulf %139, %142 : vector<16x16x32xf32>
    %cst_167 = arith.constant dense<0.000000e+00> : vector<16x16xf32>
    %144 = vector.multi_reduction <add>, %143, %cst_167 [2] : vector<16x16x32xf32> to vector<16x16xf32>
    %145 = arith.addf %138, %144 : vector<16x16xf32>
    %c5_168 = arith.constant 5 : index
    %c0_169 = arith.constant 0 : index
    %c0_170 = arith.constant 0 : index
    %146 = vector.load %arg14[%c5_168, %c0_169, %c0_170] : memref<26x26x16xf32, #tpu.memory_space<vmem>>, vector<16x16x16xf32>
    %c3_171 = arith.constant 3 : index
    %c0_172 = arith.constant 0 : index
    %147 = vector.load %arg6[%c3_171, %c0_172] : memref<9x16xf32, #tpu.memory_space<vmem>>, vector<1x16xf32>
    %148 = vector.shape_cast %147 : vector<1x16xf32> to vector<1x1x16xf32>
    %149 = vector.broadcast %148 : vector<1x1x16xf32> to vector<16x16x16xf32>
    %150 = arith.mulf %146, %149 : vector<16x16x16xf32>
    %cst_173 = arith.constant dense<0.000000e+00> : vector<16x16xf32>
    %151 = vector.multi_reduction <add>, %150, %cst_173 [2] : vector<16x16x16xf32> to vector<16x16xf32>
    %152 = arith.addf %145, %151 : vector<16x16xf32>
    %c5_174 = arith.constant 5 : index
    %c4_175 = arith.constant 4 : index
    %c0_176 = arith.constant 0 : index
    %153 = vector.load %arg14[%c5_174, %c4_175, %c0_176] : memref<26x26x16xf32, #tpu.memory_space<vmem>>, vector<16x16x16xf32>
    %c3_177 = arith.constant 3 : index
    %c0_178 = arith.constant 0 : index
    %154 = vector.load %arg8[%c3_177, %c0_178] : memref<9x16xf32, #tpu.memory_space<vmem>>, vector<1x16xf32>
    %155 = vector.shape_cast %154 : vector<1x16xf32> to vector<1x1x16xf32>
    %156 = vector.broadcast %155 : vector<1x1x16xf32> to vector<16x16x16xf32>
    %157 = arith.mulf %153, %156 : vector<16x16x16xf32>
    %cst_179 = arith.constant dense<0.000000e+00> : vector<16x16xf32>
    %158 = vector.multi_reduction <add>, %157, %cst_179 [2] : vector<16x16x16xf32> to vector<16x16xf32>
    %159 = arith.addf %152, %158 : vector<16x16xf32>
    %c2_180 = arith.constant 2 : index
    %c1_181 = arith.constant 1 : index
    %c0_182 = arith.constant 0 : index
    %160 = vector.load %arg13[%c2_180, %c1_181, %c0_182] : memref<20x20x32xf32, #tpu.memory_space<vmem>>, vector<16x16x32xf32>
    %c3_183 = arith.constant 3 : index
    %c0_184 = arith.constant 0 : index
    %161 = vector.load %arg7[%c3_183, %c0_184] : memref<9x32xf32, #tpu.memory_space<vmem>>, vector<1x32xf32>
    %162 = vector.shape_cast %161 : vector<1x32xf32> to vector<1x1x32xf32>
    %163 = vector.broadcast %162 : vector<1x1x32xf32> to vector<16x16x32xf32>
    %164 = arith.mulf %160, %163 : vector<16x16x32xf32>
    %cst_185 = arith.constant dense<0.000000e+00> : vector<16x16xf32>
    %165 = vector.multi_reduction <add>, %164, %cst_185 [2] : vector<16x16x32xf32> to vector<16x16xf32>
    %166 = arith.addf %159, %165 : vector<16x16xf32>
    %c5_186 = arith.constant 5 : index
    %c5_187 = arith.constant 5 : index
    %c0_188 = arith.constant 0 : index
    %167 = vector.load %arg14[%c5_186, %c5_187, %c0_188] : memref<26x26x16xf32, #tpu.memory_space<vmem>>, vector<16x16x16xf32>
    %c4_189 = arith.constant 4 : index
    %c0_190 = arith.constant 0 : index
    %168 = vector.load %arg6[%c4_189, %c0_190] : memref<9x16xf32, #tpu.memory_space<vmem>>, vector<1x16xf32>
    %169 = vector.shape_cast %168 : vector<1x16xf32> to vector<1x1x16xf32>
    %170 = vector.broadcast %169 : vector<1x1x16xf32> to vector<16x16x16xf32>
    %171 = arith.mulf %167, %170 : vector<16x16x16xf32>
    %cst_191 = arith.constant dense<0.000000e+00> : vector<16x16xf32>
    %172 = vector.multi_reduction <add>, %171, %cst_191 [2] : vector<16x16x16xf32> to vector<16x16xf32>
    %173 = arith.addf %166, %172 : vector<16x16xf32>
    %c5_192 = arith.constant 5 : index
    %c5_193 = arith.constant 5 : index
    %c0_194 = arith.constant 0 : index
    %174 = vector.load %arg14[%c5_192, %c5_193, %c0_194] : memref<26x26x16xf32, #tpu.memory_space<vmem>>, vector<16x16x16xf32>
    %c4_195 = arith.constant 4 : index
    %c0_196 = arith.constant 0 : index
    %175 = vector.load %arg8[%c4_195, %c0_196] : memref<9x16xf32, #tpu.memory_space<vmem>>, vector<1x16xf32>
    %176 = vector.shape_cast %175 : vector<1x16xf32> to vector<1x1x16xf32>
    %177 = vector.broadcast %176 : vector<1x1x16xf32> to vector<16x16x16xf32>
    %178 = arith.mulf %174, %177 : vector<16x16x16xf32>
    %cst_197 = arith.constant dense<0.000000e+00> : vector<16x16xf32>
    %179 = vector.multi_reduction <add>, %178, %cst_197 [2] : vector<16x16x16xf32> to vector<16x16xf32>
    %180 = arith.addf %173, %179 : vector<16x16xf32>
    %c2_198 = arith.constant 2 : index
    %c2_199 = arith.constant 2 : index
    %c0_200 = arith.constant 0 : index
    %181 = vector.load %arg13[%c2_198, %c2_199, %c0_200] : memref<20x20x32xf32, #tpu.memory_space<vmem>>, vector<16x16x32xf32>
    %c4_201 = arith.constant 4 : index
    %c0_202 = arith.constant 0 : index
    %182 = vector.load %arg7[%c4_201, %c0_202] : memref<9x32xf32, #tpu.memory_space<vmem>>, vector<1x32xf32>
    %183 = vector.shape_cast %182 : vector<1x32xf32> to vector<1x1x32xf32>
    %184 = vector.broadcast %183 : vector<1x1x32xf32> to vector<16x16x32xf32>
    %185 = arith.mulf %181, %184 : vector<16x16x32xf32>
    %cst_203 = arith.constant dense<0.000000e+00> : vector<16x16xf32>
    %186 = vector.multi_reduction <add>, %185, %cst_203 [2] : vector<16x16x32xf32> to vector<16x16xf32>
    %187 = arith.addf %180, %186 : vector<16x16xf32>
    %c5_204 = arith.constant 5 : index
    %c10_205 = arith.constant 10 : index
    %c0_206 = arith.constant 0 : index
    %188 = vector.load %arg14[%c5_204, %c10_205, %c0_206] : memref<26x26x16xf32, #tpu.memory_space<vmem>>, vector<16x16x16xf32>
    %c5_207 = arith.constant 5 : index
    %c0_208 = arith.constant 0 : index
    %189 = vector.load %arg6[%c5_207, %c0_208] : memref<9x16xf32, #tpu.memory_space<vmem>>, vector<1x16xf32>
    %190 = vector.shape_cast %189 : vector<1x16xf32> to vector<1x1x16xf32>
    %191 = vector.broadcast %190 : vector<1x1x16xf32> to vector<16x16x16xf32>
    %192 = arith.mulf %188, %191 : vector<16x16x16xf32>
    %cst_209 = arith.constant dense<0.000000e+00> : vector<16x16xf32>
    %193 = vector.multi_reduction <add>, %192, %cst_209 [2] : vector<16x16x16xf32> to vector<16x16xf32>
    %194 = arith.addf %187, %193 : vector<16x16xf32>
    %c5_210 = arith.constant 5 : index
    %c6_211 = arith.constant 6 : index
    %c0_212 = arith.constant 0 : index
    %195 = vector.load %arg14[%c5_210, %c6_211, %c0_212] : memref<26x26x16xf32, #tpu.memory_space<vmem>>, vector<16x16x16xf32>
    %c5_213 = arith.constant 5 : index
    %c0_214 = arith.constant 0 : index
    %196 = vector.load %arg8[%c5_213, %c0_214] : memref<9x16xf32, #tpu.memory_space<vmem>>, vector<1x16xf32>
    %197 = vector.shape_cast %196 : vector<1x16xf32> to vector<1x1x16xf32>
    %198 = vector.broadcast %197 : vector<1x1x16xf32> to vector<16x16x16xf32>
    %199 = arith.mulf %195, %198 : vector<16x16x16xf32>
    %cst_215 = arith.constant dense<0.000000e+00> : vector<16x16xf32>
    %200 = vector.multi_reduction <add>, %199, %cst_215 [2] : vector<16x16x16xf32> to vector<16x16xf32>
    %201 = arith.addf %194, %200 : vector<16x16xf32>
    %c2_216 = arith.constant 2 : index
    %c3_217 = arith.constant 3 : index
    %c0_218 = arith.constant 0 : index
    %202 = vector.load %arg13[%c2_216, %c3_217, %c0_218] : memref<20x20x32xf32, #tpu.memory_space<vmem>>, vector<16x16x32xf32>
    %c5_219 = arith.constant 5 : index
    %c0_220 = arith.constant 0 : index
    %203 = vector.load %arg7[%c5_219, %c0_220] : memref<9x32xf32, #tpu.memory_space<vmem>>, vector<1x32xf32>
    %204 = vector.shape_cast %203 : vector<1x32xf32> to vector<1x1x32xf32>
    %205 = vector.broadcast %204 : vector<1x1x32xf32> to vector<16x16x32xf32>
    %206 = arith.mulf %202, %205 : vector<16x16x32xf32>
    %cst_221 = arith.constant dense<0.000000e+00> : vector<16x16xf32>
    %207 = vector.multi_reduction <add>, %206, %cst_221 [2] : vector<16x16x32xf32> to vector<16x16xf32>
    %208 = arith.addf %201, %207 : vector<16x16xf32>
    %c10_222 = arith.constant 10 : index
    %c0_223 = arith.constant 0 : index
    %c0_224 = arith.constant 0 : index
    %209 = vector.load %arg14[%c10_222, %c0_223, %c0_224] : memref<26x26x16xf32, #tpu.memory_space<vmem>>, vector<16x16x16xf32>
    %c6_225 = arith.constant 6 : index
    %c0_226 = arith.constant 0 : index
    %210 = vector.load %arg6[%c6_225, %c0_226] : memref<9x16xf32, #tpu.memory_space<vmem>>, vector<1x16xf32>
    %211 = vector.shape_cast %210 : vector<1x16xf32> to vector<1x1x16xf32>
    %212 = vector.broadcast %211 : vector<1x1x16xf32> to vector<16x16x16xf32>
    %213 = arith.mulf %209, %212 : vector<16x16x16xf32>
    %cst_227 = arith.constant dense<0.000000e+00> : vector<16x16xf32>
    %214 = vector.multi_reduction <add>, %213, %cst_227 [2] : vector<16x16x16xf32> to vector<16x16xf32>
    %215 = arith.addf %208, %214 : vector<16x16xf32>
    %c6_228 = arith.constant 6 : index
    %c4_229 = arith.constant 4 : index
    %c0_230 = arith.constant 0 : index
    %216 = vector.load %arg14[%c6_228, %c4_229, %c0_230] : memref<26x26x16xf32, #tpu.memory_space<vmem>>, vector<16x16x16xf32>
    %c6_231 = arith.constant 6 : index
    %c0_232 = arith.constant 0 : index
    %217 = vector.load %arg8[%c6_231, %c0_232] : memref<9x16xf32, #tpu.memory_space<vmem>>, vector<1x16xf32>
    %218 = vector.shape_cast %217 : vector<1x16xf32> to vector<1x1x16xf32>
    %219 = vector.broadcast %218 : vector<1x1x16xf32> to vector<16x16x16xf32>
    %220 = arith.mulf %216, %219 : vector<16x16x16xf32>
    %cst_233 = arith.constant dense<0.000000e+00> : vector<16x16xf32>
    %221 = vector.multi_reduction <add>, %220, %cst_233 [2] : vector<16x16x16xf32> to vector<16x16xf32>
    %222 = arith.addf %215, %221 : vector<16x16xf32>
    %c3_234 = arith.constant 3 : index
    %c1_235 = arith.constant 1 : index
    %c0_236 = arith.constant 0 : index
    %223 = vector.load %arg13[%c3_234, %c1_235, %c0_236] : memref<20x20x32xf32, #tpu.memory_space<vmem>>, vector<16x16x32xf32>
    %c6_237 = arith.constant 6 : index
    %c0_238 = arith.constant 0 : index
    %224 = vector.load %arg7[%c6_237, %c0_238] : memref<9x32xf32, #tpu.memory_space<vmem>>, vector<1x32xf32>
    %225 = vector.shape_cast %224 : vector<1x32xf32> to vector<1x1x32xf32>
    %226 = vector.broadcast %225 : vector<1x1x32xf32> to vector<16x16x32xf32>
    %227 = arith.mulf %223, %226 : vector<16x16x32xf32>
    %cst_239 = arith.constant dense<0.000000e+00> : vector<16x16xf32>
    %228 = vector.multi_reduction <add>, %227, %cst_239 [2] : vector<16x16x32xf32> to vector<16x16xf32>
    %229 = arith.addf %222, %228 : vector<16x16xf32>
    %c10_240 = arith.constant 10 : index
    %c5_241 = arith.constant 5 : index
    %c0_242 = arith.constant 0 : index
    %230 = vector.load %arg14[%c10_240, %c5_241, %c0_242] : memref<26x26x16xf32, #tpu.memory_space<vmem>>, vector<16x16x16xf32>
    %c7 = arith.constant 7 : index
    %c0_243 = arith.constant 0 : index
    %231 = vector.load %arg6[%c7, %c0_243] : memref<9x16xf32, #tpu.memory_space<vmem>>, vector<1x16xf32>
    %232 = vector.shape_cast %231 : vector<1x16xf32> to vector<1x1x16xf32>
    %233 = vector.broadcast %232 : vector<1x1x16xf32> to vector<16x16x16xf32>
    %234 = arith.mulf %230, %233 : vector<16x16x16xf32>
    %cst_244 = arith.constant dense<0.000000e+00> : vector<16x16xf32>
    %235 = vector.multi_reduction <add>, %234, %cst_244 [2] : vector<16x16x16xf32> to vector<16x16xf32>
    %236 = arith.addf %229, %235 : vector<16x16xf32>
    %c6_245 = arith.constant 6 : index
    %c5_246 = arith.constant 5 : index
    %c0_247 = arith.constant 0 : index
    %237 = vector.load %arg14[%c6_245, %c5_246, %c0_247] : memref<26x26x16xf32, #tpu.memory_space<vmem>>, vector<16x16x16xf32>
    %c7_248 = arith.constant 7 : index
    %c0_249 = arith.constant 0 : index
    %238 = vector.load %arg8[%c7_248, %c0_249] : memref<9x16xf32, #tpu.memory_space<vmem>>, vector<1x16xf32>
    %239 = vector.shape_cast %238 : vector<1x16xf32> to vector<1x1x16xf32>
    %240 = vector.broadcast %239 : vector<1x1x16xf32> to vector<16x16x16xf32>
    %241 = arith.mulf %237, %240 : vector<16x16x16xf32>
    %cst_250 = arith.constant dense<0.000000e+00> : vector<16x16xf32>
    %242 = vector.multi_reduction <add>, %241, %cst_250 [2] : vector<16x16x16xf32> to vector<16x16xf32>
    %243 = arith.addf %236, %242 : vector<16x16xf32>
    %c3_251 = arith.constant 3 : index
    %c2_252 = arith.constant 2 : index
    %c0_253 = arith.constant 0 : index
    %244 = vector.load %arg13[%c3_251, %c2_252, %c0_253] : memref<20x20x32xf32, #tpu.memory_space<vmem>>, vector<16x16x32xf32>
    %c7_254 = arith.constant 7 : index
    %c0_255 = arith.constant 0 : index
    %245 = vector.load %arg7[%c7_254, %c0_255] : memref<9x32xf32, #tpu.memory_space<vmem>>, vector<1x32xf32>
    %246 = vector.shape_cast %245 : vector<1x32xf32> to vector<1x1x32xf32>
    %247 = vector.broadcast %246 : vector<1x1x32xf32> to vector<16x16x32xf32>
    %248 = arith.mulf %244, %247 : vector<16x16x32xf32>
    %cst_256 = arith.constant dense<0.000000e+00> : vector<16x16xf32>
    %249 = vector.multi_reduction <add>, %248, %cst_256 [2] : vector<16x16x32xf32> to vector<16x16xf32>
    %250 = arith.addf %243, %249 : vector<16x16xf32>
    %c10_257 = arith.constant 10 : index
    %c10_258 = arith.constant 10 : index
    %c0_259 = arith.constant 0 : index
    %251 = vector.load %arg14[%c10_257, %c10_258, %c0_259] : memref<26x26x16xf32, #tpu.memory_space<vmem>>, vector<16x16x16xf32>
    %c8 = arith.constant 8 : index
    %c0_260 = arith.constant 0 : index
    %252 = vector.load %arg6[%c8, %c0_260] : memref<9x16xf32, #tpu.memory_space<vmem>>, vector<1x16xf32>
    %253 = vector.shape_cast %252 : vector<1x16xf32> to vector<1x1x16xf32>
    %254 = vector.broadcast %253 : vector<1x1x16xf32> to vector<16x16x16xf32>
    %255 = arith.mulf %251, %254 : vector<16x16x16xf32>
    %cst_261 = arith.constant dense<0.000000e+00> : vector<16x16xf32>
    %256 = vector.multi_reduction <add>, %255, %cst_261 [2] : vector<16x16x16xf32> to vector<16x16xf32>
    %257 = arith.addf %250, %256 : vector<16x16xf32>
    %c6_262 = arith.constant 6 : index
    %c6_263 = arith.constant 6 : index
    %c0_264 = arith.constant 0 : index
    %258 = vector.load %arg14[%c6_262, %c6_263, %c0_264] : memref<26x26x16xf32, #tpu.memory_space<vmem>>, vector<16x16x16xf32>
    %c8_265 = arith.constant 8 : index
    %c0_266 = arith.constant 0 : index
    %259 = vector.load %arg8[%c8_265, %c0_266] : memref<9x16xf32, #tpu.memory_space<vmem>>, vector<1x16xf32>
    %260 = vector.shape_cast %259 : vector<1x16xf32> to vector<1x1x16xf32>
    %261 = vector.broadcast %260 : vector<1x1x16xf32> to vector<16x16x16xf32>
    %262 = arith.mulf %258, %261 : vector<16x16x16xf32>
    %cst_267 = arith.constant dense<0.000000e+00> : vector<16x16xf32>
    %263 = vector.multi_reduction <add>, %262, %cst_267 [2] : vector<16x16x16xf32> to vector<16x16xf32>
    %264 = arith.addf %257, %263 : vector<16x16xf32>
    %c3_268 = arith.constant 3 : index
    %c3_269 = arith.constant 3 : index
    %c0_270 = arith.constant 0 : index
    %265 = vector.load %arg13[%c3_268, %c3_269, %c0_270] : memref<20x20x32xf32, #tpu.memory_space<vmem>>, vector<16x16x32xf32>
    %c8_271 = arith.constant 8 : index
    %c0_272 = arith.constant 0 : index
    %266 = vector.load %arg7[%c8_271, %c0_272] : memref<9x32xf32, #tpu.memory_space<vmem>>, vector<1x32xf32>
    %267 = vector.shape_cast %266 : vector<1x32xf32> to vector<1x1x32xf32>
    %268 = vector.broadcast %267 : vector<1x1x32xf32> to vector<16x16x32xf32>
    %269 = arith.mulf %265, %268 : vector<16x16x32xf32>
    %cst_273 = arith.constant dense<0.000000e+00> : vector<16x16xf32>
    %270 = vector.multi_reduction <add>, %269, %cst_273 [2] : vector<16x16x32xf32> to vector<16x16xf32>
    %271 = arith.addf %264, %270 : vector<16x16xf32>
    %c9 = arith.constant 9 : index
    %272 = memref.load %arg9[%c9] : memref<11xf32, #tpu.memory_space<smem>>
    %273 = vector.broadcast %272 : f32 to vector<16x16xf32>
    %274 = arith.addf %271, %273 : vector<16x16xf32>
    %cst_274 = arith.constant 0.000000e+00 : f32
    %275 = vector.broadcast %cst_274 : f32 to vector<1x18xf32>
    %c0_275 = arith.constant 0 : index
    %c0_276 = arith.constant 0 : index
    %276 = vector.load %arg15[%c0_275, %c0_276] : memref<18x18xf32, #tpu.memory_space<vmem>>, vector<1x18xf32>
    tpu.vector_store %arg15[%c0_275, %c0_276], %275 {strides = array<i32>} : memref<18x18xf32, #tpu.memory_space<vmem>>, vector<1x18xf32>,
    %cst_277 = arith.constant 0.000000e+00 : f32
    %277 = vector.broadcast %cst_277 : f32 to vector<1x18xf32>
    %c17_278 = arith.constant 17 : index
    %c0_279 = arith.constant 0 : index
    %278 = vector.load %arg15[%c17_278, %c0_279] : memref<18x18xf32, #tpu.memory_space<vmem>>, vector<1x18xf32>
    tpu.vector_store %arg15[%c17_278, %c0_279], %277 {strides = array<i32>} : memref<18x18xf32, #tpu.memory_space<vmem>>, vector<1x18xf32>,
    %cst_280 = arith.constant 0.000000e+00 : f32
    %279 = vector.broadcast %cst_280 : f32 to vector<18x1xf32>
    %c0_281 = arith.constant 0 : index
    %c0_282 = arith.constant 0 : index
    %280 = vector.load %arg15[%c0_281, %c0_282] : memref<18x18xf32, #tpu.memory_space<vmem>>, vector<18x1xf32>
    tpu.vector_store %arg15[%c0_281, %c0_282], %279 {strides = array<i32>} : memref<18x18xf32, #tpu.memory_space<vmem>>, vector<18x1xf32>,
    %cst_283 = arith.constant 0.000000e+00 : f32
    %281 = vector.broadcast %cst_283 : f32 to vector<18x1xf32>
    %c0_284 = arith.constant 0 : index
    %c17_285 = arith.constant 17 : index
    %282 = vector.load %arg15[%c0_284, %c17_285] : memref<18x18xf32, #tpu.memory_space<vmem>>, vector<18x1xf32>
    tpu.vector_store %arg15[%c0_284, %c17_285], %281 {strides = array<i32>} : memref<18x18xf32, #tpu.memory_space<vmem>>, vector<18x1xf32>,
    %c1_286 = arith.constant 1 : index
    %c1_287 = arith.constant 1 : index
    %283 = vector.load %arg15[%c1_286, %c1_287] : memref<18x18xf32, #tpu.memory_space<vmem>>, vector<16x16xf32>
    tpu.vector_store %arg15[%c1_286, %c1_287], %274 {strides = array<i32>} : memref<18x18xf32, #tpu.memory_space<vmem>>, vector<16x16xf32>,
    %cst_288 = arith.constant 0.000000e+00 : f32
    %284 = vector.broadcast %cst_288 : f32 to vector<16x16xf32>
    %c0_289 = arith.constant 0 : index
    %c0_290 = arith.constant 0 : index
    %285 = vector.load %arg15[%c0_289, %c0_290] : memref<18x18xf32, #tpu.memory_space<vmem>>, vector<16x16xf32>
    %c0_291 = arith.constant 0 : index
    %286 = memref.load %arg9[%c0_291] : memref<11xf32, #tpu.memory_space<smem>>
    %287 = vector.broadcast %286 : f32 to vector<16x16xf32>
    %288 = arith.mulf %285, %287 : vector<16x16xf32>
    %289 = arith.addf %284, %288 : vector<16x16xf32>
    %c0_292 = arith.constant 0 : index
    %c1_293 = arith.constant 1 : index
    %290 = vector.load %arg15[%c0_292, %c1_293] : memref<18x18xf32, #tpu.memory_space<vmem>>, vector<16x16xf32>
    %c1_294 = arith.constant 1 : index
    %291 = memref.load %arg9[%c1_294] : memref<11xf32, #tpu.memory_space<smem>>
    %292 = vector.broadcast %291 : f32 to vector<16x16xf32>
    %293 = arith.mulf %290, %292 : vector<16x16xf32>
    %294 = arith.addf %289, %293 : vector<16x16xf32>
    %c0_295 = arith.constant 0 : index
    %c2_296 = arith.constant 2 : index
    %295 = vector.load %arg15[%c0_295, %c2_296] : memref<18x18xf32, #tpu.memory_space<vmem>>, vector<16x16xf32>
    %c2_297 = arith.constant 2 : index
    %296 = memref.load %arg9[%c2_297] : memref<11xf32, #tpu.memory_space<smem>>
    %297 = vector.broadcast %296 : f32 to vector<16x16xf32>
    %298 = arith.mulf %295, %297 : vector<16x16xf32>
    %299 = arith.addf %294, %298 : vector<16x16xf32>
    %c1_298 = arith.constant 1 : index
    %c0_299 = arith.constant 0 : index
    %300 = vector.load %arg15[%c1_298, %c0_299] : memref<18x18xf32, #tpu.memory_space<vmem>>, vector<16x16xf32>
    %c3_300 = arith.constant 3 : index
    %301 = memref.load %arg9[%c3_300] : memref<11xf32, #tpu.memory_space<smem>>
    %302 = vector.broadcast %301 : f32 to vector<16x16xf32>
    %303 = arith.mulf %300, %302 : vector<16x16xf32>
    %304 = arith.addf %299, %303 : vector<16x16xf32>
    %c1_301 = arith.constant 1 : index
    %c1_302 = arith.constant 1 : index
    %305 = vector.load %arg15[%c1_301, %c1_302] : memref<18x18xf32, #tpu.memory_space<vmem>>, vector<16x16xf32>
    %c4_303 = arith.constant 4 : index
    %306 = memref.load %arg9[%c4_303] : memref<11xf32, #tpu.memory_space<smem>>
    %307 = vector.broadcast %306 : f32 to vector<16x16xf32>
    %308 = arith.mulf %305, %307 : vector<16x16xf32>
    %309 = arith.addf %304, %308 : vector<16x16xf32>
    %c1_304 = arith.constant 1 : index
    %c2_305 = arith.constant 2 : index
    %310 = vector.load %arg15[%c1_304, %c2_305] : memref<18x18xf32, #tpu.memory_space<vmem>>, vector<16x16xf32>
    %c5_306 = arith.constant 5 : index
    %311 = memref.load %arg9[%c5_306] : memref<11xf32, #tpu.memory_space<smem>>
    %312 = vector.broadcast %311 : f32 to vector<16x16xf32>
    %313 = arith.mulf %310, %312 : vector<16x16xf32>
    %314 = arith.addf %309, %313 : vector<16x16xf32>
    %c2_307 = arith.constant 2 : index
    %c0_308 = arith.constant 0 : index
    %315 = vector.load %arg15[%c2_307, %c0_308] : memref<18x18xf32, #tpu.memory_space<vmem>>, vector<16x16xf32>
    %c6_309 = arith.constant 6 : index
    %316 = memref.load %arg9[%c6_309] : memref<11xf32, #tpu.memory_space<smem>>
    %317 = vector.broadcast %316 : f32 to vector<16x16xf32>
    %318 = arith.mulf %315, %317 : vector<16x16xf32>
    %319 = arith.addf %314, %318 : vector<16x16xf32>
    %c2_310 = arith.constant 2 : index
    %c1_311 = arith.constant 1 : index
    %320 = vector.load %arg15[%c2_310, %c1_311] : memref<18x18xf32, #tpu.memory_space<vmem>>, vector<16x16xf32>
    %c7_312 = arith.constant 7 : index
    %321 = memref.load %arg9[%c7_312] : memref<11xf32, #tpu.memory_space<smem>>
    %322 = vector.broadcast %321 : f32 to vector<16x16xf32>
    %323 = arith.mulf %320, %322 : vector<16x16xf32>
    %324 = arith.addf %319, %323 : vector<16x16xf32>
    %c2_313 = arith.constant 2 : index
    %c2_314 = arith.constant 2 : index
    %325 = vector.load %arg15[%c2_313, %c2_314] : memref<18x18xf32, #tpu.memory_space<vmem>>, vector<16x16xf32>
    %c8_315 = arith.constant 8 : index
    %326 = memref.load %arg9[%c8_315] : memref<11xf32, #tpu.memory_space<smem>>
    %327 = vector.broadcast %326 : f32 to vector<16x16xf32>
    %328 = arith.mulf %325, %327 : vector<16x16xf32>
    %329 = arith.addf %324, %328 : vector<16x16xf32>
    %c10_316 = arith.constant 10 : index
    %330 = memref.load %arg9[%c10_316] : memref<11xf32, #tpu.memory_space<smem>>
    %331 = vector.broadcast %330 : f32 to vector<16x16xf32>
    %332 = arith.addf %329, %331 : vector<16x16xf32>
    %c0_317 = arith.constant 0 : index
    %c0_318 = arith.constant 0 : index
    %c0_319 = arith.constant 0 : index
    %333 = vector.load %arg10[%c0_317, %c0_318, %c0_319] : memref<1x16x16xf32, #tpu.memory_space<vmem>>, vector<1x16x16xf32>
    %334 = vector.shape_cast %333 : vector<1x16x16xf32> to vector<16x16xf32>
    %335 = vector.shape_cast %332 : vector<16x16xf32> to vector<1x16x16xf32>
    tpu.vector_store %arg10[%c0_317, %c0_318, %c0_319], %335 {strides = array<i32>} : memref<1x16x16xf32, #tpu.memory_space<vmem>>, vector<1x16x16xf32>,
    %336 = vector.shape_cast %332 : vector<16x16xf32> to vector<1x16x16xf32>
    %cst_320 = arith.constant dense<0.000000e+00> : vector<1xf32>
    %337 = vector.multi_reduction <add>, %336, %cst_320 [1, 2] : vector<1x16x16xf32> to vector<1xf32>
    %338 = vector.shape_cast %337 : vector<1xf32> to vector<1x1x1xf32>
    %339 = vector.extract %338[0, 0, 0] : f32 from vector<1x1x1xf32>
    %340 = arith.mulf %332, %332 : vector<16x16xf32>
    %341 = vector.shape_cast %340 : vector<16x16xf32> to vector<1x16x16xf32>
    %cst_321 = arith.constant dense<0.000000e+00> : vector<1xf32>
    %342 = vector.multi_reduction <add>, %341, %cst_321 [1, 2] : vector<1x16x16xf32> to vector<1xf32>
    %343 = vector.shape_cast %342 : vector<1xf32> to vector<1x1x1xf32>
    %344 = vector.extract %343[0, 0, 0] : f32 from vector<1x1x1xf32>
    %345 = vector.broadcast %339 : f32 to vector<1x128xf32>
    %346 = vector.broadcast %344 : f32 to vector<1x128xf32>
    %347 = tpu.concatenate %345, %346 in 0 : vector<1x128xf32>, vector<1x128xf32> -> vector<2x128xf32>
    %c0_322 = arith.constant 0 : index
    %c0_323 = arith.constant 0 : index
    %c0_324 = arith.constant 0 : index
    %348 = vector.load %arg11[%c0_322, %c0_323, %c0_324] : memref<1x2x128xf32, #tpu.memory_space<vmem>>, vector<1x2x128xf32>
    %349 = vector.shape_cast %348 : vector<1x2x128xf32> to vector<2x128xf32>
    %350 = vector.shape_cast %347 : vector<2x128xf32> to vector<1x2x128xf32>
    tpu.vector_store %arg11[%c0_322, %c0_323, %c0_324], %350 {strides = array<i32>} : memref<1x2x128xf32, #tpu.memory_space<vmem>>, vector<1x2x128xf32>,
    return
  }
  func.func @transform_0(%arg0: i32) -> (i32, i32, i32, i32) {
    %c0_i32 = arith.constant 0 : i32
    %c0_i32_0 = arith.constant 0 : i32
    %c0_i32_1 = arith.constant 0 : i32
    %c0_i32_2 = arith.constant 0 : i32
    return %arg0, %c0_i32, %c0_i32_0, %c0_i32_1 : i32, i32, i32, i32
  }
  func.func @transform_1(%arg0: i32) -> (i32, i32) {
    %c0_i32 = arith.constant 0 : i32
    %c0_i32_0 = arith.constant 0 : i32
    %c0_i32_1 = arith.constant 0 : i32
    return %c0_i32, %c0_i32_0 : i32, i32
  }
  func.func @transform_2(%arg0: i32) -> (i32, i32) {
    %c0_i32 = arith.constant 0 : i32
    %c0_i32_0 = arith.constant 0 : i32
    %c0_i32_1 = arith.constant 0 : i32
    return %c0_i32, %c0_i32_0 : i32, i32
  }
  func.func @transform_3(%arg0: i32) -> (i32, i32) {
    %c0_i32 = arith.constant 0 : i32
    %c0_i32_0 = arith.constant 0 : i32
    %c0_i32_1 = arith.constant 0 : i32
    return %c0_i32, %c0_i32_0 : i32, i32
  }
  func.func @transform_4(%arg0: i32) -> (i32, i32) {
    %c0_i32 = arith.constant 0 : i32
    %c0_i32_0 = arith.constant 0 : i32
    %c0_i32_1 = arith.constant 0 : i32
    return %c0_i32, %c0_i32_0 : i32, i32
  }
  func.func @transform_5(%arg0: i32) -> (i32, i32) {
    %c0_i32 = arith.constant 0 : i32
    %c0_i32_0 = arith.constant 0 : i32
    %c0_i32_1 = arith.constant 0 : i32
    return %c0_i32, %c0_i32_0 : i32, i32
  }
  func.func @transform_6(%arg0: i32) -> (i32, i32) {
    %c0_i32 = arith.constant 0 : i32
    %c0_i32_0 = arith.constant 0 : i32
    %c0_i32_1 = arith.constant 0 : i32
    return %c0_i32, %c0_i32_0 : i32, i32
  }
  func.func @transform_7(%arg0: i32) -> (i32, i32) {
    %c0_i32 = arith.constant 0 : i32
    %c0_i32_0 = arith.constant 0 : i32
    %c0_i32_1 = arith.constant 0 : i32
    return %c0_i32, %c0_i32_0 : i32, i32
  }
  func.func @transform_8(%arg0: i32) -> i32 {
    %c0_i32 = arith.constant 0 : i32
    %c0_i32_0 = arith.constant 0 : i32
    return %c0_i32 : i32
  }
  func.func @transform_9(%arg0: i32) -> (i32, i32, i32) {
    %c0_i32 = arith.constant 0 : i32
    %c0_i32_0 = arith.constant 0 : i32
    %c0_i32_1 = arith.constant 0 : i32
    return %arg0, %c0_i32, %c0_i32_0 : i32, i32, i32
  }
  func.func @transform_10(%arg0: i32) -> (i32, i32, i32) {
    %c0_i32 = arith.constant 0 : i32
    %c0_i32_0 = arith.constant 0 : i32
    %c0_i32_1 = arith.constant 0 : i32
    return %arg0, %c0_i32, %c0_i32_0 : i32, i32, i32
  }
}

module attributes {stable_mosaic.version = 11 : i64} {
  func.func @_bn_sigmoid_kernel(%arg0: memref<4x128xf32, #tpu.memory_space<vmem>>, %arg1: memref<2xf32, #tpu.memory_space<smem>>, %arg2: memref<4x128xf32, #tpu.memory_space<vmem>>) attributes {dimension_semantics = [], scalar_prefetch = 0 : i64, scratch_operands = 0 : i64, tpu.core_type = #tpu.core_type<tc>} {
    %c0 = arith.constant 0 : index
    %c0_0 = arith.constant 0 : index
    %0 = vector.load %arg0[%c0, %c0_0] : memref<4x128xf32, #tpu.memory_space<vmem>>, vector<4x128xf32>
    %c0_1 = arith.constant 0 : index
    %1 = memref.load %arg1[%c0_1] : memref<2xf32, #tpu.memory_space<smem>>
    %2 = vector.broadcast %1 : f32 to vector<4x128xf32>
    %3 = arith.mulf %0, %2 : vector<4x128xf32>
    %c1 = arith.constant 1 : index
    %4 = memref.load %arg1[%c1] : memref<2xf32, #tpu.memory_space<smem>>
    %5 = vector.broadcast %4 : f32 to vector<4x128xf32>
    %6 = arith.addf %3, %5 : vector<4x128xf32>
    %cst = arith.constant 0.000000e+00 : f32
    %7 = vector.broadcast %cst : f32 to vector<4x128xf32>
    %8 = arith.subf %7, %6 : vector<4x128xf32>
    %9 = math.exp %8 : vector<4x128xf32>
    %cst_2 = arith.constant 1.000000e+00 : f32
    %10 = vector.broadcast %cst_2 : f32 to vector<4x128xf32>
    %11 = arith.addf %10, %9 : vector<4x128xf32>
    %12 = tpu.reciprocal %11 {approx = true} : vector<4x128xf32> -> vector<4x128xf32>
    %c0_3 = arith.constant 0 : index
    %c0_4 = arith.constant 0 : index
    %13 = vector.load %arg2[%c0_3, %c0_4] : memref<4x128xf32, #tpu.memory_space<vmem>>, vector<4x128xf32>
    tpu.vector_store %arg2[%c0_3, %c0_4], %12 {strides = array<i32>} : memref<4x128xf32, #tpu.memory_space<vmem>>, vector<4x128xf32>,
    return
  }
}

</mosaic_0001>

<llo_original>
// kernel: conf_block_forward.3
$region0: #{conf_block_forward.3}
  #allocation0 [shape = 'u32[]', space=smem, size = 0x4, offset = 0x4, fixed_abs, tag = 'smem constant byte address 0x4 - core index']
  #allocation1 [shape = 'u32[144,128]{1,0:T(1,128)}', space=vmem, size = 0x12000, scoped, tag = 'internal scratch']
  %s0 = inlined_call_operand.vmem [shape: f32[4,128], index: 0, kind: input, shape index: {}]
  %s1 = inlined_call_operand.vmem [shape: f32[2], index: 1, kind: input, shape index: {}]
  %s2 = inlined_call_operand.vmem [shape: f32[4,128], index: 2, kind: output, shape index: {}]
  %s3 = sld [smem:[#allocation0]]
  $region22: #{conf_block_forward.3} parent=0
    _
  %s5 = ssub.s32 1, %s3
  %s6 = scalar_select 0, %s5, %s3
  $region1: #{conf_block_forward.3} parent=0
    #allocation2 [shape = 'u8[512]{0}', space=smem, size = 0x200, scoped, tag = 'input window, operand 1, single buffered']
    #allocation3 [shape = 's32[1]{0}', space=sflag, size = 0x4, scoped, tag = 'scoped memory for conf_block_forward.3']
    %7 = vsyncpa [#allocation3], 0
    // Predicated region
    $region2: #{conf_block_forward.3} parent=1 // pred_check
      _
    $region3: #{conf_block_forward.3} parent=1 // pred_check_branch
      %9 = sbr.rel (0) target = $region5
    $region4: #{conf_block_forward.3} parent=1 // pred_region
      _
    $region5: #{conf_block_forward.3} parent=1 // pred_fallthru
      _
    // Predicated region
    $region6: #{conf_block_forward.3} parent=1 // pred_check
      _
    $region7: #{conf_block_forward.3} parent=1 // pred_check_branch
      %11 = sbr.rel (0) target = $region9
    $region8: #{conf_block_forward.3} parent=1 // pred_region
      %s13 = ssub.s32 16, 16
      %14 = vsyncadd [#allocation3], %s13
      %s16 = sshll.u32 %s1, 4
      %s17 = int_to_ptr.vmem [resolvable:$true] %s16
      %19 = dma.vmem_to_smem %s17, 16, [#allocation2], [#allocation3]
    $region9: #{conf_block_forward.3} parent=1 // pred_fallthru
      _
    // Predicated region
    $region10: #{conf_block_forward.3} parent=1 // pred_check
      _
    $region11: #{conf_block_forward.3} parent=1 // pred_check_branch
      %21 = sbr.rel (0) target = $region13
    $region12: #{conf_block_forward.3} parent=1 // pred_region
      %22 = dma.done [#allocation3], 16
    $region13: #{conf_block_forward.3} parent=1 // pred_fallthru
      _
    %23 = sfence
    %v24 = vld [vmem:[%s0] sm:$0xf]
    %s25 = sld [smem:[#allocation2]]
    %v26 = vstv %s25
    %v27 = vmul.f32 %v24, %v26
    %s28 = sld [smem:[#allocation2 + $0x1]]
    %v29 = vstv %s28
    %v30 = vadd.f32 %v27, %v29
    %v31 = vsub.f32 0.0, %v30
    %v32 = vmul.f32 %v31, 1.442695
    %v33 = vpow.pop %v32
    %v34 = vadd.f32 %v33, 1.0
    %v35 = vrcp.pop %v34
    %36 = vst [vmem:[%s2] sm:$0xf] %v35
    // Predicated region
    $region14: #{conf_block_forward.3} parent=1 // pred_check
      _
    $region15: #{conf_block_forward.3} parent=1 // pred_check_branch
      %38 = sbr.rel (0) target = $region17
    $region16: #{conf_block_forward.3} parent=1 // pred_region
      _
    $region17: #{conf_block_forward.3} parent=1 // pred_fallthru
      _
    // Predicated region
    $region18: #{conf_block_forward.3} parent=1 // pred_check
      _
    $region19: #{conf_block_forward.3} parent=1 // pred_check_branch
      %40 = sbr.rel (0) target = $region21
    $region20: #{conf_block_forward.3} parent=1 // pred_region
      _
    $region21: #{conf_block_forward.3} parent=1 // pred_fallthru
      _
    %41 = vsyncpa [#allocation3], 1

// kernel: conf_block_forward.2
$region0: #{conf_block_forward.2}
  #allocation0 [shape = 'u32[]', space=smem, size = 0x4, offset = 0x4, fixed_abs, tag = 'smem constant byte address 0x4 - core index']
  #allocation1 [shape = 'u32[144,128]{1,0:T(1,128)}', space=vmem, size = 0x12000, scoped, tag = 'internal scratch']
  #allocation2 [shape = 'f32[18,18,64]{2,1,0:T(8,128)}', space=vmem, size = 0x36000, scoped, tag = 'scratch operand']
  #allocation3 [shape = 'f32[20,20,32]{2,1,0:T(8,128)}', space=vmem, size = 0x3c000, scoped, tag = 'scratch operand']
  #allocation4 [shape = 'f32[26,26,16]{2,1,0:T(8,128)}', space=vmem, size = 0x68000, scoped, tag = 'scratch operand']
  #allocation5 [shape = 'f32[18,18]{1,0:T(8,128)}', space=vmem, size = 0x3000, scoped, tag = 'scratch operand']
  %s0 = inlined_call_operand.vmem [shape: bf16[2,16,16,64], index: 0, kind: input, shape index: {}]
  %s1 = inlined_call_operand.vmem [shape: bf16[576,32], index: 1, kind: input, shape index: {}]
  %s2 = inlined_call_operand.vmem [shape: f32[1,32], index: 2, kind: input, shape index: {}]
  %s3 = inlined_call_operand.vmem [shape: bf16[288,16], index: 3, kind: input, shape index: {}]
  %s4 = inlined_call_operand.vmem [shape: f32[1,16], index: 4, kind: input, shape index: {}]
  %s5 = inlined_call_operand.vmem [shape: f32[9,16], index: 5, kind: input, shape index: {}]
  %s6 = inlined_call_operand.vmem [shape: f32[9,32], index: 6, kind: input, shape index: {}]
  %s7 = inlined_call_operand.vmem [shape: f32[9,16], index: 7, kind: input, shape index: {}]
  %s8 = inlined_call_operand.vmem [shape: f32[11], index: 8, kind: input, shape index: {}]
  %s9 = inlined_call_operand.vmem [shape: f32[2,16,16], index: 9, kind: output, shape index: {0}]
  %s10 = inlined_call_operand.vmem [shape: f32[2,2,128], index: 10, kind: output, shape index: {1}]
  %11 = xla_tuple %s9, %s10
  %s12 = sld [smem:[#allocation0]]
  $region81: #{conf_block_forward.2} parent=0
    _
  %s14 = ssub.s32 1, %s12
  %s15 = scalar_select 0, %s14, %s12
  $region1: #{conf_block_forward.2} parent=0
    #allocation6 [shape = 'u8[512]{0}', space=smem, size = 0x200, scoped, tag = 'input window, operand 8, single buffered']
    #allocation7 [shape = 's32[2]{0}', space=sflag, size = 0x8, scoped, tag = 'scoped memory for conf_block_forward.2']
    %16 = vsyncpa [#allocation7], 0
    loop: start=0, step=1, limit=4
    $region2: #{conf_block_forward.2} parent=1 // loop_pre_header
      _
    $region3: #{conf_block_forward.2} parent=1 // loop_header
      %s18 = sphi 0, %s22
      %p19 = scmp.ge.s32.totalorder %s18, 4
      %s28 = sphi 0, %s30
      %s31 = sphi 0, %s28
      %s32 = sphi 0, %s31
      %s48 = sphi 0, %s32
      %s52 = sphi 0, %s52
      %s54 = sphi 0, %s52
      %s55 = sphi 0, %s54
      %s69 = sphi 0, %s55
      %s73 = sphi 0, %s73
      %s75 = sphi 0, %s73
      %s76 = sphi 0, %s75
      %s90 = sphi 0, %s76
      %s94 = sphi 0, %s94
      %s96 = sphi 0, %s94
      %s97 = sphi 0, %s96
      %s111 = sphi 0, %s97
      %s115 = sphi 0, %s115
      %s117 = sphi 0, %s115
      %s118 = sphi 0, %s117
      %s132 = sphi 0, %s118
      %s136 = sphi 0, %s136
      %s138 = sphi 0, %s136
      %s139 = sphi 0, %s138
      %s153 = sphi 0, %s139
      %s157 = sphi 0, %s157
      %s159 = sphi 0, %s157
      %s160 = sphi 0, %s159
      %s174 = sphi 0, %s160
      %s178 = sphi 0, %s178
      %s180 = sphi 0, %s178
      %s181 = sphi 0, %s180
      %s195 = sphi 0, %s181
      %s199 = sphi 0, %s199
      %s201 = sphi 0, %s199
      %s202 = sphi 0, %s201
      %s216 = sphi 0, %s202
      %s222 = sphi 0, %s224
      %s225 = sphi 0, %s222
      %s226 = sphi 0, %s225
      %s242 = sphi 0, %s226
      %s248 = sphi 0, %s250
      %s251 = sphi 0, %s248
      %s252 = sphi 0, %s251
      %s268 = sphi 0, %s252
    $region4: #{conf_block_forward.2} parent=1 // loop_header_branch
      %21 = sbr.rel (%p19) target = $region8
    $region5: #{conf_block_forward.2} parent=1 // loop_body
      %s23 = ssub.s32 %s18, 1
      %s24 = ssub.s32 %s18, 2
      %s25 = sadd.s32 %s18, 1
      %s26 = ssub.s32 %s18, %s25
      %p27 = scmp.eq.s32.totalorder %s26, 0
      %s29 = sadd.s32 %s28, 1
      %s30 = scalar_select %p27, %s28, %s29
      %p33 = pneg %p27
      %p34 = scmp.eq.s32.totalorder %s18, 1
      %p35 = por %p33, %p34
      %p36 = scmp.ne.s32.totalorder %s28, %s31
      %p37 = scmp.eq.s32.totalorder %s18, 0
      %p38 = por %p36, %p37
      %p39 = scmp.ne.s32.totalorder %s28, %s31
      %p40 = scmp.eq.s32.totalorder %s23, 1
      %p41 = por %p39, %p40
      %p42 = scmp.ne.s32.totalorder %s31, %s32
      %p43 = scmp.eq.s32.totalorder %s23, 0
      %p44 = por %p42, %p43
      %p45 = scmp.ne.s32.totalorder %s31, %s32
      %p46 = scmp.eq.s32.totalorder %s24, 1
      %p47 = por %p45, %p46
      %p49 = scmp.ne.s32.totalorder %s32, %s48
      %p50 = scmp.eq.s32.totalorder %s24, 0
      %p51 = por %p49, %p50
      %s53 = sadd.s32 %s52, 1
      %p56 = scmp.eq.s32.totalorder %s18, 1
      %p57 = scmp.ne.s32.totalorder %s52, %s54
      %p58 = scmp.eq.s32.totalorder %s18, 0
      %p59 = por %p57, %p58
      %p60 = scmp.ne.s32.totalorder %s52, %s54
      %p61 = scmp.eq.s32.totalorder %s23, 1
      %p62 = por %p60, %p61
      %p63 = scmp.ne.s32.totalorder %s54, %s55
      %p64 = scmp.eq.s32.totalorder %s23, 0
      %p65 = por %p63, %p64
      %p66 = scmp.ne.s32.totalorder %s54, %s55
      %p67 = scmp.eq.s32.totalorder %s24, 1
      %p68 = por %p66, %p67
      %p70 = scmp.ne.s32.totalorder %s55, %s69
      %p71 = scmp.eq.s32.totalorder %s24, 0
      %p72 = por %p70, %p71
      %s74 = sadd.s32 %s73, 1
      %p77 = scmp.eq.s32.totalorder %s18, 1
      %p78 = scmp.ne.s32.totalorder %s73, %s75
      %p79 = scmp.eq.s32.totalorder %s18, 0
      %p80 = por %p78, %p79
      %p81 = scmp.ne.s32.totalorder %s73, %s75
      %p82 = scmp.eq.s32.totalorder %s23, 1
      %p83 = por %p81, %p82
      %p84 = scmp.ne.s32.totalorder %s75, %s76
      %p85 = scmp.eq.s32.totalorder %s23, 0
      %p86 = por %p84, %p85
      %p87 = scmp.ne.s32.totalorder %s75, %s76
      %p88 = scmp.eq.s32.totalorder %s24, 1
      %p89 = por %p87, %p88
      %p91 = scmp.ne.s32.totalorder %s76, %s90
      %p92 = scmp.eq.s32.totalorder %s24, 0
      %p93 = por %p91, %p92
      %s95 = sadd.s32 %s94, 1
      %p98 = scmp.eq.s32.totalorder %s18, 1
      %p99 = scmp.ne.s32.totalorder %s94, %s96
      %p100 = scmp.eq.s32.totalorder %s18, 0
      %p101 = por %p99, %p100
      %p102 = scmp.ne.s32.totalorder %s94, %s96
      %p103 = scmp.eq.s32.totalorder %s23, 1
      %p104 = por %p102, %p103
      %p105 = scmp.ne.s32.totalorder %s96, %s97
      %p106 = scmp.eq.s32.totalorder %s23, 0
      %p107 = por %p105, %p106
      %p108 = scmp.ne.s32.totalorder %s96, %s97
      %p109 = scmp.eq.s32.totalorder %s24, 1
      %p110 = por %p108, %p109
      %p112 = scmp.ne.s32.totalorder %s97, %s111
      %p113 = scmp.eq.s32.totalorder %s24, 0
      %p114 = por %p112, %p113
      %s116 = sadd.s32 %s115, 1
      %p119 = scmp.eq.s32.totalorder %s18, 1
      %p120 = scmp.ne.s32.totalorder %s115, %s117
      %p121 = scmp.eq.s32.totalorder %s18, 0
      %p122 = por %p120, %p121
      %p123 = scmp.ne.s32.totalorder %s115, %s117
      %p124 = scmp.eq.s32.totalorder %s23, 1
      %p125 = por %p123, %p124
      %p126 = scmp.ne.s32.totalorder %s117, %s118
      %p127 = scmp.eq.s32.totalorder %s23, 0
      %p128 = por %p126, %p127
      %p129 = scmp.ne.s32.totalorder %s117, %s118
      %p130 = scmp.eq.s32.totalorder %s24, 1
      %p131 = por %p129, %p130
      %p133 = scmp.ne.s32.totalorder %s118, %s132
      %p134 = scmp.eq.s32.totalorder %s24, 0
      %p135 = por %p133, %p134
      %s137 = sadd.s32 %s136, 1
      %p140 = scmp.eq.s32.totalorder %s18, 1
      %p141 = scmp.ne.s32.totalorder %s136, %s138
      %p142 = scmp.eq.s32.totalorder %s18, 0
      %p143 = por %p141, %p142
      %p144 = scmp.ne.s32.totalorder %s136, %s138
      %p145 = scmp.eq.s32.totalorder %s23, 1
      %p146 = por %p144, %p145
      %p147 = scmp.ne.s32.totalorder %s138, %s139
      %p148 = scmp.eq.s32.totalorder %s23, 0
      %p149 = por %p147, %p148
      %p150 = scmp.ne.s32.totalorder %s138, %s139
      %p151 = scmp.eq.s32.totalorder %s24, 1
      %p152 = por %p150, %p151
      %p154 = scmp.ne.s32.totalorder %s139, %s153
      %p155 = scmp.eq.s32.totalorder %s24, 0
      %p156 = por %p154, %p155
      %s158 = sadd.s32 %s157, 1
      %p161 = scmp.eq.s32.totalorder %s18, 1
      %p162 = scmp.ne.s32.totalorder %s157, %s159
      %p163 = scmp.eq.s32.totalorder %s18, 0
      %p164 = por %p162, %p163
      %p165 = scmp.ne.s32.totalorder %s157, %s159
      %p166 = scmp.eq.s32.totalorder %s23, 1
      %p167 = por %p165, %p166
      %p168 = scmp.ne.s32.totalorder %s159, %s160
      %p169 = scmp.eq.s32.totalorder %s23, 0
      %p170 = por %p168, %p169
      %p171 = scmp.ne.s32.totalorder %s159, %s160
      %p172 = scmp.eq.s32.totalorder %s24, 1
      %p173 = por %p171, %p172
      %p175 = scmp.ne.s32.totalorder %s160, %s174
      %p176 = scmp.eq.s32.totalorder %s24, 0
      %p177 = por %p175, %p176
      %s179 = sadd.s32 %s178, 1
      %p182 = scmp.eq.s32.totalorder %s18, 1
      %p183 = scmp.ne.s32.totalorder %s178, %s180
      %p184 = scmp.eq.s32.totalorder %s18, 0
      %p185 = por %p183, %p184
      %p186 = scmp.ne.s32.totalorder %s178, %s180
      %p187 = scmp.eq.s32.totalorder %s23, 1
      %p188 = por %p186, %p187
      %p189 = scmp.ne.s32.totalorder %s180, %s181
      %p190 = scmp.eq.s32.totalorder %s23, 0
      %p191 = por %p189, %p190
      %p192 = scmp.ne.s32.totalorder %s180, %s181
      %p193 = scmp.eq.s32.totalorder %s24, 1
      %p194 = por %p192, %p193
      %p196 = scmp.ne.s32.totalorder %s181, %s195
      %p197 = scmp.eq.s32.totalorder %s24, 0
      %p198 = por %p196, %p197
      %s200 = sadd.s32 %s199, 1
      %p203 = scmp.eq.s32.totalorder %s18, 1
      %p204 = scmp.ne.s32.totalorder %s199, %s201
      %p205 = scmp.eq.s32.totalorder %s18, 0
      %p206 = por %p204, %p205
      %p207 = scmp.ne.s32.totalorder %s199, %s201
      %p208 = scmp.eq.s32.totalorder %s23, 1
      %p209 = por %p207, %p208
      %p210 = scmp.ne.s32.totalorder %s201, %s202
      %p211 = scmp.eq.s32.totalorder %s23, 0
      %p212 = por %p210, %p211
      %p213 = scmp.ne.s32.totalorder %s201, %s202
      %p214 = scmp.eq.s32.totalorder %s24, 1
      %p215 = por %p213, %p214
      %p217 = scmp.ne.s32.totalorder %s202, %s216
      %p218 = scmp.eq.s32.totalorder %s24, 0
      %p219 = por %p217, %p218
      %s220 = ssub.s32 %s18, %s25
      %p221 = scmp.eq.s32.totalorder %s220, 0
      %s223 = sadd.s32 %s222, 1
      %s224 = scalar_select %p221, %s222, %s223
      %p227 = pneg %p221
      %p228 = scmp.eq.s32.totalorder %s18, 1
      %p229 = por %p227, %p228
      %p230 = scmp.ne.s32.totalorder %s222, %s225
      %p231 = scmp.eq.s32.totalorder %s18, 0
      %p232 = por %p230, %p231
      %p233 = scmp.ne.s32.totalorder %s222, %s225
      %p234 = scmp.eq.s32.totalorder %s23, 1
      %p235 = por %p233, %p234
      %p236 = scmp.ne.s32.totalorder %s225, %s226
      %p237 = scmp.eq.s32.totalorder %s23, 0
      %p238 = por %p236, %p237
      %p239 = scmp.ne.s32.totalorder %s225, %s226
      %p240 = scmp.eq.s32.totalorder %s24, 1
      %p241 = por %p239, %p240
      %p243 = scmp.ne.s32.totalorder %s226, %s242
      %p244 = scmp.eq.s32.totalorder %s24, 0
      %p245 = por %p243, %p244
      %s246 = ssub.s32 %s18, %s25
      %p247 = scmp.eq.s32.totalorder %s246, 0
      %s249 = sadd.s32 %s248, 1
      %s250 = scalar_select %p247, %s248, %s249
      %p253 = pneg %p247
      %p254 = scmp.eq.s32.totalorder %s18, 1
      %p255 = por %p253, %p254
      %p256 = scmp.ne.s32.totalorder %s248, %s251
      %p257 = scmp.eq.s32.totalorder %s18, 0
      %p258 = por %p256, %p257
      %p259 = scmp.ne.s32.totalorder %s248, %s251
      %p260 = scmp.eq.s32.totalorder %s23, 1
      %p261 = por %p259, %p260
      %p262 = scmp.ne.s32.totalorder %s251, %s252
      %p263 = scmp.eq.s32.totalorder %s23, 0
      %p264 = por %p262, %p263
      %p265 = scmp.ne.s32.totalorder %s251, %s252
      %p266 = scmp.eq.s32.totalorder %s24, 1
      %p267 = por %p265, %p266
      %p269 = scmp.ne.s32.totalorder %s252, %s268
      %p270 = scmp.eq.s32.totalorder %s24, 0
      %p271 = por %p269, %p270
      %p272 = scmp.le.s32.totalorder 1, %s18
      %p273 = scmp.lt.s32.totalorder %s18, 3
      %p274 = pnand %p272, %p273
      %p275 = pneg %p274
      // Predicated region
      $region9: #{conf_block_forward.2} parent=5 // pred_check
        _
      $region10: #{conf_block_forward.2} parent=5 // pred_check_branch
        %277 = sbr.rel (%p274) target = $region12
      $region11: #{conf_block_forward.2} parent=5 // pred_region
        %s278 = ssub.s32 %s18, 1
        // Predicated region
        $region13: #{conf_block_forward.2} parent=11 // pred_check
          %p279 = pneg %p65
        $region14: #{conf_block_forward.2} parent=11 // pred_check_branch
          %281 = sbr.rel (%p279) target = $region16
        $region15: #{conf_block_forward.2} parent=11 // pred_region
          _
        $region16: #{conf_block_forward.2} parent=11 // pred_fallthru
          _
        // Predicated region
        $region17: #{conf_block_forward.2} parent=11 // pred_check
          %p282 = pneg %p86
        $region18: #{conf_block_forward.2} parent=11 // pred_check_branch
          %284 = sbr.rel (%p282) target = $region20
        $region19: #{conf_block_forward.2} parent=11 // pred_region
          _
        $region20: #{conf_block_forward.2} parent=11 // pred_fallthru
          _
        // Predicated region
        $region21: #{conf_block_forward.2} parent=11 // pred_check
          %p285 = pneg %p107
        $region22: #{conf_block_forward.2} parent=11 // pred_check_branch
          %287 = sbr.rel (%p285) target = $region24
        $region23: #{conf_block_forward.2} parent=11 // pred_region
          _
        $region24: #{conf_block_forward.2} parent=11 // pred_fallthru
          _
        // Predicated region
        $region25: #{conf_block_forward.2} parent=11 // pred_check
          %p288 = pneg %p128
        $region26: #{conf_block_forward.2} parent=11 // pred_check_branch
          %290 = sbr.rel (%p288) target = $region28
        $region27: #{conf_block_forward.2} parent=11 // pred_region
          _
        $region28: #{conf_block_forward.2} parent=11 // pred_fallthru
          _
        // Predicated region
        $region29: #{conf_block_forward.2} parent=11 // pred_check
          %p291 = pneg %p149
        $region30: #{conf_block_forward.2} parent=11 // pred_check_branch
          %293 = sbr.rel (%p291) target = $region32
        $region31: #{conf_block_forward.2} parent=11 // pred_region
          _
        $region32: #{conf_block_forward.2} parent=11 // pred_fallthru
          _
        // Predicated region
        $region33: #{conf_block_forward.2} parent=11 // pred_check
          %p294 = pneg %p170
        $region34: #{conf_block_forward.2} parent=11 // pred_check_branch
          %296 = sbr.rel (%p294) target = $region36
        $region35: #{conf_block_forward.2} parent=11 // pred_region
          _
        $region36: #{conf_block_forward.2} parent=11 // pred_fallthru
          _
        // Predicated region
        $region37: #{conf_block_forward.2} parent=11 // pred_check
          %p297 = pneg %p191
        $region38: #{conf_block_forward.2} parent=11 // pred_check_branch
          %299 = sbr.rel (%p297) target = $region40
        $region39: #{conf_block_forward.2} parent=11 // pred_region
          _
        $region40: #{conf_block_forward.2} parent=11 // pred_fallthru
          _
        // Predicated region
        $region41: #{conf_block_forward.2} parent=11 // pred_check
          %p300 = pneg %p212
        $region42: #{conf_block_forward.2} parent=11 // pred_check_branch
          %302 = sbr.rel (%p300) target = $region44
        $region43: #{conf_block_forward.2} parent=11 // pred_region
          %s304 = ssub.s32 16, 16
          %305 = vsyncadd [#allocation7], %s304
          %s307 = sshll.u32 %s8, 4
          %s308 = int_to_ptr.vmem [resolvable:$true] %s307
          %310 = dma.vmem_to_smem %s308, 16, [#allocation6], [#allocation7]
        $region44: #{conf_block_forward.2} parent=11 // pred_fallthru
          _
      $region12: #{conf_block_forward.2} parent=5 // pred_fallthru
        _
      %p311 = scmp.lt.s32.totalorder %s18, 2
      // Predicated region
      $region45: #{conf_block_forward.2} parent=5 // pred_check
        %p312 = pneg %p311
      $region46: #{conf_block_forward.2} parent=5 // pred_check_branch
        %314 = sbr.rel (%p312) target = $region48
      $region47: #{conf_block_forward.2} parent=5 // pred_region
        // Predicated region
        $region49: #{conf_block_forward.2} parent=47 // pred_check
          %p315 = pneg %p38
        $region50: #{conf_block_forward.2} parent=47 // pred_check_branch
          %317 = sbr.rel (%p315) target = $region52
        $region51: #{conf_block_forward.2} parent=47 // pred_region
          %p318 = scmp.lt.s32.totalorder %s18, 1
          %s319 = scalar_select %p318, %s18, 1
          %s320 = smul.addr %s319, 32
          %s321 = smul.addr %s320, 4
          %s322 = scalar_lea.vmem %s0, %s321
        $region52: #{conf_block_forward.2} parent=47 // pred_fallthru
          _
      $region48: #{conf_block_forward.2} parent=5 // pred_fallthru
        _
      %p323 = scmp.le.s32.totalorder 1, %s18
      %p324 = scmp.lt.s32.totalorder %s18, 3
      %p325 = pnand %p323, %p324
      %p326 = pneg %p325
      // Predicated region
      $region53: #{conf_block_forward.2} parent=5 // pred_check
        _
      $region54: #{conf_block_forward.2} parent=5 // pred_check_branch
        %328 = sbr.rel (%p325) target = $region56
      $region55: #{conf_block_forward.2} parent=5 // pred_region
        %s329 = ssub.s32 %s18, 1
        // Predicated region
        $region57: #{conf_block_forward.2} parent=55 // pred_check
          %p330 = pneg %p212
        $region58: #{conf_block_forward.2} parent=55 // pred_check_branch
          %332 = sbr.rel (%p330) target = $region60
        $region59: #{conf_block_forward.2} parent=55 // pred_region
          %333 = dma.done [#allocation7], 16
        $region60: #{conf_block_forward.2} parent=55 // pred_fallthru
          _
        %334 = sfence
        %p335 = scmp.lt.s32.totalorder %s23, 1
        %s336 = scalar_select %p335, %s23, 1
        %s337 = smul.addr %s336, 32
        %s338 = smul.addr %s337, 4
        %s339 = scalar_lea.vmem %s0, %s338
        %p340 = pneg %p44
        %p341 = pneg %p41
        %p342 = pneg %p65
        %p343 = pneg %p62
        %p344 = pneg %p86
        %p345 = pneg %p83
        %p346 = pneg %p107
        %p347 = pneg %p104
        %p348 = pneg %p128
        %p349 = pneg %p125
        %p350 = pneg %p149
        %p351 = pneg %p146
        %p352 = pneg %p170
        %p353 = pneg %p167
        %p354 = pneg %p191
        %p355 = pneg %p188
        %p356 = pneg %p212
        %p357 = pneg %p209
        %p358 = pneg %p238
        %p359 = pneg %p235
        %p360 = scmp.lt.s32.totalorder %s23, 1
        %s361 = scalar_select %p360, %s23, 1
        %s362 = smul.addr %s361, 2
        %s363 = smul.addr %s362, 8
        %s364 = scalar_lea.vmem %s9, %s363
        %p365 = pneg %p264
        %p366 = pneg %p261
        %p367 = scmp.lt.s32.totalorder %s23, 1
        %s368 = scalar_select %p367, %s23, 1
        %s369 = smul.addr %s368, 2
        %s370 = scalar_lea.vmem %s10, %s369
        %p371 = scmp.lt.s32.totalorder %s23, 1
        %s372 = scalar_select %p371, %s23, 1
        %s373 = smul.addr %s372, 32
        %s374 = smul.addr %s373, 4
        %s375 = scalar_lea.vmem %s0, %s374
        %p376 = scmp.lt.s32.totalorder %s23, 1
        %s377 = scalar_select %p376, %s23, 1
        %s378 = smul.addr %s377, 2
        %s379 = smul.addr %s378, 8
        %s380 = scalar_lea.vmem %s9, %s379
        %p381 = scmp.lt.s32.totalorder %s23, 1
        %s382 = scalar_select %p381, %s23, 1
        %s383 = smul.addr %s382, 2
        %s384 = scalar_lea.vmem %s10, %s383
        %vm386 = vcmask 523264
        %387 = vst.msk [vmem:[#allocation2] sm:$0xff] %vm386, 0.0
        %388 = vst.msk [vmem:[#allocation2 + $0x8] sm:$0xff] %vm386, 0.0
        %vm389 = vcmask 517120
        %390 = vst.msk [vmem:[#allocation2 + $0x10] sm:$0x3] %vm389, 0.0
        %s391 = scalar_lea.vmem [#allocation2], 408
        %392 = vst.msk [vmem:[%s391] sm:$0xff] %vm386, 0.0
        %393 = vst.msk [vmem:[%s391 + $0x8] sm:$0xff] %vm386, 0.0
        %394 = vst.msk [vmem:[%s391 + $0x10] sm:$0x3] %vm389, 0.0
        %vm395 = vcmask 516096
        %396 = vst.msk [vmem:[#allocation2] sm:$0x1] %vm395, 0.0
        %397 = vst.msk [vmem:[#allocation2 + $0x18] sm:$0x1] %vm395, 0.0
        %398 = vst.msk [vmem:[#allocation2 + $0x30] sm:$0x1] %vm395, 0.0
        %399 = vst.msk [vmem:[#allocation2 + $0x48] sm:$0x1] %vm395, 0.0
        %400 = vst.msk [vmem:[#allocation2 + $0x60] sm:$0x1] %vm395, 0.0
        %401 = vst.msk [vmem:[#allocation2 + $0x78] sm:$0x1] %vm395, 0.0
        %402 = vst.msk [vmem:[#allocation2 + $0x90] sm:$0x1] %vm395, 0.0
        %403 = vst.msk [vmem:[#allocation2 + $0xa8] sm:$0x1] %vm395, 0.0
        %404 = vst.msk [vmem:[#allocation2 + $0xc0] sm:$0x1] %vm395, 0.0
        %405 = vst.msk [vmem:[#allocation2 + $0xd8] sm:$0x1] %vm395, 0.0
        %406 = vst.msk [vmem:[#allocation2 + $0xf0] sm:$0x1] %vm395, 0.0
        %407 = vst.msk [vmem:[#allocation2 + $0x108] sm:$0x1] %vm395, 0.0
        %408 = vst.msk [vmem:[#allocation2 + $0x120] sm:$0x1] %vm395, 0.0
        %409 = vst.msk [vmem:[#allocation2 + $0x138] sm:$0x1] %vm395, 0.0
        %410 = vst.msk [vmem:[#allocation2 + $0x150] sm:$0x1] %vm395, 0.0
        %411 = vst.msk [vmem:[#allocation2 + $0x168] sm:$0x1] %vm395, 0.0
        %412 = vst.msk [vmem:[#allocation2 + $0x180] sm:$0x1] %vm395, 0.0
        %413 = vst.msk [vmem:[#allocation2 + $0x198] sm:$0x1] %vm395, 0.0
        %414 = vst.msk [vmem:[#allocation2 + $0x11] sm:$0x1] %vm395, 0.0
        %415 = vst.msk [vmem:[#allocation2 + $0x29] sm:$0x1] %vm395, 0.0
        %416 = vst.msk [vmem:[#allocation2 + $0x41] sm:$0x1] %vm395, 0.0
        %417 = vst.msk [vmem:[#allocation2 + $0x59] sm:$0x1] %vm395, 0.0
        %418 = vst.msk [vmem:[#allocation2 + $0x71] sm:$0x1] %vm395, 0.0
        %419 = vst.msk [vmem:[#allocation2 + $0x89] sm:$0x1] %vm395, 0.0
        %420 = vst.msk [vmem:[#allocation2 + $0xa1] sm:$0x1] %vm395, 0.0
        %421 = vst.msk [vmem:[#allocation2 + $0xb9] sm:$0x1] %vm395, 0.0
        %422 = vst.msk [vmem:[#allocation2 + $0xd1] sm:$0x1] %vm395, 0.0
        %423 = vst.msk [vmem:[#allocation2 + $0xe9] sm:$0x1] %vm395, 0.0
        %424 = vst.msk [vmem:[#allocation2 + $0x101] sm:$0x1] %vm395, 0.0
        %425 = vst.msk [vmem:[#allocation2 + $0x119] sm:$0x1] %vm395, 0.0
        %426 = vst.msk [vmem:[#allocation2 + $0x131] sm:$0x1] %vm395, 0.0
        %427 = vst.msk [vmem:[#allocation2 + $0x149] sm:$0x1] %vm395, 0.0
        %428 = vst.msk [vmem:[#allocation2 + $0x161] sm:$0x1] %vm395, 0.0
        %429 = vst.msk [vmem:[#allocation2 + $0x179] sm:$0x1] %vm395, 0.0
        %430 = vst.msk [vmem:[#allocation2 + $0x191] sm:$0x1] %vm395, 0.0
        %431 = vst.msk [vmem:[#allocation2 + $0x1a9] sm:$0x1] %vm395, 0.0
        %v432 = vld [vmem:[%s375] sm:$0xf]
        %v433 = vld [vmem:[%s375 + $0x4] sm:$0xf]
        %v434 = vld [vmem:[%s375 + $0x8] sm:$0xf]
        %v435 = vld [vmem:[%s375 + $0xc] sm:$0xf]
        %v436 = vld [vmem:[%s375 + $0x10] sm:$0xf]
        %v437 = vld [vmem:[%s375 + $0x14] sm:$0xf]
        %v438 = vld [vmem:[%s375 + $0x18] sm:$0xf]
        %v439 = vld [vmem:[%s375 + $0x1c] sm:$0xf]
        %v440 = vld [vmem:[%s375 + $0x20] sm:$0xf]
        %v441 = vld [vmem:[%s375 + $0x24] sm:$0xf]
        %v442 = vld [vmem:[%s375 + $0x28] sm:$0xf]
        %v443 = vld [vmem:[%s375 + $0x2c] sm:$0xf]
        %v444 = vld [vmem:[%s375 + $0x30] sm:$0xf]
        %v445 = vld [vmem:[%s375 + $0x34] sm:$0xf]
        %v446 = vld [vmem:[%s375 + $0x38] sm:$0xf]
        %v447 = vld [vmem:[%s375 + $0x3c] sm:$0xf]
        %v448 = vld [vmem:[%s375 + $0x40] sm:$0xf]
        %v449 = vld [vmem:[%s375 + $0x44] sm:$0xf]
        %v450 = vld [vmem:[%s375 + $0x48] sm:$0xf]
        %v451 = vld [vmem:[%s375 + $0x4c] sm:$0xf]
        %v452 = vld [vmem:[%s375 + $0x50] sm:$0xf]
        %v453 = vld [vmem:[%s375 + $0x54] sm:$0xf]
        %v454 = vld [vmem:[%s375 + $0x58] sm:$0xf]
        %v455 = vld [vmem:[%s375 + $0x5c] sm:$0xf]
        %v456 = vld [vmem:[%s375 + $0x60] sm:$0xf]
        %v457 = vld [vmem:[%s375 + $0x64] sm:$0xf]
        %v458 = vld [vmem:[%s375 + $0x68] sm:$0xf]
        %v459 = vld [vmem:[%s375 + $0x6c] sm:$0xf]
        %v460 = vld [vmem:[%s375 + $0x70] sm:$0xf]
        %v461 = vld [vmem:[%s375 + $0x74] sm:$0xf]
        %v462 = vld [vmem:[%s375 + $0x78] sm:$0xf]
        %v463 = vld [vmem:[%s375 + $0x7c] sm:$0xf]
        %v464 = vunpack.c.l.bf16 %v432
        %v465 = vunpack.c.l.bf16 %v433
        %v466 = vunpack.c.l.bf16 %v434
        %v467 = vunpack.c.l.bf16 %v435
        %v468 = vunpack.c.l.bf16 %v436
        %v469 = vunpack.c.l.bf16 %v437
        %v470 = vunpack.c.l.bf16 %v438
        %v471 = vunpack.c.l.bf16 %v439
        %v472 = vunpack.c.l.bf16 %v440
        %v473 = vunpack.c.l.bf16 %v441
        %v474 = vunpack.c.l.bf16 %v442
        %v475 = vunpack.c.l.bf16 %v443
        %v476 = vunpack.c.l.bf16 %v444
        %v477 = vunpack.c.l.bf16 %v445
        %v478 = vunpack.c.l.bf16 %v446
        %v479 = vunpack.c.l.bf16 %v447
        %v480 = vunpack.c.l.bf16 %v448
        %v481 = vunpack.c.l.bf16 %v449
        %v482 = vunpack.c.l.bf16 %v450
        %v483 = vunpack.c.l.bf16 %v451
        %v484 = vunpack.c.l.bf16 %v452
        %v485 = vunpack.c.l.bf16 %v453
        %v486 = vunpack.c.l.bf16 %v454
        %v487 = vunpack.c.l.bf16 %v455
        %v488 = vunpack.c.l.bf16 %v456
        %v489 = vunpack.c.l.bf16 %v457
        %v490 = vunpack.c.l.bf16 %v458
        %v491 = vunpack.c.l.bf16 %v459
        %v492 = vunpack.c.l.bf16 %v460
        %v493 = vunpack.c.l.bf16 %v461
        %v494 = vunpack.c.l.bf16 %v462
        %v495 = vunpack.c.l.bf16 %v463
        %s496 = scalar_lea.vmem [#allocation2], 24
        %497 = vst.msk [vmem:[%s496 + $0x1] sm:$0xff] %vm386, %v464
        %498 = vst.msk [vmem:[%s496 + $0x9] sm:$0xff] %vm386, %v465
        %499 = vst.msk [vmem:[%s496 + $0x19] sm:$0xff] %vm386, %v466
        %500 = vst.msk [vmem:[%s496 + $0x21] sm:$0xff] %vm386, %v467
        %501 = vst.msk [vmem:[%s496 + $0x31] sm:$0xff] %vm386, %v468
        %502 = vst.msk [vmem:[%s496 + $0x39] sm:$0xff] %vm386, %v469
        %503 = vst.msk [vmem:[%s496 + $0x49] sm:$0xff] %vm386, %v470
        %504 = vst.msk [vmem:[%s496 + $0x51] sm:$0xff] %vm386, %v471
        %505 = vst.msk [vmem:[%s496 + $0x61] sm:$0xff] %vm386, %v472
        %506 = vst.msk [vmem:[%s496 + $0x69] sm:$0xff] %vm386, %v473
        %507 = vst.msk [vmem:[%s496 + $0x79] sm:$0xff] %vm386, %v474
        %508 = vst.msk [vmem:[%s496 + $0x81] sm:$0xff] %vm386, %v475
        %509 = vst.msk [vmem:[%s496 + $0x91] sm:$0xff] %vm386, %v476
        %510 = vst.msk [vmem:[%s496 + $0x99] sm:$0xff] %vm386, %v477
        %511 = vst.msk [vmem:[%s496 + $0xa9] sm:$0xff] %vm386, %v478
        %512 = vst.msk [vmem:[%s496 + $0xb1] sm:$0xff] %vm386, %v479
        %513 = vst.msk [vmem:[%s496 + $0xc1] sm:$0xff] %vm386, %v480
        %514 = vst.msk [vmem:[%s496 + $0xc9] sm:$0xff] %vm386, %v481
        %515 = vst.msk [vmem:[%s496 + $0xd9] sm:$0xff] %vm386, %v482
        %516 = vst.msk [vmem:[%s496 + $0xe1] sm:$0xff] %vm386, %v483
        %517 = vst.msk [vmem:[%s496 + $0xf1] sm:$0xff] %vm386, %v484
        %518 = vst.msk [vmem:[%s496 + $0xf9] sm:$0xff] %vm386, %v485
        %519 = vst.msk [vmem:[%s496 + $0x109] sm:$0xff] %vm386, %v486
        %520 = vst.msk [vmem:[%s496 + $0x111] sm:$0xff] %vm386, %v487
        %521 = vst.msk [vmem:[%s496 + $0x121] sm:$0xff] %vm386, %v488
        %522 = vst.msk [vmem:[%s496 + $0x129] sm:$0xff] %vm386, %v489
        %523 = vst.msk [vmem:[%s496 + $0x139] sm:$0xff] %vm386, %v490
        %524 = vst.msk [vmem:[%s496 + $0x141] sm:$0xff] %vm386, %v491
        %525 = vst.msk [vmem:[%s496 + $0x151] sm:$0xff] %vm386, %v492
        %526 = vst.msk [vmem:[%s496 + $0x159] sm:$0xff] %vm386, %v493
        %527 = vst.msk [vmem:[%s496 + $0x169] sm:$0xff] %vm386, %v494
        %528 = vst.msk [vmem:[%s496 + $0x171] sm:$0xff] %vm386, %v495
        %v529 = vld [vmem:[#allocation2] sm:$0xff]
        %v530 = vld [vmem:[#allocation2 + $0x8] sm:$0xff]
        %v531 = vld [vmem:[#allocation2 + $0x18] sm:$0xff]
        %v532 = vld [vmem:[#allocation2 + $0x20] sm:$0xff]
        %v533 = vld [vmem:[#allocation2 + $0x30] sm:$0xff]
        %v534 = vld [vmem:[#allocation2 + $0x38] sm:$0xff]
        %v535 = vld [vmem:[#allocation2 + $0x48] sm:$0xff]
        %v536 = vld [vmem:[#allocation2 + $0x50] sm:$0xff]
        %v537 = vld [vmem:[#allocation2 + $0x60] sm:$0xff]
        %v538 = vld [vmem:[#allocation2 + $0x68] sm:$0xff]
        %v539 = vld [vmem:[#allocation2 + $0x78] sm:$0xff]
        %v540 = vld [vmem:[#allocation2 + $0x80] sm:$0xff]
        %v541 = vld [vmem:[#allocation2 + $0x90] sm:$0xff]
        %v542 = vld [vmem:[#allocation2 + $0x98] sm:$0xff]
        %v543 = vld [vmem:[#allocation2 + $0xa8] sm:$0xff]
        %v544 = vld [vmem:[#allocation2 + $0xb0] sm:$0xff]
        %v545 = vld [vmem:[#allocation2 + $0xc0] sm:$0xff]
        %v546 = vld [vmem:[#allocation2 + $0xc8] sm:$0xff]
        %v547 = vld [vmem:[#allocation2 + $0xd8] sm:$0xff]
        %v548 = vld [vmem:[#allocation2 + $0xe0] sm:$0xff]
        %v549 = vld [vmem:[#allocation2 + $0xf0] sm:$0xff]
        %v550 = vld [vmem:[#allocation2 + $0xf8] sm:$0xff]
        %v551 = vld [vmem:[#allocation2 + $0x108] sm:$0xff]
        %v552 = vld [vmem:[#allocation2 + $0x110] sm:$0xff]
        %v553 = vld [vmem:[#allocation2 + $0x120] sm:$0xff]
        %v554 = vld [vmem:[#allocation2 + $0x128] sm:$0xff]
        %v555 = vld [vmem:[#allocation2 + $0x138] sm:$0xff]
        %v556 = vld [vmem:[#allocation2 + $0x140] sm:$0xff]
        %v557 = vld [vmem:[#allocation2 + $0x150] sm:$0xff]
        %v558 = vld [vmem:[#allocation2 + $0x158] sm:$0xff]
        %v559 = vld [vmem:[#allocation2 + $0x168] sm:$0xff]
        %v560 = vld [vmem:[#allocation2 + $0x170] sm:$0xff]
        %v561 = vld [vmem:[#allocation2 + $0x1] sm:$0xff]
        %v562 = vld [vmem:[#allocation2 + $0x9] sm:$0xff]
        %v563 = vld [vmem:[#allocation2 + $0x19] sm:$0xff]
        %v564 = vld [vmem:[#allocation2 + $0x21] sm:$0xff]
        %v565 = vld [vmem:[#allocation2 + $0x31] sm:$0xff]
        %v566 = vld [vmem:[#allocation2 + $0x39] sm:$0xff]
        %v567 = vld [vmem:[#allocation2 + $0x49] sm:$0xff]
        %v568 = vld [vmem:[#allocation2 + $0x51] sm:$0xff]
        %v569 = vld [vmem:[#allocation2 + $0x61] sm:$0xff]
        %v570 = vld [vmem:[#allocation2 + $0x69] sm:$0xff]
        %v571 = vld [vmem:[#allocation2 + $0x79] sm:$0xff]
        %v572 = vld [vmem:[#allocation2 + $0x81] sm:$0xff]
        %v573 = vld [vmem:[#allocation2 + $0x91] sm:$0xff]
        %v574 = vld [vmem:[#allocation2 + $0x99] sm:$0xff]
        %v575 = vld [vmem:[#allocation2 + $0xa9] sm:$0xff]
        %v576 = vld [vmem:[#allocation2 + $0xb1] sm:$0xff]
        %v577 = vld [vmem:[#allocation2 + $0xc1] sm:$0xff]
        %v578 = vld [vmem:[#allocation2 + $0xc9] sm:$0xff]
        %v579 = vld [vmem:[#allocation2 + $0xd9] sm:$0xff]
        %v580 = vld [vmem:[#allocation2 + $0xe1] sm:$0xff]
        %v581 = vld [vmem:[#allocation2 + $0xf1] sm:$0xff]
        %v582 = vld [vmem:[#allocation2 + $0xf9] sm:$0xff]
        %v583 = vld [vmem:[#allocation2 + $0x109] sm:$0xff]
        %v584 = vld [vmem:[#allocation2 + $0x111] sm:$0xff]
        %v585 = vld [vmem:[#allocation2 + $0x121] sm:$0xff]
        %v586 = vld [vmem:[#allocation2 + $0x129] sm:$0xff]
        %v587 = vld [vmem:[#allocation2 + $0x139] sm:$0xff]
        %v588 = vld [vmem:[#allocation2 + $0x141] sm:$0xff]
        %v589 = vld [vmem:[#allocation2 + $0x151] sm:$0xff]
        %v590 = vld [vmem:[#allocation2 + $0x159] sm:$0xff]
        %v591 = vld [vmem:[#allocation2 + $0x169] sm:$0xff]
        %v592 = vld [vmem:[#allocation2 + $0x171] sm:$0xff]
        %v593 = vld [vmem:[#allocation2 + $0x2] sm:$0xff]
        %v594 = vld [vmem:[#allocation2 + $0xa] sm:$0xff]
        %v595 = vld [vmem:[#allocation2 + $0x1a] sm:$0xff]
        %v596 = vld [vmem:[#allocation2 + $0x22] sm:$0xff]
        %v597 = vld [vmem:[#allocation2 + $0x32] sm:$0xff]
        %v598 = vld [vmem:[#allocation2 + $0x3a] sm:$0xff]
        %v599 = vld [vmem:[#allocation2 + $0x4a] sm:$0xff]
        %v600 = vld [vmem:[#allocation2 + $0x52] sm:$0xff]
        %v601 = vld [vmem:[#allocation2 + $0x62] sm:$0xff]
        %v602 = vld [vmem:[#allocation2 + $0x6a] sm:$0xff]
        %v603 = vld [vmem:[#allocation2 + $0x7a] sm:$0xff]
        %v604 = vld [vmem:[#allocation2 + $0x82] sm:$0xff]
        %v605 = vld [vmem:[#allocation2 + $0x92] sm:$0xff]
        %v606 = vld [vmem:[#allocation2 + $0x9a] sm:$0xff]
        %v607 = vld [vmem:[#allocation2 + $0xaa] sm:$0xff]
        %v608 = vld [vmem:[#allocation2 + $0xb2] sm:$0xff]
        %v609 = vld [vmem:[#allocation2 + $0xc2] sm:$0xff]
        %v610 = vld [vmem:[#allocation2 + $0xca] sm:$0xff]
        %v611 = vld [vmem:[#allocation2 + $0xda] sm:$0xff]
        %v612 = vld [vmem:[#allocation2 + $0xe2] sm:$0xff]
        %v613 = vld [vmem:[#allocation2 + $0xf2] sm:$0xff]
        %v614 = vld [vmem:[#allocation2 + $0xfa] sm:$0xff]
        %v615 = vld [vmem:[#allocation2 + $0x10a] sm:$0xff]
        %v616 = vld [vmem:[#allocation2 + $0x112] sm:$0xff]
        %v617 = vld [vmem:[#allocation2 + $0x122] sm:$0xff]
        %v618 = vld [vmem:[#allocation2 + $0x12a] sm:$0xff]
        %v619 = vld [vmem:[#allocation2 + $0x13a] sm:$0xff]
        %v620 = vld [vmem:[#allocation2 + $0x142] sm:$0xff]
        %v621 = vld [vmem:[#allocation2 + $0x152] sm:$0xff]
        %v622 = vld [vmem:[#allocation2 + $0x15a] sm:$0xff]
        %v623 = vld [vmem:[#allocation2 + $0x16a] sm:$0xff]
        %v624 = vld [vmem:[#allocation2 + $0x172] sm:$0xff]
        %v625 = vld [vmem:[%s496] sm:$0xff]
        %v626 = vld [vmem:[%s496 + $0x8] sm:$0xff]
        %v627 = vld [vmem:[%s496 + $0x18] sm:$0xff]
        %v628 = vld [vmem:[%s496 + $0x20] sm:$0xff]
        %v629 = vld [vmem:[%s496 + $0x30] sm:$0xff]
        %v630 = vld [vmem:[%s496 + $0x38] sm:$0xff]
        %v631 = vld [vmem:[%s496 + $0x48] sm:$0xff]
        %v632 = vld [vmem:[%s496 + $0x50] sm:$0xff]
        %v633 = vld [vmem:[%s496 + $0x60] sm:$0xff]
        %v634 = vld [vmem:[%s496 + $0x68] sm:$0xff]
        %v635 = vld [vmem:[%s496 + $0x78] sm:$0xff]
        %v636 = vld [vmem:[%s496 + $0x80] sm:$0xff]
        %v637 = vld [vmem:[%s496 + $0x90] sm:$0xff]
        %v638 = vld [vmem:[%s496 + $0x98] sm:$0xff]
        %v639 = vld [vmem:[%s496 + $0xa8] sm:$0xff]
        %v640 = vld [vmem:[%s496 + $0xb0] sm:$0xff]
        %v641 = vld [vmem:[%s496 + $0xc0] sm:$0xff]
        %v642 = vld [vmem:[%s496 + $0xc8] sm:$0xff]
        %v643 = vld [vmem:[%s496 + $0xd8] sm:$0xff]
        %v644 = vld [vmem:[%s496 + $0xe0] sm:$0xff]
        %v645 = vld [vmem:[%s496 + $0xf0] sm:$0xff]
        %v646 = vld [vmem:[%s496 + $0xf8] sm:$0xff]
        %v647 = vld [vmem:[%s496 + $0x108] sm:$0xff]
        %v648 = vld [vmem:[%s496 + $0x110] sm:$0xff]
        %v649 = vld [vmem:[%s496 + $0x120] sm:$0xff]
        %v650 = vld [vmem:[%s496 + $0x128] sm:$0xff]
        %v651 = vld [vmem:[%s496 + $0x138] sm:$0xff]
        %v652 = vld [vmem:[%s496 + $0x140] sm:$0xff]
        %v653 = vld [vmem:[%s496 + $0x150] sm:$0xff]
        %v654 = vld [vmem:[%s496 + $0x158] sm:$0xff]
        %v655 = vld [vmem:[%s496 + $0x168] sm:$0xff]
        %v656 = vld [vmem:[%s496 + $0x170] sm:$0xff]
        %v657 = vld [vmem:[%s496 + $0x1] sm:$0xff]
        %v658 = vld [vmem:[%s496 + $0x9] sm:$0xff]
        %v659 = vld [vmem:[%s496 + $0x19] sm:$0xff]
        %v660 = vld [vmem:[%s496 + $0x21] sm:$0xff]
        %v661 = vld [vmem:[%s496 + $0x31] sm:$0xff]
        %v662 = vld [vmem:[%s496 + $0x39] sm:$0xff]
        %v663 = vld [vmem:[%s496 + $0x49] sm:$0xff]
        %v664 = vld [vmem:[%s496 + $0x51] sm:$0xff]
        %v665 = vld [vmem:[%s496 + $0x61] sm:$0xff]
        %v666 = vld [vmem:[%s496 + $0x69] sm:$0xff]
        %v667 = vld [vmem:[%s496 + $0x79] sm:$0xff]
        %v668 = vld [vmem:[%s496 + $0x81] sm:$0xff]
        %v669 = vld [vmem:[%s496 + $0x91] sm:$0xff]
        %v670 = vld [vmem:[%s496 + $0x99] sm:$0xff]
        %v671 = vld [vmem:[%s496 + $0xa9] sm:$0xff]
        %v672 = vld [vmem:[%s496 + $0xb1] sm:$0xff]
        %v673 = vld [vmem:[%s496 + $0xc1] sm:$0xff]
        %v674 = vld [vmem:[%s496 + $0xc9] sm:$0xff]
        %v675 = vld [vmem:[%s496 + $0xd9] sm:$0xff]
        %v676 = vld [vmem:[%s496 + $0xe1] sm:$0xff]
        %v677 = vld [vmem:[%s496 + $0xf1] sm:$0xff]
        %v678 = vld [vmem:[%s496 + $0xf9] sm:$0xff]
        %v679 = vld [vmem:[%s496 + $0x109] sm:$0xff]
        %v680 = vld [vmem:[%s496 + $0x111] sm:$0xff]
        %v681 = vld [vmem:[%s496 + $0x121] sm:$0xff]
        %v682 = vld [vmem:[%s496 + $0x129] sm:$0xff]
        %v683 = vld [vmem:[%s496 + $0x139] sm:$0xff]
        %v684 = vld [vmem:[%s496 + $0x141] sm:$0xff]
        %v685 = vld [vmem:[%s496 + $0x151] sm:$0xff]
        %v686 = vld [vmem:[%s496 + $0x159] sm:$0xff]
        %v687 = vld [vmem:[%s496 + $0x169] sm:$0xff]
        %v688 = vld [vmem:[%s496 + $0x171] sm:$0xff]
        %v689 = vld [vmem:[%s496 + $0x2] sm:$0xff]
        %v690 = vld [vmem:[%s496 + $0xa] sm:$0xff]
        %v691 = vld [vmem:[%s496 + $0x1a] sm:$0xff]
        %v692 = vld [vmem:[%s496 + $0x22] sm:$0xff]
        %v693 = vld [vmem:[%s496 + $0x32] sm:$0xff]
        %v694 = vld [vmem:[%s496 + $0x3a] sm:$0xff]
        %v695 = vld [vmem:[%s496 + $0x4a] sm:$0xff]
        %v696 = vld [vmem:[%s496 + $0x52] sm:$0xff]
        %v697 = vld [vmem:[%s496 + $0x62] sm:$0xff]
        %v698 = vld [vmem:[%s496 + $0x6a] sm:$0xff]
        %v699 = vld [vmem:[%s496 + $0x7a] sm:$0xff]
        %v700 = vld [vmem:[%s496 + $0x82] sm:$0xff]
        %v701 = vld [vmem:[%s496 + $0x92] sm:$0xff]
        %v702 = vld [vmem:[%s496 + $0x9a] sm:$0xff]
        %v703 = vld [vmem:[%s496 + $0xaa] sm:$0xff]
        %v704 = vld [vmem:[%s496 + $0xb2] sm:$0xff]
        %v705 = vld [vmem:[%s496 + $0xc2] sm:$0xff]
        %v706 = vld [vmem:[%s496 + $0xca] sm:$0xff]
        %v707 = vld [vmem:[%s496 + $0xda] sm:$0xff]
        %v708 = vld [vmem:[%s496 + $0xe2] sm:$0xff]
        %v709 = vld [vmem:[%s496 + $0xf2] sm:$0xff]
        %v710 = vld [vmem:[%s496 + $0xfa] sm:$0xff]
        %v711 = vld [vmem:[%s496 + $0x10a] sm:$0xff]
        %v712 = vld [vmem:[%s496 + $0x112] sm:$0xff]
        %v713 = vld [vmem:[%s496 + $0x122] sm:$0xff]
        %v714 = vld [vmem:[%s496 + $0x12a] sm:$0xff]
        %v715 = vld [vmem:[%s496 + $0x13a] sm:$0xff]
        %v716 = vld [vmem:[%s496 + $0x142] sm:$0xff]
        %v717 = vld [vmem:[%s496 + $0x152] sm:$0xff]
        %v718 = vld [vmem:[%s496 + $0x15a] sm:$0xff]
        %v719 = vld [vmem:[%s496 + $0x16a] sm:$0xff]
        %v720 = vld [vmem:[%s496 + $0x172] sm:$0xff]
        %s721 = scalar_lea.vmem [#allocation2], 48
        %v722 = vld [vmem:[%s721] sm:$0xff]
        %v723 = vld [vmem:[%s721 + $0x8] sm:$0xff]
        %v724 = vld [vmem:[%s721 + $0x18] sm:$0xff]
        %v725 = vld [vmem:[%s721 + $0x20] sm:$0xff]
        %v726 = vld [vmem:[%s721 + $0x30] sm:$0xff]
        %v727 = vld [vmem:[%s721 + $0x38] sm:$0xff]
        %v728 = vld [vmem:[%s721 + $0x48] sm:$0xff]
        %v729 = vld [vmem:[%s721 + $0x50] sm:$0xff]
        %v730 = vld [vmem:[%s721 + $0x60] sm:$0xff]
        %v731 = vld [vmem:[%s721 + $0x68] sm:$0xff]
        %v732 = vld [vmem:[%s721 + $0x78] sm:$0xff]
        %v733 = vld [vmem:[%s721 + $0x80] sm:$0xff]
        %v734 = vld [vmem:[%s721 + $0x90] sm:$0xff]
        %v735 = vld [vmem:[%s721 + $0x98] sm:$0xff]
        %v736 = vld [vmem:[%s721 + $0xa8] sm:$0xff]
        %v737 = vld [vmem:[%s721 + $0xb0] sm:$0xff]
        %v738 = vld [vmem:[%s721 + $0xc0] sm:$0xff]
        %v739 = vld [vmem:[%s721 + $0xc8] sm:$0xff]
        %v740 = vld [vmem:[%s721 + $0xd8] sm:$0xff]
        %v741 = vld [vmem:[%s721 + $0xe0] sm:$0xff]
        %v742 = vld [vmem:[%s721 + $0xf0] sm:$0xff]
        %v743 = vld [vmem:[%s721 + $0xf8] sm:$0xff]
        %v744 = vld [vmem:[%s721 + $0x108] sm:$0xff]
        %v745 = vld [vmem:[%s721 + $0x110] sm:$0xff]
        %v746 = vld [vmem:[%s721 + $0x120] sm:$0xff]
        %v747 = vld [vmem:[%s721 + $0x128] sm:$0xff]
        %v748 = vld [vmem:[%s721 + $0x138] sm:$0xff]
        %v749 = vld [vmem:[%s721 + $0x140] sm:$0xff]
        %v750 = vld [vmem:[%s721 + $0x150] sm:$0xff]
        %v751 = vld [vmem:[%s721 + $0x158] sm:$0xff]
        %v752 = vld [vmem:[%s721 + $0x168] sm:$0xff]
        %v753 = vld [vmem:[%s721 + $0x170] sm:$0xff]
        %v754 = vld [vmem:[%s721 + $0x1] sm:$0xff]
        %v755 = vld [vmem:[%s721 + $0x9] sm:$0xff]
        %v756 = vld [vmem:[%s721 + $0x19] sm:$0xff]
        %v757 = vld [vmem:[%s721 + $0x21] sm:$0xff]
        %v758 = vld [vmem:[%s721 + $0x31] sm:$0xff]
        %v759 = vld [vmem:[%s721 + $0x39] sm:$0xff]
        %v760 = vld [vmem:[%s721 + $0x49] sm:$0xff]
        %v761 = vld [vmem:[%s721 + $0x51] sm:$0xff]
        %v762 = vld [vmem:[%s721 + $0x61] sm:$0xff]
        %v763 = vld [vmem:[%s721 + $0x69] sm:$0xff]
        %v764 = vld [vmem:[%s721 + $0x79] sm:$0xff]
        %v765 = vld [vmem:[%s721 + $0x81] sm:$0xff]
        %v766 = vld [vmem:[%s721 + $0x91] sm:$0xff]
        %v767 = vld [vmem:[%s721 + $0x99] sm:$0xff]
        %v768 = vld [vmem:[%s721 + $0xa9] sm:$0xff]
        %v769 = vld [vmem:[%s721 + $0xb1] sm:$0xff]
        %v770 = vld [vmem:[%s721 + $0xc1] sm:$0xff]
        %v771 = vld [vmem:[%s721 + $0xc9] sm:$0xff]
        %v772 = vld [vmem:[%s721 + $0xd9] sm:$0xff]
        %v773 = vld [vmem:[%s721 + $0xe1] sm:$0xff]
        %v774 = vld [vmem:[%s721 + $0xf1] sm:$0xff]
        %v775 = vld [vmem:[%s721 + $0xf9] sm:$0xff]
        %v776 = vld [vmem:[%s721 + $0x109] sm:$0xff]
        %v777 = vld [vmem:[%s721 + $0x111] sm:$0xff]
        %v778 = vld [vmem:[%s721 + $0x121] sm:$0xff]
        %v779 = vld [vmem:[%s721 + $0x129] sm:$0xff]
        %v780 = vld [vmem:[%s721 + $0x139] sm:$0xff]
        %v781 = vld [vmem:[%s721 + $0x141] sm:$0xff]
        %v782 = vld [vmem:[%s721 + $0x151] sm:$0xff]
        %v783 = vld [vmem:[%s721 + $0x159] sm:$0xff]
        %v784 = vld [vmem:[%s721 + $0x169] sm:$0xff]
        %v785 = vld [vmem:[%s721 + $0x171] sm:$0xff]
        %v786 = vld [vmem:[%s721 + $0x2] sm:$0xff]
        %v787 = vld [vmem:[%s721 + $0xa] sm:$0xff]
        %v788 = vld [vmem:[%s721 + $0x1a] sm:$0xff]
        %v789 = vld [vmem:[%s721 + $0x22] sm:$0xff]
        %v790 = vld [vmem:[%s721 + $0x32] sm:$0xff]
        %v791 = vld [vmem:[%s721 + $0x3a] sm:$0xff]
        %v792 = vld [vmem:[%s721 + $0x4a] sm:$0xff]
        %v793 = vld [vmem:[%s721 + $0x52] sm:$0xff]
        %v794 = vld [vmem:[%s721 + $0x62] sm:$0xff]
        %v795 = vld [vmem:[%s721 + $0x6a] sm:$0xff]
        %v796 = vld [vmem:[%s721 + $0x7a] sm:$0xff]
        %v797 = vld [vmem:[%s721 + $0x82] sm:$0xff]
        %v798 = vld [vmem:[%s721 + $0x92] sm:$0xff]
        %v799 = vld [vmem:[%s721 + $0x9a] sm:$0xff]
        %v800 = vld [vmem:[%s721 + $0xaa] sm:$0xff]
        %v801 = vld [vmem:[%s721 + $0xb2] sm:$0xff]
        %v802 = vld [vmem:[%s721 + $0xc2] sm:$0xff]
        %v803 = vld [vmem:[%s721 + $0xca] sm:$0xff]
        %v804 = vld [vmem:[%s721 + $0xda] sm:$0xff]
        %v805 = vld [vmem:[%s721 + $0xe2] sm:$0xff]
        %v806 = vld [vmem:[%s721 + $0xf2] sm:$0xff]
        %v807 = vld [vmem:[%s721 + $0xfa] sm:$0xff]
        %v808 = vld [vmem:[%s721 + $0x10a] sm:$0xff]
        %v809 = vld [vmem:[%s721 + $0x112] sm:$0xff]
        %v810 = vld [vmem:[%s721 + $0x122] sm:$0xff]
        %v811 = vld [vmem:[%s721 + $0x12a] sm:$0xff]
        %v812 = vld [vmem:[%s721 + $0x13a] sm:$0xff]
        %v813 = vld [vmem:[%s721 + $0x142] sm:$0xff]
        %v814 = vld [vmem:[%s721 + $0x152] sm:$0xff]
        %v815 = vld [vmem:[%s721 + $0x15a] sm:$0xff]
        %v816 = vld [vmem:[%s721 + $0x16a] sm:$0xff]
        %v817 = vld [vmem:[%s721 + $0x172] sm:$0xff]
        %850 = vrot.lane.b32.xlu0 %v561, 64
        %v851 = vpop.permute.xlu0 %850
        %852 = vrot.lane.b32.xlu0 %v562, 64
        %v853 = vpop.permute.xlu0 %852
        %854 = vrot.lane.b32.xlu0 %v563, 64
        %v855 = vpop.permute.xlu0 %854
        %856 = vrot.lane.b32.xlu0 %v564, 64
        %v857 = vpop.permute.xlu0 %856
        %858 = vrot.lane.b32.xlu0 %v565, 64
        %v859 = vpop.permute.xlu0 %858
        %860 = vrot.lane.b32.xlu0 %v566, 64
        %v861 = vpop.permute.xlu0 %860
        %862 = vrot.lane.b32.xlu0 %v567, 64
        %v863 = vpop.permute.xlu0 %862
        %864 = vrot.lane.b32.xlu0 %v568, 64
        %v865 = vpop.permute.xlu0 %864
        %866 = vrot.lane.b32.xlu0 %v569, 64
        %v867 = vpop.permute.xlu0 %866
        %868 = vrot.lane.b32.xlu0 %v570, 64
        %v869 = vpop.permute.xlu0 %868
        %870 = vrot.lane.b32.xlu0 %v571, 64
        %v871 = vpop.permute.xlu0 %870
        %872 = vrot.lane.b32.xlu0 %v572, 64
        %v873 = vpop.permute.xlu0 %872
        %874 = vrot.lane.b32.xlu0 %v573, 64
        %v875 = vpop.permute.xlu0 %874
        %876 = vrot.lane.b32.xlu0 %v574, 64
        %v877 = vpop.permute.xlu0 %876
        %878 = vrot.lane.b32.xlu0 %v575, 64
        %v879 = vpop.permute.xlu0 %878
        %880 = vrot.lane.b32.xlu0 %v576, 64
        %v881 = vpop.permute.xlu0 %880
        %882 = vrot.lane.b32.xlu0 %v577, 64
        %v883 = vpop.permute.xlu0 %882
        %884 = vrot.lane.b32.xlu0 %v578, 64
        %v885 = vpop.permute.xlu0 %884
        %886 = vrot.lane.b32.xlu0 %v579, 64
        %v887 = vpop.permute.xlu0 %886
        %888 = vrot.lane.b32.xlu0 %v580, 64
        %v889 = vpop.permute.xlu0 %888
        %890 = vrot.lane.b32.xlu0 %v581, 64
        %v891 = vpop.permute.xlu0 %890
        %892 = vrot.lane.b32.xlu0 %v582, 64
        %v893 = vpop.permute.xlu0 %892
        %894 = vrot.lane.b32.xlu0 %v583, 64
        %v895 = vpop.permute.xlu0 %894
        %896 = vrot.lane.b32.xlu0 %v584, 64
        %v897 = vpop.permute.xlu0 %896
        %898 = vrot.lane.b32.xlu0 %v585, 64
        %v899 = vpop.permute.xlu0 %898
        %900 = vrot.lane.b32.xlu0 %v586, 64
        %v901 = vpop.permute.xlu0 %900
        %902 = vrot.lane.b32.xlu0 %v587, 64
        %v903 = vpop.permute.xlu0 %902
        %904 = vrot.lane.b32.xlu0 %v588, 64
        %v905 = vpop.permute.xlu0 %904
        %906 = vrot.lane.b32.xlu0 %v589, 64
        %v907 = vpop.permute.xlu0 %906
        %908 = vrot.lane.b32.xlu0 %v590, 64
        %v909 = vpop.permute.xlu0 %908
        %910 = vrot.lane.b32.xlu0 %v591, 64
        %v911 = vpop.permute.xlu0 %910
        %912 = vrot.lane.b32.xlu0 %v592, 64
        %v913 = vpop.permute.xlu0 %912
        %978 = vrot.lane.b32.xlu0 %v625, 64
        %v979 = vpop.permute.xlu0 %978
        %980 = vrot.lane.b32.xlu0 %v626, 64
        %v981 = vpop.permute.xlu0 %980
        %982 = vrot.lane.b32.xlu0 %v627, 64
        %v983 = vpop.permute.xlu0 %982
        %984 = vrot.lane.b32.xlu0 %v628, 64
        %v985 = vpop.permute.xlu0 %984
        %986 = vrot.lane.b32.xlu0 %v629, 64
        %v987 = vpop.permute.xlu0 %986
        %988 = vrot.lane.b32.xlu0 %v630, 64
        %v989 = vpop.permute.xlu0 %988
        %990 = vrot.lane.b32.xlu0 %v631, 64
        %v991 = vpop.permute.xlu0 %990
        %992 = vrot.lane.b32.xlu0 %v632, 64
        %v993 = vpop.permute.xlu0 %992
        %994 = vrot.lane.b32.xlu0 %v633, 64
        %v995 = vpop.permute.xlu0 %994
        %996 = vrot.lane.b32.xlu0 %v634, 64
        %v997 = vpop.permute.xlu0 %996
        %998 = vrot.lane.b32.xlu0 %v635, 64
        %v999 = vpop.permute.xlu0 %998
        %1000 = vrot.lane.b32.xlu0 %v636, 64
        %v1001 = vpop.permute.xlu0 %1000
        %1002 = vrot.lane.b32.xlu0 %v637, 64
        %v1003 = vpop.permute.xlu0 %1002
        %1004 = vrot.lane.b32.xlu0 %v638, 64
        %v1005 = vpop.permute.xlu0 %1004
        %1006 = vrot.lane.b32.xlu0 %v639, 64
        %v1007 = vpop.permute.xlu0 %1006
        %1008 = vrot.lane.b32.xlu0 %v640, 64
        %v1009 = vpop.permute.xlu0 %1008
        %1010 = vrot.lane.b32.xlu0 %v641, 64
        %v1011 = vpop.permute.xlu0 %1010
        %1012 = vrot.lane.b32.xlu0 %v642, 64
        %v1013 = vpop.permute.xlu0 %1012
        %1014 = vrot.lane.b32.xlu0 %v643, 64
        %v1015 = vpop.permute.xlu0 %1014
        %1016 = vrot.lane.b32.xlu0 %v644, 64
        %v1017 = vpop.permute.xlu0 %1016
        %1018 = vrot.lane.b32.xlu0 %v645, 64
        %v1019 = vpop.permute.xlu0 %1018
        %1020 = vrot.lane.b32.xlu0 %v646, 64
        %v1021 = vpop.permute.xlu0 %1020
        %1022 = vrot.lane.b32.xlu0 %v647, 64
        %v1023 = vpop.permute.xlu0 %1022
        %1024 = vrot.lane.b32.xlu0 %v648, 64
        %v1025 = vpop.permute.xlu0 %1024
        %1026 = vrot.lane.b32.xlu0 %v649, 64
        %v1027 = vpop.permute.xlu0 %1026
        %1028 = vrot.lane.b32.xlu0 %v650, 64
        %v1029 = vpop.permute.xlu0 %1028
        %1030 = vrot.lane.b32.xlu0 %v651, 64
        %v1031 = vpop.permute.xlu0 %1030
        %1032 = vrot.lane.b32.xlu0 %v652, 64
        %v1033 = vpop.permute.xlu0 %1032
        %1034 = vrot.lane.b32.xlu0 %v653, 64
        %v1035 = vpop.permute.xlu0 %1034
        %1036 = vrot.lane.b32.xlu0 %v654, 64
        %v1037 = vpop.permute.xlu0 %1036
        %1038 = vrot.lane.b32.xlu0 %v655, 64
        %v1039 = vpop.permute.xlu0 %1038
        %1040 = vrot.lane.b32.xlu0 %v656, 64
        %v1041 = vpop.permute.xlu0 %1040
        %1106 = vrot.lane.b32.xlu0 %v689, 64
        %v1107 = vpop.permute.xlu0 %1106
        %1108 = vrot.lane.b32.xlu0 %v690, 64
        %v1109 = vpop.permute.xlu0 %1108
        %1110 = vrot.lane.b32.xlu0 %v691, 64
        %v1111 = vpop.permute.xlu0 %1110
        %1112 = vrot.lane.b32.xlu0 %v692, 64
        %v1113 = vpop.permute.xlu0 %1112
        %1114 = vrot.lane.b32.xlu0 %v693, 64
        %v1115 = vpop.permute.xlu0 %1114
        %1116 = vrot.lane.b32.xlu0 %v694, 64
        %v1117 = vpop.permute.xlu0 %1116
        %1118 = vrot.lane.b32.xlu0 %v695, 64
        %v1119 = vpop.permute.xlu0 %1118
        %1120 = vrot.lane.b32.xlu0 %v696, 64
        %v1121 = vpop.permute.xlu0 %1120
        %1122 = vrot.lane.b32.xlu0 %v697, 64
        %v1123 = vpop.permute.xlu0 %1122
        %1124 = vrot.lane.b32.xlu0 %v698, 64
        %v1125 = vpop.permute.xlu0 %1124
        %1126 = vrot.lane.b32.xlu0 %v699, 64
        %v1127 = vpop.permute.xlu0 %1126
        %1128 = vrot.lane.b32.xlu0 %v700, 64
        %v1129 = vpop.permute.xlu0 %1128
        %1130 = vrot.lane.b32.xlu0 %v701, 64
        %v1131 = vpop.permute.xlu0 %1130
        %1132 = vrot.lane.b32.xlu0 %v702, 64
        %v1133 = vpop.permute.xlu0 %1132
        %1134 = vrot.lane.b32.xlu0 %v703, 64
        %v1135 = vpop.permute.xlu0 %1134
        %1136 = vrot.lane.b32.xlu0 %v704, 64
        %v1137 = vpop.permute.xlu0 %1136
        %1138 = vrot.lane.b32.xlu0 %v705, 64
        %v1139 = vpop.permute.xlu0 %1138
        %1140 = vrot.lane.b32.xlu0 %v706, 64
        %v1141 = vpop.permute.xlu0 %1140
        %1142 = vrot.lane.b32.xlu0 %v707, 64
        %v1143 = vpop.permute.xlu0 %1142
        %1144 = vrot.lane.b32.xlu0 %v708, 64
        %v1145 = vpop.permute.xlu0 %1144
        %1146 = vrot.lane.b32.xlu0 %v709, 64
        %v1147 = vpop.permute.xlu0 %1146
        %1148 = vrot.lane.b32.xlu0 %v710, 64
        %v1149 = vpop.permute.xlu0 %1148
        %1150 = vrot.lane.b32.xlu0 %v711, 64
        %v1151 = vpop.permute.xlu0 %1150
        %1152 = vrot.lane.b32.xlu0 %v712, 64
        %v1153 = vpop.permute.xlu0 %1152
        %1154 = vrot.lane.b32.xlu0 %v713, 64
        %v1155 = vpop.permute.xlu0 %1154
        %1156 = vrot.lane.b32.xlu0 %v714, 64
        %v1157 = vpop.permute.xlu0 %1156
        %1158 = vrot.lane.b32.xlu0 %v715, 64
        %v1159 = vpop.permute.xlu0 %1158
        %1160 = vrot.lane.b32.xlu0 %v716, 64
        %v1161 = vpop.permute.xlu0 %1160
        %1162 = vrot.lane.b32.xlu0 %v717, 64
        %v1163 = vpop.permute.xlu0 %1162
        %1164 = vrot.lane.b32.xlu0 %v718, 64
        %v1165 = vpop.permute.xlu0 %1164
        %1166 = vrot.lane.b32.xlu0 %v719, 64
        %v1167 = vpop.permute.xlu0 %1166
        %1168 = vrot.lane.b32.xlu0 %v720, 64
        %v1169 = vpop.permute.xlu0 %1168
        %1234 = vrot.lane.b32.xlu0 %v754, 64
        %v1235 = vpop.permute.xlu0 %1234
        %1236 = vrot.lane.b32.xlu0 %v755, 64
        %v1237 = vpop.permute.xlu0 %1236
        %1238 = vrot.lane.b32.xlu0 %v756, 64
        %v1239 = vpop.permute.xlu0 %1238
        %1240 = vrot.lane.b32.xlu0 %v757, 64
        %v1241 = vpop.permute.xlu0 %1240
        %1242 = vrot.lane.b32.xlu0 %v758, 64
        %v1243 = vpop.permute.xlu0 %1242
        %1244 = vrot.lane.b32.xlu0 %v759, 64
        %v1245 = vpop.permute.xlu0 %1244
        %1246 = vrot.lane.b32.xlu0 %v760, 64
        %v1247 = vpop.permute.xlu0 %1246
        %1248 = vrot.lane.b32.xlu0 %v761, 64
        %v1249 = vpop.permute.xlu0 %1248
        %1250 = vrot.lane.b32.xlu0 %v762, 64
        %v1251 = vpop.permute.xlu0 %1250
        %1252 = vrot.lane.b32.xlu0 %v763, 64
        %v1253 = vpop.permute.xlu0 %1252
        %1254 = vrot.lane.b32.xlu0 %v764, 64
        %v1255 = vpop.permute.xlu0 %1254
        %1256 = vrot.lane.b32.xlu0 %v765, 64
        %v1257 = vpop.permute.xlu0 %1256
        %1258 = vrot.lane.b32.xlu0 %v766, 64
        %v1259 = vpop.permute.xlu0 %1258
        %1260 = vrot.lane.b32.xlu0 %v767, 64
        %v1261 = vpop.permute.xlu0 %1260
        %1262 = vrot.lane.b32.xlu0 %v768, 64
        %v1263 = vpop.permute.xlu0 %1262
        %1264 = vrot.lane.b32.xlu0 %v769, 64
        %v1265 = vpop.permute.xlu0 %1264
        %1266 = vrot.lane.b32.xlu0 %v770, 64
        %v1267 = vpop.permute.xlu0 %1266
        %1268 = vrot.lane.b32.xlu0 %v771, 64
        %v1269 = vpop.permute.xlu0 %1268
        %1270 = vrot.lane.b32.xlu0 %v772, 64
        %v1271 = vpop.permute.xlu0 %1270
        %1272 = vrot.lane.b32.xlu0 %v773, 64
        %v1273 = vpop.permute.xlu0 %1272
        %1274 = vrot.lane.b32.xlu0 %v774, 64
        %v1275 = vpop.permute.xlu0 %1274
        %1276 = vrot.lane.b32.xlu0 %v775, 64
        %v1277 = vpop.permute.xlu0 %1276
        %1278 = vrot.lane.b32.xlu0 %v776, 64
        %v1279 = vpop.permute.xlu0 %1278
        %1280 = vrot.lane.b32.xlu0 %v777, 64
        %v1281 = vpop.permute.xlu0 %1280
        %1282 = vrot.lane.b32.xlu0 %v778, 64
        %v1283 = vpop.permute.xlu0 %1282
        %1284 = vrot.lane.b32.xlu0 %v779, 64
        %v1285 = vpop.permute.xlu0 %1284
        %1286 = vrot.lane.b32.xlu0 %v780, 64
        %v1287 = vpop.permute.xlu0 %1286
        %1288 = vrot.lane.b32.xlu0 %v781, 64
        %v1289 = vpop.permute.xlu0 %1288
        %1290 = vrot.lane.b32.xlu0 %v782, 64
        %v1291 = vpop.permute.xlu0 %1290
        %1292 = vrot.lane.b32.xlu0 %v783, 64
        %v1293 = vpop.permute.xlu0 %1292
        %1294 = vrot.lane.b32.xlu0 %v784, 64
        %v1295 = vpop.permute.xlu0 %1294
        %1296 = vrot.lane.b32.xlu0 %v785, 64
        %v1297 = vpop.permute.xlu0 %1296
        %v1330 = vsel %vm386, %v529, %v851
        %v1331 = vsel %vm386, %v530, %v853
        %v1332 = vsel %vm386, %v531, %v855
        %v1333 = vsel %vm386, %v532, %v857
        %v1334 = vsel %vm386, %v533, %v859
        %v1335 = vsel %vm386, %v534, %v861
        %v1336 = vsel %vm386, %v535, %v863
        %v1337 = vsel %vm386, %v536, %v865
        %v1338 = vsel %vm386, %v537, %v867
        %v1339 = vsel %vm386, %v538, %v869
        %v1340 = vsel %vm386, %v539, %v871
        %v1341 = vsel %vm386, %v540, %v873
        %v1342 = vsel %vm386, %v541, %v875
        %v1343 = vsel %vm386, %v542, %v877
        %v1344 = vsel %vm386, %v543, %v879
        %v1345 = vsel %vm386, %v544, %v881
        %v1346 = vsel %vm386, %v545, %v883
        %v1347 = vsel %vm386, %v546, %v885
        %v1348 = vsel %vm386, %v547, %v887
        %v1349 = vsel %vm386, %v548, %v889
        %v1350 = vsel %vm386, %v549, %v891
        %v1351 = vsel %vm386, %v550, %v893
        %v1352 = vsel %vm386, %v551, %v895
        %v1353 = vsel %vm386, %v552, %v897
        %v1354 = vsel %vm386, %v553, %v899
        %v1355 = vsel %vm386, %v554, %v901
        %v1356 = vsel %vm386, %v555, %v903
        %v1357 = vsel %vm386, %v556, %v905
        %v1358 = vsel %vm386, %v557, %v907
        %v1359 = vsel %vm386, %v558, %v909
        %v1360 = vsel %vm386, %v559, %v911
        %v1361 = vsel %vm386, %v560, %v913
        %v1362 = vsel %vm386, %v593, %v979
        %v1363 = vsel %vm386, %v594, %v981
        %v1364 = vsel %vm386, %v595, %v983
        %v1365 = vsel %vm386, %v596, %v985
        %v1366 = vsel %vm386, %v597, %v987
        %v1367 = vsel %vm386, %v598, %v989
        %v1368 = vsel %vm386, %v599, %v991
        %v1369 = vsel %vm386, %v600, %v993
        %v1370 = vsel %vm386, %v601, %v995
        %v1371 = vsel %vm386, %v602, %v997
        %v1372 = vsel %vm386, %v603, %v999
        %v1373 = vsel %vm386, %v604, %v1001
        %v1374 = vsel %vm386, %v605, %v1003
        %v1375 = vsel %vm386, %v606, %v1005
        %v1376 = vsel %vm386, %v607, %v1007
        %v1377 = vsel %vm386, %v608, %v1009
        %v1378 = vsel %vm386, %v609, %v1011
        %v1379 = vsel %vm386, %v610, %v1013
        %v1380 = vsel %vm386, %v611, %v1015
        %v1381 = vsel %vm386, %v612, %v1017
        %v1382 = vsel %vm386, %v613, %v1019
        %v1383 = vsel %vm386, %v614, %v1021
        %v1384 = vsel %vm386, %v615, %v1023
        %v1385 = vsel %vm386, %v616, %v1025
        %v1386 = vsel %vm386, %v617, %v1027
        %v1387 = vsel %vm386, %v618, %v1029
        %v1388 = vsel %vm386, %v619, %v1031
        %v1389 = vsel %vm386, %v620, %v1033
        %v1390 = vsel %vm386, %v621, %v1035
        %v1391 = vsel %vm386, %v622, %v1037
        %v1392 = vsel %vm386, %v623, %v1039
        %v1393 = vsel %vm386, %v624, %v1041
        %v1394 = vsel %vm386, %v657, %v1107
        %v1395 = vsel %vm386, %v658, %v1109
        %v1396 = vsel %vm386, %v659, %v1111
        %v1397 = vsel %vm386, %v660, %v1113
        %v1398 = vsel %vm386, %v661, %v1115
        %v1399 = vsel %vm386, %v662, %v1117
        %v1400 = vsel %vm386, %v663, %v1119
        %v1401 = vsel %vm386, %v664, %v1121
        %v1402 = vsel %vm386, %v665, %v1123
        %v1403 = vsel %vm386, %v666, %v1125
        %v1404 = vsel %vm386, %v667, %v1127
        %v1405 = vsel %vm386, %v668, %v1129
        %v1406 = vsel %vm386, %v669, %v1131
        %v1407 = vsel %vm386, %v670, %v1133
        %v1408 = vsel %vm386, %v671, %v1135
        %v1409 = vsel %vm386, %v672, %v1137
        %v1410 = vsel %vm386, %v673, %v1139
        %v1411 = vsel %vm386, %v674, %v1141
        %v1412 = vsel %vm386, %v675, %v1143
        %v1413 = vsel %vm386, %v676, %v1145
        %v1414 = vsel %vm386, %v677, %v1147
        %v1415 = vsel %vm386, %v678, %v1149
        %v1416 = vsel %vm386, %v679, %v1151
        %v1417 = vsel %vm386, %v680, %v1153
        %v1418 = vsel %vm386, %v681, %v1155
        %v1419 = vsel %vm386, %v682, %v1157
        %v1420 = vsel %vm386, %v683, %v1159
        %v1421 = vsel %vm386, %v684, %v1161
        %v1422 = vsel %vm386, %v685, %v1163
        %v1423 = vsel %vm386, %v686, %v1165
        %v1424 = vsel %vm386, %v687, %v1167
        %v1425 = vsel %vm386, %v688, %v1169
        %v1426 = vsel %vm386, %v722, %v1235
        %v1427 = vsel %vm386, %v723, %v1237
        %v1428 = vsel %vm386, %v724, %v1239
        %v1429 = vsel %vm386, %v725, %v1241
        %v1430 = vsel %vm386, %v726, %v1243
        %v1431 = vsel %vm386, %v727, %v1245
        %v1432 = vsel %vm386, %v728, %v1247
        %v1433 = vsel %vm386, %v729, %v1249
        %v1434 = vsel %vm386, %v730, %v1251
        %v1435 = vsel %vm386, %v731, %v1253
        %v1436 = vsel %vm386, %v732, %v1255
        %v1437 = vsel %vm386, %v733, %v1257
        %v1438 = vsel %vm386, %v734, %v1259
        %v1439 = vsel %vm386, %v735, %v1261
        %v1440 = vsel %vm386, %v736, %v1263
        %v1441 = vsel %vm386, %v737, %v1265
        %v1442 = vsel %vm386, %v738, %v1267
        %v1443 = vsel %vm386, %v739, %v1269
        %v1444 = vsel %vm386, %v740, %v1271
        %v1445 = vsel %vm386, %v741, %v1273
        %v1446 = vsel %vm386, %v742, %v1275
        %v1447 = vsel %vm386, %v743, %v1277
        %v1448 = vsel %vm386, %v744, %v1279
        %v1449 = vsel %vm386, %v745, %v1281
        %v1450 = vsel %vm386, %v746, %v1283
        %v1451 = vsel %vm386, %v747, %v1285
        %v1452 = vsel %vm386, %v748, %v1287
        %v1453 = vsel %vm386, %v749, %v1289
        %v1454 = vsel %vm386, %v750, %v1291
        %v1455 = vsel %vm386, %v751, %v1293
        %v1456 = vsel %vm386, %v752, %v1295
        %v1457 = vsel %vm386, %v753, %v1297
        %v1458 = vpack.c.bf16 %v1331, %v1330
        %v1459 = vpack.c.bf16 %v1363, %v1362
        %v1460 = vpack.c.bf16 %v1395, %v1394
        %v1461 = vpack.c.bf16 %v1427, %v1426
        %v1462 = vpack.c.bf16 %v787, %v786
        %v1463 = vpack.c.bf16 %v1333, %v1332
        %v1464 = vpack.c.bf16 %v1365, %v1364
        %v1465 = vpack.c.bf16 %v1397, %v1396
        %v1466 = vpack.c.bf16 %v1429, %v1428
        %v1467 = vpack.c.bf16 %v789, %v788
        %v1468 = vpack.c.bf16 %v1335, %v1334
        %v1469 = vpack.c.bf16 %v1367, %v1366
        %v1470 = vpack.c.bf16 %v1399, %v1398
        %v1471 = vpack.c.bf16 %v1431, %v1430
        %v1472 = vpack.c.bf16 %v791, %v790
        %v1473 = vpack.c.bf16 %v1337, %v1336
        %v1474 = vpack.c.bf16 %v1369, %v1368
        %v1475 = vpack.c.bf16 %v1401, %v1400
        %v1476 = vpack.c.bf16 %v1433, %v1432
        %v1477 = vpack.c.bf16 %v793, %v792
        %v1478 = vpack.c.bf16 %v1339, %v1338
        %v1479 = vpack.c.bf16 %v1371, %v1370
        %v1480 = vpack.c.bf16 %v1403, %v1402
        %v1481 = vpack.c.bf16 %v1435, %v1434
        %v1482 = vpack.c.bf16 %v795, %v794
        %v1483 = vpack.c.bf16 %v1341, %v1340
        %v1484 = vpack.c.bf16 %v1373, %v1372
        %v1485 = vpack.c.bf16 %v1405, %v1404
        %v1486 = vpack.c.bf16 %v1437, %v1436
        %v1487 = vpack.c.bf16 %v797, %v796
        %v1488 = vpack.c.bf16 %v1343, %v1342
        %v1489 = vpack.c.bf16 %v1375, %v1374
        %v1490 = vpack.c.bf16 %v1407, %v1406
        %v1491 = vpack.c.bf16 %v1439, %v1438
        %v1492 = vpack.c.bf16 %v799, %v798
        %v1493 = vpack.c.bf16 %v1345, %v1344
        %v1494 = vpack.c.bf16 %v1377, %v1376
        %v1495 = vpack.c.bf16 %v1409, %v1408
        %v1496 = vpack.c.bf16 %v1441, %v1440
        %v1497 = vpack.c.bf16 %v801, %v800
        %v1498 = vpack.c.bf16 %v1347, %v1346
        %v1499 = vpack.c.bf16 %v1379, %v1378
        %v1500 = vpack.c.bf16 %v1411, %v1410
        %v1501 = vpack.c.bf16 %v1443, %v1442
        %v1502 = vpack.c.bf16 %v803, %v802
        %v1503 = vpack.c.bf16 %v1349, %v1348
        %v1504 = vpack.c.bf16 %v1381, %v1380
        %v1505 = vpack.c.bf16 %v1413, %v1412
        %v1506 = vpack.c.bf16 %v1445, %v1444
        %v1507 = vpack.c.bf16 %v805, %v804
        %v1508 = vpack.c.bf16 %v1351, %v1350
        %v1509 = vpack.c.bf16 %v1383, %v1382
        %v1510 = vpack.c.bf16 %v1415, %v1414
        %v1511 = vpack.c.bf16 %v1447, %v1446
        %v1512 = vpack.c.bf16 %v807, %v806
        %v1513 = vpack.c.bf16 %v1353, %v1352
        %v1514 = vpack.c.bf16 %v1385, %v1384
        %v1515 = vpack.c.bf16 %v1417, %v1416
        %v1516 = vpack.c.bf16 %v1449, %v1448
        %v1517 = vpack.c.bf16 %v809, %v808
        %v1518 = vpack.c.bf16 %v1355, %v1354
        %v1519 = vpack.c.bf16 %v1387, %v1386
        %v1520 = vpack.c.bf16 %v1419, %v1418
        %v1521 = vpack.c.bf16 %v1451, %v1450
        %v1522 = vpack.c.bf16 %v811, %v810
        %v1523 = vpack.c.bf16 %v1357, %v1356
        %v1524 = vpack.c.bf16 %v1389, %v1388
        %v1525 = vpack.c.bf16 %v1421, %v1420
        %v1526 = vpack.c.bf16 %v1453, %v1452
        %v1527 = vpack.c.bf16 %v813, %v812
        %v1528 = vpack.c.bf16 %v1359, %v1358
        %v1529 = vpack.c.bf16 %v1391, %v1390
        %v1530 = vpack.c.bf16 %v1423, %v1422
        %v1531 = vpack.c.bf16 %v1455, %v1454
        %v1532 = vpack.c.bf16 %v815, %v814
        %v1533 = vpack.c.bf16 %v1361, %v1360
        %v1534 = vpack.c.bf16 %v1393, %v1392
        %v1535 = vpack.c.bf16 %v1425, %v1424
        %v1536 = vpack.c.bf16 %v1457, %v1456
        %v1537 = vpack.c.bf16 %v817, %v816
        %v1538 = vld [vmem:[%s1] sm:$0xf]
        %v1539 = vld [vmem:[%s1 + $0x4] sm:$0xf]
        %v1540 = vld [vmem:[%s1 + $0x8] sm:$0xf]
        %v1541 = vld [vmem:[%s1 + $0xc] sm:$0xf]
        %v1542 = vld [vmem:[%s1 + $0x10] sm:$0xf]
        %v1543 = vld [vmem:[%s1 + $0x14] sm:$0xf]
        %v1544 = vld [vmem:[%s1 + $0x18] sm:$0xf]
        %v1545 = vld [vmem:[%s1 + $0x1c] sm:$0xf]
        %v1546 = vld [vmem:[%s1 + $0x20] sm:$0xf]
        %v1547 = vld [vmem:[%s1 + $0x24] sm:$0xf]
        %v1548 = vld [vmem:[%s1 + $0x28] sm:$0xf]
        %v1549 = vld [vmem:[%s1 + $0x2c] sm:$0xf]
        %v1550 = vld [vmem:[%s1 + $0x30] sm:$0xf]
        %v1551 = vld [vmem:[%s1 + $0x34] sm:$0xf]
        %v1552 = vld [vmem:[%s1 + $0x38] sm:$0xf]
        %v1553 = vld [vmem:[%s1 + $0x3c] sm:$0xf]
        %v1554 = vld [vmem:[%s1 + $0x40] sm:$0xf]
        %v1555 = vld [vmem:[%s1 + $0x44] sm:$0xf]
        %v1556 = vld [vmem:[%s1 + $0x48] sm:$0xf]
        %v1557 = vld [vmem:[%s1 + $0x4c] sm:$0xf]
        %v1558 = vld [vmem:[%s1 + $0x50] sm:$0xf]
        %v1559 = vld [vmem:[%s1 + $0x54] sm:$0xf]
        %v1560 = vld [vmem:[%s1 + $0x58] sm:$0xf]
        %v1561 = vld [vmem:[%s1 + $0x5c] sm:$0xf]
        %v1562 = vld [vmem:[%s1 + $0x60] sm:$0xf]
        %v1563 = vld [vmem:[%s1 + $0x64] sm:$0xf]
        %v1564 = vld [vmem:[%s1 + $0x68] sm:$0xf]
        %v1565 = vld [vmem:[%s1 + $0x6c] sm:$0xf]
        %v1566 = vld [vmem:[%s1 + $0x70] sm:$0xf]
        %v1567 = vld [vmem:[%s1 + $0x74] sm:$0xf]
        %v1568 = vld [vmem:[%s1 + $0x78] sm:$0xf]
        %v1569 = vld [vmem:[%s1 + $0x7c] sm:$0xf]
        %v1570 = vld [vmem:[%s1 + $0x80] sm:$0xf]
        %v1571 = vld [vmem:[%s1 + $0x84] sm:$0xf]
        %v1572 = vld [vmem:[%s1 + $0x88] sm:$0xf]
        %v1573 = vld [vmem:[%s1 + $0x8c] sm:$0xf]
        %v1574 = vld [vmem:[%s1 + $0x90] sm:$0xf]
        %v1575 = vld [vmem:[%s1 + $0x94] sm:$0xf]
        %v1576 = vld [vmem:[%s1 + $0x98] sm:$0xf]
        %v1577 = vld [vmem:[%s1 + $0x9c] sm:$0xf]
        %v1578 = vld [vmem:[%s1 + $0xa0] sm:$0xf]
        %v1579 = vld [vmem:[%s1 + $0xa4] sm:$0xf]
        %v1580 = vld [vmem:[%s1 + $0xa8] sm:$0xf]
        %v1581 = vld [vmem:[%s1 + $0xac] sm:$0xf]
        %v1582 = vld [vmem:[%s1 + $0xb0] sm:$0xf]
        %v1583 = vld [vmem:[%s1 + $0xb4] sm:$0xf]
        %v1584 = vld [vmem:[%s1 + $0xb8] sm:$0xf]
        %v1585 = vld [vmem:[%s1 + $0xbc] sm:$0xf]
        %v1586 = vld [vmem:[%s1 + $0xc0] sm:$0xf]
        %v1587 = vld [vmem:[%s1 + $0xc4] sm:$0xf]
        %v1588 = vld [vmem:[%s1 + $0xc8] sm:$0xf]
        %v1589 = vld [vmem:[%s1 + $0xcc] sm:$0xf]
        %v1590 = vld [vmem:[%s1 + $0xd0] sm:$0xf]
        %v1591 = vld [vmem:[%s1 + $0xd4] sm:$0xf]
        %v1592 = vld [vmem:[%s1 + $0xd8] sm:$0xf]
        %v1593 = vld [vmem:[%s1 + $0xdc] sm:$0xf]
        %v1594 = vld [vmem:[%s1 + $0xe0] sm:$0xf]
        %v1595 = vld [vmem:[%s1 + $0xe4] sm:$0xf]
        %v1596 = vld [vmem:[%s1 + $0xe8] sm:$0xf]
        %v1597 = vld [vmem:[%s1 + $0xec] sm:$0xf]
        %v1598 = vld [vmem:[%s1 + $0xf0] sm:$0xf]
        %v1599 = vld [vmem:[%s1 + $0xf4] sm:$0xf]
        %v1600 = vld [vmem:[%s1 + $0xf8] sm:$0xf]
        %v1601 = vld [vmem:[%s1 + $0xfc] sm:$0xf]
        %v1602 = vld [vmem:[%s1 + $0x100] sm:$0xf]
        %v1603 = vld [vmem:[%s1 + $0x104] sm:$0xf]
        %v1604 = vld [vmem:[%s1 + $0x108] sm:$0xf]
        %v1605 = vld [vmem:[%s1 + $0x10c] sm:$0xf]
        %v1606 = vld [vmem:[%s1 + $0x110] sm:$0xf]
        %v1607 = vld [vmem:[%s1 + $0x114] sm:$0xf]
        %v1608 = vld [vmem:[%s1 + $0x118] sm:$0xf]
        %v1609 = vld [vmem:[%s1 + $0x11c] sm:$0xf]
        %v1610 = vld [vmem:[%s2] sm:$0x1]
        %v1612 = vlaneseq
        %v1613 = vshrl.u32 %v1612, 7
        %v1614 = vsub.s32 0, %v1613
        %v1615 = vrot.slane %v1610, %v1614
        %v1689 = vunpack.c.l.b16 %v1538
        %v1690 = vunpack.c.l.b16 %v1539
        %v1691 = vunpack.c.l.b16 %v1540
        %v1692 = vunpack.c.l.b16 %v1541
        %v1693 = vunpack.c.l.b16 %v1542
        %v1694 = vunpack.c.l.b16 %v1543
        %v1695 = vunpack.c.l.b16 %v1544
        %v1696 = vunpack.c.l.b16 %v1545
        %v1697 = vunpack.c.l.b16 %v1546
        %v1698 = vunpack.c.l.b16 %v1547
        %v1699 = vunpack.c.l.b16 %v1548
        %v1700 = vunpack.c.l.b16 %v1549
        %v1701 = vunpack.c.l.b16 %v1550
        %v1702 = vunpack.c.l.b16 %v1551
        %v1703 = vunpack.c.l.b16 %v1552
        %v1704 = vunpack.c.l.b16 %v1553
        %v1705 = vunpack.c.l.b16 %v1554
        %v1706 = vunpack.c.l.b16 %v1555
        %v1707 = vunpack.c.l.b16 %v1556
        %v1708 = vunpack.c.l.b16 %v1557
        %v1709 = vunpack.c.l.b16 %v1558
        %v1710 = vunpack.c.l.b16 %v1559
        %v1711 = vunpack.c.l.b16 %v1560
        %v1712 = vunpack.c.l.b16 %v1561
        %v1713 = vunpack.c.l.b16 %v1562
        %v1714 = vunpack.c.l.b16 %v1563
        %v1715 = vunpack.c.l.b16 %v1564
        %v1716 = vunpack.c.l.b16 %v1565
        %v1717 = vunpack.c.l.b16 %v1566
        %v1718 = vunpack.c.l.b16 %v1567
        %v1719 = vunpack.c.l.b16 %v1568
        %v1720 = vunpack.c.l.b16 %v1569
        %v1721 = vunpack.c.l.b16 %v1570
        %v1722 = vunpack.c.l.b16 %v1571
        %v1723 = vunpack.c.l.b16 %v1572
        %v1724 = vunpack.c.l.b16 %v1573
        %v1725 = vunpack.c.l.b16 %v1574
        %v1726 = vunpack.c.l.b16 %v1575
        %v1727 = vunpack.c.l.b16 %v1576
        %v1728 = vunpack.c.l.b16 %v1577
        %v1729 = vunpack.c.l.b16 %v1578
        %v1730 = vunpack.c.l.b16 %v1579
        %v1731 = vunpack.c.l.b16 %v1580
        %v1732 = vunpack.c.l.b16 %v1581
        %v1733 = vunpack.c.l.b16 %v1582
        %v1734 = vunpack.c.l.b16 %v1583
        %v1735 = vunpack.c.l.b16 %v1584
        %v1736 = vunpack.c.l.b16 %v1585
        %v1737 = vunpack.c.l.b16 %v1586
        %v1738 = vunpack.c.l.b16 %v1587
        %v1739 = vunpack.c.l.b16 %v1588
        %v1740 = vunpack.c.l.b16 %v1589
        %v1741 = vunpack.c.l.b16 %v1590
        %v1742 = vunpack.c.l.b16 %v1591
        %v1743 = vunpack.c.l.b16 %v1592
        %v1744 = vunpack.c.l.b16 %v1593
        %v1745 = vunpack.c.l.b16 %v1594
        %v1746 = vunpack.c.l.b16 %v1595
        %v1747 = vunpack.c.l.b16 %v1596
        %v1748 = vunpack.c.l.b16 %v1597
        %v1749 = vunpack.c.l.b16 %v1598
        %v1750 = vunpack.c.l.b16 %v1599
        %v1751 = vunpack.c.l.b16 %v1600
        %v1752 = vunpack.c.l.b16 %v1601
        %v1753 = vunpack.c.l.b16 %v1602
        %v1754 = vunpack.c.l.b16 %v1603
        %v1755 = vunpack.c.l.b16 %v1604
        %v1756 = vunpack.c.l.b16 %v1605
        %v1757 = vunpack.c.l.b16 %v1606
        %v1758 = vunpack.c.l.b16 %v1607
        %v1759 = vunpack.c.l.b16 %v1608
        %v1760 = vunpack.c.l.b16 %v1609
        %v1761 = vpack.c.b16 %v1690, %v1689
        %v1762 = vpack.c.b16 %v1692, %v1691
        %v1763 = vpack.c.b16 %v1694, %v1693
        %v1764 = vpack.c.b16 %v1696, %v1695
        %v1765 = vpack.c.b16 %v1698, %v1697
        %v1766 = vpack.c.b16 %v1700, %v1699
        %v1767 = vpack.c.b16 %v1702, %v1701
        %v1768 = vpack.c.b16 %v1704, %v1703
        %v1769 = vpack.c.b16 %v1706, %v1705
        %v1770 = vpack.c.b16 %v1708, %v1707
        %v1771 = vpack.c.b16 %v1710, %v1709
        %v1772 = vpack.c.b16 %v1712, %v1711
        %v1773 = vpack.c.b16 %v1714, %v1713
        %v1774 = vpack.c.b16 %v1716, %v1715
        %v1775 = vpack.c.b16 %v1718, %v1717
        %v1776 = vpack.c.b16 %v1720, %v1719
        %v1777 = vpack.c.b16 %v1722, %v1721
        %v1778 = vpack.c.b16 %v1724, %v1723
        %v1779 = vpack.c.b16 %v1726, %v1725
        %v1780 = vpack.c.b16 %v1728, %v1727
        %v1781 = vpack.c.b16 %v1730, %v1729
        %v1782 = vpack.c.b16 %v1732, %v1731
        %v1783 = vpack.c.b16 %v1734, %v1733
        %v1784 = vpack.c.b16 %v1736, %v1735
        %v1785 = vpack.c.b16 %v1738, %v1737
        %v1786 = vpack.c.b16 %v1740, %v1739
        %v1787 = vpack.c.b16 %v1742, %v1741
        %v1788 = vpack.c.b16 %v1744, %v1743
        %v1789 = vpack.c.b16 %v1746, %v1745
        %v1790 = vpack.c.b16 %v1748, %v1747
        %v1791 = vpack.c.b16 %v1750, %v1749
        %v1792 = vpack.c.b16 %v1752, %v1751
        %v1793 = vpack.c.b16 %v1754, %v1753
        %v1794 = vpack.c.b16 %v1756, %v1755
        %v1795 = vpack.c.b16 %v1758, %v1757
        %v1796 = vpack.c.b16 %v1760, %v1759
        %v1834 = vsel %vm386, %v1462, 0
        %v1837 = vsel %vm386, %v1467, 0
        %v1840 = vsel %vm386, %v1472, 0
        %v1843 = vsel %vm386, %v1477, 0
        %v1846 = vsel %vm386, %v1482, 0
        %v1849 = vsel %vm386, %v1487, 0
        %v1852 = vsel %vm386, %v1492, 0
        %v1855 = vsel %vm386, %v1497, 0
        %v1858 = vsel %vm386, %v1502, 0
        %v1861 = vsel %vm386, %v1507, 0
        %v1864 = vsel %vm386, %v1512, 0
        %v1867 = vsel %vm386, %v1517, 0
        %v1870 = vsel %vm386, %v1522, 0
        %v1873 = vsel %vm386, %v1527, 0
        %v1876 = vsel %vm386, %v1532, 0
        %v1879 = vsel %vm386, %v1537, 0
        %1881 = vmatprep.subr.bf16.mxu0 0
        %1882 = vmatpush1.bf16.msra.mxu0 %v1761
        %1883 = vmatprep.subr.bf16.mxu0 0
        %1884 = vmatpush1.bf16.msra.mxu0 %v1762
        %1885 = vmatprep.subr.bf16.mxu0 0
        %1886 = vmatpush1.bf16.msra.mxu0 %v1763
        %1887 = vmatprep.subr.bf16.mxu0 0
        %1888 = vmatpush1.bf16.msra.mxu0 %v1764
        %1889 = vmatprep.subr.bf16.mxu0 0
        %1890 = vmatpush1.bf16.msra.mxu0 %v1765
        %1891 = vmatprep.subr.bf16.mxu0 0
        %1892 = vmatpush1.bf16.msra.mxu0 %v1766
        %1893 = vmatprep.subr.bf16.mxu0 0
        %1894 = vmatpush1.bf16.msra.mxu0 %v1767
        %1895 = vmatprep.subr.bf16.mxu0 0
        %1896 = vmatpush1.bf16.msra.mxu0 %v1768
        %1897 = vmatprep.subr.bf16.mxu0 0
        %1898 = vmatpush1.bf16.msra.mxu0 %v1769
        %1899 = vmatprep.subr.bf16.mxu0 0
        %1900 = vmatpush1.bf16.msra.mxu0 %v1770
        %1901 = vmatprep.subr.bf16.mxu0 0
        %1902 = vmatpush1.bf16.msra.mxu0 %v1771
        %1903 = vmatprep.subr.bf16.mxu0 0
        %1904 = vmatpush1.bf16.msra.mxu0 %v1772
        %1905 = vmatprep.subr.bf16.mxu0 0
        %1906 = vmatpush1.bf16.msra.mxu0 %v1773
        %1907 = vmatprep.subr.bf16.mxu0 0
        %1908 = vmatpush1.bf16.msra.mxu0 %v1774
        %1909 = vmatprep.subr.bf16.mxu0 0
        %1910 = vmatpush1.bf16.msra.mxu0 %v1775
        %1911 = vmatprep.subr.bf16.mxu0 0
        %1912 = vmatpush1.bf16.msra.mxu0 %v1776
        %1913 = vmatprep.mubr.bf16.mxu0 %v1459
        %1914 = vmatmul.mubr.bf16.gmra.mrb[0].mxu0 %v1458
        %v1915 = vpop.f32.mrb[0].mxu0
        %v1916 = vadd.f32 %v1615, %v1915
        %v1917 = vpop.f32.mrb[0].mxu0
        %v1918 = vpop.f32.mrb[0].mxu0
        %v1919 = vadd.f32 %v1615, %v1918
        %v1920 = vpop.f32.mrb[0].mxu0
        %1921 = vmatprep.mubr.bf16.mxu0 %v1464
        %1922 = vmatmul.mubr.bf16.gmra.mrb[0].mxu0 %v1463
        %v1923 = vpop.f32.mrb[0].mxu0
        %v1924 = vadd.f32 %v1615, %v1923
        %v1925 = vpop.f32.mrb[0].mxu0
        %v1926 = vpop.f32.mrb[0].mxu0
        %v1927 = vadd.f32 %v1615, %v1926
        %v1928 = vpop.f32.mrb[0].mxu0
        %1929 = vmatprep.mubr.bf16.mxu0 %v1469
        %1930 = vmatmul.mubr.bf16.gmra.mrb[0].mxu0 %v1468
        %v1931 = vpop.f32.mrb[0].mxu0
        %v1932 = vadd.f32 %v1615, %v1931
        %v1933 = vpop.f32.mrb[0].mxu0
        %v1934 = vpop.f32.mrb[0].mxu0
        %v1935 = vadd.f32 %v1615, %v1934
        %v1936 = vpop.f32.mrb[0].mxu0
        %1937 = vmatprep.mubr.bf16.mxu0 %v1474
        %1938 = vmatmul.mubr.bf16.gmra.mrb[0].mxu0 %v1473
        %v1939 = vpop.f32.mrb[0].mxu0
        %v1940 = vadd.f32 %v1615, %v1939
        %v1941 = vpop.f32.mrb[0].mxu0
        %v1942 = vpop.f32.mrb[0].mxu0
        %v1943 = vadd.f32 %v1615, %v1942
        %v1944 = vpop.f32.mrb[0].mxu0
        %1945 = vmatprep.mubr.bf16.mxu0 %v1479
        %1946 = vmatmul.mubr.bf16.gmra.mrb[0].mxu0 %v1478
        %v1947 = vpop.f32.mrb[0].mxu0
        %v1948 = vadd.f32 %v1615, %v1947
        %v1949 = vpop.f32.mrb[0].mxu0
        %v1950 = vpop.f32.mrb[0].mxu0
        %v1951 = vadd.f32 %v1615, %v1950
        %v1952 = vpop.f32.mrb[0].mxu0
        %1953 = vmatprep.mubr.bf16.mxu0 %v1484
        %1954 = vmatmul.mubr.bf16.gmra.mrb[0].mxu0 %v1483
        %v1955 = vpop.f32.mrb[0].mxu0
        %v1956 = vadd.f32 %v1615, %v1955
        %v1957 = vpop.f32.mrb[0].mxu0
        %v1958 = vpop.f32.mrb[0].mxu0
        %v1959 = vadd.f32 %v1615, %v1958
        %v1960 = vpop.f32.mrb[0].mxu0
        %1961 = vmatprep.mubr.bf16.mxu0 %v1489
        %1962 = vmatmul.mubr.bf16.gmra.mrb[0].mxu0 %v1488
        %v1963 = vpop.f32.mrb[0].mxu0
        %v1964 = vadd.f32 %v1615, %v1963
        %v1965 = vpop.f32.mrb[0].mxu0
        %v1966 = vpop.f32.mrb[0].mxu0
        %v1967 = vadd.f32 %v1615, %v1966
        %v1968 = vpop.f32.mrb[0].mxu0
        %1969 = vmatprep.mubr.bf16.mxu0 %v1494
        %1970 = vmatmul.mubr.bf16.gmra.mrb[0].mxu0 %v1493
        %v1971 = vpop.f32.mrb[0].mxu0
        %v1972 = vadd.f32 %v1615, %v1971
        %v1973 = vpop.f32.mrb[0].mxu0
        %v1974 = vpop.f32.mrb[0].mxu0
        %v1975 = vadd.f32 %v1615, %v1974
        %v1976 = vpop.f32.mrb[0].mxu0
        %1977 = vmatprep.mubr.bf16.mxu0 %v1499
        %1978 = vmatmul.mubr.bf16.gmra.mrb[0].mxu0 %v1498
        %v1979 = vpop.f32.mrb[0].mxu0
        %v1980 = vadd.f32 %v1615, %v1979
        %v1981 = vpop.f32.mrb[0].mxu0
        %v1982 = vpop.f32.mrb[0].mxu0
        %v1983 = vadd.f32 %v1615, %v1982
        %v1984 = vpop.f32.mrb[0].mxu0
        %1985 = vmatprep.mubr.bf16.mxu0 %v1504
        %1986 = vmatmul.mubr.bf16.gmra.mrb[0].mxu0 %v1503
        %v1987 = vpop.f32.mrb[0].mxu0
        %v1988 = vadd.f32 %v1615, %v1987
        %v1989 = vpop.f32.mrb[0].mxu0
        %v1990 = vpop.f32.mrb[0].mxu0
        %v1991 = vadd.f32 %v1615, %v1990
        %v1992 = vpop.f32.mrb[0].mxu0
        %1993 = vmatprep.mubr.bf16.mxu0 %v1509
        %1994 = vmatmul.mubr.bf16.gmra.mrb[0].mxu0 %v1508
        %v1995 = vpop.f32.mrb[0].mxu0
        %v1996 = vadd.f32 %v1615, %v1995
        %v1997 = vpop.f32.mrb[0].mxu0
        %v1998 = vpop.f32.mrb[0].mxu0
        %v1999 = vadd.f32 %v1615, %v1998
        %v2000 = vpop.f32.mrb[0].mxu0
        %2001 = vmatprep.mubr.bf16.mxu0 %v1514
        %2002 = vmatmul.mubr.bf16.gmra.mrb[0].mxu0 %v1513
        %v2003 = vpop.f32.mrb[0].mxu0
        %v2004 = vadd.f32 %v1615, %v2003
        %v2005 = vpop.f32.mrb[0].mxu0
        %v2006 = vpop.f32.mrb[0].mxu0
        %v2007 = vadd.f32 %v1615, %v2006
        %v2008 = vpop.f32.mrb[0].mxu0
        %2009 = vmatprep.mubr.bf16.mxu0 %v1519
        %2010 = vmatmul.mubr.bf16.gmra.mrb[0].mxu0 %v1518
        %v2011 = vpop.f32.mrb[0].mxu0
        %v2012 = vadd.f32 %v1615, %v2011
        %v2013 = vpop.f32.mrb[0].mxu0
        %v2014 = vpop.f32.mrb[0].mxu0
        %v2015 = vadd.f32 %v1615, %v2014
        %v2016 = vpop.f32.mrb[0].mxu0
        %2017 = vmatprep.mubr.bf16.mxu0 %v1524
        %2018 = vmatmul.mubr.bf16.gmra.mrb[0].mxu0 %v1523
        %v2019 = vpop.f32.mrb[0].mxu0
        %v2020 = vadd.f32 %v1615, %v2019
        %v2021 = vpop.f32.mrb[0].mxu0
        %v2022 = vpop.f32.mrb[0].mxu0
        %v2023 = vadd.f32 %v1615, %v2022
        %v2024 = vpop.f32.mrb[0].mxu0
        %2025 = vmatprep.mubr.bf16.mxu0 %v1529
        %2026 = vmatmul.mubr.bf16.gmra.mrb[0].mxu0 %v1528
        %v2027 = vpop.f32.mrb[0].mxu0
        %v2028 = vadd.f32 %v1615, %v2027
        %v2029 = vpop.f32.mrb[0].mxu0
        %v2030 = vpop.f32.mrb[0].mxu0
        %v2031 = vadd.f32 %v1615, %v2030
        %v2032 = vpop.f32.mrb[0].mxu0
        %2033 = vmatprep.mubr.bf16.mxu0 %v1534
        %2034 = vmatmul.mubr.bf16.gmra.mrb[0].mxu0 %v1533
        %v2035 = vpop.f32.mrb[0].mxu0
        %v2036 = vadd.f32 %v1615, %v2035
        %v2037 = vpop.f32.mrb[0].mxu0
        %v2038 = vpop.f32.mrb[0].mxu0
        %v2039 = vadd.f32 %v1615, %v2038
        %v2040 = vpop.f32.mrb[0].mxu0
        %2041 = vdwg.mxu0
        %2042 = vmatprep.subr.bf16.mxu0 0
        %2043 = vmatpush1.bf16.msra.mxu0 %v1777
        %2044 = vmatprep.subr.bf16.mxu0 0
        %2045 = vmatpush1.bf16.msra.mxu0 %v1778
        %2046 = vmatprep.subr.bf16.mxu0 0
        %2047 = vmatpush1.bf16.msra.mxu0 %v1779
        %2048 = vmatprep.subr.bf16.mxu0 0
        %2049 = vmatpush1.bf16.msra.mxu0 %v1780
        %2050 = vmatprep.subr.bf16.mxu0 0
        %2051 = vmatpush1.bf16.msra.mxu0 %v1781
        %2052 = vmatprep.subr.bf16.mxu0 0
        %2053 = vmatpush1.bf16.msra.mxu0 %v1782
        %2054 = vmatprep.subr.bf16.mxu0 0
        %2055 = vmatpush1.bf16.msra.mxu0 %v1783
        %2056 = vmatprep.subr.bf16.mxu0 0
        %2057 = vmatpush1.bf16.msra.mxu0 %v1784
        %2058 = vmatprep.subr.bf16.mxu0 0
        %2059 = vmatpush1.bf16.msra.mxu0 %v1785
        %2060 = vmatprep.subr.bf16.mxu0 0
        %2061 = vmatpush1.bf16.msra.mxu0 %v1786
        %2062 = vmatprep.subr.bf16.mxu0 0
        %2063 = vmatpush1.bf16.msra.mxu0 %v1787
        %2064 = vmatprep.subr.bf16.mxu0 0
        %2065 = vmatpush1.bf16.msra.mxu0 %v1788
        %2066 = vmatprep.subr.bf16.mxu0 0
        %2067 = vmatpush1.bf16.msra.mxu0 %v1789
        %2068 = vmatprep.subr.bf16.mxu0 0
        %2069 = vmatpush1.bf16.msra.mxu0 %v1790
        %2070 = vmatprep.subr.bf16.mxu0 0
        %2071 = vmatpush1.bf16.msra.mxu0 %v1791
        %2072 = vmatprep.subr.bf16.mxu0 0
        %2073 = vmatpush1.bf16.msra.mxu0 %v1792
        %2074 = vmatprep.mubr.bf16.mxu0 %v1461
        %2075 = vmatmul.mubr.bf16.gmra.mrb[0].mxu0 %v1460
        %v2076 = vpop.f32.mrb[0].mxu0
        %v2077 = vadd.f32 %v1916, %v2076
        %v2078 = vpop.f32.mrb[0].mxu0
        %v2079 = vpop.f32.mrb[0].mxu0
        %v2080 = vadd.f32 %v1919, %v2079
        %v2081 = vpop.f32.mrb[0].mxu0
        %2082 = vmatprep.mubr.bf16.mxu0 %v1466
        %2083 = vmatmul.mubr.bf16.gmra.mrb[0].mxu0 %v1465
        %v2084 = vpop.f32.mrb[0].mxu0
        %v2085 = vadd.f32 %v1924, %v2084
        %v2086 = vpop.f32.mrb[0].mxu0
        %v2087 = vpop.f32.mrb[0].mxu0
        %v2088 = vadd.f32 %v1927, %v2087
        %v2089 = vpop.f32.mrb[0].mxu0
        %2090 = vmatprep.mubr.bf16.mxu0 %v1471
        %2091 = vmatmul.mubr.bf16.gmra.mrb[0].mxu0 %v1470
        %v2092 = vpop.f32.mrb[0].mxu0
        %v2093 = vadd.f32 %v1932, %v2092
        %v2094 = vpop.f32.mrb[0].mxu0
        %v2095 = vpop.f32.mrb[0].mxu0
        %v2096 = vadd.f32 %v1935, %v2095
        %v2097 = vpop.f32.mrb[0].mxu0
        %2098 = vmatprep.mubr.bf16.mxu0 %v1476
        %2099 = vmatmul.mubr.bf16.gmra.mrb[0].mxu0 %v1475
        %v2100 = vpop.f32.mrb[0].mxu0
        %v2101 = vadd.f32 %v1940, %v2100
        %v2102 = vpop.f32.mrb[0].mxu0
        %v2103 = vpop.f32.mrb[0].mxu0
        %v2104 = vadd.f32 %v1943, %v2103
        %v2105 = vpop.f32.mrb[0].mxu0
        %2106 = vmatprep.mubr.bf16.mxu0 %v1481
        %2107 = vmatmul.mubr.bf16.gmra.mrb[0].mxu0 %v1480
        %v2108 = vpop.f32.mrb[0].mxu0
        %v2109 = vadd.f32 %v1948, %v2108
        %v2110 = vpop.f32.mrb[0].mxu0
        %v2111 = vpop.f32.mrb[0].mxu0
        %v2112 = vadd.f32 %v1951, %v2111
        %v2113 = vpop.f32.mrb[0].mxu0
        %2114 = vmatprep.mubr.bf16.mxu0 %v1486
        %2115 = vmatmul.mubr.bf16.gmra.mrb[0].mxu0 %v1485
        %v2116 = vpop.f32.mrb[0].mxu0
        %v2117 = vadd.f32 %v1956, %v2116
        %v2118 = vpop.f32.mrb[0].mxu0
        %v2119 = vpop.f32.mrb[0].mxu0
        %v2120 = vadd.f32 %v1959, %v2119
        %v2121 = vpop.f32.mrb[0].mxu0
        %2122 = vmatprep.mubr.bf16.mxu0 %v1491
        %2123 = vmatmul.mubr.bf16.gmra.mrb[0].mxu0 %v1490
        %v2124 = vpop.f32.mrb[0].mxu0
        %v2125 = vadd.f32 %v1964, %v2124
        %v2126 = vpop.f32.mrb[0].mxu0
        %v2127 = vpop.f32.mrb[0].mxu0
        %v2128 = vadd.f32 %v1967, %v2127
        %v2129 = vpop.f32.mrb[0].mxu0
        %2130 = vmatprep.mubr.bf16.mxu0 %v1496
        %2131 = vmatmul.mubr.bf16.gmra.mrb[0].mxu0 %v1495
        %v2132 = vpop.f32.mrb[0].mxu0
        %v2133 = vadd.f32 %v1972, %v2132
        %v2134 = vpop.f32.mrb[0].mxu0
        %v2135 = vpop.f32.mrb[0].mxu0
        %v2136 = vadd.f32 %v1975, %v2135
        %v2137 = vpop.f32.mrb[0].mxu0
        %2138 = vmatprep.mubr.bf16.mxu0 %v1501
        %2139 = vmatmul.mubr.bf16.gmra.mrb[0].mxu0 %v1500
        %v2140 = vpop.f32.mrb[0].mxu0
        %v2141 = vadd.f32 %v1980, %v2140
        %v2142 = vpop.f32.mrb[0].mxu0
        %v2143 = vpop.f32.mrb[0].mxu0
        %v2144 = vadd.f32 %v1983, %v2143
        %v2145 = vpop.f32.mrb[0].mxu0
        %2146 = vmatprep.mubr.bf16.mxu0 %v1506
        %2147 = vmatmul.mubr.bf16.gmra.mrb[0].mxu0 %v1505
        %v2148 = vpop.f32.mrb[0].mxu0
        %v2149 = vadd.f32 %v1988, %v2148
        %v2150 = vpop.f32.mrb[0].mxu0
        %v2151 = vpop.f32.mrb[0].mxu0
        %v2152 = vadd.f32 %v1991, %v2151
        %v2153 = vpop.f32.mrb[0].mxu0
        %2154 = vmatprep.mubr.bf16.mxu0 %v1511
        %2155 = vmatmul.mubr.bf16.gmra.mrb[0].mxu0 %v1510
        %v2156 = vpop.f32.mrb[0].mxu0
        %v2157 = vadd.f32 %v1996, %v2156
        %v2158 = vpop.f32.mrb[0].mxu0
        %v2159 = vpop.f32.mrb[0].mxu0
        %v2160 = vadd.f32 %v1999, %v2159
        %v2161 = vpop.f32.mrb[0].mxu0
        %2162 = vmatprep.mubr.bf16.mxu0 %v1516
        %2163 = vmatmul.mubr.bf16.gmra.mrb[0].mxu0 %v1515
        %v2164 = vpop.f32.mrb[0].mxu0
        %v2165 = vadd.f32 %v2004, %v2164
        %v2166 = vpop.f32.mrb[0].mxu0
        %v2167 = vpop.f32.mrb[0].mxu0
        %v2168 = vadd.f32 %v2007, %v2167
        %v2169 = vpop.f32.mrb[0].mxu0
        %2170 = vmatprep.mubr.bf16.mxu0 %v1521
        %2171 = vmatmul.mubr.bf16.gmra.mrb[0].mxu0 %v1520
        %v2172 = vpop.f32.mrb[0].mxu0
        %v2173 = vadd.f32 %v2012, %v2172
        %v2174 = vpop.f32.mrb[0].mxu0
        %v2175 = vpop.f32.mrb[0].mxu0
        %v2176 = vadd.f32 %v2015, %v2175
        %v2177 = vpop.f32.mrb[0].mxu0
        %2178 = vmatprep.mubr.bf16.mxu0 %v1526
        %2179 = vmatmul.mubr.bf16.gmra.mrb[0].mxu0 %v1525
        %v2180 = vpop.f32.mrb[0].mxu0
        %v2181 = vadd.f32 %v2020, %v2180
        %v2182 = vpop.f32.mrb[0].mxu0
        %v2183 = vpop.f32.mrb[0].mxu0
        %v2184 = vadd.f32 %v2023, %v2183
        %v2185 = vpop.f32.mrb[0].mxu0
        %2186 = vmatprep.mubr.bf16.mxu0 %v1531
        %2187 = vmatmul.mubr.bf16.gmra.mrb[0].mxu0 %v1530
        %v2188 = vpop.f32.mrb[0].mxu0
        %v2189 = vadd.f32 %v2028, %v2188
        %v2190 = vpop.f32.mrb[0].mxu0
        %v2191 = vpop.f32.mrb[0].mxu0
        %v2192 = vadd.f32 %v2031, %v2191
        %v2193 = vpop.f32.mrb[0].mxu0
        %2194 = vmatprep.mubr.bf16.mxu0 %v1536
        %2195 = vmatmul.mubr.bf16.gmra.mrb[0].mxu0 %v1535
        %v2196 = vpop.f32.mrb[0].mxu0
        %v2197 = vadd.f32 %v2036, %v2196
        %v2198 = vpop.f32.mrb[0].mxu0
        %v2199 = vpop.f32.mrb[0].mxu0
        %v2200 = vadd.f32 %v2039, %v2199
        %v2201 = vpop.f32.mrb[0].mxu0
        %2202 = vdwg.mxu0
        %2203 = vmatprep.subr.bf16.mxu0 0
        %2204 = vmatpush1.bf16.msra.mxu0 %v1793
        %2205 = vmatprep.subr.bf16.mxu0 0
        %2206 = vmatpush1.bf16.msra.mxu0 %v1794
        %2207 = vmatprep.subr.bf16.mxu0 0
        %2208 = vmatpush1.bf16.msra.mxu0 %v1795
        %2209 = vmatprep.subr.bf16.mxu0 0
        %2210 = vmatpush1.bf16.msra.mxu0 %v1796
        %2211 = vmatprep.subr.bf16.mxu0 0
        %2212 = vmatpush1.bf16.msra.mxu0 0
        %2213 = vmatprep.subr.bf16.mxu0 0
        %2214 = vmatpush1.bf16.msra.mxu0 0
        %2215 = vmatprep.subr.bf16.mxu0 0
        %2216 = vmatpush1.bf16.msra.mxu0 0
        %2217 = vmatprep.subr.bf16.mxu0 0
        %2218 = vmatpush1.bf16.msra.mxu0 0
        %2219 = vmatprep.subr.bf16.mxu0 0
        %2220 = vmatpush1.bf16.msra.mxu0 0
        %2221 = vmatprep.subr.bf16.mxu0 0
        %2222 = vmatpush1.bf16.msra.mxu0 0
        %2223 = vmatprep.subr.bf16.mxu0 0
        %2224 = vmatpush1.bf16.msra.mxu0 0
        %2225 = vmatprep.subr.bf16.mxu0 0
        %2226 = vmatpush1.bf16.msra.mxu0 0
        %2227 = vmatprep.subr.bf16.mxu0 0
        %2228 = vmatpush1.bf16.msra.mxu0 0
        %2229 = vmatprep.subr.bf16.mxu0 0
        %2230 = vmatpush1.bf16.msra.mxu0 0
        %2231 = vmatprep.subr.bf16.mxu0 0
        %2232 = vmatpush1.bf16.msra.mxu0 0
        %2233 = vmatprep.subr.bf16.mxu0 0
        %2234 = vmatpush1.bf16.msra.mxu0 0
        %2235 = vmatprep.mubr.bf16.mxu0 0
        %2236 = vmatmul.mubr.bf16.gmra.mrb[0].mxu0 %v1834
        %v2237 = vpop.f32.mrb[0].mxu0
        %v2238 = vadd.f32 %v2077, %v2237
        %v2239 = vpop.f32.mrb[0].mxu0
        %v2240 = vpop.f32.mrb[0].mxu0
        %v2241 = vadd.f32 %v2080, %v2240
        %v2242 = vpop.f32.mrb[0].mxu0
        %2243 = vmatprep.mubr.bf16.mxu0 0
        %2244 = vmatmul.mubr.bf16.gmra.mrb[0].mxu0 %v1837
        %v2245 = vpop.f32.mrb[0].mxu0
        %v2246 = vadd.f32 %v2085, %v2245
        %v2247 = vpop.f32.mrb[0].mxu0
        %v2248 = vpop.f32.mrb[0].mxu0
        %v2249 = vadd.f32 %v2088, %v2248
        %v2250 = vpop.f32.mrb[0].mxu0
        %2251 = vmatprep.mubr.bf16.mxu0 0
        %2252 = vmatmul.mubr.bf16.gmra.mrb[0].mxu0 %v1840
        %v2253 = vpop.f32.mrb[0].mxu0
        %v2254 = vadd.f32 %v2093, %v2253
        %v2255 = vpop.f32.mrb[0].mxu0
        %v2256 = vpop.f32.mrb[0].mxu0
        %v2257 = vadd.f32 %v2096, %v2256
        %v2258 = vpop.f32.mrb[0].mxu0
        %2259 = vmatprep.mubr.bf16.mxu0 0
        %2260 = vmatmul.mubr.bf16.gmra.mrb[0].mxu0 %v1843
        %v2261 = vpop.f32.mrb[0].mxu0
        %v2262 = vadd.f32 %v2101, %v2261
        %v2263 = vpop.f32.mrb[0].mxu0
        %v2264 = vpop.f32.mrb[0].mxu0
        %v2265 = vadd.f32 %v2104, %v2264
        %v2266 = vpop.f32.mrb[0].mxu0
        %2267 = vmatprep.mubr.bf16.mxu0 0
        %2268 = vmatmul.mubr.bf16.gmra.mrb[0].mxu0 %v1846
        %v2269 = vpop.f32.mrb[0].mxu0
        %v2270 = vadd.f32 %v2109, %v2269
        %v2271 = vpop.f32.mrb[0].mxu0
        %v2272 = vpop.f32.mrb[0].mxu0
        %v2273 = vadd.f32 %v2112, %v2272
        %v2274 = vpop.f32.mrb[0].mxu0
        %2275 = vmatprep.mubr.bf16.mxu0 0
        %2276 = vmatmul.mubr.bf16.gmra.mrb[0].mxu0 %v1849
        %v2277 = vpop.f32.mrb[0].mxu0
        %v2278 = vadd.f32 %v2117, %v2277
        %v2279 = vpop.f32.mrb[0].mxu0
        %v2280 = vpop.f32.mrb[0].mxu0
        %v2281 = vadd.f32 %v2120, %v2280
        %v2282 = vpop.f32.mrb[0].mxu0
        %2283 = vmatprep.mubr.bf16.mxu0 0
        %2284 = vmatmul.mubr.bf16.gmra.mrb[0].mxu0 %v1852
        %v2285 = vpop.f32.mrb[0].mxu0
        %v2286 = vadd.f32 %v2125, %v2285
        %v2287 = vpop.f32.mrb[0].mxu0
        %v2288 = vpop.f32.mrb[0].mxu0
        %v2289 = vadd.f32 %v2128, %v2288
        %v2290 = vpop.f32.mrb[0].mxu0
        %2291 = vmatprep.mubr.bf16.mxu0 0
        %2292 = vmatmul.mubr.bf16.gmra.mrb[0].mxu0 %v1855
        %v2293 = vpop.f32.mrb[0].mxu0
        %v2294 = vadd.f32 %v2133, %v2293
        %v2295 = vpop.f32.mrb[0].mxu0
        %v2296 = vpop.f32.mrb[0].mxu0
        %v2297 = vadd.f32 %v2136, %v2296
        %v2298 = vpop.f32.mrb[0].mxu0
        %2299 = vmatprep.mubr.bf16.mxu0 0
        %2300 = vmatmul.mubr.bf16.gmra.mrb[0].mxu0 %v1858
        %v2301 = vpop.f32.mrb[0].mxu0
        %v2302 = vadd.f32 %v2141, %v2301
        %v2303 = vpop.f32.mrb[0].mxu0
        %v2304 = vpop.f32.mrb[0].mxu0
        %v2305 = vadd.f32 %v2144, %v2304
        %v2306 = vpop.f32.mrb[0].mxu0
        %2307 = vmatprep.mubr.bf16.mxu0 0
        %2308 = vmatmul.mubr.bf16.gmra.mrb[0].mxu0 %v1861
        %v2309 = vpop.f32.mrb[0].mxu0
        %v2310 = vadd.f32 %v2149, %v2309
        %v2311 = vpop.f32.mrb[0].mxu0
        %v2312 = vpop.f32.mrb[0].mxu0
        %v2313 = vadd.f32 %v2152, %v2312
        %v2314 = vpop.f32.mrb[0].mxu0
        %2315 = vmatprep.mubr.bf16.mxu0 0
        %2316 = vmatmul.mubr.bf16.gmra.mrb[0].mxu0 %v1864
        %v2317 = vpop.f32.mrb[0].mxu0
        %v2318 = vadd.f32 %v2157, %v2317
        %v2319 = vpop.f32.mrb[0].mxu0
        %v2320 = vpop.f32.mrb[0].mxu0
        %v2321 = vadd.f32 %v2160, %v2320
        %v2322 = vpop.f32.mrb[0].mxu0
        %2323 = vmatprep.mubr.bf16.mxu0 0
        %2324 = vmatmul.mubr.bf16.gmra.mrb[0].mxu0 %v1867
        %v2325 = vpop.f32.mrb[0].mxu0
        %v2326 = vadd.f32 %v2165, %v2325
        %v2327 = vpop.f32.mrb[0].mxu0
        %v2328 = vpop.f32.mrb[0].mxu0
        %v2329 = vadd.f32 %v2168, %v2328
        %v2330 = vpop.f32.mrb[0].mxu0
        %2331 = vmatprep.mubr.bf16.mxu0 0
        %2332 = vmatmul.mubr.bf16.gmra.mrb[0].mxu0 %v1870
        %v2333 = vpop.f32.mrb[0].mxu0
        %v2334 = vadd.f32 %v2173, %v2333
        %v2335 = vpop.f32.mrb[0].mxu0
        %v2336 = vpop.f32.mrb[0].mxu0
        %v2337 = vadd.f32 %v2176, %v2336
        %v2338 = vpop.f32.mrb[0].mxu0
        %2339 = vmatprep.mubr.bf16.mxu0 0
        %2340 = vmatmul.mubr.bf16.gmra.mrb[0].mxu0 %v1873
        %v2341 = vpop.f32.mrb[0].mxu0
        %v2342 = vadd.f32 %v2181, %v2341
        %v2343 = vpop.f32.mrb[0].mxu0
        %v2344 = vpop.f32.mrb[0].mxu0
        %v2345 = vadd.f32 %v2184, %v2344
        %v2346 = vpop.f32.mrb[0].mxu0
        %2347 = vmatprep.mubr.bf16.mxu0 0
        %2348 = vmatmul.mubr.bf16.gmra.mrb[0].mxu0 %v1876
        %v2349 = vpop.f32.mrb[0].mxu0
        %v2350 = vadd.f32 %v2189, %v2349
        %v2351 = vpop.f32.mrb[0].mxu0
        %v2352 = vpop.f32.mrb[0].mxu0
        %v2353 = vadd.f32 %v2192, %v2352
        %v2354 = vpop.f32.mrb[0].mxu0
        %2355 = vmatprep.mubr.bf16.mxu0 0
        %2356 = vmatmul.mubr.bf16.gmra.mrb[0].mxu0 %v1879
        %v2357 = vpop.f32.mrb[0].mxu0
        %v2358 = vadd.f32 %v2197, %v2357
        %v2359 = vpop.f32.mrb[0].mxu0
        %v2360 = vpop.f32.mrb[0].mxu0
        %v2361 = vadd.f32 %v2200, %v2360
        %v2362 = vpop.f32.mrb[0].mxu0
        %2363 = vdwg.mxu0
        %vm2364 = vcmask 261120
        %2365 = vst.msk [vmem:[#allocation3] sm:$0xff] %vm2364, 0.0
        %2366 = vst.msk [vmem:[#allocation3 + $0x8] sm:$0xff] %vm2364, 0.0
        %vm2367 = vcmask 257024
        %2368 = vst.msk [vmem:[#allocation3 + $0x10] sm:$0xf] %vm2367, 0.0
        %2369 = vst.msk [vmem:[#allocation3 + $0x18] sm:$0xff] %vm2364, 0.0
        %2370 = vst.msk [vmem:[#allocation3 + $0x20] sm:$0xff] %vm2364, 0.0
        %2371 = vst.msk [vmem:[#allocation3 + $0x28] sm:$0xf] %vm2367, 0.0
        %s2372 = scalar_lea.vmem [#allocation3], 432
        %2373 = vst.msk [vmem:[%s2372] sm:$0xff] %vm2364, 0.0
        %2374 = vst.msk [vmem:[%s2372 + $0x8] sm:$0xff] %vm2364, 0.0
        %2375 = vst.msk [vmem:[%s2372 + $0x10] sm:$0xf] %vm2367, 0.0
        %2376 = vst.msk [vmem:[%s2372 + $0x18] sm:$0xff] %vm2364, 0.0
        %2377 = vst.msk [vmem:[%s2372 + $0x20] sm:$0xff] %vm2364, 0.0
        %2378 = vst.msk [vmem:[%s2372 + $0x28] sm:$0xf] %vm2367, 0.0
        %vm2379 = vcmask 254976
        %2380 = vst.msk [vmem:[#allocation3] sm:$0x3] %vm2379, 0.0
        %2381 = vst.msk [vmem:[#allocation3 + $0x18] sm:$0x3] %vm2379, 0.0
        %2382 = vst.msk [vmem:[#allocation3 + $0x30] sm:$0x3] %vm2379, 0.0
        %2383 = vst.msk [vmem:[#allocation3 + $0x48] sm:$0x3] %vm2379, 0.0
        %2384 = vst.msk [vmem:[#allocation3 + $0x60] sm:$0x3] %vm2379, 0.0
        %2385 = vst.msk [vmem:[#allocation3 + $0x78] sm:$0x3] %vm2379, 0.0
        %2386 = vst.msk [vmem:[#allocation3 + $0x90] sm:$0x3] %vm2379, 0.0
        %2387 = vst.msk [vmem:[#allocation3 + $0xa8] sm:$0x3] %vm2379, 0.0
        %2388 = vst.msk [vmem:[#allocation3 + $0xc0] sm:$0x3] %vm2379, 0.0
        %2389 = vst.msk [vmem:[#allocation3 + $0xd8] sm:$0x3] %vm2379, 0.0
        %2390 = vst.msk [vmem:[#allocation3 + $0xf0] sm:$0x3] %vm2379, 0.0
        %2391 = vst.msk [vmem:[#allocation3 + $0x108] sm:$0x3] %vm2379, 0.0
        %2392 = vst.msk [vmem:[#allocation3 + $0x120] sm:$0x3] %vm2379, 0.0
        %2393 = vst.msk [vmem:[#allocation3 + $0x138] sm:$0x3] %vm2379, 0.0
        %2394 = vst.msk [vmem:[#allocation3 + $0x150] sm:$0x3] %vm2379, 0.0
        %2395 = vst.msk [vmem:[#allocation3 + $0x168] sm:$0x3] %vm2379, 0.0
        %2396 = vst.msk [vmem:[#allocation3 + $0x180] sm:$0x3] %vm2379, 0.0
        %2397 = vst.msk [vmem:[#allocation3 + $0x198] sm:$0x3] %vm2379, 0.0
        %2398 = vst.msk [vmem:[#allocation3 + $0x1b0] sm:$0x3] %vm2379, 0.0
        %2399 = vst.msk [vmem:[#allocation3 + $0x1c8] sm:$0x3] %vm2379, 0.0
        %2400 = vst.msk [vmem:[#allocation3 + $0x12] sm:$0x3] %vm2379, 0.0
        %2401 = vst.msk [vmem:[#allocation3 + $0x2a] sm:$0x3] %vm2379, 0.0
        %2402 = vst.msk [vmem:[#allocation3 + $0x42] sm:$0x3] %vm2379, 0.0
        %2403 = vst.msk [vmem:[#allocation3 + $0x5a] sm:$0x3] %vm2379, 0.0
        %2404 = vst.msk [vmem:[#allocation3 + $0x72] sm:$0x3] %vm2379, 0.0
        %2405 = vst.msk [vmem:[#allocation3 + $0x8a] sm:$0x3] %vm2379, 0.0
        %2406 = vst.msk [vmem:[#allocation3 + $0xa2] sm:$0x3] %vm2379, 0.0
        %2407 = vst.msk [vmem:[#allocation3 + $0xba] sm:$0x3] %vm2379, 0.0
        %2408 = vst.msk [vmem:[#allocation3 + $0xd2] sm:$0x3] %vm2379, 0.0
        %2409 = vst.msk [vmem:[#allocation3 + $0xea] sm:$0x3] %vm2379, 0.0
        %2410 = vst.msk [vmem:[#allocation3 + $0x102] sm:$0x3] %vm2379, 0.0
        %2411 = vst.msk [vmem:[#allocation3 + $0x11a] sm:$0x3] %vm2379, 0.0
        %2412 = vst.msk [vmem:[#allocation3 + $0x132] sm:$0x3] %vm2379, 0.0
        %2413 = vst.msk [vmem:[#allocation3 + $0x14a] sm:$0x3] %vm2379, 0.0
        %2414 = vst.msk [vmem:[#allocation3 + $0x162] sm:$0x3] %vm2379, 0.0
        %2415 = vst.msk [vmem:[#allocation3 + $0x17a] sm:$0x3] %vm2379, 0.0
        %2416 = vst.msk [vmem:[#allocation3 + $0x192] sm:$0x3] %vm2379, 0.0
        %2417 = vst.msk [vmem:[#allocation3 + $0x1aa] sm:$0x3] %vm2379, 0.0
        %2418 = vst.msk [vmem:[#allocation3 + $0x1c2] sm:$0x3] %vm2379, 0.0
        %2419 = vst.msk [vmem:[#allocation3 + $0x1da] sm:$0x3] %vm2379, 0.0
        %s2420 = scalar_lea.vmem [#allocation3], 48
        %2421 = vst.msk [vmem:[%s2420 + $0x2] sm:$0xff] %vm2364, %v2238
        %2422 = vst.msk [vmem:[%s2420 + $0xa] sm:$0xff] %vm2364, %v2241
        %2423 = vst.msk [vmem:[%s2420 + $0x1a] sm:$0xff] %vm2364, %v2246
        %2424 = vst.msk [vmem:[%s2420 + $0x22] sm:$0xff] %vm2364, %v2249
        %2425 = vst.msk [vmem:[%s2420 + $0x32] sm:$0xff] %vm2364, %v2254
        %2426 = vst.msk [vmem:[%s2420 + $0x3a] sm:$0xff] %vm2364, %v2257
        %2427 = vst.msk [vmem:[%s2420 + $0x4a] sm:$0xff] %vm2364, %v2262
        %2428 = vst.msk [vmem:[%s2420 + $0x52] sm:$0xff] %vm2364, %v2265
        %2429 = vst.msk [vmem:[%s2420 + $0x62] sm:$0xff] %vm2364, %v2270
        %2430 = vst.msk [vmem:[%s2420 + $0x6a] sm:$0xff] %vm2364, %v2273
        %2431 = vst.msk [vmem:[%s2420 + $0x7a] sm:$0xff] %vm2364, %v2278
        %2432 = vst.msk [vmem:[%s2420 + $0x82] sm:$0xff] %vm2364, %v2281
        %2433 = vst.msk [vmem:[%s2420 + $0x92] sm:$0xff] %vm2364, %v2286
        %2434 = vst.msk [vmem:[%s2420 + $0x9a] sm:$0xff] %vm2364, %v2289
        %2435 = vst.msk [vmem:[%s2420 + $0xaa] sm:$0xff] %vm2364, %v2294
        %2436 = vst.msk [vmem:[%s2420 + $0xb2] sm:$0xff] %vm2364, %v2297
        %2437 = vst.msk [vmem:[%s2420 + $0xc2] sm:$0xff] %vm2364, %v2302
        %2438 = vst.msk [vmem:[%s2420 + $0xca] sm:$0xff] %vm2364, %v2305
        %2439 = vst.msk [vmem:[%s2420 + $0xda] sm:$0xff] %vm2364, %v2310
        %2440 = vst.msk [vmem:[%s2420 + $0xe2] sm:$0xff] %vm2364, %v2313
        %2441 = vst.msk [vmem:[%s2420 + $0xf2] sm:$0xff] %vm2364, %v2318
        %2442 = vst.msk [vmem:[%s2420 + $0xfa] sm:$0xff] %vm2364, %v2321
        %2443 = vst.msk [vmem:[%s2420 + $0x10a] sm:$0xff] %vm2364, %v2326
        %2444 = vst.msk [vmem:[%s2420 + $0x112] sm:$0xff] %vm2364, %v2329
        %2445 = vst.msk [vmem:[%s2420 + $0x122] sm:$0xff] %vm2364, %v2334
        %2446 = vst.msk [vmem:[%s2420 + $0x12a] sm:$0xff] %vm2364, %v2337
        %2447 = vst.msk [vmem:[%s2420 + $0x13a] sm:$0xff] %vm2364, %v2342
        %2448 = vst.msk [vmem:[%s2420 + $0x142] sm:$0xff] %vm2364, %v2345
        %2449 = vst.msk [vmem:[%s2420 + $0x152] sm:$0xff] %vm2364, %v2350
        %2450 = vst.msk [vmem:[%s2420 + $0x15a] sm:$0xff] %vm2364, %v2353
        %2451 = vst.msk [vmem:[%s2420 + $0x16a] sm:$0xff] %vm2364, %v2358
        %2452 = vst.msk [vmem:[%s2420 + $0x172] sm:$0xff] %vm2364, %v2361
        %v2453 = vld [vmem:[#allocation3] sm:$0xff]
        %v2454 = vld [vmem:[#allocation3 + $0x8] sm:$0xff]
        %v2455 = vld [vmem:[#allocation3 + $0x18] sm:$0xff]
        %v2456 = vld [vmem:[#allocation3 + $0x20] sm:$0xff]
        %v2457 = vld [vmem:[#allocation3 + $0x30] sm:$0xff]
        %v2458 = vld [vmem:[#allocation3 + $0x38] sm:$0xff]
        %v2459 = vld [vmem:[#allocation3 + $0x48] sm:$0xff]
        %v2460 = vld [vmem:[#allocation3 + $0x50] sm:$0xff]
        %v2461 = vld [vmem:[#allocation3 + $0x60] sm:$0xff]
        %v2462 = vld [vmem:[#allocation3 + $0x68] sm:$0xff]
        %v2463 = vld [vmem:[#allocation3 + $0x78] sm:$0xff]
        %v2464 = vld [vmem:[#allocation3 + $0x80] sm:$0xff]
        %v2465 = vld [vmem:[#allocation3 + $0x90] sm:$0xff]
        %v2466 = vld [vmem:[#allocation3 + $0x98] sm:$0xff]
        %v2467 = vld [vmem:[#allocation3 + $0xa8] sm:$0xff]
        %v2468 = vld [vmem:[#allocation3 + $0xb0] sm:$0xff]
        %v2469 = vld [vmem:[#allocation3 + $0xc0] sm:$0xff]
        %v2470 = vld [vmem:[#allocation3 + $0xc8] sm:$0xff]
        %v2471 = vld [vmem:[#allocation3 + $0xd8] sm:$0xff]
        %v2472 = vld [vmem:[#allocation3 + $0xe0] sm:$0xff]
        %v2473 = vld [vmem:[#allocation3 + $0xf0] sm:$0xff]
        %v2474 = vld [vmem:[#allocation3 + $0xf8] sm:$0xff]
        %v2475 = vld [vmem:[#allocation3 + $0x108] sm:$0xff]
        %v2476 = vld [vmem:[#allocation3 + $0x110] sm:$0xff]
        %v2477 = vld [vmem:[#allocation3 + $0x120] sm:$0xff]
        %v2478 = vld [vmem:[#allocation3 + $0x128] sm:$0xff]
        %v2479 = vld [vmem:[#allocation3 + $0x138] sm:$0xff]
        %v2480 = vld [vmem:[#allocation3 + $0x140] sm:$0xff]
        %v2481 = vld [vmem:[#allocation3 + $0x150] sm:$0xff]
        %v2482 = vld [vmem:[#allocation3 + $0x158] sm:$0xff]
        %v2483 = vld [vmem:[#allocation3 + $0x168] sm:$0xff]
        %v2484 = vld [vmem:[#allocation3 + $0x170] sm:$0xff]
        %v2485 = vld [vmem:[#allocation3 + $0x2] sm:$0xff]
        %v2486 = vld [vmem:[#allocation3 + $0xa] sm:$0xff]
        %v2487 = vld [vmem:[#allocation3 + $0x1a] sm:$0xff]
        %v2488 = vld [vmem:[#allocation3 + $0x22] sm:$0xff]
        %v2489 = vld [vmem:[#allocation3 + $0x32] sm:$0xff]
        %v2490 = vld [vmem:[#allocation3 + $0x3a] sm:$0xff]
        %v2491 = vld [vmem:[#allocation3 + $0x4a] sm:$0xff]
        %v2492 = vld [vmem:[#allocation3 + $0x52] sm:$0xff]
        %v2493 = vld [vmem:[#allocation3 + $0x62] sm:$0xff]
        %v2494 = vld [vmem:[#allocation3 + $0x6a] sm:$0xff]
        %v2495 = vld [vmem:[#allocation3 + $0x7a] sm:$0xff]
        %v2496 = vld [vmem:[#allocation3 + $0x82] sm:$0xff]
        %v2497 = vld [vmem:[#allocation3 + $0x92] sm:$0xff]
        %v2498 = vld [vmem:[#allocation3 + $0x9a] sm:$0xff]
        %v2499 = vld [vmem:[#allocation3 + $0xaa] sm:$0xff]
        %v2500 = vld [vmem:[#allocation3 + $0xb2] sm:$0xff]
        %v2501 = vld [vmem:[#allocation3 + $0xc2] sm:$0xff]
        %v2502 = vld [vmem:[#allocation3 + $0xca] sm:$0xff]
        %v2503 = vld [vmem:[#allocation3 + $0xda] sm:$0xff]
        %v2504 = vld [vmem:[#allocation3 + $0xe2] sm:$0xff]
        %v2505 = vld [vmem:[#allocation3 + $0xf2] sm:$0xff]
        %v2506 = vld [vmem:[#allocation3 + $0xfa] sm:$0xff]
        %v2507 = vld [vmem:[#allocation3 + $0x10a] sm:$0xff]
        %v2508 = vld [vmem:[#allocation3 + $0x112] sm:$0xff]
        %v2509 = vld [vmem:[#allocation3 + $0x122] sm:$0xff]
        %v2510 = vld [vmem:[#allocation3 + $0x12a] sm:$0xff]
        %v2511 = vld [vmem:[#allocation3 + $0x13a] sm:$0xff]
        %v2512 = vld [vmem:[#allocation3 + $0x142] sm:$0xff]
        %v2513 = vld [vmem:[#allocation3 + $0x152] sm:$0xff]
        %v2514 = vld [vmem:[#allocation3 + $0x15a] sm:$0xff]
        %v2515 = vld [vmem:[#allocation3 + $0x16a] sm:$0xff]
        %v2516 = vld [vmem:[#allocation3 + $0x172] sm:$0xff]
        %v2517 = vld [vmem:[#allocation3 + $0x4] sm:$0xff]
        %v2518 = vld [vmem:[#allocation3 + $0xc] sm:$0xff]
        %v2519 = vld [vmem:[#allocation3 + $0x1c] sm:$0xff]
        %v2520 = vld [vmem:[#allocation3 + $0x24] sm:$0xff]
        %v2521 = vld [vmem:[#allocation3 + $0x34] sm:$0xff]
        %v2522 = vld [vmem:[#allocation3 + $0x3c] sm:$0xff]
        %v2523 = vld [vmem:[#allocation3 + $0x4c] sm:$0xff]
        %v2524 = vld [vmem:[#allocation3 + $0x54] sm:$0xff]
        %v2525 = vld [vmem:[#allocation3 + $0x64] sm:$0xff]
        %v2526 = vld [vmem:[#allocation3 + $0x6c] sm:$0xff]
        %v2527 = vld [vmem:[#allocation3 + $0x7c] sm:$0xff]
        %v2528 = vld [vmem:[#allocation3 + $0x84] sm:$0xff]
        %v2529 = vld [vmem:[#allocation3 + $0x94] sm:$0xff]
        %v2530 = vld [vmem:[#allocation3 + $0x9c] sm:$0xff]
        %v2531 = vld [vmem:[#allocation3 + $0xac] sm:$0xff]
        %v2532 = vld [vmem:[#allocation3 + $0xb4] sm:$0xff]
        %v2533 = vld [vmem:[#allocation3 + $0xc4] sm:$0xff]
        %v2534 = vld [vmem:[#allocation3 + $0xcc] sm:$0xff]
        %v2535 = vld [vmem:[#allocation3 + $0xdc] sm:$0xff]
        %v2536 = vld [vmem:[#allocation3 + $0xe4] sm:$0xff]
        %v2537 = vld [vmem:[#allocation3 + $0xf4] sm:$0xff]
        %v2538 = vld [vmem:[#allocation3 + $0xfc] sm:$0xff]
        %v2539 = vld [vmem:[#allocation3 + $0x10c] sm:$0xff]
        %v2540 = vld [vmem:[#allocation3 + $0x114] sm:$0xff]
        %v2541 = vld [vmem:[#allocation3 + $0x124] sm:$0xff]
        %v2542 = vld [vmem:[#allocation3 + $0x12c] sm:$0xff]
        %v2543 = vld [vmem:[#allocation3 + $0x13c] sm:$0xff]
        %v2544 = vld [vmem:[#allocation3 + $0x144] sm:$0xff]
        %v2545 = vld [vmem:[#allocation3 + $0x154] sm:$0xff]
        %v2546 = vld [vmem:[#allocation3 + $0x15c] sm:$0xff]
        %v2547 = vld [vmem:[#allocation3 + $0x16c] sm:$0xff]
        %v2548 = vld [vmem:[#allocation3 + $0x174] sm:$0xff]
        %v2549 = vld [vmem:[%s2420] sm:$0xff]
        %v2550 = vld [vmem:[%s2420 + $0x8] sm:$0xff]
        %v2551 = vld [vmem:[%s2420 + $0x18] sm:$0xff]
        %v2552 = vld [vmem:[%s2420 + $0x20] sm:$0xff]
        %v2553 = vld [vmem:[%s2420 + $0x30] sm:$0xff]
        %v2554 = vld [vmem:[%s2420 + $0x38] sm:$0xff]
        %v2555 = vld [vmem:[%s2420 + $0x48] sm:$0xff]
        %v2556 = vld [vmem:[%s2420 + $0x50] sm:$0xff]
        %v2557 = vld [vmem:[%s2420 + $0x60] sm:$0xff]
        %v2558 = vld [vmem:[%s2420 + $0x68] sm:$0xff]
        %v2559 = vld [vmem:[%s2420 + $0x78] sm:$0xff]
        %v2560 = vld [vmem:[%s2420 + $0x80] sm:$0xff]
        %v2561 = vld [vmem:[%s2420 + $0x90] sm:$0xff]
        %v2562 = vld [vmem:[%s2420 + $0x98] sm:$0xff]
        %v2563 = vld [vmem:[%s2420 + $0xa8] sm:$0xff]
        %v2564 = vld [vmem:[%s2420 + $0xb0] sm:$0xff]
        %v2565 = vld [vmem:[%s2420 + $0xc0] sm:$0xff]
        %v2566 = vld [vmem:[%s2420 + $0xc8] sm:$0xff]
        %v2567 = vld [vmem:[%s2420 + $0xd8] sm:$0xff]
        %v2568 = vld [vmem:[%s2420 + $0xe0] sm:$0xff]
        %v2569 = vld [vmem:[%s2420 + $0xf0] sm:$0xff]
        %v2570 = vld [vmem:[%s2420 + $0xf8] sm:$0xff]
        %v2571 = vld [vmem:[%s2420 + $0x108] sm:$0xff]
        %v2572 = vld [vmem:[%s2420 + $0x110] sm:$0xff]
        %v2573 = vld [vmem:[%s2420 + $0x120] sm:$0xff]
        %v2574 = vld [vmem:[%s2420 + $0x128] sm:$0xff]
        %v2575 = vld [vmem:[%s2420 + $0x138] sm:$0xff]
        %v2576 = vld [vmem:[%s2420 + $0x140] sm:$0xff]
        %v2577 = vld [vmem:[%s2420 + $0x150] sm:$0xff]
        %v2578 = vld [vmem:[%s2420 + $0x158] sm:$0xff]
        %v2579 = vld [vmem:[%s2420 + $0x168] sm:$0xff]
        %v2580 = vld [vmem:[%s2420 + $0x170] sm:$0xff]
        %v2581 = vld [vmem:[%s2420 + $0x2] sm:$0xff]
        %v2582 = vld [vmem:[%s2420 + $0xa] sm:$0xff]
        %v2583 = vld [vmem:[%s2420 + $0x1a] sm:$0xff]
        %v2584 = vld [vmem:[%s2420 + $0x22] sm:$0xff]
        %v2585 = vld [vmem:[%s2420 + $0x32] sm:$0xff]
        %v2586 = vld [vmem:[%s2420 + $0x3a] sm:$0xff]
        %v2587 = vld [vmem:[%s2420 + $0x4a] sm:$0xff]
        %v2588 = vld [vmem:[%s2420 + $0x52] sm:$0xff]
        %v2589 = vld [vmem:[%s2420 + $0x62] sm:$0xff]
        %v2590 = vld [vmem:[%s2420 + $0x6a] sm:$0xff]
        %v2591 = vld [vmem:[%s2420 + $0x7a] sm:$0xff]
        %v2592 = vld [vmem:[%s2420 + $0x82] sm:$0xff]
        %v2593 = vld [vmem:[%s2420 + $0x92] sm:$0xff]
        %v2594 = vld [vmem:[%s2420 + $0x9a] sm:$0xff]
        %v2595 = vld [vmem:[%s2420 + $0xaa] sm:$0xff]
        %v2596 = vld [vmem:[%s2420 + $0xb2] sm:$0xff]
        %v2597 = vld [vmem:[%s2420 + $0xc2] sm:$0xff]
        %v2598 = vld [vmem:[%s2420 + $0xca] sm:$0xff]
        %v2599 = vld [vmem:[%s2420 + $0xda] sm:$0xff]
        %v2600 = vld [vmem:[%s2420 + $0xe2] sm:$0xff]
        %v2601 = vld [vmem:[%s2420 + $0xf2] sm:$0xff]
        %v2602 = vld [vmem:[%s2420 + $0xfa] sm:$0xff]
        %v2603 = vld [vmem:[%s2420 + $0x10a] sm:$0xff]
        %v2604 = vld [vmem:[%s2420 + $0x112] sm:$0xff]
        %v2605 = vld [vmem:[%s2420 + $0x122] sm:$0xff]
        %v2606 = vld [vmem:[%s2420 + $0x12a] sm:$0xff]
        %v2607 = vld [vmem:[%s2420 + $0x13a] sm:$0xff]
        %v2608 = vld [vmem:[%s2420 + $0x142] sm:$0xff]
        %v2609 = vld [vmem:[%s2420 + $0x152] sm:$0xff]
        %v2610 = vld [vmem:[%s2420 + $0x15a] sm:$0xff]
        %v2611 = vld [vmem:[%s2420 + $0x16a] sm:$0xff]
        %v2612 = vld [vmem:[%s2420 + $0x172] sm:$0xff]
        %v2613 = vld [vmem:[%s2420 + $0x4] sm:$0xff]
        %v2614 = vld [vmem:[%s2420 + $0xc] sm:$0xff]
        %v2615 = vld [vmem:[%s2420 + $0x1c] sm:$0xff]
        %v2616 = vld [vmem:[%s2420 + $0x24] sm:$0xff]
        %v2617 = vld [vmem:[%s2420 + $0x34] sm:$0xff]
        %v2618 = vld [vmem:[%s2420 + $0x3c] sm:$0xff]
        %v2619 = vld [vmem:[%s2420 + $0x4c] sm:$0xff]
        %v2620 = vld [vmem:[%s2420 + $0x54] sm:$0xff]
        %v2621 = vld [vmem:[%s2420 + $0x64] sm:$0xff]
        %v2622 = vld [vmem:[%s2420 + $0x6c] sm:$0xff]
        %v2623 = vld [vmem:[%s2420 + $0x7c] sm:$0xff]
        %v2624 = vld [vmem:[%s2420 + $0x84] sm:$0xff]
        %v2625 = vld [vmem:[%s2420 + $0x94] sm:$0xff]
        %v2626 = vld [vmem:[%s2420 + $0x9c] sm:$0xff]
        %v2627 = vld [vmem:[%s2420 + $0xac] sm:$0xff]
        %v2628 = vld [vmem:[%s2420 + $0xb4] sm:$0xff]
        %v2629 = vld [vmem:[%s2420 + $0xc4] sm:$0xff]
        %v2630 = vld [vmem:[%s2420 + $0xcc] sm:$0xff]
        %v2631 = vld [vmem:[%s2420 + $0xdc] sm:$0xff]
        %v2632 = vld [vmem:[%s2420 + $0xe4] sm:$0xff]
        %v2633 = vld [vmem:[%s2420 + $0xf4] sm:$0xff]
        %v2634 = vld [vmem:[%s2420 + $0xfc] sm:$0xff]
        %v2635 = vld [vmem:[%s2420 + $0x10c] sm:$0xff]
        %v2636 = vld [vmem:[%s2420 + $0x114] sm:$0xff]
        %v2637 = vld [vmem:[%s2420 + $0x124] sm:$0xff]
        %v2638 = vld [vmem:[%s2420 + $0x12c] sm:$0xff]
        %v2639 = vld [vmem:[%s2420 + $0x13c] sm:$0xff]
        %v2640 = vld [vmem:[%s2420 + $0x144] sm:$0xff]
        %v2641 = vld [vmem:[%s2420 + $0x154] sm:$0xff]
        %v2642 = vld [vmem:[%s2420 + $0x15c] sm:$0xff]
        %v2643 = vld [vmem:[%s2420 + $0x16c] sm:$0xff]
        %v2644 = vld [vmem:[%s2420 + $0x174] sm:$0xff]
        %s2645 = scalar_lea.vmem [#allocation3], 96
        %v2646 = vld [vmem:[%s2645] sm:$0xff]
        %v2647 = vld [vmem:[%s2645 + $0x8] sm:$0xff]
        %v2648 = vld [vmem:[%s2645 + $0x18] sm:$0xff]
        %v2649 = vld [vmem:[%s2645 + $0x20] sm:$0xff]
        %v2650 = vld [vmem:[%s2645 + $0x30] sm:$0xff]
        %v2651 = vld [vmem:[%s2645 + $0x38] sm:$0xff]
        %v2652 = vld [vmem:[%s2645 + $0x48] sm:$0xff]
        %v2653 = vld [vmem:[%s2645 + $0x50] sm:$0xff]
        %v2654 = vld [vmem:[%s2645 + $0x60] sm:$0xff]
        %v2655 = vld [vmem:[%s2645 + $0x68] sm:$0xff]
        %v2656 = vld [vmem:[%s2645 + $0x78] sm:$0xff]
        %v2657 = vld [vmem:[%s2645 + $0x80] sm:$0xff]
        %v2658 = vld [vmem:[%s2645 + $0x90] sm:$0xff]
        %v2659 = vld [vmem:[%s2645 + $0x98] sm:$0xff]
        %v2660 = vld [vmem:[%s2645 + $0xa8] sm:$0xff]
        %v2661 = vld [vmem:[%s2645 + $0xb0] sm:$0xff]
        %v2662 = vld [vmem:[%s2645 + $0xc0] sm:$0xff]
        %v2663 = vld [vmem:[%s2645 + $0xc8] sm:$0xff]
        %v2664 = vld [vmem:[%s2645 + $0xd8] sm:$0xff]
        %v2665 = vld [vmem:[%s2645 + $0xe0] sm:$0xff]
        %v2666 = vld [vmem:[%s2645 + $0xf0] sm:$0xff]
        %v2667 = vld [vmem:[%s2645 + $0xf8] sm:$0xff]
        %v2668 = vld [vmem:[%s2645 + $0x108] sm:$0xff]
        %v2669 = vld [vmem:[%s2645 + $0x110] sm:$0xff]
        %v2670 = vld [vmem:[%s2645 + $0x120] sm:$0xff]
        %v2671 = vld [vmem:[%s2645 + $0x128] sm:$0xff]
        %v2672 = vld [vmem:[%s2645 + $0x138] sm:$0xff]
        %v2673 = vld [vmem:[%s2645 + $0x140] sm:$0xff]
        %v2674 = vld [vmem:[%s2645 + $0x150] sm:$0xff]
        %v2675 = vld [vmem:[%s2645 + $0x158] sm:$0xff]
        %v2676 = vld [vmem:[%s2645 + $0x168] sm:$0xff]
        %v2677 = vld [vmem:[%s2645 + $0x170] sm:$0xff]
        %v2678 = vld [vmem:[%s2645 + $0x2] sm:$0xff]
        %v2679 = vld [vmem:[%s2645 + $0xa] sm:$0xff]
        %v2680 = vld [vmem:[%s2645 + $0x1a] sm:$0xff]
        %v2681 = vld [vmem:[%s2645 + $0x22] sm:$0xff]
        %v2682 = vld [vmem:[%s2645 + $0x32] sm:$0xff]
        %v2683 = vld [vmem:[%s2645 + $0x3a] sm:$0xff]
        %v2684 = vld [vmem:[%s2645 + $0x4a] sm:$0xff]
        %v2685 = vld [vmem:[%s2645 + $0x52] sm:$0xff]
        %v2686 = vld [vmem:[%s2645 + $0x62] sm:$0xff]
        %v2687 = vld [vmem:[%s2645 + $0x6a] sm:$0xff]
        %v2688 = vld [vmem:[%s2645 + $0x7a] sm:$0xff]
        %v2689 = vld [vmem:[%s2645 + $0x82] sm:$0xff]
        %v2690 = vld [vmem:[%s2645 + $0x92] sm:$0xff]
        %v2691 = vld [vmem:[%s2645 + $0x9a] sm:$0xff]
        %v2692 = vld [vmem:[%s2645 + $0xaa] sm:$0xff]
        %v2693 = vld [vmem:[%s2645 + $0xb2] sm:$0xff]
        %v2694 = vld [vmem:[%s2645 + $0xc2] sm:$0xff]
        %v2695 = vld [vmem:[%s2645 + $0xca] sm:$0xff]
        %v2696 = vld [vmem:[%s2645 + $0xda] sm:$0xff]
        %v2697 = vld [vmem:[%s2645 + $0xe2] sm:$0xff]
        %v2698 = vld [vmem:[%s2645 + $0xf2] sm:$0xff]
        %v2699 = vld [vmem:[%s2645 + $0xfa] sm:$0xff]
        %v2700 = vld [vmem:[%s2645 + $0x10a] sm:$0xff]
        %v2701 = vld [vmem:[%s2645 + $0x112] sm:$0xff]
        %v2702 = vld [vmem:[%s2645 + $0x122] sm:$0xff]
        %v2703 = vld [vmem:[%s2645 + $0x12a] sm:$0xff]
        %v2704 = vld [vmem:[%s2645 + $0x13a] sm:$0xff]
        %v2705 = vld [vmem:[%s2645 + $0x142] sm:$0xff]
        %v2706 = vld [vmem:[%s2645 + $0x152] sm:$0xff]
        %v2707 = vld [vmem:[%s2645 + $0x15a] sm:$0xff]
        %v2708 = vld [vmem:[%s2645 + $0x16a] sm:$0xff]
        %v2709 = vld [vmem:[%s2645 + $0x172] sm:$0xff]
        %v2710 = vld [vmem:[%s2645 + $0x4] sm:$0xff]
        %v2711 = vld [vmem:[%s2645 + $0xc] sm:$0xff]
        %v2712 = vld [vmem:[%s2645 + $0x1c] sm:$0xff]
        %v2713 = vld [vmem:[%s2645 + $0x24] sm:$0xff]
        %v2714 = vld [vmem:[%s2645 + $0x34] sm:$0xff]
        %v2715 = vld [vmem:[%s2645 + $0x3c] sm:$0xff]
        %v2716 = vld [vmem:[%s2645 + $0x4c] sm:$0xff]
        %v2717 = vld [vmem:[%s2645 + $0x54] sm:$0xff]
        %v2718 = vld [vmem:[%s2645 + $0x64] sm:$0xff]
        %v2719 = vld [vmem:[%s2645 + $0x6c] sm:$0xff]
        %v2720 = vld [vmem:[%s2645 + $0x7c] sm:$0xff]
        %v2721 = vld [vmem:[%s2645 + $0x84] sm:$0xff]
        %v2722 = vld [vmem:[%s2645 + $0x94] sm:$0xff]
        %v2723 = vld [vmem:[%s2645 + $0x9c] sm:$0xff]
        %v2724 = vld [vmem:[%s2645 + $0xac] sm:$0xff]
        %v2725 = vld [vmem:[%s2645 + $0xb4] sm:$0xff]
        %v2726 = vld [vmem:[%s2645 + $0xc4] sm:$0xff]
        %v2727 = vld [vmem:[%s2645 + $0xcc] sm:$0xff]
        %v2728 = vld [vmem:[%s2645 + $0xdc] sm:$0xff]
        %v2729 = vld [vmem:[%s2645 + $0xe4] sm:$0xff]
        %v2730 = vld [vmem:[%s2645 + $0xf4] sm:$0xff]
        %v2731 = vld [vmem:[%s2645 + $0xfc] sm:$0xff]
        %v2732 = vld [vmem:[%s2645 + $0x10c] sm:$0xff]
        %v2733 = vld [vmem:[%s2645 + $0x114] sm:$0xff]
        %v2734 = vld [vmem:[%s2645 + $0x124] sm:$0xff]
        %v2735 = vld [vmem:[%s2645 + $0x12c] sm:$0xff]
        %v2736 = vld [vmem:[%s2645 + $0x13c] sm:$0xff]
        %v2737 = vld [vmem:[%s2645 + $0x144] sm:$0xff]
        %v2738 = vld [vmem:[%s2645 + $0x154] sm:$0xff]
        %v2739 = vld [vmem:[%s2645 + $0x15c] sm:$0xff]
        %v2740 = vld [vmem:[%s2645 + $0x16c] sm:$0xff]
        %v2741 = vld [vmem:[%s2645 + $0x174] sm:$0xff]
        %2774 = vrot.lane.b32.xlu0 %v2485, 32
        %v2775 = vpop.permute.xlu0 %2774
        %2776 = vrot.lane.b32.xlu0 %v2486, 32
        %v2777 = vpop.permute.xlu0 %2776
        %2778 = vrot.lane.b32.xlu0 %v2487, 32
        %v2779 = vpop.permute.xlu0 %2778
        %2780 = vrot.lane.b32.xlu0 %v2488, 32
        %v2781 = vpop.permute.xlu0 %2780
        %2782 = vrot.lane.b32.xlu0 %v2489, 32
        %v2783 = vpop.permute.xlu0 %2782
        %2784 = vrot.lane.b32.xlu0 %v2490, 32
        %v2785 = vpop.permute.xlu0 %2784
        %2786 = vrot.lane.b32.xlu0 %v2491, 32
        %v2787 = vpop.permute.xlu0 %2786
        %2788 = vrot.lane.b32.xlu0 %v2492, 32
        %v2789 = vpop.permute.xlu0 %2788
        %2790 = vrot.lane.b32.xlu0 %v2493, 32
        %v2791 = vpop.permute.xlu0 %2790
        %2792 = vrot.lane.b32.xlu0 %v2494, 32
        %v2793 = vpop.permute.xlu0 %2792
        %2794 = vrot.lane.b32.xlu0 %v2495, 32
        %v2795 = vpop.permute.xlu0 %2794
        %2796 = vrot.lane.b32.xlu0 %v2496, 32
        %v2797 = vpop.permute.xlu0 %2796
        %2798 = vrot.lane.b32.xlu0 %v2497, 32
        %v2799 = vpop.permute.xlu0 %2798
        %2800 = vrot.lane.b32.xlu0 %v2498, 32
        %v2801 = vpop.permute.xlu0 %2800
        %2802 = vrot.lane.b32.xlu0 %v2499, 32
        %v2803 = vpop.permute.xlu0 %2802
        %2804 = vrot.lane.b32.xlu0 %v2500, 32
        %v2805 = vpop.permute.xlu0 %2804
        %2806 = vrot.lane.b32.xlu0 %v2501, 32
        %v2807 = vpop.permute.xlu0 %2806
        %2808 = vrot.lane.b32.xlu0 %v2502, 32
        %v2809 = vpop.permute.xlu0 %2808
        %2810 = vrot.lane.b32.xlu0 %v2503, 32
        %v2811 = vpop.permute.xlu0 %2810
        %2812 = vrot.lane.b32.xlu0 %v2504, 32
        %v2813 = vpop.permute.xlu0 %2812
        %2814 = vrot.lane.b32.xlu0 %v2505, 32
        %v2815 = vpop.permute.xlu0 %2814
        %2816 = vrot.lane.b32.xlu0 %v2506, 32
        %v2817 = vpop.permute.xlu0 %2816
        %2818 = vrot.lane.b32.xlu0 %v2507, 32
        %v2819 = vpop.permute.xlu0 %2818
        %2820 = vrot.lane.b32.xlu0 %v2508, 32
        %v2821 = vpop.permute.xlu0 %2820
        %2822 = vrot.lane.b32.xlu0 %v2509, 32
        %v2823 = vpop.permute.xlu0 %2822
        %2824 = vrot.lane.b32.xlu0 %v2510, 32
        %v2825 = vpop.permute.xlu0 %2824
        %2826 = vrot.lane.b32.xlu0 %v2511, 32
        %v2827 = vpop.permute.xlu0 %2826
        %2828 = vrot.lane.b32.xlu0 %v2512, 32
        %v2829 = vpop.permute.xlu0 %2828
        %2830 = vrot.lane.b32.xlu0 %v2513, 32
        %v2831 = vpop.permute.xlu0 %2830
        %2832 = vrot.lane.b32.xlu0 %v2514, 32
        %v2833 = vpop.permute.xlu0 %2832
        %2834 = vrot.lane.b32.xlu0 %v2515, 32
        %v2835 = vpop.permute.xlu0 %2834
        %2836 = vrot.lane.b32.xlu0 %v2516, 32
        %v2837 = vpop.permute.xlu0 %2836
        %2902 = vrot.lane.b32.xlu0 %v2517, 64
        %v2903 = vpop.permute.xlu0 %2902
        %2904 = vrot.lane.b32.xlu0 %v2518, 64
        %v2905 = vpop.permute.xlu0 %2904
        %2906 = vrot.lane.b32.xlu0 %v2519, 64
        %v2907 = vpop.permute.xlu0 %2906
        %2908 = vrot.lane.b32.xlu0 %v2520, 64
        %v2909 = vpop.permute.xlu0 %2908
        %2910 = vrot.lane.b32.xlu0 %v2521, 64
        %v2911 = vpop.permute.xlu0 %2910
        %2912 = vrot.lane.b32.xlu0 %v2522, 64
        %v2913 = vpop.permute.xlu0 %2912
        %2914 = vrot.lane.b32.xlu0 %v2523, 64
        %v2915 = vpop.permute.xlu0 %2914
        %2916 = vrot.lane.b32.xlu0 %v2524, 64
        %v2917 = vpop.permute.xlu0 %2916
        %2918 = vrot.lane.b32.xlu0 %v2525, 64
        %v2919 = vpop.permute.xlu0 %2918
        %2920 = vrot.lane.b32.xlu0 %v2526, 64
        %v2921 = vpop.permute.xlu0 %2920
        %2922 = vrot.lane.b32.xlu0 %v2527, 64
        %v2923 = vpop.permute.xlu0 %2922
        %2924 = vrot.lane.b32.xlu0 %v2528, 64
        %v2925 = vpop.permute.xlu0 %2924
        %2926 = vrot.lane.b32.xlu0 %v2529, 64
        %v2927 = vpop.permute.xlu0 %2926
        %2928 = vrot.lane.b32.xlu0 %v2530, 64
        %v2929 = vpop.permute.xlu0 %2928
        %2930 = vrot.lane.b32.xlu0 %v2531, 64
        %v2931 = vpop.permute.xlu0 %2930
        %2932 = vrot.lane.b32.xlu0 %v2532, 64
        %v2933 = vpop.permute.xlu0 %2932
        %2934 = vrot.lane.b32.xlu0 %v2533, 64
        %v2935 = vpop.permute.xlu0 %2934
        %2936 = vrot.lane.b32.xlu0 %v2534, 64
        %v2937 = vpop.permute.xlu0 %2936
        %2938 = vrot.lane.b32.xlu0 %v2535, 64
        %v2939 = vpop.permute.xlu0 %2938
        %2940 = vrot.lane.b32.xlu0 %v2536, 64
        %v2941 = vpop.permute.xlu0 %2940
        %2942 = vrot.lane.b32.xlu0 %v2537, 64
        %v2943 = vpop.permute.xlu0 %2942
        %2944 = vrot.lane.b32.xlu0 %v2538, 64
        %v2945 = vpop.permute.xlu0 %2944
        %2946 = vrot.lane.b32.xlu0 %v2539, 64
        %v2947 = vpop.permute.xlu0 %2946
        %2948 = vrot.lane.b32.xlu0 %v2540, 64
        %v2949 = vpop.permute.xlu0 %2948
        %2950 = vrot.lane.b32.xlu0 %v2541, 64
        %v2951 = vpop.permute.xlu0 %2950
        %2952 = vrot.lane.b32.xlu0 %v2542, 64
        %v2953 = vpop.permute.xlu0 %2952
        %2954 = vrot.lane.b32.xlu0 %v2543, 64
        %v2955 = vpop.permute.xlu0 %2954
        %2956 = vrot.lane.b32.xlu0 %v2544, 64
        %v2957 = vpop.permute.xlu0 %2956
        %2958 = vrot.lane.b32.xlu0 %v2545, 64
        %v2959 = vpop.permute.xlu0 %2958
        %2960 = vrot.lane.b32.xlu0 %v2546, 64
        %v2961 = vpop.permute.xlu0 %2960
        %2962 = vrot.lane.b32.xlu0 %v2547, 64
        %v2963 = vpop.permute.xlu0 %2962
        %2964 = vrot.lane.b32.xlu0 %v2548, 64
        %v2965 = vpop.permute.xlu0 %2964
        %3030 = vrot.lane.b32.xlu0 %v2549, 96
        %v3031 = vpop.permute.xlu0 %3030
        %3032 = vrot.lane.b32.xlu0 %v2550, 96
        %v3033 = vpop.permute.xlu0 %3032
        %3034 = vrot.lane.b32.xlu0 %v2551, 96
        %v3035 = vpop.permute.xlu0 %3034
        %3036 = vrot.lane.b32.xlu0 %v2552, 96
        %v3037 = vpop.permute.xlu0 %3036
        %3038 = vrot.lane.b32.xlu0 %v2553, 96
        %v3039 = vpop.permute.xlu0 %3038
        %3040 = vrot.lane.b32.xlu0 %v2554, 96
        %v3041 = vpop.permute.xlu0 %3040
        %3042 = vrot.lane.b32.xlu0 %v2555, 96
        %v3043 = vpop.permute.xlu0 %3042
        %3044 = vrot.lane.b32.xlu0 %v2556, 96
        %v3045 = vpop.permute.xlu0 %3044
        %3046 = vrot.lane.b32.xlu0 %v2557, 96
        %v3047 = vpop.permute.xlu0 %3046
        %3048 = vrot.lane.b32.xlu0 %v2558, 96
        %v3049 = vpop.permute.xlu0 %3048
        %3050 = vrot.lane.b32.xlu0 %v2559, 96
        %v3051 = vpop.permute.xlu0 %3050
        %3052 = vrot.lane.b32.xlu0 %v2560, 96
        %v3053 = vpop.permute.xlu0 %3052
        %3054 = vrot.lane.b32.xlu0 %v2561, 96
        %v3055 = vpop.permute.xlu0 %3054
        %3056 = vrot.lane.b32.xlu0 %v2562, 96
        %v3057 = vpop.permute.xlu0 %3056
        %3058 = vrot.lane.b32.xlu0 %v2563, 96
        %v3059 = vpop.permute.xlu0 %3058
        %3060 = vrot.lane.b32.xlu0 %v2564, 96
        %v3061 = vpop.permute.xlu0 %3060
        %3062 = vrot.lane.b32.xlu0 %v2565, 96
        %v3063 = vpop.permute.xlu0 %3062
        %3064 = vrot.lane.b32.xlu0 %v2566, 96
        %v3065 = vpop.permute.xlu0 %3064
        %3066 = vrot.lane.b32.xlu0 %v2567, 96
        %v3067 = vpop.permute.xlu0 %3066
        %3068 = vrot.lane.b32.xlu0 %v2568, 96
        %v3069 = vpop.permute.xlu0 %3068
        %3070 = vrot.lane.b32.xlu0 %v2569, 96
        %v3071 = vpop.permute.xlu0 %3070
        %3072 = vrot.lane.b32.xlu0 %v2570, 96
        %v3073 = vpop.permute.xlu0 %3072
        %3074 = vrot.lane.b32.xlu0 %v2571, 96
        %v3075 = vpop.permute.xlu0 %3074
        %3076 = vrot.lane.b32.xlu0 %v2572, 96
        %v3077 = vpop.permute.xlu0 %3076
        %3078 = vrot.lane.b32.xlu0 %v2573, 96
        %v3079 = vpop.permute.xlu0 %3078
        %3080 = vrot.lane.b32.xlu0 %v2574, 96
        %v3081 = vpop.permute.xlu0 %3080
        %3082 = vrot.lane.b32.xlu0 %v2575, 96
        %v3083 = vpop.permute.xlu0 %3082
        %3084 = vrot.lane.b32.xlu0 %v2576, 96
        %v3085 = vpop.permute.xlu0 %3084
        %3086 = vrot.lane.b32.xlu0 %v2577, 96
        %v3087 = vpop.permute.xlu0 %3086
        %3088 = vrot.lane.b32.xlu0 %v2578, 96
        %v3089 = vpop.permute.xlu0 %3088
        %3090 = vrot.lane.b32.xlu0 %v2579, 96
        %v3091 = vpop.permute.xlu0 %3090
        %3092 = vrot.lane.b32.xlu0 %v2580, 96
        %v3093 = vpop.permute.xlu0 %3092
        %3158 = vrot.lane.b32.xlu0 %v2613, 32
        %v3159 = vpop.permute.xlu0 %3158
        %3160 = vrot.lane.b32.xlu0 %v2614, 32
        %v3161 = vpop.permute.xlu0 %3160
        %3162 = vrot.lane.b32.xlu0 %v2615, 32
        %v3163 = vpop.permute.xlu0 %3162
        %3164 = vrot.lane.b32.xlu0 %v2616, 32
        %v3165 = vpop.permute.xlu0 %3164
        %3166 = vrot.lane.b32.xlu0 %v2617, 32
        %v3167 = vpop.permute.xlu0 %3166
        %3168 = vrot.lane.b32.xlu0 %v2618, 32
        %v3169 = vpop.permute.xlu0 %3168
        %3170 = vrot.lane.b32.xlu0 %v2619, 32
        %v3171 = vpop.permute.xlu0 %3170
        %3172 = vrot.lane.b32.xlu0 %v2620, 32
        %v3173 = vpop.permute.xlu0 %3172
        %3174 = vrot.lane.b32.xlu0 %v2621, 32
        %v3175 = vpop.permute.xlu0 %3174
        %3176 = vrot.lane.b32.xlu0 %v2622, 32
        %v3177 = vpop.permute.xlu0 %3176
        %3178 = vrot.lane.b32.xlu0 %v2623, 32
        %v3179 = vpop.permute.xlu0 %3178
        %3180 = vrot.lane.b32.xlu0 %v2624, 32
        %v3181 = vpop.permute.xlu0 %3180
        %3182 = vrot.lane.b32.xlu0 %v2625, 32
        %v3183 = vpop.permute.xlu0 %3182
        %3184 = vrot.lane.b32.xlu0 %v2626, 32
        %v3185 = vpop.permute.xlu0 %3184
        %3186 = vrot.lane.b32.xlu0 %v2627, 32
        %v3187 = vpop.permute.xlu0 %3186
        %3188 = vrot.lane.b32.xlu0 %v2628, 32
        %v3189 = vpop.permute.xlu0 %3188
        %3190 = vrot.lane.b32.xlu0 %v2629, 32
        %v3191 = vpop.permute.xlu0 %3190
        %3192 = vrot.lane.b32.xlu0 %v2630, 32
        %v3193 = vpop.permute.xlu0 %3192
        %3194 = vrot.lane.b32.xlu0 %v2631, 32
        %v3195 = vpop.permute.xlu0 %3194
        %3196 = vrot.lane.b32.xlu0 %v2632, 32
        %v3197 = vpop.permute.xlu0 %3196
        %3198 = vrot.lane.b32.xlu0 %v2633, 32
        %v3199 = vpop.permute.xlu0 %3198
        %3200 = vrot.lane.b32.xlu0 %v2634, 32
        %v3201 = vpop.permute.xlu0 %3200
        %3202 = vrot.lane.b32.xlu0 %v2635, 32
        %v3203 = vpop.permute.xlu0 %3202
        %3204 = vrot.lane.b32.xlu0 %v2636, 32
        %v3205 = vpop.permute.xlu0 %3204
        %3206 = vrot.lane.b32.xlu0 %v2637, 32
        %v3207 = vpop.permute.xlu0 %3206
        %3208 = vrot.lane.b32.xlu0 %v2638, 32
        %v3209 = vpop.permute.xlu0 %3208
        %3210 = vrot.lane.b32.xlu0 %v2639, 32
        %v3211 = vpop.permute.xlu0 %3210
        %3212 = vrot.lane.b32.xlu0 %v2640, 32
        %v3213 = vpop.permute.xlu0 %3212
        %3214 = vrot.lane.b32.xlu0 %v2641, 32
        %v3215 = vpop.permute.xlu0 %3214
        %3216 = vrot.lane.b32.xlu0 %v2642, 32
        %v3217 = vpop.permute.xlu0 %3216
        %3218 = vrot.lane.b32.xlu0 %v2643, 32
        %v3219 = vpop.permute.xlu0 %3218
        %3220 = vrot.lane.b32.xlu0 %v2644, 32
        %v3221 = vpop.permute.xlu0 %3220
        %3286 = vrot.lane.b32.xlu0 %v2646, 64
        %v3287 = vpop.permute.xlu0 %3286
        %3288 = vrot.lane.b32.xlu0 %v2647, 64
        %v3289 = vpop.permute.xlu0 %3288
        %3290 = vrot.lane.b32.xlu0 %v2648, 64
        %v3291 = vpop.permute.xlu0 %3290
        %3292 = vrot.lane.b32.xlu0 %v2649, 64
        %v3293 = vpop.permute.xlu0 %3292
        %3294 = vrot.lane.b32.xlu0 %v2650, 64
        %v3295 = vpop.permute.xlu0 %3294
        %3296 = vrot.lane.b32.xlu0 %v2651, 64
        %v3297 = vpop.permute.xlu0 %3296
        %3298 = vrot.lane.b32.xlu0 %v2652, 64
        %v3299 = vpop.permute.xlu0 %3298
        %3300 = vrot.lane.b32.xlu0 %v2653, 64
        %v3301 = vpop.permute.xlu0 %3300
        %3302 = vrot.lane.b32.xlu0 %v2654, 64
        %v3303 = vpop.permute.xlu0 %3302
        %3304 = vrot.lane.b32.xlu0 %v2655, 64
        %v3305 = vpop.permute.xlu0 %3304
        %3306 = vrot.lane.b32.xlu0 %v2656, 64
        %v3307 = vpop.permute.xlu0 %3306
        %3308 = vrot.lane.b32.xlu0 %v2657, 64
        %v3309 = vpop.permute.xlu0 %3308
        %3310 = vrot.lane.b32.xlu0 %v2658, 64
        %v3311 = vpop.permute.xlu0 %3310
        %3312 = vrot.lane.b32.xlu0 %v2659, 64
        %v3313 = vpop.permute.xlu0 %3312
        %3314 = vrot.lane.b32.xlu0 %v2660, 64
        %v3315 = vpop.permute.xlu0 %3314
        %3316 = vrot.lane.b32.xlu0 %v2661, 64
        %v3317 = vpop.permute.xlu0 %3316
        %3318 = vrot.lane.b32.xlu0 %v2662, 64
        %v3319 = vpop.permute.xlu0 %3318
        %3320 = vrot.lane.b32.xlu0 %v2663, 64
        %v3321 = vpop.permute.xlu0 %3320
        %3322 = vrot.lane.b32.xlu0 %v2664, 64
        %v3323 = vpop.permute.xlu0 %3322
        %3324 = vrot.lane.b32.xlu0 %v2665, 64
        %v3325 = vpop.permute.xlu0 %3324
        %3326 = vrot.lane.b32.xlu0 %v2666, 64
        %v3327 = vpop.permute.xlu0 %3326
        %3328 = vrot.lane.b32.xlu0 %v2667, 64
        %v3329 = vpop.permute.xlu0 %3328
        %3330 = vrot.lane.b32.xlu0 %v2668, 64
        %v3331 = vpop.permute.xlu0 %3330
        %3332 = vrot.lane.b32.xlu0 %v2669, 64
        %v3333 = vpop.permute.xlu0 %3332
        %3334 = vrot.lane.b32.xlu0 %v2670, 64
        %v3335 = vpop.permute.xlu0 %3334
        %3336 = vrot.lane.b32.xlu0 %v2671, 64
        %v3337 = vpop.permute.xlu0 %3336
        %3338 = vrot.lane.b32.xlu0 %v2672, 64
        %v3339 = vpop.permute.xlu0 %3338
        %3340 = vrot.lane.b32.xlu0 %v2673, 64
        %v3341 = vpop.permute.xlu0 %3340
        %3342 = vrot.lane.b32.xlu0 %v2674, 64
        %v3343 = vpop.permute.xlu0 %3342
        %3344 = vrot.lane.b32.xlu0 %v2675, 64
        %v3345 = vpop.permute.xlu0 %3344
        %3346 = vrot.lane.b32.xlu0 %v2676, 64
        %v3347 = vpop.permute.xlu0 %3346
        %3348 = vrot.lane.b32.xlu0 %v2677, 64
        %v3349 = vpop.permute.xlu0 %3348
        %3414 = vrot.lane.b32.xlu0 %v2678, 96
        %v3415 = vpop.permute.xlu0 %3414
        %3416 = vrot.lane.b32.xlu0 %v2679, 96
        %v3417 = vpop.permute.xlu0 %3416
        %3418 = vrot.lane.b32.xlu0 %v2680, 96
        %v3419 = vpop.permute.xlu0 %3418
        %3420 = vrot.lane.b32.xlu0 %v2681, 96
        %v3421 = vpop.permute.xlu0 %3420
        %3422 = vrot.lane.b32.xlu0 %v2682, 96
        %v3423 = vpop.permute.xlu0 %3422
        %3424 = vrot.lane.b32.xlu0 %v2683, 96
        %v3425 = vpop.permute.xlu0 %3424
        %3426 = vrot.lane.b32.xlu0 %v2684, 96
        %v3427 = vpop.permute.xlu0 %3426
        %3428 = vrot.lane.b32.xlu0 %v2685, 96
        %v3429 = vpop.permute.xlu0 %3428
        %3430 = vrot.lane.b32.xlu0 %v2686, 96
        %v3431 = vpop.permute.xlu0 %3430
        %3432 = vrot.lane.b32.xlu0 %v2687, 96
        %v3433 = vpop.permute.xlu0 %3432
        %3434 = vrot.lane.b32.xlu0 %v2688, 96
        %v3435 = vpop.permute.xlu0 %3434
        %3436 = vrot.lane.b32.xlu0 %v2689, 96
        %v3437 = vpop.permute.xlu0 %3436
        %3438 = vrot.lane.b32.xlu0 %v2690, 96
        %v3439 = vpop.permute.xlu0 %3438
        %3440 = vrot.lane.b32.xlu0 %v2691, 96
        %v3441 = vpop.permute.xlu0 %3440
        %3442 = vrot.lane.b32.xlu0 %v2692, 96
        %v3443 = vpop.permute.xlu0 %3442
        %3444 = vrot.lane.b32.xlu0 %v2693, 96
        %v3445 = vpop.permute.xlu0 %3444
        %3446 = vrot.lane.b32.xlu0 %v2694, 96
        %v3447 = vpop.permute.xlu0 %3446
        %3448 = vrot.lane.b32.xlu0 %v2695, 96
        %v3449 = vpop.permute.xlu0 %3448
        %3450 = vrot.lane.b32.xlu0 %v2696, 96
        %v3451 = vpop.permute.xlu0 %3450
        %3452 = vrot.lane.b32.xlu0 %v2697, 96
        %v3453 = vpop.permute.xlu0 %3452
        %3454 = vrot.lane.b32.xlu0 %v2698, 96
        %v3455 = vpop.permute.xlu0 %3454
        %3456 = vrot.lane.b32.xlu0 %v2699, 96
        %v3457 = vpop.permute.xlu0 %3456
        %3458 = vrot.lane.b32.xlu0 %v2700, 96
        %v3459 = vpop.permute.xlu0 %3458
        %3460 = vrot.lane.b32.xlu0 %v2701, 96
        %v3461 = vpop.permute.xlu0 %3460
        %3462 = vrot.lane.b32.xlu0 %v2702, 96
        %v3463 = vpop.permute.xlu0 %3462
        %3464 = vrot.lane.b32.xlu0 %v2703, 96
        %v3465 = vpop.permute.xlu0 %3464
        %3466 = vrot.lane.b32.xlu0 %v2704, 96
        %v3467 = vpop.permute.xlu0 %3466
        %3468 = vrot.lane.b32.xlu0 %v2705, 96
        %v3469 = vpop.permute.xlu0 %3468
        %3470 = vrot.lane.b32.xlu0 %v2706, 96
        %v3471 = vpop.permute.xlu0 %3470
        %3472 = vrot.lane.b32.xlu0 %v2707, 96
        %v3473 = vpop.permute.xlu0 %3472
        %3474 = vrot.lane.b32.xlu0 %v2708, 96
        %v3475 = vpop.permute.xlu0 %3474
        %3476 = vrot.lane.b32.xlu0 %v2709, 96
        %v3477 = vpop.permute.xlu0 %3476
        %v3510 = vsel %vm2364, %v2453, %v2775
        %v3511 = vsel %vm2364, %v2454, %v2777
        %v3512 = vsel %vm2364, %v2455, %v2779
        %v3513 = vsel %vm2364, %v2456, %v2781
        %v3514 = vsel %vm2364, %v2457, %v2783
        %v3515 = vsel %vm2364, %v2458, %v2785
        %v3516 = vsel %vm2364, %v2459, %v2787
        %v3517 = vsel %vm2364, %v2460, %v2789
        %v3518 = vsel %vm2364, %v2461, %v2791
        %v3519 = vsel %vm2364, %v2462, %v2793
        %v3520 = vsel %vm2364, %v2463, %v2795
        %v3521 = vsel %vm2364, %v2464, %v2797
        %v3522 = vsel %vm2364, %v2465, %v2799
        %v3523 = vsel %vm2364, %v2466, %v2801
        %v3524 = vsel %vm2364, %v2467, %v2803
        %v3525 = vsel %vm2364, %v2468, %v2805
        %v3526 = vsel %vm2364, %v2469, %v2807
        %v3527 = vsel %vm2364, %v2470, %v2809
        %v3528 = vsel %vm2364, %v2471, %v2811
        %v3529 = vsel %vm2364, %v2472, %v2813
        %v3530 = vsel %vm2364, %v2473, %v2815
        %v3531 = vsel %vm2364, %v2474, %v2817
        %v3532 = vsel %vm2364, %v2475, %v2819
        %v3533 = vsel %vm2364, %v2476, %v2821
        %v3534 = vsel %vm2364, %v2477, %v2823
        %v3535 = vsel %vm2364, %v2478, %v2825
        %v3536 = vsel %vm2364, %v2479, %v2827
        %v3537 = vsel %vm2364, %v2480, %v2829
        %v3538 = vsel %vm2364, %v2481, %v2831
        %v3539 = vsel %vm2364, %v2482, %v2833
        %v3540 = vsel %vm2364, %v2483, %v2835
        %v3541 = vsel %vm2364, %v2484, %v2837
        %v3542 = vsel %vm386, %v3510, %v2903
        %v3543 = vsel %vm386, %v3511, %v2905
        %v3544 = vsel %vm386, %v3512, %v2907
        %v3545 = vsel %vm386, %v3513, %v2909
        %v3546 = vsel %vm386, %v3514, %v2911
        %v3547 = vsel %vm386, %v3515, %v2913
        %v3548 = vsel %vm386, %v3516, %v2915
        %v3549 = vsel %vm386, %v3517, %v2917
        %v3550 = vsel %vm386, %v3518, %v2919
        %v3551 = vsel %vm386, %v3519, %v2921
        %v3552 = vsel %vm386, %v3520, %v2923
        %v3553 = vsel %vm386, %v3521, %v2925
        %v3554 = vsel %vm386, %v3522, %v2927
        %v3555 = vsel %vm386, %v3523, %v2929
        %v3556 = vsel %vm386, %v3524, %v2931
        %v3557 = vsel %vm386, %v3525, %v2933
        %v3558 = vsel %vm386, %v3526, %v2935
        %v3559 = vsel %vm386, %v3527, %v2937
        %v3560 = vsel %vm386, %v3528, %v2939
        %v3561 = vsel %vm386, %v3529, %v2941
        %v3562 = vsel %vm386, %v3530, %v2943
        %v3563 = vsel %vm386, %v3531, %v2945
        %v3564 = vsel %vm386, %v3532, %v2947
        %v3565 = vsel %vm386, %v3533, %v2949
        %v3566 = vsel %vm386, %v3534, %v2951
        %v3567 = vsel %vm386, %v3535, %v2953
        %v3568 = vsel %vm386, %v3536, %v2955
        %v3569 = vsel %vm386, %v3537, %v2957
        %v3570 = vsel %vm386, %v3538, %v2959
        %v3571 = vsel %vm386, %v3539, %v2961
        %v3572 = vsel %vm386, %v3540, %v2963
        %v3573 = vsel %vm386, %v3541, %v2965
        %vm3574 = vcmask 785408
        %v3575 = vsel %vm3574, %v3542, %v3031
        %v3576 = vsel %vm3574, %v3543, %v3033
        %v3577 = vsel %vm3574, %v3544, %v3035
        %v3578 = vsel %vm3574, %v3545, %v3037
        %v3579 = vsel %vm3574, %v3546, %v3039
        %v3580 = vsel %vm3574, %v3547, %v3041
        %v3581 = vsel %vm3574, %v3548, %v3043
        %v3582 = vsel %vm3574, %v3549, %v3045
        %v3583 = vsel %vm3574, %v3550, %v3047
        %v3584 = vsel %vm3574, %v3551, %v3049
        %v3585 = vsel %vm3574, %v3552, %v3051
        %v3586 = vsel %vm3574, %v3553, %v3053
        %v3587 = vsel %vm3574, %v3554, %v3055
        %v3588 = vsel %vm3574, %v3555, %v3057
        %v3589 = vsel %vm3574, %v3556, %v3059
        %v3590 = vsel %vm3574, %v3557, %v3061
        %v3591 = vsel %vm3574, %v3558, %v3063
        %v3592 = vsel %vm3574, %v3559, %v3065
        %v3593 = vsel %vm3574, %v3560, %v3067
        %v3594 = vsel %vm3574, %v3561, %v3069
        %v3595 = vsel %vm3574, %v3562, %v3071
        %v3596 = vsel %vm3574, %v3563, %v3073
        %v3597 = vsel %vm3574, %v3564, %v3075
        %v3598 = vsel %vm3574, %v3565, %v3077
        %v3599 = vsel %vm3574, %v3566, %v3079
        %v3600 = vsel %vm3574, %v3567, %v3081
        %v3601 = vsel %vm3574, %v3568, %v3083
        %v3602 = vsel %vm3574, %v3569, %v3085
        %v3603 = vsel %vm3574, %v3570, %v3087
        %v3604 = vsel %vm3574, %v3571, %v3089
        %v3605 = vsel %vm3574, %v3572, %v3091
        %v3606 = vsel %vm3574, %v3573, %v3093
        %v3607 = vsel %vm2364, %v2581, %v3159
        %v3608 = vsel %vm2364, %v2582, %v3161
        %v3609 = vsel %vm2364, %v2583, %v3163
        %v3610 = vsel %vm2364, %v2584, %v3165
        %v3611 = vsel %vm2364, %v2585, %v3167
        %v3612 = vsel %vm2364, %v2586, %v3169
        %v3613 = vsel %vm2364, %v2587, %v3171
        %v3614 = vsel %vm2364, %v2588, %v3173
        %v3615 = vsel %vm2364, %v2589, %v3175
        %v3616 = vsel %vm2364, %v2590, %v3177
        %v3617 = vsel %vm2364, %v2591, %v3179
        %v3618 = vsel %vm2364, %v2592, %v3181
        %v3619 = vsel %vm2364, %v2593, %v3183
        %v3620 = vsel %vm2364, %v2594, %v3185
        %v3621 = vsel %vm2364, %v2595, %v3187
        %v3622 = vsel %vm2364, %v2596, %v3189
        %v3623 = vsel %vm2364, %v2597, %v3191
        %v3624 = vsel %vm2364, %v2598, %v3193
        %v3625 = vsel %vm2364, %v2599, %v3195
        %v3626 = vsel %vm2364, %v2600, %v3197
        %v3627 = vsel %vm2364, %v2601, %v3199
        %v3628 = vsel %vm2364, %v2602, %v3201
        %v3629 = vsel %vm2364, %v2603, %v3203
        %v3630 = vsel %vm2364, %v2604, %v3205
        %v3631 = vsel %vm2364, %v2605, %v3207
        %v3632 = vsel %vm2364, %v2606, %v3209
        %v3633 = vsel %vm2364, %v2607, %v3211
        %v3634 = vsel %vm2364, %v2608, %v3213
        %v3635 = vsel %vm2364, %v2609, %v3215
        %v3636 = vsel %vm2364, %v2610, %v3217
        %v3637 = vsel %vm2364, %v2611, %v3219
        %v3638 = vsel %vm2364, %v2612, %v3221
        %v3639 = vsel %vm386, %v3607, %v3287
        %v3640 = vsel %vm386, %v3608, %v3289
        %v3641 = vsel %vm386, %v3609, %v3291
        %v3642 = vsel %vm386, %v3610, %v3293
        %v3643 = vsel %vm386, %v3611, %v3295
        %v3644 = vsel %vm386, %v3612, %v3297
        %v3645 = vsel %vm386, %v3613, %v3299
        %v3646 = vsel %vm386, %v3614, %v3301
        %v3647 = vsel %vm386, %v3615, %v3303
        %v3648 = vsel %vm386, %v3616, %v3305
        %v3649 = vsel %vm386, %v3617, %v3307
        %v3650 = vsel %vm386, %v3618, %v3309
        %v3651 = vsel %vm386, %v3619, %v3311
        %v3652 = vsel %vm386, %v3620, %v3313
        %v3653 = vsel %vm386, %v3621, %v3315
        %v3654 = vsel %vm386, %v3622, %v3317
        %v3655 = vsel %vm386, %v3623, %v3319
        %v3656 = vsel %vm386, %v3624, %v3321
        %v3657 = vsel %vm386, %v3625, %v3323
        %v3658 = vsel %vm386, %v3626, %v3325
        %v3659 = vsel %vm386, %v3627, %v3327
        %v3660 = vsel %vm386, %v3628, %v3329
        %v3661 = vsel %vm386, %v3629, %v3331
        %v3662 = vsel %vm386, %v3630, %v3333
        %v3663 = vsel %vm386, %v3631, %v3335
        %v3664 = vsel %vm386, %v3632, %v3337
        %v3665 = vsel %vm386, %v3633, %v3339
        %v3666 = vsel %vm386, %v3634, %v3341
        %v3667 = vsel %vm386, %v3635, %v3343
        %v3668 = vsel %vm386, %v3636, %v3345
        %v3669 = vsel %vm386, %v3637, %v3347
        %v3670 = vsel %vm386, %v3638, %v3349
        %v3671 = vsel %vm3574, %v3639, %v3415
        %v3672 = vsel %vm3574, %v3640, %v3417
        %v3673 = vsel %vm3574, %v3641, %v3419
        %v3674 = vsel %vm3574, %v3642, %v3421
        %v3675 = vsel %vm3574, %v3643, %v3423
        %v3676 = vsel %vm3574, %v3644, %v3425
        %v3677 = vsel %vm3574, %v3645, %v3427
        %v3678 = vsel %vm3574, %v3646, %v3429
        %v3679 = vsel %vm3574, %v3647, %v3431
        %v3680 = vsel %vm3574, %v3648, %v3433
        %v3681 = vsel %vm3574, %v3649, %v3435
        %v3682 = vsel %vm3574, %v3650, %v3437
        %v3683 = vsel %vm3574, %v3651, %v3439
        %v3684 = vsel %vm3574, %v3652, %v3441
        %v3685 = vsel %vm3574, %v3653, %v3443
        %v3686 = vsel %vm3574, %v3654, %v3445
        %v3687 = vsel %vm3574, %v3655, %v3447
        %v3688 = vsel %vm3574, %v3656, %v3449
        %v3689 = vsel %vm3574, %v3657, %v3451
        %v3690 = vsel %vm3574, %v3658, %v3453
        %v3691 = vsel %vm3574, %v3659, %v3455
        %v3692 = vsel %vm3574, %v3660, %v3457
        %v3693 = vsel %vm3574, %v3661, %v3459
        %v3694 = vsel %vm3574, %v3662, %v3461
        %v3695 = vsel %vm3574, %v3663, %v3463
        %v3696 = vsel %vm3574, %v3664, %v3465
        %v3697 = vsel %vm3574, %v3665, %v3467
        %v3698 = vsel %vm3574, %v3666, %v3469
        %v3699 = vsel %vm3574, %v3667, %v3471
        %v3700 = vsel %vm3574, %v3668, %v3473
        %v3701 = vsel %vm3574, %v3669, %v3475
        %v3702 = vsel %vm3574, %v3670, %v3477
        %v3703 = vpack.c.bf16 %v3576, %v3575
        %v3704 = vpack.c.bf16 %v3672, %v3671
        %v3705 = vpack.c.bf16 %v2711, %v2710
        %v3706 = vpack.c.bf16 %v3578, %v3577
        %v3707 = vpack.c.bf16 %v3674, %v3673
        %v3708 = vpack.c.bf16 %v2713, %v2712
        %v3709 = vpack.c.bf16 %v3580, %v3579
        %v3710 = vpack.c.bf16 %v3676, %v3675
        %v3711 = vpack.c.bf16 %v2715, %v2714
        %v3712 = vpack.c.bf16 %v3582, %v3581
        %v3713 = vpack.c.bf16 %v3678, %v3677
        %v3714 = vpack.c.bf16 %v2717, %v2716
        %v3715 = vpack.c.bf16 %v3584, %v3583
        %v3716 = vpack.c.bf16 %v3680, %v3679
        %v3717 = vpack.c.bf16 %v2719, %v2718
        %v3718 = vpack.c.bf16 %v3586, %v3585
        %v3719 = vpack.c.bf16 %v3682, %v3681
        %v3720 = vpack.c.bf16 %v2721, %v2720
        %v3721 = vpack.c.bf16 %v3588, %v3587
        %v3722 = vpack.c.bf16 %v3684, %v3683
        %v3723 = vpack.c.bf16 %v2723, %v2722
        %v3724 = vpack.c.bf16 %v3590, %v3589
        %v3725 = vpack.c.bf16 %v3686, %v3685
        %v3726 = vpack.c.bf16 %v2725, %v2724
        %v3727 = vpack.c.bf16 %v3592, %v3591
        %v3728 = vpack.c.bf16 %v3688, %v3687
        %v3729 = vpack.c.bf16 %v2727, %v2726
        %v3730 = vpack.c.bf16 %v3594, %v3593
        %v3731 = vpack.c.bf16 %v3690, %v3689
        %v3732 = vpack.c.bf16 %v2729, %v2728
        %v3733 = vpack.c.bf16 %v3596, %v3595
        %v3734 = vpack.c.bf16 %v3692, %v3691
        %v3735 = vpack.c.bf16 %v2731, %v2730
        %v3736 = vpack.c.bf16 %v3598, %v3597
        %v3737 = vpack.c.bf16 %v3694, %v3693
        %v3738 = vpack.c.bf16 %v2733, %v2732
        %v3739 = vpack.c.bf16 %v3600, %v3599
        %v3740 = vpack.c.bf16 %v3696, %v3695
        %v3741 = vpack.c.bf16 %v2735, %v2734
        %v3742 = vpack.c.bf16 %v3602, %v3601
        %v3743 = vpack.c.bf16 %v3698, %v3697
        %v3744 = vpack.c.bf16 %v2737, %v2736
        %v3745 = vpack.c.bf16 %v3604, %v3603
        %v3746 = vpack.c.bf16 %v3700, %v3699
        %v3747 = vpack.c.bf16 %v2739, %v2738
        %v3748 = vpack.c.bf16 %v3606, %v3605
        %v3749 = vpack.c.bf16 %v3702, %v3701
        %v3750 = vpack.c.bf16 %v2741, %v2740
        %v3751 = vld [vmem:[%s3] sm:$0xf]
        %v3752 = vld [vmem:[%s3 + $0x4] sm:$0xf]
        %v3753 = vld [vmem:[%s3 + $0x8] sm:$0xf]
        %v3754 = vld [vmem:[%s3 + $0xc] sm:$0xf]
        %v3755 = vld [vmem:[%s3 + $0x10] sm:$0xf]
        %v3756 = vld [vmem:[%s3 + $0x14] sm:$0xf]
        %v3757 = vld [vmem:[%s3 + $0x18] sm:$0xf]
        %v3758 = vld [vmem:[%s3 + $0x1c] sm:$0xf]
        %v3759 = vld [vmem:[%s3 + $0x20] sm:$0xf]
        %v3760 = vld [vmem:[%s3 + $0x24] sm:$0xf]
        %v3761 = vld [vmem:[%s3 + $0x28] sm:$0xf]
        %v3762 = vld [vmem:[%s3 + $0x2c] sm:$0xf]
        %v3763 = vld [vmem:[%s3 + $0x30] sm:$0xf]
        %v3764 = vld [vmem:[%s3 + $0x34] sm:$0xf]
        %v3765 = vld [vmem:[%s3 + $0x38] sm:$0xf]
        %v3766 = vld [vmem:[%s3 + $0x3c] sm:$0xf]
        %v3767 = vld [vmem:[%s3 + $0x40] sm:$0xf]
        %v3768 = vld [vmem:[%s3 + $0x44] sm:$0xf]
        %v3769 = vld [vmem:[%s3 + $0x48] sm:$0xf]
        %v3770 = vld [vmem:[%s3 + $0x4c] sm:$0xf]
        %v3771 = vld [vmem:[%s3 + $0x50] sm:$0xf]
        %v3772 = vld [vmem:[%s3 + $0x54] sm:$0xf]
        %v3773 = vld [vmem:[%s3 + $0x58] sm:$0xf]
        %v3774 = vld [vmem:[%s3 + $0x5c] sm:$0xf]
        %v3775 = vld [vmem:[%s3 + $0x60] sm:$0xf]
        %v3776 = vld [vmem:[%s3 + $0x64] sm:$0xf]
        %v3777 = vld [vmem:[%s3 + $0x68] sm:$0xf]
        %v3778 = vld [vmem:[%s3 + $0x6c] sm:$0xf]
        %v3779 = vld [vmem:[%s3 + $0x70] sm:$0xf]
        %v3780 = vld [vmem:[%s3 + $0x74] sm:$0xf]
        %v3781 = vld [vmem:[%s3 + $0x78] sm:$0xf]
        %v3782 = vld [vmem:[%s3 + $0x7c] sm:$0xf]
        %v3783 = vld [vmem:[%s3 + $0x80] sm:$0xf]
        %v3784 = vld [vmem:[%s3 + $0x84] sm:$0xf]
        %v3785 = vld [vmem:[%s3 + $0x88] sm:$0xf]
        %v3786 = vld [vmem:[%s3 + $0x8c] sm:$0xf]
        %v3787 = vld [vmem:[%s4] sm:$0x1]
        %v3789 = vlaneseq
        %v3790 = vshrl.u32 %v3789, 7
        %v3791 = vsub.s32 0, %v3790
        %v3792 = vrot.slane %v3787, %v3791
        %v3830 = vunpack.c.l.b16 %v3751
        %v3831 = vunpack.c.l.b16 %v3752
        %v3832 = vunpack.c.l.b16 %v3753
        %v3833 = vunpack.c.l.b16 %v3754
        %v3834 = vunpack.c.l.b16 %v3755
        %v3835 = vunpack.c.l.b16 %v3756
        %v3836 = vunpack.c.l.b16 %v3757
        %v3837 = vunpack.c.l.b16 %v3758
        %v3838 = vunpack.c.l.b16 %v3759
        %v3839 = vunpack.c.l.b16 %v3760
        %v3840 = vunpack.c.l.b16 %v3761
        %v3841 = vunpack.c.l.b16 %v3762
        %v3842 = vunpack.c.l.b16 %v3763
        %v3843 = vunpack.c.l.b16 %v3764
        %v3844 = vunpack.c.l.b16 %v3765
        %v3845 = vunpack.c.l.b16 %v3766
        %v3846 = vunpack.c.l.b16 %v3767
        %v3847 = vunpack.c.l.b16 %v3768
        %v3848 = vunpack.c.l.b16 %v3769
        %v3849 = vunpack.c.l.b16 %v3770
        %v3850 = vunpack.c.l.b16 %v3771
        %v3851 = vunpack.c.l.b16 %v3772
        %v3852 = vunpack.c.l.b16 %v3773
        %v3853 = vunpack.c.l.b16 %v3774
        %v3854 = vunpack.c.l.b16 %v3775
        %v3855 = vunpack.c.l.b16 %v3776
        %v3856 = vunpack.c.l.b16 %v3777
        %v3857 = vunpack.c.l.b16 %v3778
        %v3858 = vunpack.c.l.b16 %v3779
        %v3859 = vunpack.c.l.b16 %v3780
        %v3860 = vunpack.c.l.b16 %v3781
        %v3861 = vunpack.c.l.b16 %v3782
        %v3862 = vunpack.c.l.b16 %v3783
        %v3863 = vunpack.c.l.b16 %v3784
        %v3864 = vunpack.c.l.b16 %v3785
        %v3865 = vunpack.c.l.b16 %v3786
        %v3866 = vpack.c.b16 %v3831, %v3830
        %v3867 = vpack.c.b16 %v3833, %v3832
        %v3868 = vpack.c.b16 %v3835, %v3834
        %v3869 = vpack.c.b16 %v3837, %v3836
        %v3870 = vpack.c.b16 %v3839, %v3838
        %v3871 = vpack.c.b16 %v3841, %v3840
        %v3872 = vpack.c.b16 %v3843, %v3842
        %v3873 = vpack.c.b16 %v3845, %v3844
        %v3874 = vpack.c.b16 %v3847, %v3846
        %v3875 = vpack.c.b16 %v3849, %v3848
        %v3876 = vpack.c.b16 %v3851, %v3850
        %v3877 = vpack.c.b16 %v3853, %v3852
        %v3878 = vpack.c.b16 %v3855, %v3854
        %v3879 = vpack.c.b16 %v3857, %v3856
        %v3880 = vpack.c.b16 %v3859, %v3858
        %v3881 = vpack.c.b16 %v3861, %v3860
        %v3882 = vpack.c.b16 %v3863, %v3862
        %v3883 = vpack.c.b16 %v3865, %v3864
        %v3903 = vsel %vm2364, %v3705, 0
        %v3906 = vsel %vm2364, %v3708, 0
        %v3909 = vsel %vm2364, %v3711, 0
        %v3912 = vsel %vm2364, %v3714, 0
        %v3915 = vsel %vm2364, %v3717, 0
        %v3918 = vsel %vm2364, %v3720, 0
        %v3921 = vsel %vm2364, %v3723, 0
        %v3924 = vsel %vm2364, %v3726, 0
        %v3927 = vsel %vm2364, %v3729, 0
        %v3930 = vsel %vm2364, %v3732, 0
        %v3933 = vsel %vm2364, %v3735, 0
        %v3936 = vsel %vm2364, %v3738, 0
        %v3939 = vsel %vm2364, %v3741, 0
        %v3942 = vsel %vm2364, %v3744, 0
        %v3945 = vsel %vm2364, %v3747, 0
        %v3948 = vsel %vm2364, %v3750, 0
        %3950 = vmatprep.subr.bf16.mxu0 0
        %3951 = vmatpush1.bf16.msra.mxu0 %v3866
        %3952 = vmatprep.subr.bf16.mxu0 0
        %3953 = vmatpush1.bf16.msra.mxu0 %v3867
        %3954 = vmatprep.subr.bf16.mxu0 0
        %3955 = vmatpush1.bf16.msra.mxu0 %v3868
        %3956 = vmatprep.subr.bf16.mxu0 0
        %3957 = vmatpush1.bf16.msra.mxu0 %v3869
        %3958 = vmatprep.subr.bf16.mxu0 0
        %3959 = vmatpush1.bf16.msra.mxu0 %v3870
        %3960 = vmatprep.subr.bf16.mxu0 0
        %3961 = vmatpush1.bf16.msra.mxu0 %v3871
        %3962 = vmatprep.subr.bf16.mxu0 0
        %3963 = vmatpush1.bf16.msra.mxu0 %v3872
        %3964 = vmatprep.subr.bf16.mxu0 0
        %3965 = vmatpush1.bf16.msra.mxu0 %v3873
        %3966 = vmatprep.subr.bf16.mxu0 0
        %3967 = vmatpush1.bf16.msra.mxu0 %v3874
        %3968 = vmatprep.subr.bf16.mxu0 0
        %3969 = vmatpush1.bf16.msra.mxu0 %v3875
        %3970 = vmatprep.subr.bf16.mxu0 0
        %3971 = vmatpush1.bf16.msra.mxu0 %v3876
        %3972 = vmatprep.subr.bf16.mxu0 0
        %3973 = vmatpush1.bf16.msra.mxu0 %v3877
        %3974 = vmatprep.subr.bf16.mxu0 0
        %3975 = vmatpush1.bf16.msra.mxu0 %v3878
        %3976 = vmatprep.subr.bf16.mxu0 0
        %3977 = vmatpush1.bf16.msra.mxu0 %v3879
        %3978 = vmatprep.subr.bf16.mxu0 0
        %3979 = vmatpush1.bf16.msra.mxu0 %v3880
        %3980 = vmatprep.subr.bf16.mxu0 0
        %3981 = vmatpush1.bf16.msra.mxu0 %v3881
        %3982 = vmatprep.mubr.bf16.mxu0 %v3704
        %3983 = vmatmul.mubr.bf16.gmra.mrb[0].mxu0 %v3703
        %v3984 = vpop.f32.mrb[0].mxu0
        %v3985 = vadd.f32 %v3792, %v3984
        %v3986 = vpop.f32.mrb[0].mxu0
        %v3987 = vpop.f32.mrb[0].mxu0
        %v3988 = vadd.f32 %v3792, %v3987
        %v3989 = vpop.f32.mrb[0].mxu0
        %3990 = vmatprep.mubr.bf16.mxu0 %v3707
        %3991 = vmatmul.mubr.bf16.gmra.mrb[0].mxu0 %v3706
        %v3992 = vpop.f32.mrb[0].mxu0
        %v3993 = vadd.f32 %v3792, %v3992
        %v3994 = vpop.f32.mrb[0].mxu0
        %v3995 = vpop.f32.mrb[0].mxu0
        %v3996 = vadd.f32 %v3792, %v3995
        %v3997 = vpop.f32.mrb[0].mxu0
        %3998 = vmatprep.mubr.bf16.mxu0 %v3710
        %3999 = vmatmul.mubr.bf16.gmra.mrb[0].mxu0 %v3709
        %v4000 = vpop.f32.mrb[0].mxu0
        %v4001 = vadd.f32 %v3792, %v4000
        %v4002 = vpop.f32.mrb[0].mxu0
        %v4003 = vpop.f32.mrb[0].mxu0
        %v4004 = vadd.f32 %v3792, %v4003
        %v4005 = vpop.f32.mrb[0].mxu0
        %4006 = vmatprep.mubr.bf16.mxu0 %v3713
        %4007 = vmatmul.mubr.bf16.gmra.mrb[0].mxu0 %v3712
        %v4008 = vpop.f32.mrb[0].mxu0
        %v4009 = vadd.f32 %v3792, %v4008
        %v4010 = vpop.f32.mrb[0].mxu0
        %v4011 = vpop.f32.mrb[0].mxu0
        %v4012 = vadd.f32 %v3792, %v4011
        %v4013 = vpop.f32.mrb[0].mxu0
        %4014 = vmatprep.mubr.bf16.mxu0 %v3716
        %4015 = vmatmul.mubr.bf16.gmra.mrb[0].mxu0 %v3715
        %v4016 = vpop.f32.mrb[0].mxu0
        %v4017 = vadd.f32 %v3792, %v4016
        %v4018 = vpop.f32.mrb[0].mxu0
        %v4019 = vpop.f32.mrb[0].mxu0
        %v4020 = vadd.f32 %v3792, %v4019
        %v4021 = vpop.f32.mrb[0].mxu0
        %4022 = vmatprep.mubr.bf16.mxu0 %v3719
        %4023 = vmatmul.mubr.bf16.gmra.mrb[0].mxu0 %v3718
        %v4024 = vpop.f32.mrb[0].mxu0
        %v4025 = vadd.f32 %v3792, %v4024
        %v4026 = vpop.f32.mrb[0].mxu0
        %v4027 = vpop.f32.mrb[0].mxu0
        %v4028 = vadd.f32 %v3792, %v4027
        %v4029 = vpop.f32.mrb[0].mxu0
        %4030 = vmatprep.mubr.bf16.mxu0 %v3722
        %4031 = vmatmul.mubr.bf16.gmra.mrb[0].mxu0 %v3721
        %v4032 = vpop.f32.mrb[0].mxu0
        %v4033 = vadd.f32 %v3792, %v4032
        %v4034 = vpop.f32.mrb[0].mxu0
        %v4035 = vpop.f32.mrb[0].mxu0
        %v4036 = vadd.f32 %v3792, %v4035
        %v4037 = vpop.f32.mrb[0].mxu0
        %4038 = vmatprep.mubr.bf16.mxu0 %v3725
        %4039 = vmatmul.mubr.bf16.gmra.mrb[0].mxu0 %v3724
        %v4040 = vpop.f32.mrb[0].mxu0
        %v4041 = vadd.f32 %v3792, %v4040
        %v4042 = vpop.f32.mrb[0].mxu0
        %v4043 = vpop.f32.mrb[0].mxu0
        %v4044 = vadd.f32 %v3792, %v4043
        %v4045 = vpop.f32.mrb[0].mxu0
        %4046 = vmatprep.mubr.bf16.mxu0 %v3728
        %4047 = vmatmul.mubr.bf16.gmra.mrb[0].mxu0 %v3727
        %v4048 = vpop.f32.mrb[0].mxu0
        %v4049 = vadd.f32 %v3792, %v4048
        %v4050 = vpop.f32.mrb[0].mxu0
        %v4051 = vpop.f32.mrb[0].mxu0
        %v4052 = vadd.f32 %v3792, %v4051
        %v4053 = vpop.f32.mrb[0].mxu0
        %4054 = vmatprep.mubr.bf16.mxu0 %v3731
        %4055 = vmatmul.mubr.bf16.gmra.mrb[0].mxu0 %v3730
        %v4056 = vpop.f32.mrb[0].mxu0
        %v4057 = vadd.f32 %v3792, %v4056
        %v4058 = vpop.f32.mrb[0].mxu0
        %v4059 = vpop.f32.mrb[0].mxu0
        %v4060 = vadd.f32 %v3792, %v4059
        %v4061 = vpop.f32.mrb[0].mxu0
        %4062 = vmatprep.mubr.bf16.mxu0 %v3734
        %4063 = vmatmul.mubr.bf16.gmra.mrb[0].mxu0 %v3733
        %v4064 = vpop.f32.mrb[0].mxu0
        %v4065 = vadd.f32 %v3792, %v4064
        %v4066 = vpop.f32.mrb[0].mxu0
        %v4067 = vpop.f32.mrb[0].mxu0
        %v4068 = vadd.f32 %v3792, %v4067
        %v4069 = vpop.f32.mrb[0].mxu0
        %4070 = vmatprep.mubr.bf16.mxu0 %v3737
        %4071 = vmatmul.mubr.bf16.gmra.mrb[0].mxu0 %v3736
        %v4072 = vpop.f32.mrb[0].mxu0
        %v4073 = vadd.f32 %v3792, %v4072
        %v4074 = vpop.f32.mrb[0].mxu0
        %v4075 = vpop.f32.mrb[0].mxu0
        %v4076 = vadd.f32 %v3792, %v4075
        %v4077 = vpop.f32.mrb[0].mxu0
        %4078 = vmatprep.mubr.bf16.mxu0 %v3740
        %4079 = vmatmul.mubr.bf16.gmra.mrb[0].mxu0 %v3739
        %v4080 = vpop.f32.mrb[0].mxu0
        %v4081 = vadd.f32 %v3792, %v4080
        %v4082 = vpop.f32.mrb[0].mxu0
        %v4083 = vpop.f32.mrb[0].mxu0
        %v4084 = vadd.f32 %v3792, %v4083
        %v4085 = vpop.f32.mrb[0].mxu0
        %4086 = vmatprep.mubr.bf16.mxu0 %v3743
        %4087 = vmatmul.mubr.bf16.gmra.mrb[0].mxu0 %v3742
        %v4088 = vpop.f32.mrb[0].mxu0
        %v4089 = vadd.f32 %v3792, %v4088
        %v4090 = vpop.f32.mrb[0].mxu0
        %v4091 = vpop.f32.mrb[0].mxu0
        %v4092 = vadd.f32 %v3792, %v4091
        %v4093 = vpop.f32.mrb[0].mxu0
        %4094 = vmatprep.mubr.bf16.mxu0 %v3746
        %4095 = vmatmul.mubr.bf16.gmra.mrb[0].mxu0 %v3745
        %v4096 = vpop.f32.mrb[0].mxu0
        %v4097 = vadd.f32 %v3792, %v4096
        %v4098 = vpop.f32.mrb[0].mxu0
        %v4099 = vpop.f32.mrb[0].mxu0
        %v4100 = vadd.f32 %v3792, %v4099
        %v4101 = vpop.f32.mrb[0].mxu0
        %4102 = vmatprep.mubr.bf16.mxu0 %v3749
        %4103 = vmatmul.mubr.bf16.gmra.mrb[0].mxu0 %v3748
        %v4104 = vpop.f32.mrb[0].mxu0
        %v4105 = vadd.f32 %v3792, %v4104
        %v4106 = vpop.f32.mrb[0].mxu0
        %v4107 = vpop.f32.mrb[0].mxu0
        %v4108 = vadd.f32 %v3792, %v4107
        %v4109 = vpop.f32.mrb[0].mxu0
        %4110 = vdwg.mxu0
        %4111 = vmatprep.subr.bf16.mxu0 0
        %4112 = vmatpush1.bf16.msra.mxu0 %v3882
        %4113 = vmatprep.subr.bf16.mxu0 0
        %4114 = vmatpush1.bf16.msra.mxu0 %v3883
        %4115 = vmatprep.subr.bf16.mxu0 0
        %4116 = vmatpush1.bf16.msra.mxu0 0
        %4117 = vmatprep.subr.bf16.mxu0 0
        %4118 = vmatpush1.bf16.msra.mxu0 0
        %4119 = vmatprep.subr.bf16.mxu0 0
        %4120 = vmatpush1.bf16.msra.mxu0 0
        %4121 = vmatprep.subr.bf16.mxu0 0
        %4122 = vmatpush1.bf16.msra.mxu0 0
        %4123 = vmatprep.subr.bf16.mxu0 0
        %4124 = vmatpush1.bf16.msra.mxu0 0
        %4125 = vmatprep.subr.bf16.mxu0 0
        %4126 = vmatpush1.bf16.msra.mxu0 0
        %4127 = vmatprep.subr.bf16.mxu0 0
        %4128 = vmatpush1.bf16.msra.mxu0 0
        %4129 = vmatprep.subr.bf16.mxu0 0
        %4130 = vmatpush1.bf16.msra.mxu0 0
        %4131 = vmatprep.subr.bf16.mxu0 0
        %4132 = vmatpush1.bf16.msra.mxu0 0
        %4133 = vmatprep.subr.bf16.mxu0 0
        %4134 = vmatpush1.bf16.msra.mxu0 0
        %4135 = vmatprep.subr.bf16.mxu0 0
        %4136 = vmatpush1.bf16.msra.mxu0 0
        %4137 = vmatprep.subr.bf16.mxu0 0
        %4138 = vmatpush1.bf16.msra.mxu0 0
        %4139 = vmatprep.subr.bf16.mxu0 0
        %4140 = vmatpush1.bf16.msra.mxu0 0
        %4141 = vmatprep.subr.bf16.mxu0 0
        %4142 = vmatpush1.bf16.msra.mxu0 0
        %4143 = vmatprep.mubr.bf16.mxu0 0
        %4144 = vmatmul.mubr.bf16.gmra.mrb[0].mxu0 %v3903
        %v4145 = vpop.f32.mrb[0].mxu0
        %v4146 = vadd.f32 %v3985, %v4145
        %v4147 = vpop.f32.mrb[0].mxu0
        %v4148 = vpop.f32.mrb[0].mxu0
        %v4149 = vadd.f32 %v3988, %v4148
        %v4150 = vpop.f32.mrb[0].mxu0
        %4151 = vmatprep.mubr.bf16.mxu0 0
        %4152 = vmatmul.mubr.bf16.gmra.mrb[0].mxu0 %v3906
        %v4153 = vpop.f32.mrb[0].mxu0
        %v4154 = vadd.f32 %v3993, %v4153
        %v4155 = vpop.f32.mrb[0].mxu0
        %v4156 = vpop.f32.mrb[0].mxu0
        %v4157 = vadd.f32 %v3996, %v4156
        %v4158 = vpop.f32.mrb[0].mxu0
        %4159 = vmatprep.mubr.bf16.mxu0 0
        %4160 = vmatmul.mubr.bf16.gmra.mrb[0].mxu0 %v3909
        %v4161 = vpop.f32.mrb[0].mxu0
        %v4162 = vadd.f32 %v4001, %v4161
        %v4163 = vpop.f32.mrb[0].mxu0
        %v4164 = vpop.f32.mrb[0].mxu0
        %v4165 = vadd.f32 %v4004, %v4164
        %v4166 = vpop.f32.mrb[0].mxu0
        %4167 = vmatprep.mubr.bf16.mxu0 0
        %4168 = vmatmul.mubr.bf16.gmra.mrb[0].mxu0 %v3912
        %v4169 = vpop.f32.mrb[0].mxu0
        %v4170 = vadd.f32 %v4009, %v4169
        %v4171 = vpop.f32.mrb[0].mxu0
        %v4172 = vpop.f32.mrb[0].mxu0
        %v4173 = vadd.f32 %v4012, %v4172
        %v4174 = vpop.f32.mrb[0].mxu0
        %4175 = vmatprep.mubr.bf16.mxu0 0
        %4176 = vmatmul.mubr.bf16.gmra.mrb[0].mxu0 %v3915
        %v4177 = vpop.f32.mrb[0].mxu0
        %v4178 = vadd.f32 %v4017, %v4177
        %v4179 = vpop.f32.mrb[0].mxu0
        %v4180 = vpop.f32.mrb[0].mxu0
        %v4181 = vadd.f32 %v4020, %v4180
        %v4182 = vpop.f32.mrb[0].mxu0
        %4183 = vmatprep.mubr.bf16.mxu0 0
        %4184 = vmatmul.mubr.bf16.gmra.mrb[0].mxu0 %v3918
        %v4185 = vpop.f32.mrb[0].mxu0
        %v4186 = vadd.f32 %v4025, %v4185
        %v4187 = vpop.f32.mrb[0].mxu0
        %v4188 = vpop.f32.mrb[0].mxu0
        %v4189 = vadd.f32 %v4028, %v4188
        %v4190 = vpop.f32.mrb[0].mxu0
        %4191 = vmatprep.mubr.bf16.mxu0 0
        %4192 = vmatmul.mubr.bf16.gmra.mrb[0].mxu0 %v3921
        %v4193 = vpop.f32.mrb[0].mxu0
        %v4194 = vadd.f32 %v4033, %v4193
        %v4195 = vpop.f32.mrb[0].mxu0
        %v4196 = vpop.f32.mrb[0].mxu0
        %v4197 = vadd.f32 %v4036, %v4196
        %v4198 = vpop.f32.mrb[0].mxu0
        %4199 = vmatprep.mubr.bf16.mxu0 0
        %4200 = vmatmul.mubr.bf16.gmra.mrb[0].mxu0 %v3924
        %v4201 = vpop.f32.mrb[0].mxu0
        %v4202 = vadd.f32 %v4041, %v4201
        %v4203 = vpop.f32.mrb[0].mxu0
        %v4204 = vpop.f32.mrb[0].mxu0
        %v4205 = vadd.f32 %v4044, %v4204
        %v4206 = vpop.f32.mrb[0].mxu0
        %4207 = vmatprep.mubr.bf16.mxu0 0
        %4208 = vmatmul.mubr.bf16.gmra.mrb[0].mxu0 %v3927
        %v4209 = vpop.f32.mrb[0].mxu0
        %v4210 = vadd.f32 %v4049, %v4209
        %v4211 = vpop.f32.mrb[0].mxu0
        %v4212 = vpop.f32.mrb[0].mxu0
        %v4213 = vadd.f32 %v4052, %v4212
        %v4214 = vpop.f32.mrb[0].mxu0
        %4215 = vmatprep.mubr.bf16.mxu0 0
        %4216 = vmatmul.mubr.bf16.gmra.mrb[0].mxu0 %v3930
        %v4217 = vpop.f32.mrb[0].mxu0
        %v4218 = vadd.f32 %v4057, %v4217
        %v4219 = vpop.f32.mrb[0].mxu0
        %v4220 = vpop.f32.mrb[0].mxu0
        %v4221 = vadd.f32 %v4060, %v4220
        %v4222 = vpop.f32.mrb[0].mxu0
        %4223 = vmatprep.mubr.bf16.mxu0 0
        %4224 = vmatmul.mubr.bf16.gmra.mrb[0].mxu0 %v3933
        %v4225 = vpop.f32.mrb[0].mxu0
        %v4226 = vadd.f32 %v4065, %v4225
        %v4227 = vpop.f32.mrb[0].mxu0
        %v4228 = vpop.f32.mrb[0].mxu0
        %v4229 = vadd.f32 %v4068, %v4228
        %v4230 = vpop.f32.mrb[0].mxu0
        %4231 = vmatprep.mubr.bf16.mxu0 0
        %4232 = vmatmul.mubr.bf16.gmra.mrb[0].mxu0 %v3936
        %v4233 = vpop.f32.mrb[0].mxu0
        %v4234 = vadd.f32 %v4073, %v4233
        %v4235 = vpop.f32.mrb[0].mxu0
        %v4236 = vpop.f32.mrb[0].mxu0
        %v4237 = vadd.f32 %v4076, %v4236
        %v4238 = vpop.f32.mrb[0].mxu0
        %4239 = vmatprep.mubr.bf16.mxu0 0
        %4240 = vmatmul.mubr.bf16.gmra.mrb[0].mxu0 %v3939
        %v4241 = vpop.f32.mrb[0].mxu0
        %v4242 = vadd.f32 %v4081, %v4241
        %v4243 = vpop.f32.mrb[0].mxu0
        %v4244 = vpop.f32.mrb[0].mxu0
        %v4245 = vadd.f32 %v4084, %v4244
        %v4246 = vpop.f32.mrb[0].mxu0
        %4247 = vmatprep.mubr.bf16.mxu0 0
        %4248 = vmatmul.mubr.bf16.gmra.mrb[0].mxu0 %v3942
        %v4249 = vpop.f32.mrb[0].mxu0
        %v4250 = vadd.f32 %v4089, %v4249
        %v4251 = vpop.f32.mrb[0].mxu0
        %v4252 = vpop.f32.mrb[0].mxu0
        %v4253 = vadd.f32 %v4092, %v4252
        %v4254 = vpop.f32.mrb[0].mxu0
        %4255 = vmatprep.mubr.bf16.mxu0 0
        %4256 = vmatmul.mubr.bf16.gmra.mrb[0].mxu0 %v3945
        %v4257 = vpop.f32.mrb[0].mxu0
        %v4258 = vadd.f32 %v4097, %v4257
        %v4259 = vpop.f32.mrb[0].mxu0
        %v4260 = vpop.f32.mrb[0].mxu0
        %v4261 = vadd.f32 %v4100, %v4260
        %v4262 = vpop.f32.mrb[0].mxu0
        %4263 = vmatprep.mubr.bf16.mxu0 0
        %4264 = vmatmul.mubr.bf16.gmra.mrb[0].mxu0 %v3948
        %v4265 = vpop.f32.mrb[0].mxu0
        %v4266 = vadd.f32 %v4105, %v4265
        %v4267 = vpop.f32.mrb[0].mxu0
        %v4268 = vpop.f32.mrb[0].mxu0
        %v4269 = vadd.f32 %v4108, %v4268
        %v4270 = vpop.f32.mrb[0].mxu0
        %4271 = vdwg.mxu0
        %vm4272 = vcmask 130048
        %4273 = vst.msk [vmem:[#allocation4] sm:$0xff] %vm4272, 0.0
        %4274 = vst.msk [vmem:[#allocation4 + $0x8] sm:$0xff] %vm4272, 0.0
        %4275 = vst.msk [vmem:[#allocation4 + $0x10] sm:$0xff] %vm4272, 0.0
        %vm4276 = vcmask 123904
        %4277 = vst.msk [vmem:[#allocation4 + $0x18] sm:$0x3] %vm4276, 0.0
        %4278 = vst.msk [vmem:[#allocation4 + $0x20] sm:$0xff] %vm4272, 0.0
        %4279 = vst.msk [vmem:[#allocation4 + $0x28] sm:$0xff] %vm4272, 0.0
        %4280 = vst.msk [vmem:[#allocation4 + $0x30] sm:$0xff] %vm4272, 0.0
        %4281 = vst.msk [vmem:[#allocation4 + $0x38] sm:$0x3] %vm4276, 0.0
        %4282 = vst.msk [vmem:[#allocation4 + $0x40] sm:$0xff] %vm4272, 0.0
        %4283 = vst.msk [vmem:[#allocation4 + $0x48] sm:$0xff] %vm4272, 0.0
        %4284 = vst.msk [vmem:[#allocation4 + $0x50] sm:$0xff] %vm4272, 0.0
        %4285 = vst.msk [vmem:[#allocation4 + $0x58] sm:$0x3] %vm4276, 0.0
        %4286 = vst.msk [vmem:[#allocation4 + $0x60] sm:$0xff] %vm4272, 0.0
        %4287 = vst.msk [vmem:[#allocation4 + $0x68] sm:$0xff] %vm4272, 0.0
        %4288 = vst.msk [vmem:[#allocation4 + $0x70] sm:$0xff] %vm4272, 0.0
        %4289 = vst.msk [vmem:[#allocation4 + $0x78] sm:$0x3] %vm4276, 0.0
        %4290 = vst.msk [vmem:[#allocation4 + $0x80] sm:$0xff] %vm4272, 0.0
        %4291 = vst.msk [vmem:[#allocation4 + $0x88] sm:$0xff] %vm4272, 0.0
        %4292 = vst.msk [vmem:[#allocation4 + $0x90] sm:$0xff] %vm4272, 0.0
        %4293 = vst.msk [vmem:[#allocation4 + $0x98] sm:$0x3] %vm4276, 0.0
        %s4294 = scalar_lea.vmem [#allocation4], 672
        %4295 = vst.msk [vmem:[%s4294] sm:$0xff] %vm4272, 0.0
        %4296 = vst.msk [vmem:[%s4294 + $0x8] sm:$0xff] %vm4272, 0.0
        %4297 = vst.msk [vmem:[%s4294 + $0x10] sm:$0xff] %vm4272, 0.0
        %4298 = vst.msk [vmem:[%s4294 + $0x18] sm:$0x3] %vm4276, 0.0
        %4299 = vst.msk [vmem:[%s4294 + $0x20] sm:$0xff] %vm4272, 0.0
        %4300 = vst.msk [vmem:[%s4294 + $0x28] sm:$0xff] %vm4272, 0.0
        %4301 = vst.msk [vmem:[%s4294 + $0x30] sm:$0xff] %vm4272, 0.0
        %4302 = vst.msk [vmem:[%s4294 + $0x38] sm:$0x3] %vm4276, 0.0
        %4303 = vst.msk [vmem:[%s4294 + $0x40] sm:$0xff] %vm4272, 0.0
        %4304 = vst.msk [vmem:[%s4294 + $0x48] sm:$0xff] %vm4272, 0.0
        %4305 = vst.msk [vmem:[%s4294 + $0x50] sm:$0xff] %vm4272, 0.0
        %4306 = vst.msk [vmem:[%s4294 + $0x58] sm:$0x3] %vm4276, 0.0
        %4307 = vst.msk [vmem:[%s4294 + $0x60] sm:$0xff] %vm4272, 0.0
        %4308 = vst.msk [vmem:[%s4294 + $0x68] sm:$0xff] %vm4272, 0.0
        %4309 = vst.msk [vmem:[%s4294 + $0x70] sm:$0xff] %vm4272, 0.0
        %4310 = vst.msk [vmem:[%s4294 + $0x78] sm:$0x3] %vm4276, 0.0
        %4311 = vst.msk [vmem:[%s4294 + $0x80] sm:$0xff] %vm4272, 0.0
        %4312 = vst.msk [vmem:[%s4294 + $0x88] sm:$0xff] %vm4272, 0.0
        %4313 = vst.msk [vmem:[%s4294 + $0x90] sm:$0xff] %vm4272, 0.0
        %4314 = vst.msk [vmem:[%s4294 + $0x98] sm:$0x3] %vm4276, 0.0
        %vm4315 = vcmask 126976
        %4316 = vst.msk [vmem:[#allocation4] sm:$0x1f] %vm4315, 0.0
        %4317 = vst.msk [vmem:[#allocation4 + $0x20] sm:$0x1f] %vm4315, 0.0
        %4318 = vst.msk [vmem:[#allocation4 + $0x40] sm:$0x1f] %vm4315, 0.0
        %4319 = vst.msk [vmem:[#allocation4 + $0x60] sm:$0x1f] %vm4315, 0.0
        %4320 = vst.msk [vmem:[#allocation4 + $0x80] sm:$0x1f] %vm4315, 0.0
        %4321 = vst.msk [vmem:[#allocation4 + $0xa0] sm:$0x1f] %vm4315, 0.0
        %4322 = vst.msk [vmem:[#allocation4 + $0xc0] sm:$0x1f] %vm4315, 0.0
        %4323 = vst.msk [vmem:[#allocation4 + $0xe0] sm:$0x1f] %vm4315, 0.0
        %4324 = vst.msk [vmem:[#allocation4 + $0x100] sm:$0x1f] %vm4315, 0.0
        %4325 = vst.msk [vmem:[#allocation4 + $0x120] sm:$0x1f] %vm4315, 0.0
        %4326 = vst.msk [vmem:[#allocation4 + $0x140] sm:$0x1f] %vm4315, 0.0
        %4327 = vst.msk [vmem:[#allocation4 + $0x160] sm:$0x1f] %vm4315, 0.0
        %4328 = vst.msk [vmem:[#allocation4 + $0x180] sm:$0x1f] %vm4315, 0.0
        %4329 = vst.msk [vmem:[#allocation4 + $0x1a0] sm:$0x1f] %vm4315, 0.0
        %4330 = vst.msk [vmem:[#allocation4 + $0x1c0] sm:$0x1f] %vm4315, 0.0
        %4331 = vst.msk [vmem:[#allocation4 + $0x1e0] sm:$0x1f] %vm4315, 0.0
        %4332 = vst.msk [vmem:[#allocation4 + $0x200] sm:$0x1f] %vm4315, 0.0
        %4333 = vst.msk [vmem:[#allocation4 + $0x220] sm:$0x1f] %vm4315, 0.0
        %4334 = vst.msk [vmem:[#allocation4 + $0x240] sm:$0x1f] %vm4315, 0.0
        %4335 = vst.msk [vmem:[#allocation4 + $0x260] sm:$0x1f] %vm4315, 0.0
        %4336 = vst.msk [vmem:[#allocation4 + $0x280] sm:$0x1f] %vm4315, 0.0
        %4337 = vst.msk [vmem:[#allocation4 + $0x2a0] sm:$0x1f] %vm4315, 0.0
        %4338 = vst.msk [vmem:[#allocation4 + $0x2c0] sm:$0x1f] %vm4315, 0.0
        %4339 = vst.msk [vmem:[#allocation4 + $0x2e0] sm:$0x1f] %vm4315, 0.0
        %4340 = vst.msk [vmem:[#allocation4 + $0x300] sm:$0x1f] %vm4315, 0.0
        %4341 = vst.msk [vmem:[#allocation4 + $0x320] sm:$0x1f] %vm4315, 0.0
        %4342 = vst.msk [vmem:[#allocation4 + $0x15] sm:$0x1f] %vm4315, 0.0
        %4343 = vst.msk [vmem:[#allocation4 + $0x35] sm:$0x1f] %vm4315, 0.0
        %4344 = vst.msk [vmem:[#allocation4 + $0x55] sm:$0x1f] %vm4315, 0.0
        %4345 = vst.msk [vmem:[#allocation4 + $0x75] sm:$0x1f] %vm4315, 0.0
        %4346 = vst.msk [vmem:[#allocation4 + $0x95] sm:$0x1f] %vm4315, 0.0
        %4347 = vst.msk [vmem:[#allocation4 + $0xb5] sm:$0x1f] %vm4315, 0.0
        %4348 = vst.msk [vmem:[#allocation4 + $0xd5] sm:$0x1f] %vm4315, 0.0
        %4349 = vst.msk [vmem:[#allocation4 + $0xf5] sm:$0x1f] %vm4315, 0.0
        %4350 = vst.msk [vmem:[#allocation4 + $0x115] sm:$0x1f] %vm4315, 0.0
        %4351 = vst.msk [vmem:[#allocation4 + $0x135] sm:$0x1f] %vm4315, 0.0
        %4352 = vst.msk [vmem:[#allocation4 + $0x155] sm:$0x1f] %vm4315, 0.0
        %4353 = vst.msk [vmem:[#allocation4 + $0x175] sm:$0x1f] %vm4315, 0.0
        %4354 = vst.msk [vmem:[#allocation4 + $0x195] sm:$0x1f] %vm4315, 0.0
        %4355 = vst.msk [vmem:[#allocation4 + $0x1b5] sm:$0x1f] %vm4315, 0.0
        %4356 = vst.msk [vmem:[#allocation4 + $0x1d5] sm:$0x1f] %vm4315, 0.0
        %4357 = vst.msk [vmem:[#allocation4 + $0x1f5] sm:$0x1f] %vm4315, 0.0
        %4358 = vst.msk [vmem:[#allocation4 + $0x215] sm:$0x1f] %vm4315, 0.0
        %4359 = vst.msk [vmem:[#allocation4 + $0x235] sm:$0x1f] %vm4315, 0.0
        %4360 = vst.msk [vmem:[#allocation4 + $0x255] sm:$0x1f] %vm4315, 0.0
        %4361 = vst.msk [vmem:[#allocation4 + $0x275] sm:$0x1f] %vm4315, 0.0
        %4362 = vst.msk [vmem:[#allocation4 + $0x295] sm:$0x1f] %vm4315, 0.0
        %4363 = vst.msk [vmem:[#allocation4 + $0x2b5] sm:$0x1f] %vm4315, 0.0
        %4364 = vst.msk [vmem:[#allocation4 + $0x2d5] sm:$0x1f] %vm4315, 0.0
        %4365 = vst.msk [vmem:[#allocation4 + $0x2f5] sm:$0x1f] %vm4315, 0.0
        %4366 = vst.msk [vmem:[#allocation4 + $0x315] sm:$0x1f] %vm4315, 0.0
        %4367 = vst.msk [vmem:[#allocation4 + $0x335] sm:$0x1f] %vm4315, 0.0
        %s4368 = scalar_lea.vmem [#allocation4], 160
        %4369 = vst.msk [vmem:[%s4368 + $0x5] sm:$0xff] %vm4272, %v4146
        %4370 = vst.msk [vmem:[%s4368 + $0xd] sm:$0xff] %vm4272, %v4149
        %4371 = vst.msk [vmem:[%s4368 + $0x25] sm:$0xff] %vm4272, %v4154
        %4372 = vst.msk [vmem:[%s4368 + $0x2d] sm:$0xff] %vm4272, %v4157
        %4373 = vst.msk [vmem:[%s4368 + $0x45] sm:$0xff] %vm4272, %v4162
        %4374 = vst.msk [vmem:[%s4368 + $0x4d] sm:$0xff] %vm4272, %v4165
        %4375 = vst.msk [vmem:[%s4368 + $0x65] sm:$0xff] %vm4272, %v4170
        %4376 = vst.msk [vmem:[%s4368 + $0x6d] sm:$0xff] %vm4272, %v4173
        %4377 = vst.msk [vmem:[%s4368 + $0x85] sm:$0xff] %vm4272, %v4178
        %4378 = vst.msk [vmem:[%s4368 + $0x8d] sm:$0xff] %vm4272, %v4181
        %4379 = vst.msk [vmem:[%s4368 + $0xa5] sm:$0xff] %vm4272, %v4186
        %4380 = vst.msk [vmem:[%s4368 + $0xad] sm:$0xff] %vm4272, %v4189
        %4381 = vst.msk [vmem:[%s4368 + $0xc5] sm:$0xff] %vm4272, %v4194
        %4382 = vst.msk [vmem:[%s4368 + $0xcd] sm:$0xff] %vm4272, %v4197
        %4383 = vst.msk [vmem:[%s4368 + $0xe5] sm:$0xff] %vm4272, %v4202
        %4384 = vst.msk [vmem:[%s4368 + $0xed] sm:$0xff] %vm4272, %v4205
        %4385 = vst.msk [vmem:[%s4368 + $0x105] sm:$0xff] %vm4272, %v4210
        %4386 = vst.msk [vmem:[%s4368 + $0x10d] sm:$0xff] %vm4272, %v4213
        %4387 = vst.msk [vmem:[%s4368 + $0x125] sm:$0xff] %vm4272, %v4218
        %4388 = vst.msk [vmem:[%s4368 + $0x12d] sm:$0xff] %vm4272, %v4221
        %4389 = vst.msk [vmem:[%s4368 + $0x145] sm:$0xff] %vm4272, %v4226
        %4390 = vst.msk [vmem:[%s4368 + $0x14d] sm:$0xff] %vm4272, %v4229
        %4391 = vst.msk [vmem:[%s4368 + $0x165] sm:$0xff] %vm4272, %v4234
        %4392 = vst.msk [vmem:[%s4368 + $0x16d] sm:$0xff] %vm4272, %v4237
        %4393 = vst.msk [vmem:[%s4368 + $0x185] sm:$0xff] %vm4272, %v4242
        %4394 = vst.msk [vmem:[%s4368 + $0x18d] sm:$0xff] %vm4272, %v4245
        %4395 = vst.msk [vmem:[%s4368 + $0x1a5] sm:$0xff] %vm4272, %v4250
        %4396 = vst.msk [vmem:[%s4368 + $0x1ad] sm:$0xff] %vm4272, %v4253
        %4397 = vst.msk [vmem:[%s4368 + $0x1c5] sm:$0xff] %vm4272, %v4258
        %4398 = vst.msk [vmem:[%s4368 + $0x1cd] sm:$0xff] %vm4272, %v4261
        %4399 = vst.msk [vmem:[%s4368 + $0x1e5] sm:$0xff] %vm4272, %v4266
        %4400 = vst.msk [vmem:[%s4368 + $0x1ed] sm:$0xff] %vm4272, %v4269
        %v4401 = vld [vmem:[#allocation4] sm:$0xff]
        %v4402 = vld [vmem:[#allocation4 + $0x8] sm:$0xff]
        %v4403 = vld [vmem:[#allocation4 + $0x20] sm:$0xff]
        %v4404 = vld [vmem:[#allocation4 + $0x28] sm:$0xff]
        %v4405 = vld [vmem:[#allocation4 + $0x40] sm:$0xff]
        %v4406 = vld [vmem:[#allocation4 + $0x48] sm:$0xff]
        %v4407 = vld [vmem:[#allocation4 + $0x60] sm:$0xff]
        %v4408 = vld [vmem:[#allocation4 + $0x68] sm:$0xff]
        %v4409 = vld [vmem:[#allocation4 + $0x80] sm:$0xff]
        %v4410 = vld [vmem:[#allocation4 + $0x88] sm:$0xff]
        %v4411 = vld [vmem:[#allocation4 + $0xa0] sm:$0xff]
        %v4412 = vld [vmem:[#allocation4 + $0xa8] sm:$0xff]
        %v4413 = vld [vmem:[#allocation4 + $0xc0] sm:$0xff]
        %v4414 = vld [vmem:[#allocation4 + $0xc8] sm:$0xff]
        %v4415 = vld [vmem:[#allocation4 + $0xe0] sm:$0xff]
        %v4416 = vld [vmem:[#allocation4 + $0xe8] sm:$0xff]
        %v4417 = vld [vmem:[#allocation4 + $0x100] sm:$0xff]
        %v4418 = vld [vmem:[#allocation4 + $0x108] sm:$0xff]
        %v4419 = vld [vmem:[#allocation4 + $0x120] sm:$0xff]
        %v4420 = vld [vmem:[#allocation4 + $0x128] sm:$0xff]
        %v4421 = vld [vmem:[#allocation4 + $0x140] sm:$0xff]
        %v4422 = vld [vmem:[#allocation4 + $0x148] sm:$0xff]
        %v4423 = vld [vmem:[#allocation4 + $0x160] sm:$0xff]
        %v4424 = vld [vmem:[#allocation4 + $0x168] sm:$0xff]
        %v4425 = vld [vmem:[#allocation4 + $0x180] sm:$0xff]
        %v4426 = vld [vmem:[#allocation4 + $0x188] sm:$0xff]
        %v4427 = vld [vmem:[#allocation4 + $0x1a0] sm:$0xff]
        %v4428 = vld [vmem:[#allocation4 + $0x1a8] sm:$0xff]
        %v4429 = vld [vmem:[#allocation4 + $0x1c0] sm:$0xff]
        %v4430 = vld [vmem:[#allocation4 + $0x1c8] sm:$0xff]
        %v4431 = vld [vmem:[#allocation4 + $0x1e0] sm:$0xff]
        %v4432 = vld [vmem:[#allocation4 + $0x1e8] sm:$0xff]
        %v4433 = vld [vmem:[%s5] sm:$0x1]
        %v4434 = vlaneseq
        %v4435 = vshrl.u32 %v4434, 7
        %v4436 = vsub.s32 0, %v4435
        %v4437 = vrot.slane %v4433, %v4436
        %v4438 = vmul.f32 %v4401, %v4437
        %v4439 = vmul.f32 %v4402, %v4437
        %v4440 = vmul.f32 %v4403, %v4437
        %v4441 = vmul.f32 %v4404, %v4437
        %v4442 = vmul.f32 %v4405, %v4437
        %v4443 = vmul.f32 %v4406, %v4437
        %v4444 = vmul.f32 %v4407, %v4437
        %v4445 = vmul.f32 %v4408, %v4437
        %v4446 = vmul.f32 %v4409, %v4437
        %v4447 = vmul.f32 %v4410, %v4437
        %v4448 = vmul.f32 %v4411, %v4437
        %v4449 = vmul.f32 %v4412, %v4437
        %v4450 = vmul.f32 %v4413, %v4437
        %v4451 = vmul.f32 %v4414, %v4437
        %v4452 = vmul.f32 %v4415, %v4437
        %v4453 = vmul.f32 %v4416, %v4437
        %v4454 = vmul.f32 %v4417, %v4437
        %v4455 = vmul.f32 %v4418, %v4437
        %v4456 = vmul.f32 %v4419, %v4437
        %v4457 = vmul.f32 %v4420, %v4437
        %v4458 = vmul.f32 %v4421, %v4437
        %v4459 = vmul.f32 %v4422, %v4437
        %v4460 = vmul.f32 %v4423, %v4437
        %v4461 = vmul.f32 %v4424, %v4437
        %v4462 = vmul.f32 %v4425, %v4437
        %v4463 = vmul.f32 %v4426, %v4437
        %v4464 = vmul.f32 %v4427, %v4437
        %v4465 = vmul.f32 %v4428, %v4437
        %v4466 = vmul.f32 %v4429, %v4437
        %v4467 = vmul.f32 %v4430, %v4437
        %v4468 = vmul.f32 %v4431, %v4437
        %v4469 = vmul.f32 %v4432, %v4437
        %v4470 = vsel %vm4272, %v4438, 0.0
        %4471 = vadd.xlane.f32.xlu0 %v4470
        %v4472 = vpop.xlane.xlu0 %4471
        %v4473 = vsel %vm4272, %v4439, 0.0
        %4474 = vadd.xlane.f32.xlu0 %v4473
        %v4475 = vpop.xlane.xlu0 %4474
        %v4476 = vsel %vm4272, %v4440, 0.0
        %4477 = vadd.xlane.f32.xlu0 %v4476
        %v4478 = vpop.xlane.xlu0 %4477
        %v4479 = vsel %vm4272, %v4441, 0.0
        %4480 = vadd.xlane.f32.xlu0 %v4479
        %v4481 = vpop.xlane.xlu0 %4480
        %v4482 = vsel %vm4272, %v4442, 0.0
        %4483 = vadd.xlane.f32.xlu0 %v4482
        %v4484 = vpop.xlane.xlu0 %4483
        %v4485 = vsel %vm4272, %v4443, 0.0
        %4486 = vadd.xlane.f32.xlu0 %v4485
        %v4487 = vpop.xlane.xlu0 %4486
        %v4488 = vsel %vm4272, %v4444, 0.0
        %4489 = vadd.xlane.f32.xlu0 %v4488
        %v4490 = vpop.xlane.xlu0 %4489
        %v4491 = vsel %vm4272, %v4445, 0.0
        %4492 = vadd.xlane.f32.xlu0 %v4491
        %v4493 = vpop.xlane.xlu0 %4492
        %v4494 = vsel %vm4272, %v4446, 0.0
        %4495 = vadd.xlane.f32.xlu0 %v4494
        %v4496 = vpop.xlane.xlu0 %4495
        %v4497 = vsel %vm4272, %v4447, 0.0
        %4498 = vadd.xlane.f32.xlu0 %v4497
        %v4499 = vpop.xlane.xlu0 %4498
        %v4500 = vsel %vm4272, %v4448, 0.0
        %4501 = vadd.xlane.f32.xlu0 %v4500
        %v4502 = vpop.xlane.xlu0 %4501
        %v4503 = vsel %vm4272, %v4449, 0.0
        %4504 = vadd.xlane.f32.xlu0 %v4503
        %v4505 = vpop.xlane.xlu0 %4504
        %v4506 = vsel %vm4272, %v4450, 0.0
        %4507 = vadd.xlane.f32.xlu0 %v4506
        %v4508 = vpop.xlane.xlu0 %4507
        %v4509 = vsel %vm4272, %v4451, 0.0
        %4510 = vadd.xlane.f32.xlu0 %v4509
        %v4511 = vpop.xlane.xlu0 %4510
        %v4512 = vsel %vm4272, %v4452, 0.0
        %4513 = vadd.xlane.f32.xlu0 %v4512
        %v4514 = vpop.xlane.xlu0 %4513
        %v4515 = vsel %vm4272, %v4453, 0.0
        %4516 = vadd.xlane.f32.xlu0 %v4515
        %v4517 = vpop.xlane.xlu0 %4516
        %v4518 = vsel %vm4272, %v4454, 0.0
        %4519 = vadd.xlane.f32.xlu0 %v4518
        %v4520 = vpop.xlane.xlu0 %4519
        %v4521 = vsel %vm4272, %v4455, 0.0
        %4522 = vadd.xlane.f32.xlu0 %v4521
        %v4523 = vpop.xlane.xlu0 %4522
        %v4524 = vsel %vm4272, %v4456, 0.0
        %4525 = vadd.xlane.f32.xlu0 %v4524
        %v4526 = vpop.xlane.xlu0 %4525
        %v4527 = vsel %vm4272, %v4457, 0.0
        %4528 = vadd.xlane.f32.xlu0 %v4527
        %v4529 = vpop.xlane.xlu0 %4528
        %v4530 = vsel %vm4272, %v4458, 0.0
        %4531 = vadd.xlane.f32.xlu0 %v4530
        %v4532 = vpop.xlane.xlu0 %4531
        %v4533 = vsel %vm4272, %v4459, 0.0
        %4534 = vadd.xlane.f32.xlu0 %v4533
        %v4535 = vpop.xlane.xlu0 %4534
        %v4536 = vsel %vm4272, %v4460, 0.0
        %4537 = vadd.xlane.f32.xlu0 %v4536
        %v4538 = vpop.xlane.xlu0 %4537
        %v4539 = vsel %vm4272, %v4461, 0.0
        %4540 = vadd.xlane.f32.xlu0 %v4539
        %v4541 = vpop.xlane.xlu0 %4540
        %v4542 = vsel %vm4272, %v4462, 0.0
        %4543 = vadd.xlane.f32.xlu0 %v4542
        %v4544 = vpop.xlane.xlu0 %4543
        %v4545 = vsel %vm4272, %v4463, 0.0
        %4546 = vadd.xlane.f32.xlu0 %v4545
        %v4547 = vpop.xlane.xlu0 %4546
        %v4548 = vsel %vm4272, %v4464, 0.0
        %4549 = vadd.xlane.f32.xlu0 %v4548
        %v4550 = vpop.xlane.xlu0 %4549
        %v4551 = vsel %vm4272, %v4465, 0.0
        %4552 = vadd.xlane.f32.xlu0 %v4551
        %v4553 = vpop.xlane.xlu0 %4552
        %v4554 = vsel %vm4272, %v4466, 0.0
        %4555 = vadd.xlane.f32.xlu0 %v4554
        %v4556 = vpop.xlane.xlu0 %4555
        %v4557 = vsel %vm4272, %v4467, 0.0
        %4558 = vadd.xlane.f32.xlu0 %v4557
        %v4559 = vpop.xlane.xlu0 %4558
        %v4560 = vsel %vm4272, %v4468, 0.0
        %4561 = vadd.xlane.f32.xlu0 %v4560
        %v4562 = vpop.xlane.xlu0 %4561
        %v4563 = vsel %vm4272, %v4469, 0.0
        %4564 = vadd.xlane.f32.xlu0 %v4563
        %v4565 = vpop.xlane.xlu0 %4564
        %v4566 = vadd.f32 %v4472, 0.0
        %v4567 = vadd.f32 %v4475, 0.0
        %v4568 = vadd.f32 %v4478, 0.0
        %v4569 = vadd.f32 %v4481, 0.0
        %v4570 = vadd.f32 %v4484, 0.0
        %v4571 = vadd.f32 %v4487, 0.0
        %v4572 = vadd.f32 %v4490, 0.0
        %v4573 = vadd.f32 %v4493, 0.0
        %v4574 = vadd.f32 %v4496, 0.0
        %v4575 = vadd.f32 %v4499, 0.0
        %v4576 = vadd.f32 %v4502, 0.0
        %v4577 = vadd.f32 %v4505, 0.0
        %v4578 = vadd.f32 %v4508, 0.0
        %v4579 = vadd.f32 %v4511, 0.0
        %v4580 = vadd.f32 %v4514, 0.0
        %v4581 = vadd.f32 %v4517, 0.0
        %v4582 = vadd.f32 %v4520, 0.0
        %v4583 = vadd.f32 %v4523, 0.0
        %v4584 = vadd.f32 %v4526, 0.0
        %v4585 = vadd.f32 %v4529, 0.0
        %v4586 = vadd.f32 %v4532, 0.0
        %v4587 = vadd.f32 %v4535, 0.0
        %v4588 = vadd.f32 %v4538, 0.0
        %v4589 = vadd.f32 %v4541, 0.0
        %v4590 = vadd.f32 %v4544, 0.0
        %v4591 = vadd.f32 %v4547, 0.0
        %v4592 = vadd.f32 %v4550, 0.0
        %v4593 = vadd.f32 %v4553, 0.0
        %v4594 = vadd.f32 %v4556, 0.0
        %v4595 = vadd.f32 %v4559, 0.0
        %v4596 = vadd.f32 %v4562, 0.0
        %v4597 = vadd.f32 %v4565, 0.0
        %s4598 = scalar_lea.vmem [#allocation4], 128
        %v4599 = vld [vmem:[%s4598 + $0x4] sm:$0xff]
        %v4600 = vld [vmem:[%s4598 + $0xc] sm:$0xff]
        %v4601 = vld [vmem:[%s4598 + $0x24] sm:$0xff]
        %v4602 = vld [vmem:[%s4598 + $0x2c] sm:$0xff]
        %v4603 = vld [vmem:[%s4598 + $0x44] sm:$0xff]
        %v4604 = vld [vmem:[%s4598 + $0x4c] sm:$0xff]
        %v4605 = vld [vmem:[%s4598 + $0x64] sm:$0xff]
        %v4606 = vld [vmem:[%s4598 + $0x6c] sm:$0xff]
        %v4607 = vld [vmem:[%s4598 + $0x84] sm:$0xff]
        %v4608 = vld [vmem:[%s4598 + $0x8c] sm:$0xff]
        %v4609 = vld [vmem:[%s4598 + $0xa4] sm:$0xff]
        %v4610 = vld [vmem:[%s4598 + $0xac] sm:$0xff]
        %v4611 = vld [vmem:[%s4598 + $0xc4] sm:$0xff]
        %v4612 = vld [vmem:[%s4598 + $0xcc] sm:$0xff]
        %v4613 = vld [vmem:[%s4598 + $0xe4] sm:$0xff]
        %v4614 = vld [vmem:[%s4598 + $0xec] sm:$0xff]
        %v4615 = vld [vmem:[%s4598 + $0x104] sm:$0xff]
        %v4616 = vld [vmem:[%s4598 + $0x10c] sm:$0xff]
        %v4617 = vld [vmem:[%s4598 + $0x124] sm:$0xff]
        %v4618 = vld [vmem:[%s4598 + $0x12c] sm:$0xff]
        %v4619 = vld [vmem:[%s4598 + $0x144] sm:$0xff]
        %v4620 = vld [vmem:[%s4598 + $0x14c] sm:$0xff]
        %v4621 = vld [vmem:[%s4598 + $0x164] sm:$0xff]
        %v4622 = vld [vmem:[%s4598 + $0x16c] sm:$0xff]
        %v4623 = vld [vmem:[%s4598 + $0x184] sm:$0xff]
        %v4624 = vld [vmem:[%s4598 + $0x18c] sm:$0xff]
        %v4625 = vld [vmem:[%s4598 + $0x1a4] sm:$0xff]
        %v4626 = vld [vmem:[%s4598 + $0x1ac] sm:$0xff]
        %v4627 = vld [vmem:[%s4598 + $0x1c4] sm:$0xff]
        %v4628 = vld [vmem:[%s4598 + $0x1cc] sm:$0xff]
        %v4629 = vld [vmem:[%s4598 + $0x1e4] sm:$0xff]
        %v4630 = vld [vmem:[%s4598 + $0x1ec] sm:$0xff]
        %v4631 = vld [vmem:[%s7] sm:$0x1]
        %v4632 = vlaneseq
        %v4633 = vshrl.u32 %v4632, 7
        %v4634 = vsub.s32 0, %v4633
        %v4635 = vrot.slane %v4631, %v4634
        %v4636 = vmul.f32 %v4599, %v4635
        %v4637 = vmul.f32 %v4600, %v4635
        %v4638 = vmul.f32 %v4601, %v4635
        %v4639 = vmul.f32 %v4602, %v4635
        %v4640 = vmul.f32 %v4603, %v4635
        %v4641 = vmul.f32 %v4604, %v4635
        %v4642 = vmul.f32 %v4605, %v4635
        %v4643 = vmul.f32 %v4606, %v4635
        %v4644 = vmul.f32 %v4607, %v4635
        %v4645 = vmul.f32 %v4608, %v4635
        %v4646 = vmul.f32 %v4609, %v4635
        %v4647 = vmul.f32 %v4610, %v4635
        %v4648 = vmul.f32 %v4611, %v4635
        %v4649 = vmul.f32 %v4612, %v4635
        %v4650 = vmul.f32 %v4613, %v4635
        %v4651 = vmul.f32 %v4614, %v4635
        %v4652 = vmul.f32 %v4615, %v4635
        %v4653 = vmul.f32 %v4616, %v4635
        %v4654 = vmul.f32 %v4617, %v4635
        %v4655 = vmul.f32 %v4618, %v4635
        %v4656 = vmul.f32 %v4619, %v4635
        %v4657 = vmul.f32 %v4620, %v4635
        %v4658 = vmul.f32 %v4621, %v4635
        %v4659 = vmul.f32 %v4622, %v4635
        %v4660 = vmul.f32 %v4623, %v4635
        %v4661 = vmul.f32 %v4624, %v4635
        %v4662 = vmul.f32 %v4625, %v4635
        %v4663 = vmul.f32 %v4626, %v4635
        %v4664 = vmul.f32 %v4627, %v4635
        %v4665 = vmul.f32 %v4628, %v4635
        %v4666 = vmul.f32 %v4629, %v4635
        %v4667 = vmul.f32 %v4630, %v4635
        %v4668 = vsel %vm4272, %v4636, 0.0
        %4669 = vadd.xlane.f32.xlu0 %v4668
        %v4670 = vpop.xlane.xlu0 %4669
        %v4671 = vsel %vm4272, %v4637, 0.0
        %4672 = vadd.xlane.f32.xlu0 %v4671
        %v4673 = vpop.xlane.xlu0 %4672
        %v4674 = vsel %vm4272, %v4638, 0.0
        %4675 = vadd.xlane.f32.xlu0 %v4674
        %v4676 = vpop.xlane.xlu0 %4675
        %v4677 = vsel %vm4272, %v4639, 0.0
        %4678 = vadd.xlane.f32.xlu0 %v4677
        %v4679 = vpop.xlane.xlu0 %4678
        %v4680 = vsel %vm4272, %v4640, 0.0
        %4681 = vadd.xlane.f32.xlu0 %v4680
        %v4682 = vpop.xlane.xlu0 %4681
        %v4683 = vsel %vm4272, %v4641, 0.0
        %4684 = vadd.xlane.f32.xlu0 %v4683
        %v4685 = vpop.xlane.xlu0 %4684
        %v4686 = vsel %vm4272, %v4642, 0.0
        %4687 = vadd.xlane.f32.xlu0 %v4686
        %v4688 = vpop.xlane.xlu0 %4687
        %v4689 = vsel %vm4272, %v4643, 0.0
        %4690 = vadd.xlane.f32.xlu0 %v4689
        %v4691 = vpop.xlane.xlu0 %4690
        %v4692 = vsel %vm4272, %v4644, 0.0
        %4693 = vadd.xlane.f32.xlu0 %v4692
        %v4694 = vpop.xlane.xlu0 %4693
        %v4695 = vsel %vm4272, %v4645, 0.0
        %4696 = vadd.xlane.f32.xlu0 %v4695
        %v4697 = vpop.xlane.xlu0 %4696
        %v4698 = vsel %vm4272, %v4646, 0.0
        %4699 = vadd.xlane.f32.xlu0 %v4698
        %v4700 = vpop.xlane.xlu0 %4699
        %v4701 = vsel %vm4272, %v4647, 0.0
        %4702 = vadd.xlane.f32.xlu0 %v4701
        %v4703 = vpop.xlane.xlu0 %4702
        %v4704 = vsel %vm4272, %v4648, 0.0
        %4705 = vadd.xlane.f32.xlu0 %v4704
        %v4706 = vpop.xlane.xlu0 %4705
        %v4707 = vsel %vm4272, %v4649, 0.0
        %4708 = vadd.xlane.f32.xlu0 %v4707
        %v4709 = vpop.xlane.xlu0 %4708
        %v4710 = vsel %vm4272, %v4650, 0.0
        %4711 = vadd.xlane.f32.xlu0 %v4710
        %v4712 = vpop.xlane.xlu0 %4711
        %v4713 = vsel %vm4272, %v4651, 0.0
        %4714 = vadd.xlane.f32.xlu0 %v4713
        %v4715 = vpop.xlane.xlu0 %4714
        %v4716 = vsel %vm4272, %v4652, 0.0
        %4717 = vadd.xlane.f32.xlu0 %v4716
        %v4718 = vpop.xlane.xlu0 %4717
        %v4719 = vsel %vm4272, %v4653, 0.0
        %4720 = vadd.xlane.f32.xlu0 %v4719
        %v4721 = vpop.xlane.xlu0 %4720
        %v4722 = vsel %vm4272, %v4654, 0.0
        %4723 = vadd.xlane.f32.xlu0 %v4722
        %v4724 = vpop.xlane.xlu0 %4723
        %v4725 = vsel %vm4272, %v4655, 0.0
        %4726 = vadd.xlane.f32.xlu0 %v4725
        %v4727 = vpop.xlane.xlu0 %4726
        %v4728 = vsel %vm4272, %v4656, 0.0
        %4729 = vadd.xlane.f32.xlu0 %v4728
        %v4730 = vpop.xlane.xlu0 %4729
        %v4731 = vsel %vm4272, %v4657, 0.0
        %4732 = vadd.xlane.f32.xlu0 %v4731
        %v4733 = vpop.xlane.xlu0 %4732
        %v4734 = vsel %vm4272, %v4658, 0.0
        %4735 = vadd.xlane.f32.xlu0 %v4734
        %v4736 = vpop.xlane.xlu0 %4735
        %v4737 = vsel %vm4272, %v4659, 0.0
        %4738 = vadd.xlane.f32.xlu0 %v4737
        %v4739 = vpop.xlane.xlu0 %4738
        %v4740 = vsel %vm4272, %v4660, 0.0
        %4741 = vadd.xlane.f32.xlu0 %v4740
        %v4742 = vpop.xlane.xlu0 %4741
        %v4743 = vsel %vm4272, %v4661, 0.0
        %4744 = vadd.xlane.f32.xlu0 %v4743
        %v4745 = vpop.xlane.xlu0 %4744
        %v4746 = vsel %vm4272, %v4662, 0.0
        %4747 = vadd.xlane.f32.xlu0 %v4746
        %v4748 = vpop.xlane.xlu0 %4747
        %v4749 = vsel %vm4272, %v4663, 0.0
        %4750 = vadd.xlane.f32.xlu0 %v4749
        %v4751 = vpop.xlane.xlu0 %4750
        %v4752 = vsel %vm4272, %v4664, 0.0
        %4753 = vadd.xlane.f32.xlu0 %v4752
        %v4754 = vpop.xlane.xlu0 %4753
        %v4755 = vsel %vm4272, %v4665, 0.0
        %4756 = vadd.xlane.f32.xlu0 %v4755
        %v4757 = vpop.xlane.xlu0 %4756
        %v4758 = vsel %vm4272, %v4666, 0.0
        %4759 = vadd.xlane.f32.xlu0 %v4758
        %v4760 = vpop.xlane.xlu0 %4759
        %v4761 = vsel %vm4272, %v4667, 0.0
        %4762 = vadd.xlane.f32.xlu0 %v4761
        %v4763 = vpop.xlane.xlu0 %4762
        %v4764 = vadd.f32 %v4566, %v4670
        %v4765 = vadd.f32 %v4567, %v4673
        %v4766 = vadd.f32 %v4568, %v4676
        %v4767 = vadd.f32 %v4569, %v4679
        %v4768 = vadd.f32 %v4570, %v4682
        %v4769 = vadd.f32 %v4571, %v4685
        %v4770 = vadd.f32 %v4572, %v4688
        %v4771 = vadd.f32 %v4573, %v4691
        %v4772 = vadd.f32 %v4574, %v4694
        %v4773 = vadd.f32 %v4575, %v4697
        %v4774 = vadd.f32 %v4576, %v4700
        %v4775 = vadd.f32 %v4577, %v4703
        %v4776 = vadd.f32 %v4578, %v4706
        %v4777 = vadd.f32 %v4579, %v4709
        %v4778 = vadd.f32 %v4580, %v4712
        %v4779 = vadd.f32 %v4581, %v4715
        %v4780 = vadd.f32 %v4582, %v4718
        %v4781 = vadd.f32 %v4583, %v4721
        %v4782 = vadd.f32 %v4584, %v4724
        %v4783 = vadd.f32 %v4585, %v4727
        %v4784 = vadd.f32 %v4586, %v4730
        %v4785 = vadd.f32 %v4587, %v4733
        %v4786 = vadd.f32 %v4588, %v4736
        %v4787 = vadd.f32 %v4589, %v4739
        %v4788 = vadd.f32 %v4590, %v4742
        %v4789 = vadd.f32 %v4591, %v4745
        %v4790 = vadd.f32 %v4592, %v4748
        %v4791 = vadd.f32 %v4593, %v4751
        %v4792 = vadd.f32 %v4594, %v4754
        %v4793 = vadd.f32 %v4595, %v4757
        %v4794 = vadd.f32 %v4596, %v4760
        %v4795 = vadd.f32 %v4597, %v4763
        %s4796 = scalar_lea.vmem [#allocation3], 24
        %v4797 = vld [vmem:[%s4796 + $0x1] sm:$0xff]
        %v4798 = vld [vmem:[%s4796 + $0x9] sm:$0xff]
        %v4799 = vld [vmem:[%s4796 + $0x19] sm:$0xff]
        %v4800 = vld [vmem:[%s4796 + $0x21] sm:$0xff]
        %v4801 = vld [vmem:[%s4796 + $0x31] sm:$0xff]
        %v4802 = vld [vmem:[%s4796 + $0x39] sm:$0xff]
        %v4803 = vld [vmem:[%s4796 + $0x49] sm:$0xff]
        %v4804 = vld [vmem:[%s4796 + $0x51] sm:$0xff]
        %v4805 = vld [vmem:[%s4796 + $0x61] sm:$0xff]
        %v4806 = vld [vmem:[%s4796 + $0x69] sm:$0xff]
        %v4807 = vld [vmem:[%s4796 + $0x79] sm:$0xff]
        %v4808 = vld [vmem:[%s4796 + $0x81] sm:$0xff]
        %v4809 = vld [vmem:[%s4796 + $0x91] sm:$0xff]
        %v4810 = vld [vmem:[%s4796 + $0x99] sm:$0xff]
        %v4811 = vld [vmem:[%s4796 + $0xa9] sm:$0xff]
        %v4812 = vld [vmem:[%s4796 + $0xb1] sm:$0xff]
        %v4813 = vld [vmem:[%s4796 + $0xc1] sm:$0xff]
        %v4814 = vld [vmem:[%s4796 + $0xc9] sm:$0xff]
        %v4815 = vld [vmem:[%s4796 + $0xd9] sm:$0xff]
        %v4816 = vld [vmem:[%s4796 + $0xe1] sm:$0xff]
        %v4817 = vld [vmem:[%s4796 + $0xf1] sm:$0xff]
        %v4818 = vld [vmem:[%s4796 + $0xf9] sm:$0xff]
        %v4819 = vld [vmem:[%s4796 + $0x109] sm:$0xff]
        %v4820 = vld [vmem:[%s4796 + $0x111] sm:$0xff]
        %v4821 = vld [vmem:[%s4796 + $0x121] sm:$0xff]
        %v4822 = vld [vmem:[%s4796 + $0x129] sm:$0xff]
        %v4823 = vld [vmem:[%s4796 + $0x139] sm:$0xff]
        %v4824 = vld [vmem:[%s4796 + $0x141] sm:$0xff]
        %v4825 = vld [vmem:[%s4796 + $0x151] sm:$0xff]
        %v4826 = vld [vmem:[%s4796 + $0x159] sm:$0xff]
        %v4827 = vld [vmem:[%s4796 + $0x169] sm:$0xff]
        %v4828 = vld [vmem:[%s4796 + $0x171] sm:$0xff]
        %v4829 = vld [vmem:[%s6] sm:$0x1]
        %v4830 = vlaneseq
        %v4831 = vshrl.u32 %v4830, 7
        %v4832 = vsub.s32 0, %v4831
        %v4833 = vrot.slane %v4829, %v4832
        %v4834 = vmul.f32 %v4797, %v4833
        %v4835 = vmul.f32 %v4798, %v4833
        %v4836 = vmul.f32 %v4799, %v4833
        %v4837 = vmul.f32 %v4800, %v4833
        %v4838 = vmul.f32 %v4801, %v4833
        %v4839 = vmul.f32 %v4802, %v4833
        %v4840 = vmul.f32 %v4803, %v4833
        %v4841 = vmul.f32 %v4804, %v4833
        %v4842 = vmul.f32 %v4805, %v4833
        %v4843 = vmul.f32 %v4806, %v4833
        %v4844 = vmul.f32 %v4807, %v4833
        %v4845 = vmul.f32 %v4808, %v4833
        %v4846 = vmul.f32 %v4809, %v4833
        %v4847 = vmul.f32 %v4810, %v4833
        %v4848 = vmul.f32 %v4811, %v4833
        %v4849 = vmul.f32 %v4812, %v4833
        %v4850 = vmul.f32 %v4813, %v4833
        %v4851 = vmul.f32 %v4814, %v4833
        %v4852 = vmul.f32 %v4815, %v4833
        %v4853 = vmul.f32 %v4816, %v4833
        %v4854 = vmul.f32 %v4817, %v4833
        %v4855 = vmul.f32 %v4818, %v4833
        %v4856 = vmul.f32 %v4819, %v4833
        %v4857 = vmul.f32 %v4820, %v4833
        %v4858 = vmul.f32 %v4821, %v4833
        %v4859 = vmul.f32 %v4822, %v4833
        %v4860 = vmul.f32 %v4823, %v4833
        %v4861 = vmul.f32 %v4824, %v4833
        %v4862 = vmul.f32 %v4825, %v4833
        %v4863 = vmul.f32 %v4826, %v4833
        %v4864 = vmul.f32 %v4827, %v4833
        %v4865 = vmul.f32 %v4828, %v4833
        %v4866 = vsel %vm2364, %v4834, 0.0
        %4867 = vadd.xlane.f32.xlu0 %v4866
        %v4868 = vpop.xlane.xlu0 %4867
        %v4869 = vsel %vm2364, %v4835, 0.0
        %4870 = vadd.xlane.f32.xlu0 %v4869
        %v4871 = vpop.xlane.xlu0 %4870
        %v4872 = vsel %vm2364, %v4836, 0.0
        %4873 = vadd.xlane.f32.xlu0 %v4872
        %v4874 = vpop.xlane.xlu0 %4873
        %v4875 = vsel %vm2364, %v4837, 0.0
        %4876 = vadd.xlane.f32.xlu0 %v4875
        %v4877 = vpop.xlane.xlu0 %4876
        %v4878 = vsel %vm2364, %v4838, 0.0
        %4879 = vadd.xlane.f32.xlu0 %v4878
        %v4880 = vpop.xlane.xlu0 %4879
        %v4881 = vsel %vm2364, %v4839, 0.0
        %4882 = vadd.xlane.f32.xlu0 %v4881
        %v4883 = vpop.xlane.xlu0 %4882
        %v4884 = vsel %vm2364, %v4840, 0.0
        %4885 = vadd.xlane.f32.xlu0 %v4884
        %v4886 = vpop.xlane.xlu0 %4885
        %v4887 = vsel %vm2364, %v4841, 0.0
        %4888 = vadd.xlane.f32.xlu0 %v4887
        %v4889 = vpop.xlane.xlu0 %4888
        %v4890 = vsel %vm2364, %v4842, 0.0
        %4891 = vadd.xlane.f32.xlu0 %v4890
        %v4892 = vpop.xlane.xlu0 %4891
        %v4893 = vsel %vm2364, %v4843, 0.0
        %4894 = vadd.xlane.f32.xlu0 %v4893
        %v4895 = vpop.xlane.xlu0 %4894
        %v4896 = vsel %vm2364, %v4844, 0.0
        %4897 = vadd.xlane.f32.xlu0 %v4896
        %v4898 = vpop.xlane.xlu0 %4897
        %v4899 = vsel %vm2364, %v4845, 0.0
        %4900 = vadd.xlane.f32.xlu0 %v4899
        %v4901 = vpop.xlane.xlu0 %4900
        %v4902 = vsel %vm2364, %v4846, 0.0
        %4903 = vadd.xlane.f32.xlu0 %v4902
        %v4904 = vpop.xlane.xlu0 %4903
        %v4905 = vsel %vm2364, %v4847, 0.0
        %4906 = vadd.xlane.f32.xlu0 %v4905
        %v4907 = vpop.xlane.xlu0 %4906
        %v4908 = vsel %vm2364, %v4848, 0.0
        %4909 = vadd.xlane.f32.xlu0 %v4908
        %v4910 = vpop.xlane.xlu0 %4909
        %v4911 = vsel %vm2364, %v4849, 0.0
        %4912 = vadd.xlane.f32.xlu0 %v4911
        %v4913 = vpop.xlane.xlu0 %4912
        %v4914 = vsel %vm2364, %v4850, 0.0
        %4915 = vadd.xlane.f32.xlu0 %v4914
        %v4916 = vpop.xlane.xlu0 %4915
        %v4917 = vsel %vm2364, %v4851, 0.0
        %4918 = vadd.xlane.f32.xlu0 %v4917
        %v4919 = vpop.xlane.xlu0 %4918
        %v4920 = vsel %vm2364, %v4852, 0.0
        %4921 = vadd.xlane.f32.xlu0 %v4920
        %v4922 = vpop.xlane.xlu0 %4921
        %v4923 = vsel %vm2364, %v4853, 0.0
        %4924 = vadd.xlane.f32.xlu0 %v4923
        %v4925 = vpop.xlane.xlu0 %4924
        %v4926 = vsel %vm2364, %v4854, 0.0
        %4927 = vadd.xlane.f32.xlu0 %v4926
        %v4928 = vpop.xlane.xlu0 %4927
        %v4929 = vsel %vm2364, %v4855, 0.0
        %4930 = vadd.xlane.f32.xlu0 %v4929
        %v4931 = vpop.xlane.xlu0 %4930
        %v4932 = vsel %vm2364, %v4856, 0.0
        %4933 = vadd.xlane.f32.xlu0 %v4932
        %v4934 = vpop.xlane.xlu0 %4933
        %v4935 = vsel %vm2364, %v4857, 0.0
        %4936 = vadd.xlane.f32.xlu0 %v4935
        %v4937 = vpop.xlane.xlu0 %4936
        %v4938 = vsel %vm2364, %v4858, 0.0
        %4939 = vadd.xlane.f32.xlu0 %v4938
        %v4940 = vpop.xlane.xlu0 %4939
        %v4941 = vsel %vm2364, %v4859, 0.0
        %4942 = vadd.xlane.f32.xlu0 %v4941
        %v4943 = vpop.xlane.xlu0 %4942
        %v4944 = vsel %vm2364, %v4860, 0.0
        %4945 = vadd.xlane.f32.xlu0 %v4944
        %v4946 = vpop.xlane.xlu0 %4945
        %v4947 = vsel %vm2364, %v4861, 0.0
        %4948 = vadd.xlane.f32.xlu0 %v4947
        %v4949 = vpop.xlane.xlu0 %4948
        %v4950 = vsel %vm2364, %v4862, 0.0
        %4951 = vadd.xlane.f32.xlu0 %v4950
        %v4952 = vpop.xlane.xlu0 %4951
        %v4953 = vsel %vm2364, %v4863, 0.0
        %4954 = vadd.xlane.f32.xlu0 %v4953
        %v4955 = vpop.xlane.xlu0 %4954
        %v4956 = vsel %vm2364, %v4864, 0.0
        %4957 = vadd.xlane.f32.xlu0 %v4956
        %v4958 = vpop.xlane.xlu0 %4957
        %v4959 = vsel %vm2364, %v4865, 0.0
        %4960 = vadd.xlane.f32.xlu0 %v4959
        %v4961 = vpop.xlane.xlu0 %4960
        %v4962 = vadd.f32 %v4764, %v4868
        %v4963 = vadd.f32 %v4765, %v4871
        %v4964 = vadd.f32 %v4766, %v4874
        %v4965 = vadd.f32 %v4767, %v4877
        %v4966 = vadd.f32 %v4768, %v4880
        %v4967 = vadd.f32 %v4769, %v4883
        %v4968 = vadd.f32 %v4770, %v4886
        %v4969 = vadd.f32 %v4771, %v4889
        %v4970 = vadd.f32 %v4772, %v4892
        %v4971 = vadd.f32 %v4773, %v4895
        %v4972 = vadd.f32 %v4774, %v4898
        %v4973 = vadd.f32 %v4775, %v4901
        %v4974 = vadd.f32 %v4776, %v4904
        %v4975 = vadd.f32 %v4777, %v4907
        %v4976 = vadd.f32 %v4778, %v4910
        %v4977 = vadd.f32 %v4779, %v4913
        %v4978 = vadd.f32 %v4780, %v4916
        %v4979 = vadd.f32 %v4781, %v4919
        %v4980 = vadd.f32 %v4782, %v4922
        %v4981 = vadd.f32 %v4783, %v4925
        %v4982 = vadd.f32 %v4784, %v4928
        %v4983 = vadd.f32 %v4785, %v4931
        %v4984 = vadd.f32 %v4786, %v4934
        %v4985 = vadd.f32 %v4787, %v4937
        %v4986 = vadd.f32 %v4788, %v4940
        %v4987 = vadd.f32 %v4789, %v4943
        %v4988 = vadd.f32 %v4790, %v4946
        %v4989 = vadd.f32 %v4791, %v4949
        %v4990 = vadd.f32 %v4792, %v4952
        %v4991 = vadd.f32 %v4793, %v4955
        %v4992 = vadd.f32 %v4794, %v4958
        %v4993 = vadd.f32 %v4795, %v4961
        %v4994 = vld [vmem:[#allocation4 + $0x5] sm:$0xff]
        %v4995 = vld [vmem:[#allocation4 + $0xd] sm:$0xff]
        %v4996 = vld [vmem:[#allocation4 + $0x25] sm:$0xff]
        %v4997 = vld [vmem:[#allocation4 + $0x2d] sm:$0xff]
        %v4998 = vld [vmem:[#allocation4 + $0x45] sm:$0xff]
        %v4999 = vld [vmem:[#allocation4 + $0x4d] sm:$0xff]
        %v5000 = vld [vmem:[#allocation4 + $0x65] sm:$0xff]
        %v5001 = vld [vmem:[#allocation4 + $0x6d] sm:$0xff]
        %v5002 = vld [vmem:[#allocation4 + $0x85] sm:$0xff]
        %v5003 = vld [vmem:[#allocation4 + $0x8d] sm:$0xff]
        %v5004 = vld [vmem:[#allocation4 + $0xa5] sm:$0xff]
        %v5005 = vld [vmem:[#allocation4 + $0xad] sm:$0xff]
        %v5006 = vld [vmem:[#allocation4 + $0xc5] sm:$0xff]
        %v5007 = vld [vmem:[#allocation4 + $0xcd] sm:$0xff]
        %v5008 = vld [vmem:[#allocation4 + $0xe5] sm:$0xff]
        %v5009 = vld [vmem:[#allocation4 + $0xed] sm:$0xff]
        %v5010 = vld [vmem:[#allocation4 + $0x105] sm:$0xff]
        %v5011 = vld [vmem:[#allocation4 + $0x10d] sm:$0xff]
        %v5012 = vld [vmem:[#allocation4 + $0x125] sm:$0xff]
        %v5013 = vld [vmem:[#allocation4 + $0x12d] sm:$0xff]
        %v5014 = vld [vmem:[#allocation4 + $0x145] sm:$0xff]
        %v5015 = vld [vmem:[#allocation4 + $0x14d] sm:$0xff]
        %v5016 = vld [vmem:[#allocation4 + $0x165] sm:$0xff]
        %v5017 = vld [vmem:[#allocation4 + $0x16d] sm:$0xff]
        %v5018 = vld [vmem:[#allocation4 + $0x185] sm:$0xff]
        %v5019 = vld [vmem:[#allocation4 + $0x18d] sm:$0xff]
        %v5020 = vld [vmem:[#allocation4 + $0x1a5] sm:$0xff]
        %v5021 = vld [vmem:[#allocation4 + $0x1ad] sm:$0xff]
        %v5022 = vld [vmem:[#allocation4 + $0x1c5] sm:$0xff]
        %v5023 = vld [vmem:[#allocation4 + $0x1cd] sm:$0xff]
        %v5024 = vld [vmem:[#allocation4 + $0x1e5] sm:$0xff]
        %v5025 = vld [vmem:[#allocation4 + $0x1ed] sm:$0xff]
        %v5026 = vld [vmem:[%s5 + $0x1] sm:$0x1]
        %v5027 = vlaneseq
        %v5028 = vshrl.u32 %v5027, 7
        %v5029 = vsub.s32 0, %v5028
        %v5030 = vrot.slane %v5026, %v5029
        %v5031 = vmul.f32 %v4994, %v5030
        %v5032 = vmul.f32 %v4995, %v5030
        %v5033 = vmul.f32 %v4996, %v5030
        %v5034 = vmul.f32 %v4997, %v5030
        %v5035 = vmul.f32 %v4998, %v5030
        %v5036 = vmul.f32 %v4999, %v5030
        %v5037 = vmul.f32 %v5000, %v5030
        %v5038 = vmul.f32 %v5001, %v5030
        %v5039 = vmul.f32 %v5002, %v5030
        %v5040 = vmul.f32 %v5003, %v5030
        %v5041 = vmul.f32 %v5004, %v5030
        %v5042 = vmul.f32 %v5005, %v5030
        %v5043 = vmul.f32 %v5006, %v5030
        %v5044 = vmul.f32 %v5007, %v5030
        %v5045 = vmul.f32 %v5008, %v5030
        %v5046 = vmul.f32 %v5009, %v5030
        %v5047 = vmul.f32 %v5010, %v5030
        %v5048 = vmul.f32 %v5011, %v5030
        %v5049 = vmul.f32 %v5012, %v5030
        %v5050 = vmul.f32 %v5013, %v5030
        %v5051 = vmul.f32 %v5014, %v5030
        %v5052 = vmul.f32 %v5015, %v5030
        %v5053 = vmul.f32 %v5016, %v5030
        %v5054 = vmul.f32 %v5017, %v5030
        %v5055 = vmul.f32 %v5018, %v5030
        %v5056 = vmul.f32 %v5019, %v5030
        %v5057 = vmul.f32 %v5020, %v5030
        %v5058 = vmul.f32 %v5021, %v5030
        %v5059 = vmul.f32 %v5022, %v5030
        %v5060 = vmul.f32 %v5023, %v5030
        %v5061 = vmul.f32 %v5024, %v5030
        %v5062 = vmul.f32 %v5025, %v5030
        %v5063 = vsel %vm4272, %v5031, 0.0
        %5064 = vadd.xlane.f32.xlu0 %v5063
        %v5065 = vpop.xlane.xlu0 %5064
        %v5066 = vsel %vm4272, %v5032, 0.0
        %5067 = vadd.xlane.f32.xlu0 %v5066
        %v5068 = vpop.xlane.xlu0 %5067
        %v5069 = vsel %vm4272, %v5033, 0.0
        %5070 = vadd.xlane.f32.xlu0 %v5069
        %v5071 = vpop.xlane.xlu0 %5070
        %v5072 = vsel %vm4272, %v5034, 0.0
        %5073 = vadd.xlane.f32.xlu0 %v5072
        %v5074 = vpop.xlane.xlu0 %5073
        %v5075 = vsel %vm4272, %v5035, 0.0
        %5076 = vadd.xlane.f32.xlu0 %v5075
        %v5077 = vpop.xlane.xlu0 %5076
        %v5078 = vsel %vm4272, %v5036, 0.0
        %5079 = vadd.xlane.f32.xlu0 %v5078
        %v5080 = vpop.xlane.xlu0 %5079
        %v5081 = vsel %vm4272, %v5037, 0.0
        %5082 = vadd.xlane.f32.xlu0 %v5081
        %v5083 = vpop.xlane.xlu0 %5082
        %v5084 = vsel %vm4272, %v5038, 0.0
        %5085 = vadd.xlane.f32.xlu0 %v5084
        %v5086 = vpop.xlane.xlu0 %5085
        %v5087 = vsel %vm4272, %v5039, 0.0
        %5088 = vadd.xlane.f32.xlu0 %v5087
        %v5089 = vpop.xlane.xlu0 %5088
        %v5090 = vsel %vm4272, %v5040, 0.0
        %5091 = vadd.xlane.f32.xlu0 %v5090
        %v5092 = vpop.xlane.xlu0 %5091
        %v5093 = vsel %vm4272, %v5041, 0.0
        %5094 = vadd.xlane.f32.xlu0 %v5093
        %v5095 = vpop.xlane.xlu0 %5094
        %v5096 = vsel %vm4272, %v5042, 0.0
        %5097 = vadd.xlane.f32.xlu0 %v5096
        %v5098 = vpop.xlane.xlu0 %5097
        %v5099 = vsel %vm4272, %v5043, 0.0
        %5100 = vadd.xlane.f32.xlu0 %v5099
        %v5101 = vpop.xlane.xlu0 %5100
        %v5102 = vsel %vm4272, %v5044, 0.0
        %5103 = vadd.xlane.f32.xlu0 %v5102
        %v5104 = vpop.xlane.xlu0 %5103
        %v5105 = vsel %vm4272, %v5045, 0.0
        %5106 = vadd.xlane.f32.xlu0 %v5105
        %v5107 = vpop.xlane.xlu0 %5106
        %v5108 = vsel %vm4272, %v5046, 0.0
        %5109 = vadd.xlane.f32.xlu0 %v5108
        %v5110 = vpop.xlane.xlu0 %5109
        %v5111 = vsel %vm4272, %v5047, 0.0
        %5112 = vadd.xlane.f32.xlu0 %v5111
        %v5113 = vpop.xlane.xlu0 %5112
        %v5114 = vsel %vm4272, %v5048, 0.0
        %5115 = vadd.xlane.f32.xlu0 %v5114
        %v5116 = vpop.xlane.xlu0 %5115
        %v5117 = vsel %vm4272, %v5049, 0.0
        %5118 = vadd.xlane.f32.xlu0 %v5117
        %v5119 = vpop.xlane.xlu0 %5118
        %v5120 = vsel %vm4272, %v5050, 0.0
        %5121 = vadd.xlane.f32.xlu0 %v5120
        %v5122 = vpop.xlane.xlu0 %5121
        %v5123 = vsel %vm4272, %v5051, 0.0
        %5124 = vadd.xlane.f32.xlu0 %v5123
        %v5125 = vpop.xlane.xlu0 %5124
        %v5126 = vsel %vm4272, %v5052, 0.0
        %5127 = vadd.xlane.f32.xlu0 %v5126
        %v5128 = vpop.xlane.xlu0 %5127
        %v5129 = vsel %vm4272, %v5053, 0.0
        %5130 = vadd.xlane.f32.xlu0 %v5129
        %v5131 = vpop.xlane.xlu0 %5130
        %v5132 = vsel %vm4272, %v5054, 0.0
        %5133 = vadd.xlane.f32.xlu0 %v5132
        %v5134 = vpop.xlane.xlu0 %5133
        %v5135 = vsel %vm4272, %v5055, 0.0
        %5136 = vadd.xlane.f32.xlu0 %v5135
        %v5137 = vpop.xlane.xlu0 %5136
        %v5138 = vsel %vm4272, %v5056, 0.0
        %5139 = vadd.xlane.f32.xlu0 %v5138
        %v5140 = vpop.xlane.xlu0 %5139
        %v5141 = vsel %vm4272, %v5057, 0.0
        %5142 = vadd.xlane.f32.xlu0 %v5141
        %v5143 = vpop.xlane.xlu0 %5142
        %v5144 = vsel %vm4272, %v5058, 0.0
        %5145 = vadd.xlane.f32.xlu0 %v5144
        %v5146 = vpop.xlane.xlu0 %5145
        %v5147 = vsel %vm4272, %v5059, 0.0
        %5148 = vadd.xlane.f32.xlu0 %v5147
        %v5149 = vpop.xlane.xlu0 %5148
        %v5150 = vsel %vm4272, %v5060, 0.0
        %5151 = vadd.xlane.f32.xlu0 %v5150
        %v5152 = vpop.xlane.xlu0 %5151
        %v5153 = vsel %vm4272, %v5061, 0.0
        %5154 = vadd.xlane.f32.xlu0 %v5153
        %v5155 = vpop.xlane.xlu0 %5154
        %v5156 = vsel %vm4272, %v5062, 0.0
        %5157 = vadd.xlane.f32.xlu0 %v5156
        %v5158 = vpop.xlane.xlu0 %5157
        %v5159 = vadd.f32 %v4962, %v5065
        %v5160 = vadd.f32 %v4963, %v5068
        %v5161 = vadd.f32 %v4964, %v5071
        %v5162 = vadd.f32 %v4965, %v5074
        %v5163 = vadd.f32 %v4966, %v5077
        %v5164 = vadd.f32 %v4967, %v5080
        %v5165 = vadd.f32 %v4968, %v5083
        %v5166 = vadd.f32 %v4969, %v5086
        %v5167 = vadd.f32 %v4970, %v5089
        %v5168 = vadd.f32 %v4971, %v5092
        %v5169 = vadd.f32 %v4972, %v5095
        %v5170 = vadd.f32 %v4973, %v5098
        %v5171 = vadd.f32 %v4974, %v5101
        %v5172 = vadd.f32 %v4975, %v5104
        %v5173 = vadd.f32 %v4976, %v5107
        %v5174 = vadd.f32 %v4977, %v5110
        %v5175 = vadd.f32 %v4978, %v5113
        %v5176 = vadd.f32 %v4979, %v5116
        %v5177 = vadd.f32 %v4980, %v5119
        %v5178 = vadd.f32 %v4981, %v5122
        %v5179 = vadd.f32 %v4982, %v5125
        %v5180 = vadd.f32 %v4983, %v5128
        %v5181 = vadd.f32 %v4984, %v5131
        %v5182 = vadd.f32 %v4985, %v5134
        %v5183 = vadd.f32 %v4986, %v5137
        %v5184 = vadd.f32 %v4987, %v5140
        %v5185 = vadd.f32 %v4988, %v5143
        %v5186 = vadd.f32 %v4989, %v5146
        %v5187 = vadd.f32 %v4990, %v5149
        %v5188 = vadd.f32 %v4991, %v5152
        %v5189 = vadd.f32 %v4992, %v5155
        %v5190 = vadd.f32 %v4993, %v5158
        %v5191 = vld [vmem:[%s4598 + $0x5] sm:$0xff]
        %v5192 = vld [vmem:[%s4598 + $0xd] sm:$0xff]
        %v5193 = vld [vmem:[%s4598 + $0x25] sm:$0xff]
        %v5194 = vld [vmem:[%s4598 + $0x2d] sm:$0xff]
        %v5195 = vld [vmem:[%s4598 + $0x45] sm:$0xff]
        %v5196 = vld [vmem:[%s4598 + $0x4d] sm:$0xff]
        %v5197 = vld [vmem:[%s4598 + $0x65] sm:$0xff]
        %v5198 = vld [vmem:[%s4598 + $0x6d] sm:$0xff]
        %v5199 = vld [vmem:[%s4598 + $0x85] sm:$0xff]
        %v5200 = vld [vmem:[%s4598 + $0x8d] sm:$0xff]
        %v5201 = vld [vmem:[%s4598 + $0xa5] sm:$0xff]
        %v5202 = vld [vmem:[%s4598 + $0xad] sm:$0xff]
        %v5203 = vld [vmem:[%s4598 + $0xc5] sm:$0xff]
        %v5204 = vld [vmem:[%s4598 + $0xcd] sm:$0xff]
        %v5205 = vld [vmem:[%s4598 + $0xe5] sm:$0xff]
        %v5206 = vld [vmem:[%s4598 + $0xed] sm:$0xff]
        %v5207 = vld [vmem:[%s4598 + $0x105] sm:$0xff]
        %v5208 = vld [vmem:[%s4598 + $0x10d] sm:$0xff]
        %v5209 = vld [vmem:[%s4598 + $0x125] sm:$0xff]
        %v5210 = vld [vmem:[%s4598 + $0x12d] sm:$0xff]
        %v5211 = vld [vmem:[%s4598 + $0x145] sm:$0xff]
        %v5212 = vld [vmem:[%s4598 + $0x14d] sm:$0xff]
        %v5213 = vld [vmem:[%s4598 + $0x165] sm:$0xff]
        %v5214 = vld [vmem:[%s4598 + $0x16d] sm:$0xff]
        %v5215 = vld [vmem:[%s4598 + $0x185] sm:$0xff]
        %v5216 = vld [vmem:[%s4598 + $0x18d] sm:$0xff]
        %v5217 = vld [vmem:[%s4598 + $0x1a5] sm:$0xff]
        %v5218 = vld [vmem:[%s4598 + $0x1ad] sm:$0xff]
        %v5219 = vld [vmem:[%s4598 + $0x1c5] sm:$0xff]
        %v5220 = vld [vmem:[%s4598 + $0x1cd] sm:$0xff]
        %v5221 = vld [vmem:[%s4598 + $0x1e5] sm:$0xff]
        %v5222 = vld [vmem:[%s4598 + $0x1ed] sm:$0xff]
        %v5223 = vld [vmem:[%s7 + $0x1] sm:$0x1]
        %v5224 = vlaneseq
        %v5225 = vshrl.u32 %v5224, 7
        %v5226 = vsub.s32 0, %v5225
        %v5227 = vrot.slane %v5223, %v5226
        %v5228 = vmul.f32 %v5191, %v5227
        %v5229 = vmul.f32 %v5192, %v5227
        %v5230 = vmul.f32 %v5193, %v5227
        %v5231 = vmul.f32 %v5194, %v5227
        %v5232 = vmul.f32 %v5195, %v5227
        %v5233 = vmul.f32 %v5196, %v5227
        %v5234 = vmul.f32 %v5197, %v5227
        %v5235 = vmul.f32 %v5198, %v5227
        %v5236 = vmul.f32 %v5199, %v5227
        %v5237 = vmul.f32 %v5200, %v5227
        %v5238 = vmul.f32 %v5201, %v5227
        %v5239 = vmul.f32 %v5202, %v5227
        %v5240 = vmul.f32 %v5203, %v5227
        %v5241 = vmul.f32 %v5204, %v5227
        %v5242 = vmul.f32 %v5205, %v5227
        %v5243 = vmul.f32 %v5206, %v5227
        %v5244 = vmul.f32 %v5207, %v5227
        %v5245 = vmul.f32 %v5208, %v5227
        %v5246 = vmul.f32 %v5209, %v5227
        %v5247 = vmul.f32 %v5210, %v5227
        %v5248 = vmul.f32 %v5211, %v5227
        %v5249 = vmul.f32 %v5212, %v5227
        %v5250 = vmul.f32 %v5213, %v5227
        %v5251 = vmul.f32 %v5214, %v5227
        %v5252 = vmul.f32 %v5215, %v5227
        %v5253 = vmul.f32 %v5216, %v5227
        %v5254 = vmul.f32 %v5217, %v5227
        %v5255 = vmul.f32 %v5218, %v5227
        %v5256 = vmul.f32 %v5219, %v5227
        %v5257 = vmul.f32 %v5220, %v5227
        %v5258 = vmul.f32 %v5221, %v5227
        %v5259 = vmul.f32 %v5222, %v5227
        %v5260 = vsel %vm4272, %v5228, 0.0
        %5261 = vadd.xlane.f32.xlu0 %v5260
        %v5262 = vpop.xlane.xlu0 %5261
        %v5263 = vsel %vm4272, %v5229, 0.0
        %5264 = vadd.xlane.f32.xlu0 %v5263
        %v5265 = vpop.xlane.xlu0 %5264
        %v5266 = vsel %vm4272, %v5230, 0.0
        %5267 = vadd.xlane.f32.xlu0 %v5266
        %v5268 = vpop.xlane.xlu0 %5267
        %v5269 = vsel %vm4272, %v5231, 0.0
        %5270 = vadd.xlane.f32.xlu0 %v5269
        %v5271 = vpop.xlane.xlu0 %5270
        %v5272 = vsel %vm4272, %v5232, 0.0
        %5273 = vadd.xlane.f32.xlu0 %v5272
        %v5274 = vpop.xlane.xlu0 %5273
        %v5275 = vsel %vm4272, %v5233, 0.0
        %5276 = vadd.xlane.f32.xlu0 %v5275
        %v5277 = vpop.xlane.xlu0 %5276
        %v5278 = vsel %vm4272, %v5234, 0.0
        %5279 = vadd.xlane.f32.xlu0 %v5278
        %v5280 = vpop.xlane.xlu0 %5279
        %v5281 = vsel %vm4272, %v5235, 0.0
        %5282 = vadd.xlane.f32.xlu0 %v5281
        %v5283 = vpop.xlane.xlu0 %5282
        %v5284 = vsel %vm4272, %v5236, 0.0
        %5285 = vadd.xlane.f32.xlu0 %v5284
        %v5286 = vpop.xlane.xlu0 %5285
        %v5287 = vsel %vm4272, %v5237, 0.0
        %5288 = vadd.xlane.f32.xlu0 %v5287
        %v5289 = vpop.xlane.xlu0 %5288
        %v5290 = vsel %vm4272, %v5238, 0.0
        %5291 = vadd.xlane.f32.xlu0 %v5290
        %v5292 = vpop.xlane.xlu0 %5291
        %v5293 = vsel %vm4272, %v5239, 0.0
        %5294 = vadd.xlane.f32.xlu0 %v5293
        %v5295 = vpop.xlane.xlu0 %5294
        %v5296 = vsel %vm4272, %v5240, 0.0
        %5297 = vadd.xlane.f32.xlu0 %v5296
        %v5298 = vpop.xlane.xlu0 %5297
        %v5299 = vsel %vm4272, %v5241, 0.0
        %5300 = vadd.xlane.f32.xlu0 %v5299
        %v5301 = vpop.xlane.xlu0 %5300
        %v5302 = vsel %vm4272, %v5242, 0.0
        %5303 = vadd.xlane.f32.xlu0 %v5302
        %v5304 = vpop.xlane.xlu0 %5303
        %v5305 = vsel %vm4272, %v5243, 0.0
        %5306 = vadd.xlane.f32.xlu0 %v5305
        %v5307 = vpop.xlane.xlu0 %5306
        %v5308 = vsel %vm4272, %v5244, 0.0
        %5309 = vadd.xlane.f32.xlu0 %v5308
        %v5310 = vpop.xlane.xlu0 %5309
        %v5311 = vsel %vm4272, %v5245, 0.0
        %5312 = vadd.xlane.f32.xlu0 %v5311
        %v5313 = vpop.xlane.xlu0 %5312
        %v5314 = vsel %vm4272, %v5246, 0.0
        %5315 = vadd.xlane.f32.xlu0 %v5314
        %v5316 = vpop.xlane.xlu0 %5315
        %v5317 = vsel %vm4272, %v5247, 0.0
        %5318 = vadd.xlane.f32.xlu0 %v5317
        %v5319 = vpop.xlane.xlu0 %5318
        %v5320 = vsel %vm4272, %v5248, 0.0
        %5321 = vadd.xlane.f32.xlu0 %v5320
        %v5322 = vpop.xlane.xlu0 %5321
        %v5323 = vsel %vm4272, %v5249, 0.0
        %5324 = vadd.xlane.f32.xlu0 %v5323
        %v5325 = vpop.xlane.xlu0 %5324
        %v5326 = vsel %vm4272, %v5250, 0.0
        %5327 = vadd.xlane.f32.xlu0 %v5326
        %v5328 = vpop.xlane.xlu0 %5327
        %v5329 = vsel %vm4272, %v5251, 0.0
        %5330 = vadd.xlane.f32.xlu0 %v5329
        %v5331 = vpop.xlane.xlu0 %5330
        %v5332 = vsel %vm4272, %v5252, 0.0
        %5333 = vadd.xlane.f32.xlu0 %v5332
        %v5334 = vpop.xlane.xlu0 %5333
        %v5335 = vsel %vm4272, %v5253, 0.0
        %5336 = vadd.xlane.f32.xlu0 %v5335
        %v5337 = vpop.xlane.xlu0 %5336
        %v5338 = vsel %vm4272, %v5254, 0.0
        %5339 = vadd.xlane.f32.xlu0 %v5338
        %v5340 = vpop.xlane.xlu0 %5339
        %v5341 = vsel %vm4272, %v5255, 0.0
        %5342 = vadd.xlane.f32.xlu0 %v5341
        %v5343 = vpop.xlane.xlu0 %5342
        %v5344 = vsel %vm4272, %v5256, 0.0
        %5345 = vadd.xlane.f32.xlu0 %v5344
        %v5346 = vpop.xlane.xlu0 %5345
        %v5347 = vsel %vm4272, %v5257, 0.0
        %5348 = vadd.xlane.f32.xlu0 %v5347
        %v5349 = vpop.xlane.xlu0 %5348
        %v5350 = vsel %vm4272, %v5258, 0.0
        %5351 = vadd.xlane.f32.xlu0 %v5350
        %v5352 = vpop.xlane.xlu0 %5351
        %v5353 = vsel %vm4272, %v5259, 0.0
        %5354 = vadd.xlane.f32.xlu0 %v5353
        %v5355 = vpop.xlane.xlu0 %5354
        %v5356 = vadd.f32 %v5159, %v5262
        %v5357 = vadd.f32 %v5160, %v5265
        %v5358 = vadd.f32 %v5161, %v5268
        %v5359 = vadd.f32 %v5162, %v5271
        %v5360 = vadd.f32 %v5163, %v5274
        %v5361 = vadd.f32 %v5164, %v5277
        %v5362 = vadd.f32 %v5165, %v5280
        %v5363 = vadd.f32 %v5166, %v5283
        %v5364 = vadd.f32 %v5167, %v5286
        %v5365 = vadd.f32 %v5168, %v5289
        %v5366 = vadd.f32 %v5169, %v5292
        %v5367 = vadd.f32 %v5170, %v5295
        %v5368 = vadd.f32 %v5171, %v5298
        %v5369 = vadd.f32 %v5172, %v5301
        %v5370 = vadd.f32 %v5173, %v5304
        %v5371 = vadd.f32 %v5174, %v5307
        %v5372 = vadd.f32 %v5175, %v5310
        %v5373 = vadd.f32 %v5176, %v5313
        %v5374 = vadd.f32 %v5177, %v5316
        %v5375 = vadd.f32 %v5178, %v5319
        %v5376 = vadd.f32 %v5179, %v5322
        %v5377 = vadd.f32 %v5180, %v5325
        %v5378 = vadd.f32 %v5181, %v5328
        %v5379 = vadd.f32 %v5182, %v5331
        %v5380 = vadd.f32 %v5183, %v5334
        %v5381 = vadd.f32 %v5184, %v5337
        %v5382 = vadd.f32 %v5185, %v5340
        %v5383 = vadd.f32 %v5186, %v5343
        %v5384 = vadd.f32 %v5187, %v5346
        %v5385 = vadd.f32 %v5188, %v5349
        %v5386 = vadd.f32 %v5189, %v5352
        %v5387 = vadd.f32 %v5190, %v5355
        %v5388 = vld [vmem:[%s4796 + $0x2] sm:$0xff]
        %v5389 = vld [vmem:[%s4796 + $0xa] sm:$0xff]
        %v5390 = vld [vmem:[%s4796 + $0x1a] sm:$0xff]
        %v5391 = vld [vmem:[%s4796 + $0x22] sm:$0xff]
        %v5392 = vld [vmem:[%s4796 + $0x32] sm:$0xff]
        %v5393 = vld [vmem:[%s4796 + $0x3a] sm:$0xff]
        %v5394 = vld [vmem:[%s4796 + $0x4a] sm:$0xff]
        %v5395 = vld [vmem:[%s4796 + $0x52] sm:$0xff]
        %v5396 = vld [vmem:[%s4796 + $0x62] sm:$0xff]
        %v5397 = vld [vmem:[%s4796 + $0x6a] sm:$0xff]
        %v5398 = vld [vmem:[%s4796 + $0x7a] sm:$0xff]
        %v5399 = vld [vmem:[%s4796 + $0x82] sm:$0xff]
        %v5400 = vld [vmem:[%s4796 + $0x92] sm:$0xff]
        %v5401 = vld [vmem:[%s4796 + $0x9a] sm:$0xff]
        %v5402 = vld [vmem:[%s4796 + $0xaa] sm:$0xff]
        %v5403 = vld [vmem:[%s4796 + $0xb2] sm:$0xff]
        %v5404 = vld [vmem:[%s4796 + $0xc2] sm:$0xff]
        %v5405 = vld [vmem:[%s4796 + $0xca] sm:$0xff]
        %v5406 = vld [vmem:[%s4796 + $0xda] sm:$0xff]
        %v5407 = vld [vmem:[%s4796 + $0xe2] sm:$0xff]
        %v5408 = vld [vmem:[%s4796 + $0xf2] sm:$0xff]
        %v5409 = vld [vmem:[%s4796 + $0xfa] sm:$0xff]
        %v5410 = vld [vmem:[%s4796 + $0x10a] sm:$0xff]
        %v5411 = vld [vmem:[%s4796 + $0x112] sm:$0xff]
        %v5412 = vld [vmem:[%s4796 + $0x122] sm:$0xff]
        %v5413 = vld [vmem:[%s4796 + $0x12a] sm:$0xff]
        %v5414 = vld [vmem:[%s4796 + $0x13a] sm:$0xff]
        %v5415 = vld [vmem:[%s4796 + $0x142] sm:$0xff]
        %v5416 = vld [vmem:[%s4796 + $0x152] sm:$0xff]
        %v5417 = vld [vmem:[%s4796 + $0x15a] sm:$0xff]
        %v5418 = vld [vmem:[%s4796 + $0x16a] sm:$0xff]
        %v5419 = vld [vmem:[%s4796 + $0x172] sm:$0xff]
        %v5420 = vld [vmem:[%s6 + $0x1] sm:$0x1]
        %v5421 = vlaneseq
        %v5422 = vshrl.u32 %v5421, 7
        %v5423 = vsub.s32 0, %v5422
        %v5424 = vrot.slane %v5420, %v5423
        %v5425 = vmul.f32 %v5388, %v5424
        %v5426 = vmul.f32 %v5389, %v5424
        %v5427 = vmul.f32 %v5390, %v5424
        %v5428 = vmul.f32 %v5391, %v5424
        %v5429 = vmul.f32 %v5392, %v5424
        %v5430 = vmul.f32 %v5393, %v5424
        %v5431 = vmul.f32 %v5394, %v5424
        %v5432 = vmul.f32 %v5395, %v5424
        %v5433 = vmul.f32 %v5396, %v5424
        %v5434 = vmul.f32 %v5397, %v5424
        %v5435 = vmul.f32 %v5398, %v5424
        %v5436 = vmul.f32 %v5399, %v5424
        %v5437 = vmul.f32 %v5400, %v5424
        %v5438 = vmul.f32 %v5401, %v5424
        %v5439 = vmul.f32 %v5402, %v5424
        %v5440 = vmul.f32 %v5403, %v5424
        %v5441 = vmul.f32 %v5404, %v5424
        %v5442 = vmul.f32 %v5405, %v5424
        %v5443 = vmul.f32 %v5406, %v5424
        %v5444 = vmul.f32 %v5407, %v5424
        %v5445 = vmul.f32 %v5408, %v5424
        %v5446 = vmul.f32 %v5409, %v5424
        %v5447 = vmul.f32 %v5410, %v5424
        %v5448 = vmul.f32 %v5411, %v5424
        %v5449 = vmul.f32 %v5412, %v5424
        %v5450 = vmul.f32 %v5413, %v5424
        %v5451 = vmul.f32 %v5414, %v5424
        %v5452 = vmul.f32 %v5415, %v5424
        %v5453 = vmul.f32 %v5416, %v5424
        %v5454 = vmul.f32 %v5417, %v5424
        %v5455 = vmul.f32 %v5418, %v5424
        %v5456 = vmul.f32 %v5419, %v5424
        %v5457 = vsel %vm2364, %v5425, 0.0
        %5458 = vadd.xlane.f32.xlu0 %v5457
        %v5459 = vpop.xlane.xlu0 %5458
        %v5460 = vsel %vm2364, %v5426, 0.0
        %5461 = vadd.xlane.f32.xlu0 %v5460
        %v5462 = vpop.xlane.xlu0 %5461
        %v5463 = vsel %vm2364, %v5427, 0.0
        %5464 = vadd.xlane.f32.xlu0 %v5463
        %v5465 = vpop.xlane.xlu0 %5464
        %v5466 = vsel %vm2364, %v5428, 0.0
        %5467 = vadd.xlane.f32.xlu0 %v5466
        %v5468 = vpop.xlane.xlu0 %5467
        %v5469 = vsel %vm2364, %v5429, 0.0
        %5470 = vadd.xlane.f32.xlu0 %v5469
        %v5471 = vpop.xlane.xlu0 %5470
        %v5472 = vsel %vm2364, %v5430, 0.0
        %5473 = vadd.xlane.f32.xlu0 %v5472
        %v5474 = vpop.xlane.xlu0 %5473
        %v5475 = vsel %vm2364, %v5431, 0.0
        %5476 = vadd.xlane.f32.xlu0 %v5475
        %v5477 = vpop.xlane.xlu0 %5476
        %v5478 = vsel %vm2364, %v5432, 0.0
        %5479 = vadd.xlane.f32.xlu0 %v5478
        %v5480 = vpop.xlane.xlu0 %5479
        %v5481 = vsel %vm2364, %v5433, 0.0
        %5482 = vadd.xlane.f32.xlu0 %v5481
        %v5483 = vpop.xlane.xlu0 %5482
        %v5484 = vsel %vm2364, %v5434, 0.0
        %5485 = vadd.xlane.f32.xlu0 %v5484
        %v5486 = vpop.xlane.xlu0 %5485
        %v5487 = vsel %vm2364, %v5435, 0.0
        %5488 = vadd.xlane.f32.xlu0 %v5487
        %v5489 = vpop.xlane.xlu0 %5488
        %v5490 = vsel %vm2364, %v5436, 0.0
        %5491 = vadd.xlane.f32.xlu0 %v5490
        %v5492 = vpop.xlane.xlu0 %5491
        %v5493 = vsel %vm2364, %v5437, 0.0
        %5494 = vadd.xlane.f32.xlu0 %v5493
        %v5495 = vpop.xlane.xlu0 %5494
        %v5496 = vsel %vm2364, %v5438, 0.0
        %5497 = vadd.xlane.f32.xlu0 %v5496
        %v5498 = vpop.xlane.xlu0 %5497
        %v5499 = vsel %vm2364, %v5439, 0.0
        %5500 = vadd.xlane.f32.xlu0 %v5499
        %v5501 = vpop.xlane.xlu0 %5500
        %v5502 = vsel %vm2364, %v5440, 0.0
        %5503 = vadd.xlane.f32.xlu0 %v5502
        %v5504 = vpop.xlane.xlu0 %5503
        %v5505 = vsel %vm2364, %v5441, 0.0
        %5506 = vadd.xlane.f32.xlu0 %v5505
        %v5507 = vpop.xlane.xlu0 %5506
        %v5508 = vsel %vm2364, %v5442, 0.0
        %5509 = vadd.xlane.f32.xlu0 %v5508
        %v5510 = vpop.xlane.xlu0 %5509
        %v5511 = vsel %vm2364, %v5443, 0.0
        %5512 = vadd.xlane.f32.xlu0 %v5511
        %v5513 = vpop.xlane.xlu0 %5512
        %v5514 = vsel %vm2364, %v5444, 0.0
        %5515 = vadd.xlane.f32.xlu0 %v5514
        %v5516 = vpop.xlane.xlu0 %5515
        %v5517 = vsel %vm2364, %v5445, 0.0
        %5518 = vadd.xlane.f32.xlu0 %v5517
        %v5519 = vpop.xlane.xlu0 %5518
        %v5520 = vsel %vm2364, %v5446, 0.0
        %5521 = vadd.xlane.f32.xlu0 %v5520
        %v5522 = vpop.xlane.xlu0 %5521
        %v5523 = vsel %vm2364, %v5447, 0.0
        %5524 = vadd.xlane.f32.xlu0 %v5523
        %v5525 = vpop.xlane.xlu0 %5524
        %v5526 = vsel %vm2364, %v5448, 0.0
        %5527 = vadd.xlane.f32.xlu0 %v5526
        %v5528 = vpop.xlane.xlu0 %5527
        %v5529 = vsel %vm2364, %v5449, 0.0
        %5530 = vadd.xlane.f32.xlu0 %v5529
        %v5531 = vpop.xlane.xlu0 %5530
        %v5532 = vsel %vm2364, %v5450, 0.0
        %5533 = vadd.xlane.f32.xlu0 %v5532
        %v5534 = vpop.xlane.xlu0 %5533
        %v5535 = vsel %vm2364, %v5451, 0.0
        %5536 = vadd.xlane.f32.xlu0 %v5535
        %v5537 = vpop.xlane.xlu0 %5536
        %v5538 = vsel %vm2364, %v5452, 0.0
        %5539 = vadd.xlane.f32.xlu0 %v5538
        %v5540 = vpop.xlane.xlu0 %5539
        %v5541 = vsel %vm2364, %v5453, 0.0
        %5542 = vadd.xlane.f32.xlu0 %v5541
        %v5543 = vpop.xlane.xlu0 %5542
        %v5544 = vsel %vm2364, %v5454, 0.0
        %5545 = vadd.xlane.f32.xlu0 %v5544
        %v5546 = vpop.xlane.xlu0 %5545
        %v5547 = vsel %vm2364, %v5455, 0.0
        %5548 = vadd.xlane.f32.xlu0 %v5547
        %v5549 = vpop.xlane.xlu0 %5548
        %v5550 = vsel %vm2364, %v5456, 0.0
        %5551 = vadd.xlane.f32.xlu0 %v5550
        %v5552 = vpop.xlane.xlu0 %5551
        %v5553 = vadd.f32 %v5356, %v5459
        %v5554 = vadd.f32 %v5357, %v5462
        %v5555 = vadd.f32 %v5358, %v5465
        %v5556 = vadd.f32 %v5359, %v5468
        %v5557 = vadd.f32 %v5360, %v5471
        %v5558 = vadd.f32 %v5361, %v5474
        %v5559 = vadd.f32 %v5362, %v5477
        %v5560 = vadd.f32 %v5363, %v5480
        %v5561 = vadd.f32 %v5364, %v5483
        %v5562 = vadd.f32 %v5365, %v5486
        %v5563 = vadd.f32 %v5366, %v5489
        %v5564 = vadd.f32 %v5367, %v5492
        %v5565 = vadd.f32 %v5368, %v5495
        %v5566 = vadd.f32 %v5369, %v5498
        %v5567 = vadd.f32 %v5370, %v5501
        %v5568 = vadd.f32 %v5371, %v5504
        %v5569 = vadd.f32 %v5372, %v5507
        %v5570 = vadd.f32 %v5373, %v5510
        %v5571 = vadd.f32 %v5374, %v5513
        %v5572 = vadd.f32 %v5375, %v5516
        %v5573 = vadd.f32 %v5376, %v5519
        %v5574 = vadd.f32 %v5377, %v5522
        %v5575 = vadd.f32 %v5378, %v5525
        %v5576 = vadd.f32 %v5379, %v5528
        %v5577 = vadd.f32 %v5380, %v5531
        %v5578 = vadd.f32 %v5381, %v5534
        %v5579 = vadd.f32 %v5382, %v5537
        %v5580 = vadd.f32 %v5383, %v5540
        %v5581 = vadd.f32 %v5384, %v5543
        %v5582 = vadd.f32 %v5385, %v5546
        %v5583 = vadd.f32 %v5386, %v5549
        %v5584 = vadd.f32 %v5387, %v5552
        %v5585 = vld [vmem:[#allocation4 + $0xa] sm:$0xff]
        %v5586 = vld [vmem:[#allocation4 + $0x12] sm:$0xff]
        %v5587 = vld [vmem:[#allocation4 + $0x2a] sm:$0xff]
        %v5588 = vld [vmem:[#allocation4 + $0x32] sm:$0xff]
        %v5589 = vld [vmem:[#allocation4 + $0x4a] sm:$0xff]
        %v5590 = vld [vmem:[#allocation4 + $0x52] sm:$0xff]
        %v5591 = vld [vmem:[#allocation4 + $0x6a] sm:$0xff]
        %v5592 = vld [vmem:[#allocation4 + $0x72] sm:$0xff]
        %v5593 = vld [vmem:[#allocation4 + $0x8a] sm:$0xff]
        %v5594 = vld [vmem:[#allocation4 + $0x92] sm:$0xff]
        %v5595 = vld [vmem:[#allocation4 + $0xaa] sm:$0xff]
        %v5596 = vld [vmem:[#allocation4 + $0xb2] sm:$0xff]
        %v5597 = vld [vmem:[#allocation4 + $0xca] sm:$0xff]
        %v5598 = vld [vmem:[#allocation4 + $0xd2] sm:$0xff]
        %v5599 = vld [vmem:[#allocation4 + $0xea] sm:$0xff]
        %v5600 = vld [vmem:[#allocation4 + $0xf2] sm:$0xff]
        %v5601 = vld [vmem:[#allocation4 + $0x10a] sm:$0xff]
        %v5602 = vld [vmem:[#allocation4 + $0x112] sm:$0xff]
        %v5603 = vld [vmem:[#allocation4 + $0x12a] sm:$0xff]
        %v5604 = vld [vmem:[#allocation4 + $0x132] sm:$0xff]
        %v5605 = vld [vmem:[#allocation4 + $0x14a] sm:$0xff]
        %v5606 = vld [vmem:[#allocation4 + $0x152] sm:$0xff]
        %v5607 = vld [vmem:[#allocation4 + $0x16a] sm:$0xff]
        %v5608 = vld [vmem:[#allocation4 + $0x172] sm:$0xff]
        %v5609 = vld [vmem:[#allocation4 + $0x18a] sm:$0xff]
        %v5610 = vld [vmem:[#allocation4 + $0x192] sm:$0xff]
        %v5611 = vld [vmem:[#allocation4 + $0x1aa] sm:$0xff]
        %v5612 = vld [vmem:[#allocation4 + $0x1b2] sm:$0xff]
        %v5613 = vld [vmem:[#allocation4 + $0x1ca] sm:$0xff]
        %v5614 = vld [vmem:[#allocation4 + $0x1d2] sm:$0xff]
        %v5615 = vld [vmem:[#allocation4 + $0x1ea] sm:$0xff]
        %v5616 = vld [vmem:[#allocation4 + $0x1f2] sm:$0xff]
        %v5617 = vld [vmem:[%s5 + $0x2] sm:$0x1]
        %v5618 = vlaneseq
        %v5619 = vshrl.u32 %v5618, 7
        %v5620 = vsub.s32 0, %v5619
        %v5621 = vrot.slane %v5617, %v5620
        %v5622 = vmul.f32 %v5585, %v5621
        %v5623 = vmul.f32 %v5586, %v5621
        %v5624 = vmul.f32 %v5587, %v5621
        %v5625 = vmul.f32 %v5588, %v5621
        %v5626 = vmul.f32 %v5589, %v5621
        %v5627 = vmul.f32 %v5590, %v5621
        %v5628 = vmul.f32 %v5591, %v5621
        %v5629 = vmul.f32 %v5592, %v5621
        %v5630 = vmul.f32 %v5593, %v5621
        %v5631 = vmul.f32 %v5594, %v5621
        %v5632 = vmul.f32 %v5595, %v5621
        %v5633 = vmul.f32 %v5596, %v5621
        %v5634 = vmul.f32 %v5597, %v5621
        %v5635 = vmul.f32 %v5598, %v5621
        %v5636 = vmul.f32 %v5599, %v5621
        %v5637 = vmul.f32 %v5600, %v5621
        %v5638 = vmul.f32 %v5601, %v5621
        %v5639 = vmul.f32 %v5602, %v5621
        %v5640 = vmul.f32 %v5603, %v5621
        %v5641 = vmul.f32 %v5604, %v5621
        %v5642 = vmul.f32 %v5605, %v5621
        %v5643 = vmul.f32 %v5606, %v5621
        %v5644 = vmul.f32 %v5607, %v5621
        %v5645 = vmul.f32 %v5608, %v5621
        %v5646 = vmul.f32 %v5609, %v5621
        %v5647 = vmul.f32 %v5610, %v5621
        %v5648 = vmul.f32 %v5611, %v5621
        %v5649 = vmul.f32 %v5612, %v5621
        %v5650 = vmul.f32 %v5613, %v5621
        %v5651 = vmul.f32 %v5614, %v5621
        %v5652 = vmul.f32 %v5615, %v5621
        %v5653 = vmul.f32 %v5616, %v5621
        %v5654 = vsel %vm4272, %v5622, 0.0
        %5655 = vadd.xlane.f32.xlu0 %v5654
        %v5656 = vpop.xlane.xlu0 %5655
        %v5657 = vsel %vm4272, %v5623, 0.0
        %5658 = vadd.xlane.f32.xlu0 %v5657
        %v5659 = vpop.xlane.xlu0 %5658
        %v5660 = vsel %vm4272, %v5624, 0.0
        %5661 = vadd.xlane.f32.xlu0 %v5660
        %v5662 = vpop.xlane.xlu0 %5661
        %v5663 = vsel %vm4272, %v5625, 0.0
        %5664 = vadd.xlane.f32.xlu0 %v5663
        %v5665 = vpop.xlane.xlu0 %5664
        %v5666 = vsel %vm4272, %v5626, 0.0
        %5667 = vadd.xlane.f32.xlu0 %v5666
        %v5668 = vpop.xlane.xlu0 %5667
        %v5669 = vsel %vm4272, %v5627, 0.0
        %5670 = vadd.xlane.f32.xlu0 %v5669
        %v5671 = vpop.xlane.xlu0 %5670
        %v5672 = vsel %vm4272, %v5628, 0.0
        %5673 = vadd.xlane.f32.xlu0 %v5672
        %v5674 = vpop.xlane.xlu0 %5673
        %v5675 = vsel %vm4272, %v5629, 0.0
        %5676 = vadd.xlane.f32.xlu0 %v5675
        %v5677 = vpop.xlane.xlu0 %5676
        %v5678 = vsel %vm4272, %v5630, 0.0
        %5679 = vadd.xlane.f32.xlu0 %v5678
        %v5680 = vpop.xlane.xlu0 %5679
        %v5681 = vsel %vm4272, %v5631, 0.0
        %5682 = vadd.xlane.f32.xlu0 %v5681
        %v5683 = vpop.xlane.xlu0 %5682
        %v5684 = vsel %vm4272, %v5632, 0.0
        %5685 = vadd.xlane.f32.xlu0 %v5684
        %v5686 = vpop.xlane.xlu0 %5685
        %v5687 = vsel %vm4272, %v5633, 0.0
        %5688 = vadd.xlane.f32.xlu0 %v5687
        %v5689 = vpop.xlane.xlu0 %5688
        %v5690 = vsel %vm4272, %v5634, 0.0
        %5691 = vadd.xlane.f32.xlu0 %v5690
        %v5692 = vpop.xlane.xlu0 %5691
        %v5693 = vsel %vm4272, %v5635, 0.0
        %5694 = vadd.xlane.f32.xlu0 %v5693
        %v5695 = vpop.xlane.xlu0 %5694
        %v5696 = vsel %vm4272, %v5636, 0.0
        %5697 = vadd.xlane.f32.xlu0 %v5696
        %v5698 = vpop.xlane.xlu0 %5697
        %v5699 = vsel %vm4272, %v5637, 0.0
        %5700 = vadd.xlane.f32.xlu0 %v5699
        %v5701 = vpop.xlane.xlu0 %5700
        %v5702 = vsel %vm4272, %v5638, 0.0
        %5703 = vadd.xlane.f32.xlu0 %v5702
        %v5704 = vpop.xlane.xlu0 %5703
        %v5705 = vsel %vm4272, %v5639, 0.0
        %5706 = vadd.xlane.f32.xlu0 %v5705
        %v5707 = vpop.xlane.xlu0 %5706
        %v5708 = vsel %vm4272, %v5640, 0.0
        %5709 = vadd.xlane.f32.xlu0 %v5708
        %v5710 = vpop.xlane.xlu0 %5709
        %v5711 = vsel %vm4272, %v5641, 0.0
        %5712 = vadd.xlane.f32.xlu0 %v5711
        %v5713 = vpop.xlane.xlu0 %5712
        %v5714 = vsel %vm4272, %v5642, 0.0
        %5715 = vadd.xlane.f32.xlu0 %v5714
        %v5716 = vpop.xlane.xlu0 %5715
        %v5717 = vsel %vm4272, %v5643, 0.0
        %5718 = vadd.xlane.f32.xlu0 %v5717
        %v5719 = vpop.xlane.xlu0 %5718
        %v5720 = vsel %vm4272, %v5644, 0.0
        %5721 = vadd.xlane.f32.xlu0 %v5720
        %v5722 = vpop.xlane.xlu0 %5721
        %v5723 = vsel %vm4272, %v5645, 0.0
        %5724 = vadd.xlane.f32.xlu0 %v5723
        %v5725 = vpop.xlane.xlu0 %5724
        %v5726 = vsel %vm4272, %v5646, 0.0
        %5727 = vadd.xlane.f32.xlu0 %v5726
        %v5728 = vpop.xlane.xlu0 %5727
        %v5729 = vsel %vm4272, %v5647, 0.0
        %5730 = vadd.xlane.f32.xlu0 %v5729
        %v5731 = vpop.xlane.xlu0 %5730
        %v5732 = vsel %vm4272, %v5648, 0.0
        %5733 = vadd.xlane.f32.xlu0 %v5732
        %v5734 = vpop.xlane.xlu0 %5733
        %v5735 = vsel %vm4272, %v5649, 0.0
        %5736 = vadd.xlane.f32.xlu0 %v5735
        %v5737 = vpop.xlane.xlu0 %5736
        %v5738 = vsel %vm4272, %v5650, 0.0
        %5739 = vadd.xlane.f32.xlu0 %v5738
        %v5740 = vpop.xlane.xlu0 %5739
        %v5741 = vsel %vm4272, %v5651, 0.0
        %5742 = vadd.xlane.f32.xlu0 %v5741
        %v5743 = vpop.xlane.xlu0 %5742
        %v5744 = vsel %vm4272, %v5652, 0.0
        %5745 = vadd.xlane.f32.xlu0 %v5744
        %v5746 = vpop.xlane.xlu0 %5745
        %v5747 = vsel %vm4272, %v5653, 0.0
        %5748 = vadd.xlane.f32.xlu0 %v5747
        %v5749 = vpop.xlane.xlu0 %5748
        %v5750 = vadd.f32 %v5553, %v5656
        %v5751 = vadd.f32 %v5554, %v5659
        %v5752 = vadd.f32 %v5555, %v5662
        %v5753 = vadd.f32 %v5556, %v5665
        %v5754 = vadd.f32 %v5557, %v5668
        %v5755 = vadd.f32 %v5558, %v5671
        %v5756 = vadd.f32 %v5559, %v5674
        %v5757 = vadd.f32 %v5560, %v5677
        %v5758 = vadd.f32 %v5561, %v5680
        %v5759 = vadd.f32 %v5562, %v5683
        %v5760 = vadd.f32 %v5563, %v5686
        %v5761 = vadd.f32 %v5564, %v5689
        %v5762 = vadd.f32 %v5565, %v5692
        %v5763 = vadd.f32 %v5566, %v5695
        %v5764 = vadd.f32 %v5567, %v5698
        %v5765 = vadd.f32 %v5568, %v5701
        %v5766 = vadd.f32 %v5569, %v5704
        %v5767 = vadd.f32 %v5570, %v5707
        %v5768 = vadd.f32 %v5571, %v5710
        %v5769 = vadd.f32 %v5572, %v5713
        %v5770 = vadd.f32 %v5573, %v5716
        %v5771 = vadd.f32 %v5574, %v5719
        %v5772 = vadd.f32 %v5575, %v5722
        %v5773 = vadd.f32 %v5576, %v5725
        %v5774 = vadd.f32 %v5577, %v5728
        %v5775 = vadd.f32 %v5578, %v5731
        %v5776 = vadd.f32 %v5579, %v5734
        %v5777 = vadd.f32 %v5580, %v5737
        %v5778 = vadd.f32 %v5581, %v5740
        %v5779 = vadd.f32 %v5582, %v5743
        %v5780 = vadd.f32 %v5583, %v5746
        %v5781 = vadd.f32 %v5584, %v5749
        %v5782 = vld [vmem:[%s4598 + $0x6] sm:$0xff]
        %v5783 = vld [vmem:[%s4598 + $0xe] sm:$0xff]
        %v5784 = vld [vmem:[%s4598 + $0x26] sm:$0xff]
        %v5785 = vld [vmem:[%s4598 + $0x2e] sm:$0xff]
        %v5786 = vld [vmem:[%s4598 + $0x46] sm:$0xff]
        %v5787 = vld [vmem:[%s4598 + $0x4e] sm:$0xff]
        %v5788 = vld [vmem:[%s4598 + $0x66] sm:$0xff]
        %v5789 = vld [vmem:[%s4598 + $0x6e] sm:$0xff]
        %v5790 = vld [vmem:[%s4598 + $0x86] sm:$0xff]
        %v5791 = vld [vmem:[%s4598 + $0x8e] sm:$0xff]
        %v5792 = vld [vmem:[%s4598 + $0xa6] sm:$0xff]
        %v5793 = vld [vmem:[%s4598 + $0xae] sm:$0xff]
        %v5794 = vld [vmem:[%s4598 + $0xc6] sm:$0xff]
        %v5795 = vld [vmem:[%s4598 + $0xce] sm:$0xff]
        %v5796 = vld [vmem:[%s4598 + $0xe6] sm:$0xff]
        %v5797 = vld [vmem:[%s4598 + $0xee] sm:$0xff]
        %v5798 = vld [vmem:[%s4598 + $0x106] sm:$0xff]
        %v5799 = vld [vmem:[%s4598 + $0x10e] sm:$0xff]
        %v5800 = vld [vmem:[%s4598 + $0x126] sm:$0xff]
        %v5801 = vld [vmem:[%s4598 + $0x12e] sm:$0xff]
        %v5802 = vld [vmem:[%s4598 + $0x146] sm:$0xff]
        %v5803 = vld [vmem:[%s4598 + $0x14e] sm:$0xff]
        %v5804 = vld [vmem:[%s4598 + $0x166] sm:$0xff]
        %v5805 = vld [vmem:[%s4598 + $0x16e] sm:$0xff]
        %v5806 = vld [vmem:[%s4598 + $0x186] sm:$0xff]
        %v5807 = vld [vmem:[%s4598 + $0x18e] sm:$0xff]
        %v5808 = vld [vmem:[%s4598 + $0x1a6] sm:$0xff]
        %v5809 = vld [vmem:[%s4598 + $0x1ae] sm:$0xff]
        %v5810 = vld [vmem:[%s4598 + $0x1c6] sm:$0xff]
        %v5811 = vld [vmem:[%s4598 + $0x1ce] sm:$0xff]
        %v5812 = vld [vmem:[%s4598 + $0x1e6] sm:$0xff]
        %v5813 = vld [vmem:[%s4598 + $0x1ee] sm:$0xff]
        %v5814 = vld [vmem:[%s7 + $0x2] sm:$0x1]
        %v5815 = vlaneseq
        %v5816 = vshrl.u32 %v5815, 7
        %v5817 = vsub.s32 0, %v5816
        %v5818 = vrot.slane %v5814, %v5817
        %v5819 = vmul.f32 %v5782, %v5818
        %v5820 = vmul.f32 %v5783, %v5818
        %v5821 = vmul.f32 %v5784, %v5818
        %v5822 = vmul.f32 %v5785, %v5818
        %v5823 = vmul.f32 %v5786, %v5818
        %v5824 = vmul.f32 %v5787, %v5818
        %v5825 = vmul.f32 %v5788, %v5818
        %v5826 = vmul.f32 %v5789, %v5818
        %v5827 = vmul.f32 %v5790, %v5818
        %v5828 = vmul.f32 %v5791, %v5818
        %v5829 = vmul.f32 %v5792, %v5818
        %v5830 = vmul.f32 %v5793, %v5818
        %v5831 = vmul.f32 %v5794, %v5818
        %v5832 = vmul.f32 %v5795, %v5818
        %v5833 = vmul.f32 %v5796, %v5818
        %v5834 = vmul.f32 %v5797, %v5818
        %v5835 = vmul.f32 %v5798, %v5818
        %v5836 = vmul.f32 %v5799, %v5818
        %v5837 = vmul.f32 %v5800, %v5818
        %v5838 = vmul.f32 %v5801, %v5818
        %v5839 = vmul.f32 %v5802, %v5818
        %v5840 = vmul.f32 %v5803, %v5818
        %v5841 = vmul.f32 %v5804, %v5818
        %v5842 = vmul.f32 %v5805, %v5818
        %v5843 = vmul.f32 %v5806, %v5818
        %v5844 = vmul.f32 %v5807, %v5818
        %v5845 = vmul.f32 %v5808, %v5818
        %v5846 = vmul.f32 %v5809, %v5818
        %v5847 = vmul.f32 %v5810, %v5818
        %v5848 = vmul.f32 %v5811, %v5818
        %v5849 = vmul.f32 %v5812, %v5818
        %v5850 = vmul.f32 %v5813, %v5818
        %v5851 = vsel %vm4272, %v5819, 0.0
        %5852 = vadd.xlane.f32.xlu0 %v5851
        %v5853 = vpop.xlane.xlu0 %5852
        %v5854 = vsel %vm4272, %v5820, 0.0
        %5855 = vadd.xlane.f32.xlu0 %v5854
        %v5856 = vpop.xlane.xlu0 %5855
        %v5857 = vsel %vm4272, %v5821, 0.0
        %5858 = vadd.xlane.f32.xlu0 %v5857
        %v5859 = vpop.xlane.xlu0 %5858
        %v5860 = vsel %vm4272, %v5822, 0.0
        %5861 = vadd.xlane.f32.xlu0 %v5860
        %v5862 = vpop.xlane.xlu0 %5861
        %v5863 = vsel %vm4272, %v5823, 0.0
        %5864 = vadd.xlane.f32.xlu0 %v5863
        %v5865 = vpop.xlane.xlu0 %5864
        %v5866 = vsel %vm4272, %v5824, 0.0
        %5867 = vadd.xlane.f32.xlu0 %v5866
        %v5868 = vpop.xlane.xlu0 %5867
        %v5869 = vsel %vm4272, %v5825, 0.0
        %5870 = vadd.xlane.f32.xlu0 %v5869
        %v5871 = vpop.xlane.xlu0 %5870
        %v5872 = vsel %vm4272, %v5826, 0.0
        %5873 = vadd.xlane.f32.xlu0 %v5872
        %v5874 = vpop.xlane.xlu0 %5873
        %v5875 = vsel %vm4272, %v5827, 0.0
        %5876 = vadd.xlane.f32.xlu0 %v5875
        %v5877 = vpop.xlane.xlu0 %5876
        %v5878 = vsel %vm4272, %v5828, 0.0
        %5879 = vadd.xlane.f32.xlu0 %v5878
        %v5880 = vpop.xlane.xlu0 %5879
        %v5881 = vsel %vm4272, %v5829, 0.0
        %5882 = vadd.xlane.f32.xlu0 %v5881
        %v5883 = vpop.xlane.xlu0 %5882
        %v5884 = vsel %vm4272, %v5830, 0.0
        %5885 = vadd.xlane.f32.xlu0 %v5884
        %v5886 = vpop.xlane.xlu0 %5885
        %v5887 = vsel %vm4272, %v5831, 0.0
        %5888 = vadd.xlane.f32.xlu0 %v5887
        %v5889 = vpop.xlane.xlu0 %5888
        %v5890 = vsel %vm4272, %v5832, 0.0
        %5891 = vadd.xlane.f32.xlu0 %v5890
        %v5892 = vpop.xlane.xlu0 %5891
        %v5893 = vsel %vm4272, %v5833, 0.0
        %5894 = vadd.xlane.f32.xlu0 %v5893
        %v5895 = vpop.xlane.xlu0 %5894
        %v5896 = vsel %vm4272, %v5834, 0.0
        %5897 = vadd.xlane.f32.xlu0 %v5896
        %v5898 = vpop.xlane.xlu0 %5897
        %v5899 = vsel %vm4272, %v5835, 0.0
        %5900 = vadd.xlane.f32.xlu0 %v5899
        %v5901 = vpop.xlane.xlu0 %5900
        %v5902 = vsel %vm4272, %v5836, 0.0
        %5903 = vadd.xlane.f32.xlu0 %v5902
        %v5904 = vpop.xlane.xlu0 %5903
        %v5905 = vsel %vm4272, %v5837, 0.0
        %5906 = vadd.xlane.f32.xlu0 %v5905
        %v5907 = vpop.xlane.xlu0 %5906
        %v5908 = vsel %vm4272, %v5838, 0.0
        %5909 = vadd.xlane.f32.xlu0 %v5908
        %v5910 = vpop.xlane.xlu0 %5909
        %v5911 = vsel %vm4272, %v5839, 0.0
        %5912 = vadd.xlane.f32.xlu0 %v5911
        %v5913 = vpop.xlane.xlu0 %5912
        %v5914 = vsel %vm4272, %v5840, 0.0
        %5915 = vadd.xlane.f32.xlu0 %v5914
        %v5916 = vpop.xlane.xlu0 %5915
        %v5917 = vsel %vm4272, %v5841, 0.0
        %5918 = vadd.xlane.f32.xlu0 %v5917
        %v5919 = vpop.xlane.xlu0 %5918
        %v5920 = vsel %vm4272, %v5842, 0.0
        %5921 = vadd.xlane.f32.xlu0 %v5920
        %v5922 = vpop.xlane.xlu0 %5921
        %v5923 = vsel %vm4272, %v5843, 0.0
        %5924 = vadd.xlane.f32.xlu0 %v5923
        %v5925 = vpop.xlane.xlu0 %5924
        %v5926 = vsel %vm4272, %v5844, 0.0
        %5927 = vadd.xlane.f32.xlu0 %v5926
        %v5928 = vpop.xlane.xlu0 %5927
        %v5929 = vsel %vm4272, %v5845, 0.0
        %5930 = vadd.xlane.f32.xlu0 %v5929
        %v5931 = vpop.xlane.xlu0 %5930
        %v5932 = vsel %vm4272, %v5846, 0.0
        %5933 = vadd.xlane.f32.xlu0 %v5932
        %v5934 = vpop.xlane.xlu0 %5933
        %v5935 = vsel %vm4272, %v5847, 0.0
        %5936 = vadd.xlane.f32.xlu0 %v5935
        %v5937 = vpop.xlane.xlu0 %5936
        %v5938 = vsel %vm4272, %v5848, 0.0
        %5939 = vadd.xlane.f32.xlu0 %v5938
        %v5940 = vpop.xlane.xlu0 %5939
        %v5941 = vsel %vm4272, %v5849, 0.0
        %5942 = vadd.xlane.f32.xlu0 %v5941
        %v5943 = vpop.xlane.xlu0 %5942
        %v5944 = vsel %vm4272, %v5850, 0.0
        %5945 = vadd.xlane.f32.xlu0 %v5944
        %v5946 = vpop.xlane.xlu0 %5945
        %v5947 = vadd.f32 %v5750, %v5853
        %v5948 = vadd.f32 %v5751, %v5856
        %v5949 = vadd.f32 %v5752, %v5859
        %v5950 = vadd.f32 %v5753, %v5862
        %v5951 = vadd.f32 %v5754, %v5865
        %v5952 = vadd.f32 %v5755, %v5868
        %v5953 = vadd.f32 %v5756, %v5871
        %v5954 = vadd.f32 %v5757, %v5874
        %v5955 = vadd.f32 %v5758, %v5877
        %v5956 = vadd.f32 %v5759, %v5880
        %v5957 = vadd.f32 %v5760, %v5883
        %v5958 = vadd.f32 %v5761, %v5886
        %v5959 = vadd.f32 %v5762, %v5889
        %v5960 = vadd.f32 %v5763, %v5892
        %v5961 = vadd.f32 %v5764, %v5895
        %v5962 = vadd.f32 %v5765, %v5898
        %v5963 = vadd.f32 %v5766, %v5901
        %v5964 = vadd.f32 %v5767, %v5904
        %v5965 = vadd.f32 %v5768, %v5907
        %v5966 = vadd.f32 %v5769, %v5910
        %v5967 = vadd.f32 %v5770, %v5913
        %v5968 = vadd.f32 %v5771, %v5916
        %v5969 = vadd.f32 %v5772, %v5919
        %v5970 = vadd.f32 %v5773, %v5922
        %v5971 = vadd.f32 %v5774, %v5925
        %v5972 = vadd.f32 %v5775, %v5928
        %v5973 = vadd.f32 %v5776, %v5931
        %v5974 = vadd.f32 %v5777, %v5934
        %v5975 = vadd.f32 %v5778, %v5937
        %v5976 = vadd.f32 %v5779, %v5940
        %v5977 = vadd.f32 %v5780, %v5943
        %v5978 = vadd.f32 %v5781, %v5946
        %v5979 = vld [vmem:[%s4796 + $0x3] sm:$0xff]
        %v5980 = vld [vmem:[%s4796 + $0xb] sm:$0xff]
        %v5981 = vld [vmem:[%s4796 + $0x1b] sm:$0xff]
        %v5982 = vld [vmem:[%s4796 + $0x23] sm:$0xff]
        %v5983 = vld [vmem:[%s4796 + $0x33] sm:$0xff]
        %v5984 = vld [vmem:[%s4796 + $0x3b] sm:$0xff]
        %v5985 = vld [vmem:[%s4796 + $0x4b] sm:$0xff]
        %v5986 = vld [vmem:[%s4796 + $0x53] sm:$0xff]
        %v5987 = vld [vmem:[%s4796 + $0x63] sm:$0xff]
        %v5988 = vld [vmem:[%s4796 + $0x6b] sm:$0xff]
        %v5989 = vld [vmem:[%s4796 + $0x7b] sm:$0xff]
        %v5990 = vld [vmem:[%s4796 + $0x83] sm:$0xff]
        %v5991 = vld [vmem:[%s4796 + $0x93] sm:$0xff]
        %v5992 = vld [vmem:[%s4796 + $0x9b] sm:$0xff]
        %v5993 = vld [vmem:[%s4796 + $0xab] sm:$0xff]
        %v5994 = vld [vmem:[%s4796 + $0xb3] sm:$0xff]
        %v5995 = vld [vmem:[%s4796 + $0xc3] sm:$0xff]
        %v5996 = vld [vmem:[%s4796 + $0xcb] sm:$0xff]
        %v5997 = vld [vmem:[%s4796 + $0xdb] sm:$0xff]
        %v5998 = vld [vmem:[%s4796 + $0xe3] sm:$0xff]
        %v5999 = vld [vmem:[%s4796 + $0xf3] sm:$0xff]
        %v6000 = vld [vmem:[%s4796 + $0xfb] sm:$0xff]
        %v6001 = vld [vmem:[%s4796 + $0x10b] sm:$0xff]
        %v6002 = vld [vmem:[%s4796 + $0x113] sm:$0xff]
        %v6003 = vld [vmem:[%s4796 + $0x123] sm:$0xff]
        %v6004 = vld [vmem:[%s4796 + $0x12b] sm:$0xff]
        %v6005 = vld [vmem:[%s4796 + $0x13b] sm:$0xff]
        %v6006 = vld [vmem:[%s4796 + $0x143] sm:$0xff]
        %v6007 = vld [vmem:[%s4796 + $0x153] sm:$0xff]
        %v6008 = vld [vmem:[%s4796 + $0x15b] sm:$0xff]
        %v6009 = vld [vmem:[%s4796 + $0x16b] sm:$0xff]
        %v6010 = vld [vmem:[%s4796 + $0x173] sm:$0xff]
        %v6011 = vld [vmem:[%s6 + $0x2] sm:$0x1]
        %v6012 = vlaneseq
        %v6013 = vshrl.u32 %v6012, 7
        %v6014 = vsub.s32 0, %v6013
        %v6015 = vrot.slane %v6011, %v6014
        %v6016 = vmul.f32 %v5979, %v6015
        %v6017 = vmul.f32 %v5980, %v6015
        %v6018 = vmul.f32 %v5981, %v6015
        %v6019 = vmul.f32 %v5982, %v6015
        %v6020 = vmul.f32 %v5983, %v6015
        %v6021 = vmul.f32 %v5984, %v6015
        %v6022 = vmul.f32 %v5985, %v6015
        %v6023 = vmul.f32 %v5986, %v6015
        %v6024 = vmul.f32 %v5987, %v6015
        %v6025 = vmul.f32 %v5988, %v6015
        %v6026 = vmul.f32 %v5989, %v6015
        %v6027 = vmul.f32 %v5990, %v6015
        %v6028 = vmul.f32 %v5991, %v6015
        %v6029 = vmul.f32 %v5992, %v6015
        %v6030 = vmul.f32 %v5993, %v6015
        %v6031 = vmul.f32 %v5994, %v6015
        %v6032 = vmul.f32 %v5995, %v6015
        %v6033 = vmul.f32 %v5996, %v6015
        %v6034 = vmul.f32 %v5997, %v6015
        %v6035 = vmul.f32 %v5998, %v6015
        %v6036 = vmul.f32 %v5999, %v6015
        %v6037 = vmul.f32 %v6000, %v6015
        %v6038 = vmul.f32 %v6001, %v6015
        %v6039 = vmul.f32 %v6002, %v6015
        %v6040 = vmul.f32 %v6003, %v6015
        %v6041 = vmul.f32 %v6004, %v6015
        %v6042 = vmul.f32 %v6005, %v6015
        %v6043 = vmul.f32 %v6006, %v6015
        %v6044 = vmul.f32 %v6007, %v6015
        %v6045 = vmul.f32 %v6008, %v6015
        %v6046 = vmul.f32 %v6009, %v6015
        %v6047 = vmul.f32 %v6010, %v6015
        %v6048 = vsel %vm2364, %v6016, 0.0
        %6049 = vadd.xlane.f32.xlu0 %v6048
        %v6050 = vpop.xlane.xlu0 %6049
        %v6051 = vsel %vm2364, %v6017, 0.0
        %6052 = vadd.xlane.f32.xlu0 %v6051
        %v6053 = vpop.xlane.xlu0 %6052
        %v6054 = vsel %vm2364, %v6018, 0.0
        %6055 = vadd.xlane.f32.xlu0 %v6054
        %v6056 = vpop.xlane.xlu0 %6055
        %v6057 = vsel %vm2364, %v6019, 0.0
        %6058 = vadd.xlane.f32.xlu0 %v6057
        %v6059 = vpop.xlane.xlu0 %6058
        %v6060 = vsel %vm2364, %v6020, 0.0
        %6061 = vadd.xlane.f32.xlu0 %v6060
        %v6062 = vpop.xlane.xlu0 %6061
        %v6063 = vsel %vm2364, %v6021, 0.0
        %6064 = vadd.xlane.f32.xlu0 %v6063
        %v6065 = vpop.xlane.xlu0 %6064
        %v6066 = vsel %vm2364, %v6022, 0.0
        %6067 = vadd.xlane.f32.xlu0 %v6066
        %v6068 = vpop.xlane.xlu0 %6067
        %v6069 = vsel %vm2364, %v6023, 0.0
        %6070 = vadd.xlane.f32.xlu0 %v6069
        %v6071 = vpop.xlane.xlu0 %6070
        %v6072 = vsel %vm2364, %v6024, 0.0
        %6073 = vadd.xlane.f32.xlu0 %v6072
        %v6074 = vpop.xlane.xlu0 %6073
        %v6075 = vsel %vm2364, %v6025, 0.0
        %6076 = vadd.xlane.f32.xlu0 %v6075
        %v6077 = vpop.xlane.xlu0 %6076
        %v6078 = vsel %vm2364, %v6026, 0.0
        %6079 = vadd.xlane.f32.xlu0 %v6078
        %v6080 = vpop.xlane.xlu0 %6079
        %v6081 = vsel %vm2364, %v6027, 0.0
        %6082 = vadd.xlane.f32.xlu0 %v6081
        %v6083 = vpop.xlane.xlu0 %6082
        %v6084 = vsel %vm2364, %v6028, 0.0
        %6085 = vadd.xlane.f32.xlu0 %v6084
        %v6086 = vpop.xlane.xlu0 %6085
        %v6087 = vsel %vm2364, %v6029, 0.0
        %6088 = vadd.xlane.f32.xlu0 %v6087
        %v6089 = vpop.xlane.xlu0 %6088
        %v6090 = vsel %vm2364, %v6030, 0.0
        %6091 = vadd.xlane.f32.xlu0 %v6090
        %v6092 = vpop.xlane.xlu0 %6091
        %v6093 = vsel %vm2364, %v6031, 0.0
        %6094 = vadd.xlane.f32.xlu0 %v6093
        %v6095 = vpop.xlane.xlu0 %6094
        %v6096 = vsel %vm2364, %v6032, 0.0
        %6097 = vadd.xlane.f32.xlu0 %v6096
        %v6098 = vpop.xlane.xlu0 %6097
        %v6099 = vsel %vm2364, %v6033, 0.0
        %6100 = vadd.xlane.f32.xlu0 %v6099
        %v6101 = vpop.xlane.xlu0 %6100
        %v6102 = vsel %vm2364, %v6034, 0.0
        %6103 = vadd.xlane.f32.xlu0 %v6102
        %v6104 = vpop.xlane.xlu0 %6103
        %v6105 = vsel %vm2364, %v6035, 0.0
        %6106 = vadd.xlane.f32.xlu0 %v6105
        %v6107 = vpop.xlane.xlu0 %6106
        %v6108 = vsel %vm2364, %v6036, 0.0
        %6109 = vadd.xlane.f32.xlu0 %v6108
        %v6110 = vpop.xlane.xlu0 %6109
        %v6111 = vsel %vm2364, %v6037, 0.0
        %6112 = vadd.xlane.f32.xlu0 %v6111
        %v6113 = vpop.xlane.xlu0 %6112
        %v6114 = vsel %vm2364, %v6038, 0.0
        %6115 = vadd.xlane.f32.xlu0 %v6114
        %v6116 = vpop.xlane.xlu0 %6115
        %v6117 = vsel %vm2364, %v6039, 0.0
        %6118 = vadd.xlane.f32.xlu0 %v6117
        %v6119 = vpop.xlane.xlu0 %6118
        %v6120 = vsel %vm2364, %v6040, 0.0
        %6121 = vadd.xlane.f32.xlu0 %v6120
        %v6122 = vpop.xlane.xlu0 %6121
        %v6123 = vsel %vm2364, %v6041, 0.0
        %6124 = vadd.xlane.f32.xlu0 %v6123
        %v6125 = vpop.xlane.xlu0 %6124
        %v6126 = vsel %vm2364, %v6042, 0.0
        %6127 = vadd.xlane.f32.xlu0 %v6126
        %v6128 = vpop.xlane.xlu0 %6127
        %v6129 = vsel %vm2364, %v6043, 0.0
        %6130 = vadd.xlane.f32.xlu0 %v6129
        %v6131 = vpop.xlane.xlu0 %6130
        %v6132 = vsel %vm2364, %v6044, 0.0
        %6133 = vadd.xlane.f32.xlu0 %v6132
        %v6134 = vpop.xlane.xlu0 %6133
        %v6135 = vsel %vm2364, %v6045, 0.0
        %6136 = vadd.xlane.f32.xlu0 %v6135
        %v6137 = vpop.xlane.xlu0 %6136
        %v6138 = vsel %vm2364, %v6046, 0.0
        %6139 = vadd.xlane.f32.xlu0 %v6138
        %v6140 = vpop.xlane.xlu0 %6139
        %v6141 = vsel %vm2364, %v6047, 0.0
        %6142 = vadd.xlane.f32.xlu0 %v6141
        %v6143 = vpop.xlane.xlu0 %6142
        %v6144 = vadd.f32 %v5947, %v6050
        %v6145 = vadd.f32 %v5948, %v6053
        %v6146 = vadd.f32 %v5949, %v6056
        %v6147 = vadd.f32 %v5950, %v6059
        %v6148 = vadd.f32 %v5951, %v6062
        %v6149 = vadd.f32 %v5952, %v6065
        %v6150 = vadd.f32 %v5953, %v6068
        %v6151 = vadd.f32 %v5954, %v6071
        %v6152 = vadd.f32 %v5955, %v6074
        %v6153 = vadd.f32 %v5956, %v6077
        %v6154 = vadd.f32 %v5957, %v6080
        %v6155 = vadd.f32 %v5958, %v6083
        %v6156 = vadd.f32 %v5959, %v6086
        %v6157 = vadd.f32 %v5960, %v6089
        %v6158 = vadd.f32 %v5961, %v6092
        %v6159 = vadd.f32 %v5962, %v6095
        %v6160 = vadd.f32 %v5963, %v6098
        %v6161 = vadd.f32 %v5964, %v6101
        %v6162 = vadd.f32 %v5965, %v6104
        %v6163 = vadd.f32 %v5966, %v6107
        %v6164 = vadd.f32 %v5967, %v6110
        %v6165 = vadd.f32 %v5968, %v6113
        %v6166 = vadd.f32 %v5969, %v6116
        %v6167 = vadd.f32 %v5970, %v6119
        %v6168 = vadd.f32 %v5971, %v6122
        %v6169 = vadd.f32 %v5972, %v6125
        %v6170 = vadd.f32 %v5973, %v6128
        %v6171 = vadd.f32 %v5974, %v6131
        %v6172 = vadd.f32 %v5975, %v6134
        %v6173 = vadd.f32 %v5976, %v6137
        %v6174 = vadd.f32 %v5977, %v6140
        %v6175 = vadd.f32 %v5978, %v6143
        %v6176 = vld [vmem:[%s4368] sm:$0xff]
        %v6177 = vld [vmem:[%s4368 + $0x8] sm:$0xff]
        %v6178 = vld [vmem:[%s4368 + $0x20] sm:$0xff]
        %v6179 = vld [vmem:[%s4368 + $0x28] sm:$0xff]
        %v6180 = vld [vmem:[%s4368 + $0x40] sm:$0xff]
        %v6181 = vld [vmem:[%s4368 + $0x48] sm:$0xff]
        %v6182 = vld [vmem:[%s4368 + $0x60] sm:$0xff]
        %v6183 = vld [vmem:[%s4368 + $0x68] sm:$0xff]
        %v6184 = vld [vmem:[%s4368 + $0x80] sm:$0xff]
        %v6185 = vld [vmem:[%s4368 + $0x88] sm:$0xff]
        %v6186 = vld [vmem:[%s4368 + $0xa0] sm:$0xff]
        %v6187 = vld [vmem:[%s4368 + $0xa8] sm:$0xff]
        %v6188 = vld [vmem:[%s4368 + $0xc0] sm:$0xff]
        %v6189 = vld [vmem:[%s4368 + $0xc8] sm:$0xff]
        %v6190 = vld [vmem:[%s4368 + $0xe0] sm:$0xff]
        %v6191 = vld [vmem:[%s4368 + $0xe8] sm:$0xff]
        %v6192 = vld [vmem:[%s4368 + $0x100] sm:$0xff]
        %v6193 = vld [vmem:[%s4368 + $0x108] sm:$0xff]
        %v6194 = vld [vmem:[%s4368 + $0x120] sm:$0xff]
        %v6195 = vld [vmem:[%s4368 + $0x128] sm:$0xff]
        %v6196 = vld [vmem:[%s4368 + $0x140] sm:$0xff]
        %v6197 = vld [vmem:[%s4368 + $0x148] sm:$0xff]
        %v6198 = vld [vmem:[%s4368 + $0x160] sm:$0xff]
        %v6199 = vld [vmem:[%s4368 + $0x168] sm:$0xff]
        %v6200 = vld [vmem:[%s4368 + $0x180] sm:$0xff]
        %v6201 = vld [vmem:[%s4368 + $0x188] sm:$0xff]
        %v6202 = vld [vmem:[%s4368 + $0x1a0] sm:$0xff]
        %v6203 = vld [vmem:[%s4368 + $0x1a8] sm:$0xff]
        %v6204 = vld [vmem:[%s4368 + $0x1c0] sm:$0xff]
        %v6205 = vld [vmem:[%s4368 + $0x1c8] sm:$0xff]
        %v6206 = vld [vmem:[%s4368 + $0x1e0] sm:$0xff]
        %v6207 = vld [vmem:[%s4368 + $0x1e8] sm:$0xff]
        %v6208 = vld [vmem:[%s5 + $0x3] sm:$0x1]
        %v6209 = vlaneseq
        %v6210 = vshrl.u32 %v6209, 7
        %v6211 = vsub.s32 0, %v6210
        %v6212 = vrot.slane %v6208, %v6211
        %v6213 = vmul.f32 %v6176, %v6212
        %v6214 = vmul.f32 %v6177, %v6212
        %v6215 = vmul.f32 %v6178, %v6212
        %v6216 = vmul.f32 %v6179, %v6212
        %v6217 = vmul.f32 %v6180, %v6212
        %v6218 = vmul.f32 %v6181, %v6212
        %v6219 = vmul.f32 %v6182, %v6212
        %v6220 = vmul.f32 %v6183, %v6212
        %v6221 = vmul.f32 %v6184, %v6212
        %v6222 = vmul.f32 %v6185, %v6212
        %v6223 = vmul.f32 %v6186, %v6212
        %v6224 = vmul.f32 %v6187, %v6212
        %v6225 = vmul.f32 %v6188, %v6212
        %v6226 = vmul.f32 %v6189, %v6212
        %v6227 = vmul.f32 %v6190, %v6212
        %v6228 = vmul.f32 %v6191, %v6212
        %v6229 = vmul.f32 %v6192, %v6212
        %v6230 = vmul.f32 %v6193, %v6212
        %v6231 = vmul.f32 %v6194, %v6212
        %v6232 = vmul.f32 %v6195, %v6212
        %v6233 = vmul.f32 %v6196, %v6212
        %v6234 = vmul.f32 %v6197, %v6212
        %v6235 = vmul.f32 %v6198, %v6212
        %v6236 = vmul.f32 %v6199, %v6212
        %v6237 = vmul.f32 %v6200, %v6212
        %v6238 = vmul.f32 %v6201, %v6212
        %v6239 = vmul.f32 %v6202, %v6212
        %v6240 = vmul.f32 %v6203, %v6212
        %v6241 = vmul.f32 %v6204, %v6212
        %v6242 = vmul.f32 %v6205, %v6212
        %v6243 = vmul.f32 %v6206, %v6212
        %v6244 = vmul.f32 %v6207, %v6212
        %v6245 = vsel %vm4272, %v6213, 0.0
        %6246 = vadd.xlane.f32.xlu0 %v6245
        %v6247 = vpop.xlane.xlu0 %6246
        %v6248 = vsel %vm4272, %v6214, 0.0
        %6249 = vadd.xlane.f32.xlu0 %v6248
        %v6250 = vpop.xlane.xlu0 %6249
        %v6251 = vsel %vm4272, %v6215, 0.0
        %6252 = vadd.xlane.f32.xlu0 %v6251
        %v6253 = vpop.xlane.xlu0 %6252
        %v6254 = vsel %vm4272, %v6216, 0.0
        %6255 = vadd.xlane.f32.xlu0 %v6254
        %v6256 = vpop.xlane.xlu0 %6255
        %v6257 = vsel %vm4272, %v6217, 0.0
        %6258 = vadd.xlane.f32.xlu0 %v6257
        %v6259 = vpop.xlane.xlu0 %6258
        %v6260 = vsel %vm4272, %v6218, 0.0
        %6261 = vadd.xlane.f32.xlu0 %v6260
        %v6262 = vpop.xlane.xlu0 %6261
        %v6263 = vsel %vm4272, %v6219, 0.0
        %6264 = vadd.xlane.f32.xlu0 %v6263
        %v6265 = vpop.xlane.xlu0 %6264
        %v6266 = vsel %vm4272, %v6220, 0.0
        %6267 = vadd.xlane.f32.xlu0 %v6266
        %v6268 = vpop.xlane.xlu0 %6267
        %v6269 = vsel %vm4272, %v6221, 0.0
        %6270 = vadd.xlane.f32.xlu0 %v6269
        %v6271 = vpop.xlane.xlu0 %6270
        %v6272 = vsel %vm4272, %v6222, 0.0
        %6273 = vadd.xlane.f32.xlu0 %v6272
        %v6274 = vpop.xlane.xlu0 %6273
        %v6275 = vsel %vm4272, %v6223, 0.0
        %6276 = vadd.xlane.f32.xlu0 %v6275
        %v6277 = vpop.xlane.xlu0 %6276
        %v6278 = vsel %vm4272, %v6224, 0.0
        %6279 = vadd.xlane.f32.xlu0 %v6278
        %v6280 = vpop.xlane.xlu0 %6279
        %v6281 = vsel %vm4272, %v6225, 0.0
        %6282 = vadd.xlane.f32.xlu0 %v6281
        %v6283 = vpop.xlane.xlu0 %6282
        %v6284 = vsel %vm4272, %v6226, 0.0
        %6285 = vadd.xlane.f32.xlu0 %v6284
        %v6286 = vpop.xlane.xlu0 %6285
        %v6287 = vsel %vm4272, %v6227, 0.0
        %6288 = vadd.xlane.f32.xlu0 %v6287
        %v6289 = vpop.xlane.xlu0 %6288
        %v6290 = vsel %vm4272, %v6228, 0.0
        %6291 = vadd.xlane.f32.xlu0 %v6290
        %v6292 = vpop.xlane.xlu0 %6291
        %v6293 = vsel %vm4272, %v6229, 0.0
        %6294 = vadd.xlane.f32.xlu0 %v6293
        %v6295 = vpop.xlane.xlu0 %6294
        %v6296 = vsel %vm4272, %v6230, 0.0
        %6297 = vadd.xlane.f32.xlu0 %v6296
        %v6298 = vpop.xlane.xlu0 %6297
        %v6299 = vsel %vm4272, %v6231, 0.0
        %6300 = vadd.xlane.f32.xlu0 %v6299
        %v6301 = vpop.xlane.xlu0 %6300
        %v6302 = vsel %vm4272, %v6232, 0.0
        %6303 = vadd.xlane.f32.xlu0 %v6302
        %v6304 = vpop.xlane.xlu0 %6303
        %v6305 = vsel %vm4272, %v6233, 0.0
        %6306 = vadd.xlane.f32.xlu0 %v6305
        %v6307 = vpop.xlane.xlu0 %6306
        %v6308 = vsel %vm4272, %v6234, 0.0
        %6309 = vadd.xlane.f32.xlu0 %v6308
        %v6310 = vpop.xlane.xlu0 %6309
        %v6311 = vsel %vm4272, %v6235, 0.0
        %6312 = vadd.xlane.f32.xlu0 %v6311
        %v6313 = vpop.xlane.xlu0 %6312
        %v6314 = vsel %vm4272, %v6236, 0.0
        %6315 = vadd.xlane.f32.xlu0 %v6314
        %v6316 = vpop.xlane.xlu0 %6315
        %v6317 = vsel %vm4272, %v6237, 0.0
        %6318 = vadd.xlane.f32.xlu0 %v6317
        %v6319 = vpop.xlane.xlu0 %6318
        %v6320 = vsel %vm4272, %v6238, 0.0
        %6321 = vadd.xlane.f32.xlu0 %v6320
        %v6322 = vpop.xlane.xlu0 %6321
        %v6323 = vsel %vm4272, %v6239, 0.0
        %6324 = vadd.xlane.f32.xlu0 %v6323
        %v6325 = vpop.xlane.xlu0 %6324
        %v6326 = vsel %vm4272, %v6240, 0.0
        %6327 = vadd.xlane.f32.xlu0 %v6326
        %v6328 = vpop.xlane.xlu0 %6327
        %v6329 = vsel %vm4272, %v6241, 0.0
        %6330 = vadd.xlane.f32.xlu0 %v6329
        %v6331 = vpop.xlane.xlu0 %6330
        %v6332 = vsel %vm4272, %v6242, 0.0
        %6333 = vadd.xlane.f32.xlu0 %v6332
        %v6334 = vpop.xlane.xlu0 %6333
        %v6335 = vsel %vm4272, %v6243, 0.0
        %6336 = vadd.xlane.f32.xlu0 %v6335
        %v6337 = vpop.xlane.xlu0 %6336
        %v6338 = vsel %vm4272, %v6244, 0.0
        %6339 = vadd.xlane.f32.xlu0 %v6338
        %v6340 = vpop.xlane.xlu0 %6339
        %v6341 = vadd.f32 %v6144, %v6247
        %v6342 = vadd.f32 %v6145, %v6250
        %v6343 = vadd.f32 %v6146, %v6253
        %v6344 = vadd.f32 %v6147, %v6256
        %v6345 = vadd.f32 %v6148, %v6259
        %v6346 = vadd.f32 %v6149, %v6262
        %v6347 = vadd.f32 %v6150, %v6265
        %v6348 = vadd.f32 %v6151, %v6268
        %v6349 = vadd.f32 %v6152, %v6271
        %v6350 = vadd.f32 %v6153, %v6274
        %v6351 = vadd.f32 %v6154, %v6277
        %v6352 = vadd.f32 %v6155, %v6280
        %v6353 = vadd.f32 %v6156, %v6283
        %v6354 = vadd.f32 %v6157, %v6286
        %v6355 = vadd.f32 %v6158, %v6289
        %v6356 = vadd.f32 %v6159, %v6292
        %v6357 = vadd.f32 %v6160, %v6295
        %v6358 = vadd.f32 %v6161, %v6298
        %v6359 = vadd.f32 %v6162, %v6301
        %v6360 = vadd.f32 %v6163, %v6304
        %v6361 = vadd.f32 %v6164, %v6307
        %v6362 = vadd.f32 %v6165, %v6310
        %v6363 = vadd.f32 %v6166, %v6313
        %v6364 = vadd.f32 %v6167, %v6316
        %v6365 = vadd.f32 %v6168, %v6319
        %v6366 = vadd.f32 %v6169, %v6322
        %v6367 = vadd.f32 %v6170, %v6325
        %v6368 = vadd.f32 %v6171, %v6328
        %v6369 = vadd.f32 %v6172, %v6331
        %v6370 = vadd.f32 %v6173, %v6334
        %v6371 = vadd.f32 %v6174, %v6337
        %v6372 = vadd.f32 %v6175, %v6340
        %v6373 = vld [vmem:[%s4368 + $0x4] sm:$0xff]
        %v6374 = vld [vmem:[%s4368 + $0xc] sm:$0xff]
        %v6375 = vld [vmem:[%s4368 + $0x24] sm:$0xff]
        %v6376 = vld [vmem:[%s4368 + $0x2c] sm:$0xff]
        %v6377 = vld [vmem:[%s4368 + $0x44] sm:$0xff]
        %v6378 = vld [vmem:[%s4368 + $0x4c] sm:$0xff]
        %v6379 = vld [vmem:[%s4368 + $0x64] sm:$0xff]
        %v6380 = vld [vmem:[%s4368 + $0x6c] sm:$0xff]
        %v6381 = vld [vmem:[%s4368 + $0x84] sm:$0xff]
        %v6382 = vld [vmem:[%s4368 + $0x8c] sm:$0xff]
        %v6383 = vld [vmem:[%s4368 + $0xa4] sm:$0xff]
        %v6384 = vld [vmem:[%s4368 + $0xac] sm:$0xff]
        %v6385 = vld [vmem:[%s4368 + $0xc4] sm:$0xff]
        %v6386 = vld [vmem:[%s4368 + $0xcc] sm:$0xff]
        %v6387 = vld [vmem:[%s4368 + $0xe4] sm:$0xff]
        %v6388 = vld [vmem:[%s4368 + $0xec] sm:$0xff]
        %v6389 = vld [vmem:[%s4368 + $0x104] sm:$0xff]
        %v6390 = vld [vmem:[%s4368 + $0x10c] sm:$0xff]
        %v6391 = vld [vmem:[%s4368 + $0x124] sm:$0xff]
        %v6392 = vld [vmem:[%s4368 + $0x12c] sm:$0xff]
        %v6393 = vld [vmem:[%s4368 + $0x144] sm:$0xff]
        %v6394 = vld [vmem:[%s4368 + $0x14c] sm:$0xff]
        %v6395 = vld [vmem:[%s4368 + $0x164] sm:$0xff]
        %v6396 = vld [vmem:[%s4368 + $0x16c] sm:$0xff]
        %v6397 = vld [vmem:[%s4368 + $0x184] sm:$0xff]
        %v6398 = vld [vmem:[%s4368 + $0x18c] sm:$0xff]
        %v6399 = vld [vmem:[%s4368 + $0x1a4] sm:$0xff]
        %v6400 = vld [vmem:[%s4368 + $0x1ac] sm:$0xff]
        %v6401 = vld [vmem:[%s4368 + $0x1c4] sm:$0xff]
        %v6402 = vld [vmem:[%s4368 + $0x1cc] sm:$0xff]
        %v6403 = vld [vmem:[%s4368 + $0x1e4] sm:$0xff]
        %v6404 = vld [vmem:[%s4368 + $0x1ec] sm:$0xff]
        %v6405 = vld [vmem:[%s7 + $0x3] sm:$0x1]
        %v6406 = vlaneseq
        %v6407 = vshrl.u32 %v6406, 7
        %v6408 = vsub.s32 0, %v6407
        %v6409 = vrot.slane %v6405, %v6408
        %v6410 = vmul.f32 %v6373, %v6409
        %v6411 = vmul.f32 %v6374, %v6409
        %v6412 = vmul.f32 %v6375, %v6409
        %v6413 = vmul.f32 %v6376, %v6409
        %v6414 = vmul.f32 %v6377, %v6409
        %v6415 = vmul.f32 %v6378, %v6409
        %v6416 = vmul.f32 %v6379, %v6409
        %v6417 = vmul.f32 %v6380, %v6409
        %v6418 = vmul.f32 %v6381, %v6409
        %v6419 = vmul.f32 %v6382, %v6409
        %v6420 = vmul.f32 %v6383, %v6409
        %v6421 = vmul.f32 %v6384, %v6409
        %v6422 = vmul.f32 %v6385, %v6409
        %v6423 = vmul.f32 %v6386, %v6409
        %v6424 = vmul.f32 %v6387, %v6409
        %v6425 = vmul.f32 %v6388, %v6409
        %v6426 = vmul.f32 %v6389, %v6409
        %v6427 = vmul.f32 %v6390, %v6409
        %v6428 = vmul.f32 %v6391, %v6409
        %v6429 = vmul.f32 %v6392, %v6409
        %v6430 = vmul.f32 %v6393, %v6409
        %v6431 = vmul.f32 %v6394, %v6409
        %v6432 = vmul.f32 %v6395, %v6409
        %v6433 = vmul.f32 %v6396, %v6409
        %v6434 = vmul.f32 %v6397, %v6409
        %v6435 = vmul.f32 %v6398, %v6409
        %v6436 = vmul.f32 %v6399, %v6409
        %v6437 = vmul.f32 %v6400, %v6409
        %v6438 = vmul.f32 %v6401, %v6409
        %v6439 = vmul.f32 %v6402, %v6409
        %v6440 = vmul.f32 %v6403, %v6409
        %v6441 = vmul.f32 %v6404, %v6409
        %v6442 = vsel %vm4272, %v6410, 0.0
        %6443 = vadd.xlane.f32.xlu0 %v6442
        %v6444 = vpop.xlane.xlu0 %6443
        %v6445 = vsel %vm4272, %v6411, 0.0
        %6446 = vadd.xlane.f32.xlu0 %v6445
        %v6447 = vpop.xlane.xlu0 %6446
        %v6448 = vsel %vm4272, %v6412, 0.0
        %6449 = vadd.xlane.f32.xlu0 %v6448
        %v6450 = vpop.xlane.xlu0 %6449
        %v6451 = vsel %vm4272, %v6413, 0.0
        %6452 = vadd.xlane.f32.xlu0 %v6451
        %v6453 = vpop.xlane.xlu0 %6452
        %v6454 = vsel %vm4272, %v6414, 0.0
        %6455 = vadd.xlane.f32.xlu0 %v6454
        %v6456 = vpop.xlane.xlu0 %6455
        %v6457 = vsel %vm4272, %v6415, 0.0
        %6458 = vadd.xlane.f32.xlu0 %v6457
        %v6459 = vpop.xlane.xlu0 %6458
        %v6460 = vsel %vm4272, %v6416, 0.0
        %6461 = vadd.xlane.f32.xlu0 %v6460
        %v6462 = vpop.xlane.xlu0 %6461
        %v6463 = vsel %vm4272, %v6417, 0.0
        %6464 = vadd.xlane.f32.xlu0 %v6463
        %v6465 = vpop.xlane.xlu0 %6464
        %v6466 = vsel %vm4272, %v6418, 0.0
        %6467 = vadd.xlane.f32.xlu0 %v6466
        %v6468 = vpop.xlane.xlu0 %6467
        %v6469 = vsel %vm4272, %v6419, 0.0
        %6470 = vadd.xlane.f32.xlu0 %v6469
        %v6471 = vpop.xlane.xlu0 %6470
        %v6472 = vsel %vm4272, %v6420, 0.0
        %6473 = vadd.xlane.f32.xlu0 %v6472
        %v6474 = vpop.xlane.xlu0 %6473
        %v6475 = vsel %vm4272, %v6421, 0.0
        %6476 = vadd.xlane.f32.xlu0 %v6475
        %v6477 = vpop.xlane.xlu0 %6476
        %v6478 = vsel %vm4272, %v6422, 0.0
        %6479 = vadd.xlane.f32.xlu0 %v6478
        %v6480 = vpop.xlane.xlu0 %6479
        %v6481 = vsel %vm4272, %v6423, 0.0
        %6482 = vadd.xlane.f32.xlu0 %v6481
        %v6483 = vpop.xlane.xlu0 %6482
        %v6484 = vsel %vm4272, %v6424, 0.0
        %6485 = vadd.xlane.f32.xlu0 %v6484
        %v6486 = vpop.xlane.xlu0 %6485
        %v6487 = vsel %vm4272, %v6425, 0.0
        %6488 = vadd.xlane.f32.xlu0 %v6487
        %v6489 = vpop.xlane.xlu0 %6488
        %v6490 = vsel %vm4272, %v6426, 0.0
        %6491 = vadd.xlane.f32.xlu0 %v6490
        %v6492 = vpop.xlane.xlu0 %6491
        %v6493 = vsel %vm4272, %v6427, 0.0
        %6494 = vadd.xlane.f32.xlu0 %v6493
        %v6495 = vpop.xlane.xlu0 %6494
        %v6496 = vsel %vm4272, %v6428, 0.0
        %6497 = vadd.xlane.f32.xlu0 %v6496
        %v6498 = vpop.xlane.xlu0 %6497
        %v6499 = vsel %vm4272, %v6429, 0.0
        %6500 = vadd.xlane.f32.xlu0 %v6499
        %v6501 = vpop.xlane.xlu0 %6500
        %v6502 = vsel %vm4272, %v6430, 0.0
        %6503 = vadd.xlane.f32.xlu0 %v6502
        %v6504 = vpop.xlane.xlu0 %6503
        %v6505 = vsel %vm4272, %v6431, 0.0
        %6506 = vadd.xlane.f32.xlu0 %v6505
        %v6507 = vpop.xlane.xlu0 %6506
        %v6508 = vsel %vm4272, %v6432, 0.0
        %6509 = vadd.xlane.f32.xlu0 %v6508
        %v6510 = vpop.xlane.xlu0 %6509
        %v6511 = vsel %vm4272, %v6433, 0.0
        %6512 = vadd.xlane.f32.xlu0 %v6511
        %v6513 = vpop.xlane.xlu0 %6512
        %v6514 = vsel %vm4272, %v6434, 0.0
        %6515 = vadd.xlane.f32.xlu0 %v6514
        %v6516 = vpop.xlane.xlu0 %6515
        %v6517 = vsel %vm4272, %v6435, 0.0
        %6518 = vadd.xlane.f32.xlu0 %v6517
        %v6519 = vpop.xlane.xlu0 %6518
        %v6520 = vsel %vm4272, %v6436, 0.0
        %6521 = vadd.xlane.f32.xlu0 %v6520
        %v6522 = vpop.xlane.xlu0 %6521
        %v6523 = vsel %vm4272, %v6437, 0.0
        %6524 = vadd.xlane.f32.xlu0 %v6523
        %v6525 = vpop.xlane.xlu0 %6524
        %v6526 = vsel %vm4272, %v6438, 0.0
        %6527 = vadd.xlane.f32.xlu0 %v6526
        %v6528 = vpop.xlane.xlu0 %6527
        %v6529 = vsel %vm4272, %v6439, 0.0
        %6530 = vadd.xlane.f32.xlu0 %v6529
        %v6531 = vpop.xlane.xlu0 %6530
        %v6532 = vsel %vm4272, %v6440, 0.0
        %6533 = vadd.xlane.f32.xlu0 %v6532
        %v6534 = vpop.xlane.xlu0 %6533
        %v6535 = vsel %vm4272, %v6441, 0.0
        %6536 = vadd.xlane.f32.xlu0 %v6535
        %v6537 = vpop.xlane.xlu0 %6536
        %v6538 = vadd.f32 %v6341, %v6444
        %v6539 = vadd.f32 %v6342, %v6447
        %v6540 = vadd.f32 %v6343, %v6450
        %v6541 = vadd.f32 %v6344, %v6453
        %v6542 = vadd.f32 %v6345, %v6456
        %v6543 = vadd.f32 %v6346, %v6459
        %v6544 = vadd.f32 %v6347, %v6462
        %v6545 = vadd.f32 %v6348, %v6465
        %v6546 = vadd.f32 %v6349, %v6468
        %v6547 = vadd.f32 %v6350, %v6471
        %v6548 = vadd.f32 %v6351, %v6474
        %v6549 = vadd.f32 %v6352, %v6477
        %v6550 = vadd.f32 %v6353, %v6480
        %v6551 = vadd.f32 %v6354, %v6483
        %v6552 = vadd.f32 %v6355, %v6486
        %v6553 = vadd.f32 %v6356, %v6489
        %v6554 = vadd.f32 %v6357, %v6492
        %v6555 = vadd.f32 %v6358, %v6495
        %v6556 = vadd.f32 %v6359, %v6498
        %v6557 = vadd.f32 %v6360, %v6501
        %v6558 = vadd.f32 %v6361, %v6504
        %v6559 = vadd.f32 %v6362, %v6507
        %v6560 = vadd.f32 %v6363, %v6510
        %v6561 = vadd.f32 %v6364, %v6513
        %v6562 = vadd.f32 %v6365, %v6516
        %v6563 = vadd.f32 %v6366, %v6519
        %v6564 = vadd.f32 %v6367, %v6522
        %v6565 = vadd.f32 %v6368, %v6525
        %v6566 = vadd.f32 %v6369, %v6528
        %v6567 = vadd.f32 %v6370, %v6531
        %v6568 = vadd.f32 %v6371, %v6534
        %v6569 = vadd.f32 %v6372, %v6537
        %v6570 = vld [vmem:[%s2420 + $0x1] sm:$0xff]
        %v6571 = vld [vmem:[%s2420 + $0x9] sm:$0xff]
        %v6572 = vld [vmem:[%s2420 + $0x19] sm:$0xff]
        %v6573 = vld [vmem:[%s2420 + $0x21] sm:$0xff]
        %v6574 = vld [vmem:[%s2420 + $0x31] sm:$0xff]
        %v6575 = vld [vmem:[%s2420 + $0x39] sm:$0xff]
        %v6576 = vld [vmem:[%s2420 + $0x49] sm:$0xff]
        %v6577 = vld [vmem:[%s2420 + $0x51] sm:$0xff]
        %v6578 = vld [vmem:[%s2420 + $0x61] sm:$0xff]
        %v6579 = vld [vmem:[%s2420 + $0x69] sm:$0xff]
        %v6580 = vld [vmem:[%s2420 + $0x79] sm:$0xff]
        %v6581 = vld [vmem:[%s2420 + $0x81] sm:$0xff]
        %v6582 = vld [vmem:[%s2420 + $0x91] sm:$0xff]
        %v6583 = vld [vmem:[%s2420 + $0x99] sm:$0xff]
        %v6584 = vld [vmem:[%s2420 + $0xa9] sm:$0xff]
        %v6585 = vld [vmem:[%s2420 + $0xb1] sm:$0xff]
        %v6586 = vld [vmem:[%s2420 + $0xc1] sm:$0xff]
        %v6587 = vld [vmem:[%s2420 + $0xc9] sm:$0xff]
        %v6588 = vld [vmem:[%s2420 + $0xd9] sm:$0xff]
        %v6589 = vld [vmem:[%s2420 + $0xe1] sm:$0xff]
        %v6590 = vld [vmem:[%s2420 + $0xf1] sm:$0xff]
        %v6591 = vld [vmem:[%s2420 + $0xf9] sm:$0xff]
        %v6592 = vld [vmem:[%s2420 + $0x109] sm:$0xff]
        %v6593 = vld [vmem:[%s2420 + $0x111] sm:$0xff]
        %v6594 = vld [vmem:[%s2420 + $0x121] sm:$0xff]
        %v6595 = vld [vmem:[%s2420 + $0x129] sm:$0xff]
        %v6596 = vld [vmem:[%s2420 + $0x139] sm:$0xff]
        %v6597 = vld [vmem:[%s2420 + $0x141] sm:$0xff]
        %v6598 = vld [vmem:[%s2420 + $0x151] sm:$0xff]
        %v6599 = vld [vmem:[%s2420 + $0x159] sm:$0xff]
        %v6600 = vld [vmem:[%s2420 + $0x169] sm:$0xff]
        %v6601 = vld [vmem:[%s2420 + $0x171] sm:$0xff]
        %v6602 = vld [vmem:[%s6 + $0x3] sm:$0x1]
        %v6603 = vlaneseq
        %v6604 = vshrl.u32 %v6603, 7
        %v6605 = vsub.s32 0, %v6604
        %v6606 = vrot.slane %v6602, %v6605
        %v6607 = vmul.f32 %v6570, %v6606
        %v6608 = vmul.f32 %v6571, %v6606
        %v6609 = vmul.f32 %v6572, %v6606
        %v6610 = vmul.f32 %v6573, %v6606
        %v6611 = vmul.f32 %v6574, %v6606
        %v6612 = vmul.f32 %v6575, %v6606
        %v6613 = vmul.f32 %v6576, %v6606
        %v6614 = vmul.f32 %v6577, %v6606
        %v6615 = vmul.f32 %v6578, %v6606
        %v6616 = vmul.f32 %v6579, %v6606
        %v6617 = vmul.f32 %v6580, %v6606
        %v6618 = vmul.f32 %v6581, %v6606
        %v6619 = vmul.f32 %v6582, %v6606
        %v6620 = vmul.f32 %v6583, %v6606
        %v6621 = vmul.f32 %v6584, %v6606
        %v6622 = vmul.f32 %v6585, %v6606
        %v6623 = vmul.f32 %v6586, %v6606
        %v6624 = vmul.f32 %v6587, %v6606
        %v6625 = vmul.f32 %v6588, %v6606
        %v6626 = vmul.f32 %v6589, %v6606
        %v6627 = vmul.f32 %v6590, %v6606
        %v6628 = vmul.f32 %v6591, %v6606
        %v6629 = vmul.f32 %v6592, %v6606
        %v6630 = vmul.f32 %v6593, %v6606
        %v6631 = vmul.f32 %v6594, %v6606
        %v6632 = vmul.f32 %v6595, %v6606
        %v6633 = vmul.f32 %v6596, %v6606
        %v6634 = vmul.f32 %v6597, %v6606
        %v6635 = vmul.f32 %v6598, %v6606
        %v6636 = vmul.f32 %v6599, %v6606
        %v6637 = vmul.f32 %v6600, %v6606
        %v6638 = vmul.f32 %v6601, %v6606
        %v6639 = vsel %vm2364, %v6607, 0.0
        %6640 = vadd.xlane.f32.xlu0 %v6639
        %v6641 = vpop.xlane.xlu0 %6640
        %v6642 = vsel %vm2364, %v6608, 0.0
        %6643 = vadd.xlane.f32.xlu0 %v6642
        %v6644 = vpop.xlane.xlu0 %6643
        %v6645 = vsel %vm2364, %v6609, 0.0
        %6646 = vadd.xlane.f32.xlu0 %v6645
        %v6647 = vpop.xlane.xlu0 %6646
        %v6648 = vsel %vm2364, %v6610, 0.0
        %6649 = vadd.xlane.f32.xlu0 %v6648
        %v6650 = vpop.xlane.xlu0 %6649
        %v6651 = vsel %vm2364, %v6611, 0.0
        %6652 = vadd.xlane.f32.xlu0 %v6651
        %v6653 = vpop.xlane.xlu0 %6652
        %v6654 = vsel %vm2364, %v6612, 0.0
        %6655 = vadd.xlane.f32.xlu0 %v6654
        %v6656 = vpop.xlane.xlu0 %6655
        %v6657 = vsel %vm2364, %v6613, 0.0
        %6658 = vadd.xlane.f32.xlu0 %v6657
        %v6659 = vpop.xlane.xlu0 %6658
        %v6660 = vsel %vm2364, %v6614, 0.0
        %6661 = vadd.xlane.f32.xlu0 %v6660
        %v6662 = vpop.xlane.xlu0 %6661
        %v6663 = vsel %vm2364, %v6615, 0.0
        %6664 = vadd.xlane.f32.xlu0 %v6663
        %v6665 = vpop.xlane.xlu0 %6664
        %v6666 = vsel %vm2364, %v6616, 0.0
        %6667 = vadd.xlane.f32.xlu0 %v6666
        %v6668 = vpop.xlane.xlu0 %6667
        %v6669 = vsel %vm2364, %v6617, 0.0
        %6670 = vadd.xlane.f32.xlu0 %v6669
        %v6671 = vpop.xlane.xlu0 %6670
        %v6672 = vsel %vm2364, %v6618, 0.0
        %6673 = vadd.xlane.f32.xlu0 %v6672
        %v6674 = vpop.xlane.xlu0 %6673
        %v6675 = vsel %vm2364, %v6619, 0.0
        %6676 = vadd.xlane.f32.xlu0 %v6675
        %v6677 = vpop.xlane.xlu0 %6676
        %v6678 = vsel %vm2364, %v6620, 0.0
        %6679 = vadd.xlane.f32.xlu0 %v6678
        %v6680 = vpop.xlane.xlu0 %6679
        %v6681 = vsel %vm2364, %v6621, 0.0
        %6682 = vadd.xlane.f32.xlu0 %v6681
        %v6683 = vpop.xlane.xlu0 %6682
        %v6684 = vsel %vm2364, %v6622, 0.0
        %6685 = vadd.xlane.f32.xlu0 %v6684
        %v6686 = vpop.xlane.xlu0 %6685
        %v6687 = vsel %vm2364, %v6623, 0.0
        %6688 = vadd.xlane.f32.xlu0 %v6687
        %v6689 = vpop.xlane.xlu0 %6688
        %v6690 = vsel %vm2364, %v6624, 0.0
        %6691 = vadd.xlane.f32.xlu0 %v6690
        %v6692 = vpop.xlane.xlu0 %6691
        %v6693 = vsel %vm2364, %v6625, 0.0
        %6694 = vadd.xlane.f32.xlu0 %v6693
        %v6695 = vpop.xlane.xlu0 %6694
        %v6696 = vsel %vm2364, %v6626, 0.0
        %6697 = vadd.xlane.f32.xlu0 %v6696
        %v6698 = vpop.xlane.xlu0 %6697
        %v6699 = vsel %vm2364, %v6627, 0.0
        %6700 = vadd.xlane.f32.xlu0 %v6699
        %v6701 = vpop.xlane.xlu0 %6700
        %v6702 = vsel %vm2364, %v6628, 0.0
        %6703 = vadd.xlane.f32.xlu0 %v6702
        %v6704 = vpop.xlane.xlu0 %6703
        %v6705 = vsel %vm2364, %v6629, 0.0
        %6706 = vadd.xlane.f32.xlu0 %v6705
        %v6707 = vpop.xlane.xlu0 %6706
        %v6708 = vsel %vm2364, %v6630, 0.0
        %6709 = vadd.xlane.f32.xlu0 %v6708
        %v6710 = vpop.xlane.xlu0 %6709
        %v6711 = vsel %vm2364, %v6631, 0.0
        %6712 = vadd.xlane.f32.xlu0 %v6711
        %v6713 = vpop.xlane.xlu0 %6712
        %v6714 = vsel %vm2364, %v6632, 0.0
        %6715 = vadd.xlane.f32.xlu0 %v6714
        %v6716 = vpop.xlane.xlu0 %6715
        %v6717 = vsel %vm2364, %v6633, 0.0
        %6718 = vadd.xlane.f32.xlu0 %v6717
        %v6719 = vpop.xlane.xlu0 %6718
        %v6720 = vsel %vm2364, %v6634, 0.0
        %6721 = vadd.xlane.f32.xlu0 %v6720
        %v6722 = vpop.xlane.xlu0 %6721
        %v6723 = vsel %vm2364, %v6635, 0.0
        %6724 = vadd.xlane.f32.xlu0 %v6723
        %v6725 = vpop.xlane.xlu0 %6724
        %v6726 = vsel %vm2364, %v6636, 0.0
        %6727 = vadd.xlane.f32.xlu0 %v6726
        %v6728 = vpop.xlane.xlu0 %6727
        %v6729 = vsel %vm2364, %v6637, 0.0
        %6730 = vadd.xlane.f32.xlu0 %v6729
        %v6731 = vpop.xlane.xlu0 %6730
        %v6732 = vsel %vm2364, %v6638, 0.0
        %6733 = vadd.xlane.f32.xlu0 %v6732
        %v6734 = vpop.xlane.xlu0 %6733
        %v6735 = vadd.f32 %v6538, %v6641
        %v6736 = vadd.f32 %v6539, %v6644
        %v6737 = vadd.f32 %v6540, %v6647
        %v6738 = vadd.f32 %v6541, %v6650
        %v6739 = vadd.f32 %v6542, %v6653
        %v6740 = vadd.f32 %v6543, %v6656
        %v6741 = vadd.f32 %v6544, %v6659
        %v6742 = vadd.f32 %v6545, %v6662
        %v6743 = vadd.f32 %v6546, %v6665
        %v6744 = vadd.f32 %v6547, %v6668
        %v6745 = vadd.f32 %v6548, %v6671
        %v6746 = vadd.f32 %v6549, %v6674
        %v6747 = vadd.f32 %v6550, %v6677
        %v6748 = vadd.f32 %v6551, %v6680
        %v6749 = vadd.f32 %v6552, %v6683
        %v6750 = vadd.f32 %v6553, %v6686
        %v6751 = vadd.f32 %v6554, %v6689
        %v6752 = vadd.f32 %v6555, %v6692
        %v6753 = vadd.f32 %v6556, %v6695
        %v6754 = vadd.f32 %v6557, %v6698
        %v6755 = vadd.f32 %v6558, %v6701
        %v6756 = vadd.f32 %v6559, %v6704
        %v6757 = vadd.f32 %v6560, %v6707
        %v6758 = vadd.f32 %v6561, %v6710
        %v6759 = vadd.f32 %v6562, %v6713
        %v6760 = vadd.f32 %v6563, %v6716
        %v6761 = vadd.f32 %v6564, %v6719
        %v6762 = vadd.f32 %v6565, %v6722
        %v6763 = vadd.f32 %v6566, %v6725
        %v6764 = vadd.f32 %v6567, %v6728
        %v6765 = vadd.f32 %v6568, %v6731
        %v6766 = vadd.f32 %v6569, %v6734
        %v6767 = vld [vmem:[%s4368 + $0x5] sm:$0xff]
        %v6768 = vld [vmem:[%s4368 + $0xd] sm:$0xff]
        %v6769 = vld [vmem:[%s4368 + $0x25] sm:$0xff]
        %v6770 = vld [vmem:[%s4368 + $0x2d] sm:$0xff]
        %v6771 = vld [vmem:[%s4368 + $0x45] sm:$0xff]
        %v6772 = vld [vmem:[%s4368 + $0x4d] sm:$0xff]
        %v6773 = vld [vmem:[%s4368 + $0x65] sm:$0xff]
        %v6774 = vld [vmem:[%s4368 + $0x6d] sm:$0xff]
        %v6775 = vld [vmem:[%s4368 + $0x85] sm:$0xff]
        %v6776 = vld [vmem:[%s4368 + $0x8d] sm:$0xff]
        %v6777 = vld [vmem:[%s4368 + $0xa5] sm:$0xff]
        %v6778 = vld [vmem:[%s4368 + $0xad] sm:$0xff]
        %v6779 = vld [vmem:[%s4368 + $0xc5] sm:$0xff]
        %v6780 = vld [vmem:[%s4368 + $0xcd] sm:$0xff]
        %v6781 = vld [vmem:[%s4368 + $0xe5] sm:$0xff]
        %v6782 = vld [vmem:[%s4368 + $0xed] sm:$0xff]
        %v6783 = vld [vmem:[%s4368 + $0x105] sm:$0xff]
        %v6784 = vld [vmem:[%s4368 + $0x10d] sm:$0xff]
        %v6785 = vld [vmem:[%s4368 + $0x125] sm:$0xff]
        %v6786 = vld [vmem:[%s4368 + $0x12d] sm:$0xff]
        %v6787 = vld [vmem:[%s4368 + $0x145] sm:$0xff]
        %v6788 = vld [vmem:[%s4368 + $0x14d] sm:$0xff]
        %v6789 = vld [vmem:[%s4368 + $0x165] sm:$0xff]
        %v6790 = vld [vmem:[%s4368 + $0x16d] sm:$0xff]
        %v6791 = vld [vmem:[%s4368 + $0x185] sm:$0xff]
        %v6792 = vld [vmem:[%s4368 + $0x18d] sm:$0xff]
        %v6793 = vld [vmem:[%s4368 + $0x1a5] sm:$0xff]
        %v6794 = vld [vmem:[%s4368 + $0x1ad] sm:$0xff]
        %v6795 = vld [vmem:[%s4368 + $0x1c5] sm:$0xff]
        %v6796 = vld [vmem:[%s4368 + $0x1cd] sm:$0xff]
        %v6797 = vld [vmem:[%s4368 + $0x1e5] sm:$0xff]
        %v6798 = vld [vmem:[%s4368 + $0x1ed] sm:$0xff]
        %v6799 = vld [vmem:[%s5 + $0x4] sm:$0x1]
        %v6800 = vlaneseq
        %v6801 = vshrl.u32 %v6800, 7
        %v6802 = vsub.s32 0, %v6801
        %v6803 = vrot.slane %v6799, %v6802
        %v6804 = vmul.f32 %v6767, %v6803
        %v6805 = vmul.f32 %v6768, %v6803
        %v6806 = vmul.f32 %v6769, %v6803
        %v6807 = vmul.f32 %v6770, %v6803
        %v6808 = vmul.f32 %v6771, %v6803
        %v6809 = vmul.f32 %v6772, %v6803
        %v6810 = vmul.f32 %v6773, %v6803
        %v6811 = vmul.f32 %v6774, %v6803
        %v6812 = vmul.f32 %v6775, %v6803
        %v6813 = vmul.f32 %v6776, %v6803
        %v6814 = vmul.f32 %v6777, %v6803
        %v6815 = vmul.f32 %v6778, %v6803
        %v6816 = vmul.f32 %v6779, %v6803
        %v6817 = vmul.f32 %v6780, %v6803
        %v6818 = vmul.f32 %v6781, %v6803
        %v6819 = vmul.f32 %v6782, %v6803
        %v6820 = vmul.f32 %v6783, %v6803
        %v6821 = vmul.f32 %v6784, %v6803
        %v6822 = vmul.f32 %v6785, %v6803
        %v6823 = vmul.f32 %v6786, %v6803
        %v6824 = vmul.f32 %v6787, %v6803
        %v6825 = vmul.f32 %v6788, %v6803
        %v6826 = vmul.f32 %v6789, %v6803
        %v6827 = vmul.f32 %v6790, %v6803
        %v6828 = vmul.f32 %v6791, %v6803
        %v6829 = vmul.f32 %v6792, %v6803
        %v6830 = vmul.f32 %v6793, %v6803
        %v6831 = vmul.f32 %v6794, %v6803
        %v6832 = vmul.f32 %v6795, %v6803
        %v6833 = vmul.f32 %v6796, %v6803
        %v6834 = vmul.f32 %v6797, %v6803
        %v6835 = vmul.f32 %v6798, %v6803
        %v6836 = vsel %vm4272, %v6804, 0.0
        %6837 = vadd.xlane.f32.xlu0 %v6836
        %v6838 = vpop.xlane.xlu0 %6837
        %v6839 = vsel %vm4272, %v6805, 0.0
        %6840 = vadd.xlane.f32.xlu0 %v6839
        %v6841 = vpop.xlane.xlu0 %6840
        %v6842 = vsel %vm4272, %v6806, 0.0
        %6843 = vadd.xlane.f32.xlu0 %v6842
        %v6844 = vpop.xlane.xlu0 %6843
        %v6845 = vsel %vm4272, %v6807, 0.0
        %6846 = vadd.xlane.f32.xlu0 %v6845
        %v6847 = vpop.xlane.xlu0 %6846
        %v6848 = vsel %vm4272, %v6808, 0.0
        %6849 = vadd.xlane.f32.xlu0 %v6848
        %v6850 = vpop.xlane.xlu0 %6849
        %v6851 = vsel %vm4272, %v6809, 0.0
        %6852 = vadd.xlane.f32.xlu0 %v6851
        %v6853 = vpop.xlane.xlu0 %6852
        %v6854 = vsel %vm4272, %v6810, 0.0
        %6855 = vadd.xlane.f32.xlu0 %v6854
        %v6856 = vpop.xlane.xlu0 %6855
        %v6857 = vsel %vm4272, %v6811, 0.0
        %6858 = vadd.xlane.f32.xlu0 %v6857
        %v6859 = vpop.xlane.xlu0 %6858
        %v6860 = vsel %vm4272, %v6812, 0.0
        %6861 = vadd.xlane.f32.xlu0 %v6860
        %v6862 = vpop.xlane.xlu0 %6861
        %v6863 = vsel %vm4272, %v6813, 0.0
        %6864 = vadd.xlane.f32.xlu0 %v6863
        %v6865 = vpop.xlane.xlu0 %6864
        %v6866 = vsel %vm4272, %v6814, 0.0
        %6867 = vadd.xlane.f32.xlu0 %v6866
        %v6868 = vpop.xlane.xlu0 %6867
        %v6869 = vsel %vm4272, %v6815, 0.0
        %6870 = vadd.xlane.f32.xlu0 %v6869
        %v6871 = vpop.xlane.xlu0 %6870
        %v6872 = vsel %vm4272, %v6816, 0.0
        %6873 = vadd.xlane.f32.xlu0 %v6872
        %v6874 = vpop.xlane.xlu0 %6873
        %v6875 = vsel %vm4272, %v6817, 0.0
        %6876 = vadd.xlane.f32.xlu0 %v6875
        %v6877 = vpop.xlane.xlu0 %6876
        %v6878 = vsel %vm4272, %v6818, 0.0
        %6879 = vadd.xlane.f32.xlu0 %v6878
        %v6880 = vpop.xlane.xlu0 %6879
        %v6881 = vsel %vm4272, %v6819, 0.0
        %6882 = vadd.xlane.f32.xlu0 %v6881
        %v6883 = vpop.xlane.xlu0 %6882
        %v6884 = vsel %vm4272, %v6820, 0.0
        %6885 = vadd.xlane.f32.xlu0 %v6884
        %v6886 = vpop.xlane.xlu0 %6885
        %v6887 = vsel %vm4272, %v6821, 0.0
        %6888 = vadd.xlane.f32.xlu0 %v6887
        %v6889 = vpop.xlane.xlu0 %6888
        %v6890 = vsel %vm4272, %v6822, 0.0
        %6891 = vadd.xlane.f32.xlu0 %v6890
        %v6892 = vpop.xlane.xlu0 %6891
        %v6893 = vsel %vm4272, %v6823, 0.0
        %6894 = vadd.xlane.f32.xlu0 %v6893
        %v6895 = vpop.xlane.xlu0 %6894
        %v6896 = vsel %vm4272, %v6824, 0.0
        %6897 = vadd.xlane.f32.xlu0 %v6896
        %v6898 = vpop.xlane.xlu0 %6897
        %v6899 = vsel %vm4272, %v6825, 0.0
        %6900 = vadd.xlane.f32.xlu0 %v6899
        %v6901 = vpop.xlane.xlu0 %6900
        %v6902 = vsel %vm4272, %v6826, 0.0
        %6903 = vadd.xlane.f32.xlu0 %v6902
        %v6904 = vpop.xlane.xlu0 %6903
        %v6905 = vsel %vm4272, %v6827, 0.0
        %6906 = vadd.xlane.f32.xlu0 %v6905
        %v6907 = vpop.xlane.xlu0 %6906
        %v6908 = vsel %vm4272, %v6828, 0.0
        %6909 = vadd.xlane.f32.xlu0 %v6908
        %v6910 = vpop.xlane.xlu0 %6909
        %v6911 = vsel %vm4272, %v6829, 0.0
        %6912 = vadd.xlane.f32.xlu0 %v6911
        %v6913 = vpop.xlane.xlu0 %6912
        %v6914 = vsel %vm4272, %v6830, 0.0
        %6915 = vadd.xlane.f32.xlu0 %v6914
        %v6916 = vpop.xlane.xlu0 %6915
        %v6917 = vsel %vm4272, %v6831, 0.0
        %6918 = vadd.xlane.f32.xlu0 %v6917
        %v6919 = vpop.xlane.xlu0 %6918
        %v6920 = vsel %vm4272, %v6832, 0.0
        %6921 = vadd.xlane.f32.xlu0 %v6920
        %v6922 = vpop.xlane.xlu0 %6921
        %v6923 = vsel %vm4272, %v6833, 0.0
        %6924 = vadd.xlane.f32.xlu0 %v6923
        %v6925 = vpop.xlane.xlu0 %6924
        %v6926 = vsel %vm4272, %v6834, 0.0
        %6927 = vadd.xlane.f32.xlu0 %v6926
        %v6928 = vpop.xlane.xlu0 %6927
        %v6929 = vsel %vm4272, %v6835, 0.0
        %6930 = vadd.xlane.f32.xlu0 %v6929
        %v6931 = vpop.xlane.xlu0 %6930
        %v6932 = vadd.f32 %v6735, %v6838
        %v6933 = vadd.f32 %v6736, %v6841
        %v6934 = vadd.f32 %v6737, %v6844
        %v6935 = vadd.f32 %v6738, %v6847
        %v6936 = vadd.f32 %v6739, %v6850
        %v6937 = vadd.f32 %v6740, %v6853
        %v6938 = vadd.f32 %v6741, %v6856
        %v6939 = vadd.f32 %v6742, %v6859
        %v6940 = vadd.f32 %v6743, %v6862
        %v6941 = vadd.f32 %v6744, %v6865
        %v6942 = vadd.f32 %v6745, %v6868
        %v6943 = vadd.f32 %v6746, %v6871
        %v6944 = vadd.f32 %v6747, %v6874
        %v6945 = vadd.f32 %v6748, %v6877
        %v6946 = vadd.f32 %v6749, %v6880
        %v6947 = vadd.f32 %v6750, %v6883
        %v6948 = vadd.f32 %v6751, %v6886
        %v6949 = vadd.f32 %v6752, %v6889
        %v6950 = vadd.f32 %v6753, %v6892
        %v6951 = vadd.f32 %v6754, %v6895
        %v6952 = vadd.f32 %v6755, %v6898
        %v6953 = vadd.f32 %v6756, %v6901
        %v6954 = vadd.f32 %v6757, %v6904
        %v6955 = vadd.f32 %v6758, %v6907
        %v6956 = vadd.f32 %v6759, %v6910
        %v6957 = vadd.f32 %v6760, %v6913
        %v6958 = vadd.f32 %v6761, %v6916
        %v6959 = vadd.f32 %v6762, %v6919
        %v6960 = vadd.f32 %v6763, %v6922
        %v6961 = vadd.f32 %v6764, %v6925
        %v6962 = vadd.f32 %v6765, %v6928
        %v6963 = vadd.f32 %v6766, %v6931
        %v6964 = vld [vmem:[%s7 + $0x4] sm:$0x1]
        %v6965 = vlaneseq
        %v6966 = vshrl.u32 %v6965, 7
        %v6967 = vsub.s32 0, %v6966
        %v6968 = vrot.slane %v6964, %v6967
        %v6969 = vmul.f32 %v6767, %v6968
        %v6970 = vmul.f32 %v6768, %v6968
        %v6971 = vmul.f32 %v6769, %v6968
        %v6972 = vmul.f32 %v6770, %v6968
        %v6973 = vmul.f32 %v6771, %v6968
        %v6974 = vmul.f32 %v6772, %v6968
        %v6975 = vmul.f32 %v6773, %v6968
        %v6976 = vmul.f32 %v6774, %v6968
        %v6977 = vmul.f32 %v6775, %v6968
        %v6978 = vmul.f32 %v6776, %v6968
        %v6979 = vmul.f32 %v6777, %v6968
        %v6980 = vmul.f32 %v6778, %v6968
        %v6981 = vmul.f32 %v6779, %v6968
        %v6982 = vmul.f32 %v6780, %v6968
        %v6983 = vmul.f32 %v6781, %v6968
        %v6984 = vmul.f32 %v6782, %v6968
        %v6985 = vmul.f32 %v6783, %v6968
        %v6986 = vmul.f32 %v6784, %v6968
        %v6987 = vmul.f32 %v6785, %v6968
        %v6988 = vmul.f32 %v6786, %v6968
        %v6989 = vmul.f32 %v6787, %v6968
        %v6990 = vmul.f32 %v6788, %v6968
        %v6991 = vmul.f32 %v6789, %v6968
        %v6992 = vmul.f32 %v6790, %v6968
        %v6993 = vmul.f32 %v6791, %v6968
        %v6994 = vmul.f32 %v6792, %v6968
        %v6995 = vmul.f32 %v6793, %v6968
        %v6996 = vmul.f32 %v6794, %v6968
        %v6997 = vmul.f32 %v6795, %v6968
        %v6998 = vmul.f32 %v6796, %v6968
        %v6999 = vmul.f32 %v6797, %v6968
        %v7000 = vmul.f32 %v6798, %v6968
        %v7001 = vsel %vm4272, %v6969, 0.0
        %7002 = vadd.xlane.f32.xlu0 %v7001
        %v7003 = vpop.xlane.xlu0 %7002
        %v7004 = vsel %vm4272, %v6970, 0.0
        %7005 = vadd.xlane.f32.xlu0 %v7004
        %v7006 = vpop.xlane.xlu0 %7005
        %v7007 = vsel %vm4272, %v6971, 0.0
        %7008 = vadd.xlane.f32.xlu0 %v7007
        %v7009 = vpop.xlane.xlu0 %7008
        %v7010 = vsel %vm4272, %v6972, 0.0
        %7011 = vadd.xlane.f32.xlu0 %v7010
        %v7012 = vpop.xlane.xlu0 %7011
        %v7013 = vsel %vm4272, %v6973, 0.0
        %7014 = vadd.xlane.f32.xlu0 %v7013
        %v7015 = vpop.xlane.xlu0 %7014
        %v7016 = vsel %vm4272, %v6974, 0.0
        %7017 = vadd.xlane.f32.xlu0 %v7016
        %v7018 = vpop.xlane.xlu0 %7017
        %v7019 = vsel %vm4272, %v6975, 0.0
        %7020 = vadd.xlane.f32.xlu0 %v7019
        %v7021 = vpop.xlane.xlu0 %7020
        %v7022 = vsel %vm4272, %v6976, 0.0
        %7023 = vadd.xlane.f32.xlu0 %v7022
        %v7024 = vpop.xlane.xlu0 %7023
        %v7025 = vsel %vm4272, %v6977, 0.0
        %7026 = vadd.xlane.f32.xlu0 %v7025
        %v7027 = vpop.xlane.xlu0 %7026
        %v7028 = vsel %vm4272, %v6978, 0.0
        %7029 = vadd.xlane.f32.xlu0 %v7028
        %v7030 = vpop.xlane.xlu0 %7029
        %v7031 = vsel %vm4272, %v6979, 0.0
        %7032 = vadd.xlane.f32.xlu0 %v7031
        %v7033 = vpop.xlane.xlu0 %7032
        %v7034 = vsel %vm4272, %v6980, 0.0
        %7035 = vadd.xlane.f32.xlu0 %v7034
        %v7036 = vpop.xlane.xlu0 %7035
        %v7037 = vsel %vm4272, %v6981, 0.0
        %7038 = vadd.xlane.f32.xlu0 %v7037
        %v7039 = vpop.xlane.xlu0 %7038
        %v7040 = vsel %vm4272, %v6982, 0.0
        %7041 = vadd.xlane.f32.xlu0 %v7040
        %v7042 = vpop.xlane.xlu0 %7041
        %v7043 = vsel %vm4272, %v6983, 0.0
        %7044 = vadd.xlane.f32.xlu0 %v7043
        %v7045 = vpop.xlane.xlu0 %7044
        %v7046 = vsel %vm4272, %v6984, 0.0
        %7047 = vadd.xlane.f32.xlu0 %v7046
        %v7048 = vpop.xlane.xlu0 %7047
        %v7049 = vsel %vm4272, %v6985, 0.0
        %7050 = vadd.xlane.f32.xlu0 %v7049
        %v7051 = vpop.xlane.xlu0 %7050
        %v7052 = vsel %vm4272, %v6986, 0.0
        %7053 = vadd.xlane.f32.xlu0 %v7052
        %v7054 = vpop.xlane.xlu0 %7053
        %v7055 = vsel %vm4272, %v6987, 0.0
        %7056 = vadd.xlane.f32.xlu0 %v7055
        %v7057 = vpop.xlane.xlu0 %7056
        %v7058 = vsel %vm4272, %v6988, 0.0
        %7059 = vadd.xlane.f32.xlu0 %v7058
        %v7060 = vpop.xlane.xlu0 %7059
        %v7061 = vsel %vm4272, %v6989, 0.0
        %7062 = vadd.xlane.f32.xlu0 %v7061
        %v7063 = vpop.xlane.xlu0 %7062
        %v7064 = vsel %vm4272, %v6990, 0.0
        %7065 = vadd.xlane.f32.xlu0 %v7064
        %v7066 = vpop.xlane.xlu0 %7065
        %v7067 = vsel %vm4272, %v6991, 0.0
        %7068 = vadd.xlane.f32.xlu0 %v7067
        %v7069 = vpop.xlane.xlu0 %7068
        %v7070 = vsel %vm4272, %v6992, 0.0
        %7071 = vadd.xlane.f32.xlu0 %v7070
        %v7072 = vpop.xlane.xlu0 %7071
        %v7073 = vsel %vm4272, %v6993, 0.0
        %7074 = vadd.xlane.f32.xlu0 %v7073
        %v7075 = vpop.xlane.xlu0 %7074
        %v7076 = vsel %vm4272, %v6994, 0.0
        %7077 = vadd.xlane.f32.xlu0 %v7076
        %v7078 = vpop.xlane.xlu0 %7077
        %v7079 = vsel %vm4272, %v6995, 0.0
        %7080 = vadd.xlane.f32.xlu0 %v7079
        %v7081 = vpop.xlane.xlu0 %7080
        %v7082 = vsel %vm4272, %v6996, 0.0
        %7083 = vadd.xlane.f32.xlu0 %v7082
        %v7084 = vpop.xlane.xlu0 %7083
        %v7085 = vsel %vm4272, %v6997, 0.0
        %7086 = vadd.xlane.f32.xlu0 %v7085
        %v7087 = vpop.xlane.xlu0 %7086
        %v7088 = vsel %vm4272, %v6998, 0.0
        %7089 = vadd.xlane.f32.xlu0 %v7088
        %v7090 = vpop.xlane.xlu0 %7089
        %v7091 = vsel %vm4272, %v6999, 0.0
        %7092 = vadd.xlane.f32.xlu0 %v7091
        %v7093 = vpop.xlane.xlu0 %7092
        %v7094 = vsel %vm4272, %v7000, 0.0
        %7095 = vadd.xlane.f32.xlu0 %v7094
        %v7096 = vpop.xlane.xlu0 %7095
        %v7097 = vadd.f32 %v6932, %v7003
        %v7098 = vadd.f32 %v6933, %v7006
        %v7099 = vadd.f32 %v6934, %v7009
        %v7100 = vadd.f32 %v6935, %v7012
        %v7101 = vadd.f32 %v6936, %v7015
        %v7102 = vadd.f32 %v6937, %v7018
        %v7103 = vadd.f32 %v6938, %v7021
        %v7104 = vadd.f32 %v6939, %v7024
        %v7105 = vadd.f32 %v6940, %v7027
        %v7106 = vadd.f32 %v6941, %v7030
        %v7107 = vadd.f32 %v6942, %v7033
        %v7108 = vadd.f32 %v6943, %v7036
        %v7109 = vadd.f32 %v6944, %v7039
        %v7110 = vadd.f32 %v6945, %v7042
        %v7111 = vadd.f32 %v6946, %v7045
        %v7112 = vadd.f32 %v6947, %v7048
        %v7113 = vadd.f32 %v6948, %v7051
        %v7114 = vadd.f32 %v6949, %v7054
        %v7115 = vadd.f32 %v6950, %v7057
        %v7116 = vadd.f32 %v6951, %v7060
        %v7117 = vadd.f32 %v6952, %v7063
        %v7118 = vadd.f32 %v6953, %v7066
        %v7119 = vadd.f32 %v6954, %v7069
        %v7120 = vadd.f32 %v6955, %v7072
        %v7121 = vadd.f32 %v6956, %v7075
        %v7122 = vadd.f32 %v6957, %v7078
        %v7123 = vadd.f32 %v6958, %v7081
        %v7124 = vadd.f32 %v6959, %v7084
        %v7125 = vadd.f32 %v6960, %v7087
        %v7126 = vadd.f32 %v6961, %v7090
        %v7127 = vadd.f32 %v6962, %v7093
        %v7128 = vadd.f32 %v6963, %v7096
        %v7129 = vld [vmem:[%s2420 + $0x2] sm:$0xff]
        %v7130 = vld [vmem:[%s2420 + $0xa] sm:$0xff]
        %v7131 = vld [vmem:[%s2420 + $0x1a] sm:$0xff]
        %v7132 = vld [vmem:[%s2420 + $0x22] sm:$0xff]
        %v7133 = vld [vmem:[%s2420 + $0x32] sm:$0xff]
        %v7134 = vld [vmem:[%s2420 + $0x3a] sm:$0xff]
        %v7135 = vld [vmem:[%s2420 + $0x4a] sm:$0xff]
        %v7136 = vld [vmem:[%s2420 + $0x52] sm:$0xff]
        %v7137 = vld [vmem:[%s2420 + $0x62] sm:$0xff]
        %v7138 = vld [vmem:[%s2420 + $0x6a] sm:$0xff]
        %v7139 = vld [vmem:[%s2420 + $0x7a] sm:$0xff]
        %v7140 = vld [vmem:[%s2420 + $0x82] sm:$0xff]
        %v7141 = vld [vmem:[%s2420 + $0x92] sm:$0xff]
        %v7142 = vld [vmem:[%s2420 + $0x9a] sm:$0xff]
        %v7143 = vld [vmem:[%s2420 + $0xaa] sm:$0xff]
        %v7144 = vld [vmem:[%s2420 + $0xb2] sm:$0xff]
        %v7145 = vld [vmem:[%s2420 + $0xc2] sm:$0xff]
        %v7146 = vld [vmem:[%s2420 + $0xca] sm:$0xff]
        %v7147 = vld [vmem:[%s2420 + $0xda] sm:$0xff]
        %v7148 = vld [vmem:[%s2420 + $0xe2] sm:$0xff]
        %v7149 = vld [vmem:[%s2420 + $0xf2] sm:$0xff]
        %v7150 = vld [vmem:[%s2420 + $0xfa] sm:$0xff]
        %v7151 = vld [vmem:[%s2420 + $0x10a] sm:$0xff]
        %v7152 = vld [vmem:[%s2420 + $0x112] sm:$0xff]
        %v7153 = vld [vmem:[%s2420 + $0x122] sm:$0xff]
        %v7154 = vld [vmem:[%s2420 + $0x12a] sm:$0xff]
        %v7155 = vld [vmem:[%s2420 + $0x13a] sm:$0xff]
        %v7156 = vld [vmem:[%s2420 + $0x142] sm:$0xff]
        %v7157 = vld [vmem:[%s2420 + $0x152] sm:$0xff]
        %v7158 = vld [vmem:[%s2420 + $0x15a] sm:$0xff]
        %v7159 = vld [vmem:[%s2420 + $0x16a] sm:$0xff]
        %v7160 = vld [vmem:[%s2420 + $0x172] sm:$0xff]
        %v7161 = vld [vmem:[%s6 + $0x4] sm:$0x1]
        %v7162 = vlaneseq
        %v7163 = vshrl.u32 %v7162, 7
        %v7164 = vsub.s32 0, %v7163
        %v7165 = vrot.slane %v7161, %v7164
        %v7166 = vmul.f32 %v7129, %v7165
        %v7167 = vmul.f32 %v7130, %v7165
        %v7168 = vmul.f32 %v7131, %v7165
        %v7169 = vmul.f32 %v7132, %v7165
        %v7170 = vmul.f32 %v7133, %v7165
        %v7171 = vmul.f32 %v7134, %v7165
        %v7172 = vmul.f32 %v7135, %v7165
        %v7173 = vmul.f32 %v7136, %v7165
        %v7174 = vmul.f32 %v7137, %v7165
        %v7175 = vmul.f32 %v7138, %v7165
        %v7176 = vmul.f32 %v7139, %v7165
        %v7177 = vmul.f32 %v7140, %v7165
        %v7178 = vmul.f32 %v7141, %v7165
        %v7179 = vmul.f32 %v7142, %v7165
        %v7180 = vmul.f32 %v7143, %v7165
        %v7181 = vmul.f32 %v7144, %v7165
        %v7182 = vmul.f32 %v7145, %v7165
        %v7183 = vmul.f32 %v7146, %v7165
        %v7184 = vmul.f32 %v7147, %v7165
        %v7185 = vmul.f32 %v7148, %v7165
        %v7186 = vmul.f32 %v7149, %v7165
        %v7187 = vmul.f32 %v7150, %v7165
        %v7188 = vmul.f32 %v7151, %v7165
        %v7189 = vmul.f32 %v7152, %v7165
        %v7190 = vmul.f32 %v7153, %v7165
        %v7191 = vmul.f32 %v7154, %v7165
        %v7192 = vmul.f32 %v7155, %v7165
        %v7193 = vmul.f32 %v7156, %v7165
        %v7194 = vmul.f32 %v7157, %v7165
        %v7195 = vmul.f32 %v7158, %v7165
        %v7196 = vmul.f32 %v7159, %v7165
        %v7197 = vmul.f32 %v7160, %v7165
        %v7198 = vsel %vm2364, %v7166, 0.0
        %7199 = vadd.xlane.f32.xlu0 %v7198
        %v7200 = vpop.xlane.xlu0 %7199
        %v7201 = vsel %vm2364, %v7167, 0.0
        %7202 = vadd.xlane.f32.xlu0 %v7201
        %v7203 = vpop.xlane.xlu0 %7202
        %v7204 = vsel %vm2364, %v7168, 0.0
        %7205 = vadd.xlane.f32.xlu0 %v7204
        %v7206 = vpop.xlane.xlu0 %7205
        %v7207 = vsel %vm2364, %v7169, 0.0
        %7208 = vadd.xlane.f32.xlu0 %v7207
        %v7209 = vpop.xlane.xlu0 %7208
        %v7210 = vsel %vm2364, %v7170, 0.0
        %7211 = vadd.xlane.f32.xlu0 %v7210
        %v7212 = vpop.xlane.xlu0 %7211
        %v7213 = vsel %vm2364, %v7171, 0.0
        %7214 = vadd.xlane.f32.xlu0 %v7213
        %v7215 = vpop.xlane.xlu0 %7214
        %v7216 = vsel %vm2364, %v7172, 0.0
        %7217 = vadd.xlane.f32.xlu0 %v7216
        %v7218 = vpop.xlane.xlu0 %7217
        %v7219 = vsel %vm2364, %v7173, 0.0
        %7220 = vadd.xlane.f32.xlu0 %v7219
        %v7221 = vpop.xlane.xlu0 %7220
        %v7222 = vsel %vm2364, %v7174, 0.0
        %7223 = vadd.xlane.f32.xlu0 %v7222
        %v7224 = vpop.xlane.xlu0 %7223
        %v7225 = vsel %vm2364, %v7175, 0.0
        %7226 = vadd.xlane.f32.xlu0 %v7225
        %v7227 = vpop.xlane.xlu0 %7226
        %v7228 = vsel %vm2364, %v7176, 0.0
        %7229 = vadd.xlane.f32.xlu0 %v7228
        %v7230 = vpop.xlane.xlu0 %7229
        %v7231 = vsel %vm2364, %v7177, 0.0
        %7232 = vadd.xlane.f32.xlu0 %v7231
        %v7233 = vpop.xlane.xlu0 %7232
        %v7234 = vsel %vm2364, %v7178, 0.0
        %7235 = vadd.xlane.f32.xlu0 %v7234
        %v7236 = vpop.xlane.xlu0 %7235
        %v7237 = vsel %vm2364, %v7179, 0.0
        %7238 = vadd.xlane.f32.xlu0 %v7237
        %v7239 = vpop.xlane.xlu0 %7238
        %v7240 = vsel %vm2364, %v7180, 0.0
        %7241 = vadd.xlane.f32.xlu0 %v7240
        %v7242 = vpop.xlane.xlu0 %7241
        %v7243 = vsel %vm2364, %v7181, 0.0
        %7244 = vadd.xlane.f32.xlu0 %v7243
        %v7245 = vpop.xlane.xlu0 %7244
        %v7246 = vsel %vm2364, %v7182, 0.0
        %7247 = vadd.xlane.f32.xlu0 %v7246
        %v7248 = vpop.xlane.xlu0 %7247
        %v7249 = vsel %vm2364, %v7183, 0.0
        %7250 = vadd.xlane.f32.xlu0 %v7249
        %v7251 = vpop.xlane.xlu0 %7250
        %v7252 = vsel %vm2364, %v7184, 0.0
        %7253 = vadd.xlane.f32.xlu0 %v7252
        %v7254 = vpop.xlane.xlu0 %7253
        %v7255 = vsel %vm2364, %v7185, 0.0
        %7256 = vadd.xlane.f32.xlu0 %v7255
        %v7257 = vpop.xlane.xlu0 %7256
        %v7258 = vsel %vm2364, %v7186, 0.0
        %7259 = vadd.xlane.f32.xlu0 %v7258
        %v7260 = vpop.xlane.xlu0 %7259
        %v7261 = vsel %vm2364, %v7187, 0.0
        %7262 = vadd.xlane.f32.xlu0 %v7261
        %v7263 = vpop.xlane.xlu0 %7262
        %v7264 = vsel %vm2364, %v7188, 0.0
        %7265 = vadd.xlane.f32.xlu0 %v7264
        %v7266 = vpop.xlane.xlu0 %7265
        %v7267 = vsel %vm2364, %v7189, 0.0
        %7268 = vadd.xlane.f32.xlu0 %v7267
        %v7269 = vpop.xlane.xlu0 %7268
        %v7270 = vsel %vm2364, %v7190, 0.0
        %7271 = vadd.xlane.f32.xlu0 %v7270
        %v7272 = vpop.xlane.xlu0 %7271
        %v7273 = vsel %vm2364, %v7191, 0.0
        %7274 = vadd.xlane.f32.xlu0 %v7273
        %v7275 = vpop.xlane.xlu0 %7274
        %v7276 = vsel %vm2364, %v7192, 0.0
        %7277 = vadd.xlane.f32.xlu0 %v7276
        %v7278 = vpop.xlane.xlu0 %7277
        %v7279 = vsel %vm2364, %v7193, 0.0
        %7280 = vadd.xlane.f32.xlu0 %v7279
        %v7281 = vpop.xlane.xlu0 %7280
        %v7282 = vsel %vm2364, %v7194, 0.0
        %7283 = vadd.xlane.f32.xlu0 %v7282
        %v7284 = vpop.xlane.xlu0 %7283
        %v7285 = vsel %vm2364, %v7195, 0.0
        %7286 = vadd.xlane.f32.xlu0 %v7285
        %v7287 = vpop.xlane.xlu0 %7286
        %v7288 = vsel %vm2364, %v7196, 0.0
        %7289 = vadd.xlane.f32.xlu0 %v7288
        %v7290 = vpop.xlane.xlu0 %7289
        %v7291 = vsel %vm2364, %v7197, 0.0
        %7292 = vadd.xlane.f32.xlu0 %v7291
        %v7293 = vpop.xlane.xlu0 %7292
        %v7294 = vadd.f32 %v7097, %v7200
        %v7295 = vadd.f32 %v7098, %v7203
        %v7296 = vadd.f32 %v7099, %v7206
        %v7297 = vadd.f32 %v7100, %v7209
        %v7298 = vadd.f32 %v7101, %v7212
        %v7299 = vadd.f32 %v7102, %v7215
        %v7300 = vadd.f32 %v7103, %v7218
        %v7301 = vadd.f32 %v7104, %v7221
        %v7302 = vadd.f32 %v7105, %v7224
        %v7303 = vadd.f32 %v7106, %v7227
        %v7304 = vadd.f32 %v7107, %v7230
        %v7305 = vadd.f32 %v7108, %v7233
        %v7306 = vadd.f32 %v7109, %v7236
        %v7307 = vadd.f32 %v7110, %v7239
        %v7308 = vadd.f32 %v7111, %v7242
        %v7309 = vadd.f32 %v7112, %v7245
        %v7310 = vadd.f32 %v7113, %v7248
        %v7311 = vadd.f32 %v7114, %v7251
        %v7312 = vadd.f32 %v7115, %v7254
        %v7313 = vadd.f32 %v7116, %v7257
        %v7314 = vadd.f32 %v7117, %v7260
        %v7315 = vadd.f32 %v7118, %v7263
        %v7316 = vadd.f32 %v7119, %v7266
        %v7317 = vadd.f32 %v7120, %v7269
        %v7318 = vadd.f32 %v7121, %v7272
        %v7319 = vadd.f32 %v7122, %v7275
        %v7320 = vadd.f32 %v7123, %v7278
        %v7321 = vadd.f32 %v7124, %v7281
        %v7322 = vadd.f32 %v7125, %v7284
        %v7323 = vadd.f32 %v7126, %v7287
        %v7324 = vadd.f32 %v7127, %v7290
        %v7325 = vadd.f32 %v7128, %v7293
        %v7326 = vld [vmem:[%s4368 + $0xa] sm:$0xff]
        %v7327 = vld [vmem:[%s4368 + $0x12] sm:$0xff]
        %v7328 = vld [vmem:[%s4368 + $0x2a] sm:$0xff]
        %v7329 = vld [vmem:[%s4368 + $0x32] sm:$0xff]
        %v7330 = vld [vmem:[%s4368 + $0x4a] sm:$0xff]
        %v7331 = vld [vmem:[%s4368 + $0x52] sm:$0xff]
        %v7332 = vld [vmem:[%s4368 + $0x6a] sm:$0xff]
        %v7333 = vld [vmem:[%s4368 + $0x72] sm:$0xff]
        %v7334 = vld [vmem:[%s4368 + $0x8a] sm:$0xff]
        %v7335 = vld [vmem:[%s4368 + $0x92] sm:$0xff]
        %v7336 = vld [vmem:[%s4368 + $0xaa] sm:$0xff]
        %v7337 = vld [vmem:[%s4368 + $0xb2] sm:$0xff]
        %v7338 = vld [vmem:[%s4368 + $0xca] sm:$0xff]
        %v7339 = vld [vmem:[%s4368 + $0xd2] sm:$0xff]
        %v7340 = vld [vmem:[%s4368 + $0xea] sm:$0xff]
        %v7341 = vld [vmem:[%s4368 + $0xf2] sm:$0xff]
        %v7342 = vld [vmem:[%s4368 + $0x10a] sm:$0xff]
        %v7343 = vld [vmem:[%s4368 + $0x112] sm:$0xff]
        %v7344 = vld [vmem:[%s4368 + $0x12a] sm:$0xff]
        %v7345 = vld [vmem:[%s4368 + $0x132] sm:$0xff]
        %v7346 = vld [vmem:[%s4368 + $0x14a] sm:$0xff]
        %v7347 = vld [vmem:[%s4368 + $0x152] sm:$0xff]
        %v7348 = vld [vmem:[%s4368 + $0x16a] sm:$0xff]
        %v7349 = vld [vmem:[%s4368 + $0x172] sm:$0xff]
        %v7350 = vld [vmem:[%s4368 + $0x18a] sm:$0xff]
        %v7351 = vld [vmem:[%s4368 + $0x192] sm:$0xff]
        %v7352 = vld [vmem:[%s4368 + $0x1aa] sm:$0xff]
        %v7353 = vld [vmem:[%s4368 + $0x1b2] sm:$0xff]
        %v7354 = vld [vmem:[%s4368 + $0x1ca] sm:$0xff]
        %v7355 = vld [vmem:[%s4368 + $0x1d2] sm:$0xff]
        %v7356 = vld [vmem:[%s4368 + $0x1ea] sm:$0xff]
        %v7357 = vld [vmem:[%s4368 + $0x1f2] sm:$0xff]
        %v7358 = vld [vmem:[%s5 + $0x5] sm:$0x1]
        %v7359 = vlaneseq
        %v7360 = vshrl.u32 %v7359, 7
        %v7361 = vsub.s32 0, %v7360
        %v7362 = vrot.slane %v7358, %v7361
        %v7363 = vmul.f32 %v7326, %v7362
        %v7364 = vmul.f32 %v7327, %v7362
        %v7365 = vmul.f32 %v7328, %v7362
        %v7366 = vmul.f32 %v7329, %v7362
        %v7367 = vmul.f32 %v7330, %v7362
        %v7368 = vmul.f32 %v7331, %v7362
        %v7369 = vmul.f32 %v7332, %v7362
        %v7370 = vmul.f32 %v7333, %v7362
        %v7371 = vmul.f32 %v7334, %v7362
        %v7372 = vmul.f32 %v7335, %v7362
        %v7373 = vmul.f32 %v7336, %v7362
        %v7374 = vmul.f32 %v7337, %v7362
        %v7375 = vmul.f32 %v7338, %v7362
        %v7376 = vmul.f32 %v7339, %v7362
        %v7377 = vmul.f32 %v7340, %v7362
        %v7378 = vmul.f32 %v7341, %v7362
        %v7379 = vmul.f32 %v7342, %v7362
        %v7380 = vmul.f32 %v7343, %v7362
        %v7381 = vmul.f32 %v7344, %v7362
        %v7382 = vmul.f32 %v7345, %v7362
        %v7383 = vmul.f32 %v7346, %v7362
        %v7384 = vmul.f32 %v7347, %v7362
        %v7385 = vmul.f32 %v7348, %v7362
        %v7386 = vmul.f32 %v7349, %v7362
        %v7387 = vmul.f32 %v7350, %v7362
        %v7388 = vmul.f32 %v7351, %v7362
        %v7389 = vmul.f32 %v7352, %v7362
        %v7390 = vmul.f32 %v7353, %v7362
        %v7391 = vmul.f32 %v7354, %v7362
        %v7392 = vmul.f32 %v7355, %v7362
        %v7393 = vmul.f32 %v7356, %v7362
        %v7394 = vmul.f32 %v7357, %v7362
        %v7395 = vsel %vm4272, %v7363, 0.0
        %7396 = vadd.xlane.f32.xlu0 %v7395
        %v7397 = vpop.xlane.xlu0 %7396
        %v7398 = vsel %vm4272, %v7364, 0.0
        %7399 = vadd.xlane.f32.xlu0 %v7398
        %v7400 = vpop.xlane.xlu0 %7399
        %v7401 = vsel %vm4272, %v7365, 0.0
        %7402 = vadd.xlane.f32.xlu0 %v7401
        %v7403 = vpop.xlane.xlu0 %7402
        %v7404 = vsel %vm4272, %v7366, 0.0
        %7405 = vadd.xlane.f32.xlu0 %v7404
        %v7406 = vpop.xlane.xlu0 %7405
        %v7407 = vsel %vm4272, %v7367, 0.0
        %7408 = vadd.xlane.f32.xlu0 %v7407
        %v7409 = vpop.xlane.xlu0 %7408
        %v7410 = vsel %vm4272, %v7368, 0.0
        %7411 = vadd.xlane.f32.xlu0 %v7410
        %v7412 = vpop.xlane.xlu0 %7411
        %v7413 = vsel %vm4272, %v7369, 0.0
        %7414 = vadd.xlane.f32.xlu0 %v7413
        %v7415 = vpop.xlane.xlu0 %7414
        %v7416 = vsel %vm4272, %v7370, 0.0
        %7417 = vadd.xlane.f32.xlu0 %v7416
        %v7418 = vpop.xlane.xlu0 %7417
        %v7419 = vsel %vm4272, %v7371, 0.0
        %7420 = vadd.xlane.f32.xlu0 %v7419
        %v7421 = vpop.xlane.xlu0 %7420
        %v7422 = vsel %vm4272, %v7372, 0.0
        %7423 = vadd.xlane.f32.xlu0 %v7422
        %v7424 = vpop.xlane.xlu0 %7423
        %v7425 = vsel %vm4272, %v7373, 0.0
        %7426 = vadd.xlane.f32.xlu0 %v7425
        %v7427 = vpop.xlane.xlu0 %7426
        %v7428 = vsel %vm4272, %v7374, 0.0
        %7429 = vadd.xlane.f32.xlu0 %v7428
        %v7430 = vpop.xlane.xlu0 %7429
        %v7431 = vsel %vm4272, %v7375, 0.0
        %7432 = vadd.xlane.f32.xlu0 %v7431
        %v7433 = vpop.xlane.xlu0 %7432
        %v7434 = vsel %vm4272, %v7376, 0.0
        %7435 = vadd.xlane.f32.xlu0 %v7434
        %v7436 = vpop.xlane.xlu0 %7435
        %v7437 = vsel %vm4272, %v7377, 0.0
        %7438 = vadd.xlane.f32.xlu0 %v7437
        %v7439 = vpop.xlane.xlu0 %7438
        %v7440 = vsel %vm4272, %v7378, 0.0
        %7441 = vadd.xlane.f32.xlu0 %v7440
        %v7442 = vpop.xlane.xlu0 %7441
        %v7443 = vsel %vm4272, %v7379, 0.0
        %7444 = vadd.xlane.f32.xlu0 %v7443
        %v7445 = vpop.xlane.xlu0 %7444
        %v7446 = vsel %vm4272, %v7380, 0.0
        %7447 = vadd.xlane.f32.xlu0 %v7446
        %v7448 = vpop.xlane.xlu0 %7447
        %v7449 = vsel %vm4272, %v7381, 0.0
        %7450 = vadd.xlane.f32.xlu0 %v7449
        %v7451 = vpop.xlane.xlu0 %7450
        %v7452 = vsel %vm4272, %v7382, 0.0
        %7453 = vadd.xlane.f32.xlu0 %v7452
        %v7454 = vpop.xlane.xlu0 %7453
        %v7455 = vsel %vm4272, %v7383, 0.0
        %7456 = vadd.xlane.f32.xlu0 %v7455
        %v7457 = vpop.xlane.xlu0 %7456
        %v7458 = vsel %vm4272, %v7384, 0.0
        %7459 = vadd.xlane.f32.xlu0 %v7458
        %v7460 = vpop.xlane.xlu0 %7459
        %v7461 = vsel %vm4272, %v7385, 0.0
        %7462 = vadd.xlane.f32.xlu0 %v7461
        %v7463 = vpop.xlane.xlu0 %7462
        %v7464 = vsel %vm4272, %v7386, 0.0
        %7465 = vadd.xlane.f32.xlu0 %v7464
        %v7466 = vpop.xlane.xlu0 %7465
        %v7467 = vsel %vm4272, %v7387, 0.0
        %7468 = vadd.xlane.f32.xlu0 %v7467
        %v7469 = vpop.xlane.xlu0 %7468
        %v7470 = vsel %vm4272, %v7388, 0.0
        %7471 = vadd.xlane.f32.xlu0 %v7470
        %v7472 = vpop.xlane.xlu0 %7471
        %v7473 = vsel %vm4272, %v7389, 0.0
        %7474 = vadd.xlane.f32.xlu0 %v7473
        %v7475 = vpop.xlane.xlu0 %7474
        %v7476 = vsel %vm4272, %v7390, 0.0
        %7477 = vadd.xlane.f32.xlu0 %v7476
        %v7478 = vpop.xlane.xlu0 %7477
        %v7479 = vsel %vm4272, %v7391, 0.0
        %7480 = vadd.xlane.f32.xlu0 %v7479
        %v7481 = vpop.xlane.xlu0 %7480
        %v7482 = vsel %vm4272, %v7392, 0.0
        %7483 = vadd.xlane.f32.xlu0 %v7482
        %v7484 = vpop.xlane.xlu0 %7483
        %v7485 = vsel %vm4272, %v7393, 0.0
        %7486 = vadd.xlane.f32.xlu0 %v7485
        %v7487 = vpop.xlane.xlu0 %7486
        %v7488 = vsel %vm4272, %v7394, 0.0
        %7489 = vadd.xlane.f32.xlu0 %v7488
        %v7490 = vpop.xlane.xlu0 %7489
        %v7491 = vadd.f32 %v7294, %v7397
        %v7492 = vadd.f32 %v7295, %v7400
        %v7493 = vadd.f32 %v7296, %v7403
        %v7494 = vadd.f32 %v7297, %v7406
        %v7495 = vadd.f32 %v7298, %v7409
        %v7496 = vadd.f32 %v7299, %v7412
        %v7497 = vadd.f32 %v7300, %v7415
        %v7498 = vadd.f32 %v7301, %v7418
        %v7499 = vadd.f32 %v7302, %v7421
        %v7500 = vadd.f32 %v7303, %v7424
        %v7501 = vadd.f32 %v7304, %v7427
        %v7502 = vadd.f32 %v7305, %v7430
        %v7503 = vadd.f32 %v7306, %v7433
        %v7504 = vadd.f32 %v7307, %v7436
        %v7505 = vadd.f32 %v7308, %v7439
        %v7506 = vadd.f32 %v7309, %v7442
        %v7507 = vadd.f32 %v7310, %v7445
        %v7508 = vadd.f32 %v7311, %v7448
        %v7509 = vadd.f32 %v7312, %v7451
        %v7510 = vadd.f32 %v7313, %v7454
        %v7511 = vadd.f32 %v7314, %v7457
        %v7512 = vadd.f32 %v7315, %v7460
        %v7513 = vadd.f32 %v7316, %v7463
        %v7514 = vadd.f32 %v7317, %v7466
        %v7515 = vadd.f32 %v7318, %v7469
        %v7516 = vadd.f32 %v7319, %v7472
        %v7517 = vadd.f32 %v7320, %v7475
        %v7518 = vadd.f32 %v7321, %v7478
        %v7519 = vadd.f32 %v7322, %v7481
        %v7520 = vadd.f32 %v7323, %v7484
        %v7521 = vadd.f32 %v7324, %v7487
        %v7522 = vadd.f32 %v7325, %v7490
        %v7523 = vld [vmem:[%s4368 + $0x6] sm:$0xff]
        %v7524 = vld [vmem:[%s4368 + $0xe] sm:$0xff]
        %v7525 = vld [vmem:[%s4368 + $0x26] sm:$0xff]
        %v7526 = vld [vmem:[%s4368 + $0x2e] sm:$0xff]
        %v7527 = vld [vmem:[%s4368 + $0x46] sm:$0xff]
        %v7528 = vld [vmem:[%s4368 + $0x4e] sm:$0xff]
        %v7529 = vld [vmem:[%s4368 + $0x66] sm:$0xff]
        %v7530 = vld [vmem:[%s4368 + $0x6e] sm:$0xff]
        %v7531 = vld [vmem:[%s4368 + $0x86] sm:$0xff]
        %v7532 = vld [vmem:[%s4368 + $0x8e] sm:$0xff]
        %v7533 = vld [vmem:[%s4368 + $0xa6] sm:$0xff]
        %v7534 = vld [vmem:[%s4368 + $0xae] sm:$0xff]
        %v7535 = vld [vmem:[%s4368 + $0xc6] sm:$0xff]
        %v7536 = vld [vmem:[%s4368 + $0xce] sm:$0xff]
        %v7537 = vld [vmem:[%s4368 + $0xe6] sm:$0xff]
        %v7538 = vld [vmem:[%s4368 + $0xee] sm:$0xff]
        %v7539 = vld [vmem:[%s4368 + $0x106] sm:$0xff]
        %v7540 = vld [vmem:[%s4368 + $0x10e] sm:$0xff]
        %v7541 = vld [vmem:[%s4368 + $0x126] sm:$0xff]
        %v7542 = vld [vmem:[%s4368 + $0x12e] sm:$0xff]
        %v7543 = vld [vmem:[%s4368 + $0x146] sm:$0xff]
        %v7544 = vld [vmem:[%s4368 + $0x14e] sm:$0xff]
        %v7545 = vld [vmem:[%s4368 + $0x166] sm:$0xff]
        %v7546 = vld [vmem:[%s4368 + $0x16e] sm:$0xff]
        %v7547 = vld [vmem:[%s4368 + $0x186] sm:$0xff]
        %v7548 = vld [vmem:[%s4368 + $0x18e] sm:$0xff]
        %v7549 = vld [vmem:[%s4368 + $0x1a6] sm:$0xff]
        %v7550 = vld [vmem:[%s4368 + $0x1ae] sm:$0xff]
        %v7551 = vld [vmem:[%s4368 + $0x1c6] sm:$0xff]
        %v7552 = vld [vmem:[%s4368 + $0x1ce] sm:$0xff]
        %v7553 = vld [vmem:[%s4368 + $0x1e6] sm:$0xff]
        %v7554 = vld [vmem:[%s4368 + $0x1ee] sm:$0xff]
        %v7555 = vld [vmem:[%s7 + $0x5] sm:$0x1]
        %v7556 = vlaneseq
        %v7557 = vshrl.u32 %v7556, 7
        %v7558 = vsub.s32 0, %v7557
        %v7559 = vrot.slane %v7555, %v7558
        %v7560 = vmul.f32 %v7523, %v7559
        %v7561 = vmul.f32 %v7524, %v7559
        %v7562 = vmul.f32 %v7525, %v7559
        %v7563 = vmul.f32 %v7526, %v7559
        %v7564 = vmul.f32 %v7527, %v7559
        %v7565 = vmul.f32 %v7528, %v7559
        %v7566 = vmul.f32 %v7529, %v7559
        %v7567 = vmul.f32 %v7530, %v7559
        %v7568 = vmul.f32 %v7531, %v7559
        %v7569 = vmul.f32 %v7532, %v7559
        %v7570 = vmul.f32 %v7533, %v7559
        %v7571 = vmul.f32 %v7534, %v7559
        %v7572 = vmul.f32 %v7535, %v7559
        %v7573 = vmul.f32 %v7536, %v7559
        %v7574 = vmul.f32 %v7537, %v7559
        %v7575 = vmul.f32 %v7538, %v7559
        %v7576 = vmul.f32 %v7539, %v7559
        %v7577 = vmul.f32 %v7540, %v7559
        %v7578 = vmul.f32 %v7541, %v7559
        %v7579 = vmul.f32 %v7542, %v7559
        %v7580 = vmul.f32 %v7543, %v7559
        %v7581 = vmul.f32 %v7544, %v7559
        %v7582 = vmul.f32 %v7545, %v7559
        %v7583 = vmul.f32 %v7546, %v7559
        %v7584 = vmul.f32 %v7547, %v7559
        %v7585 = vmul.f32 %v7548, %v7559
        %v7586 = vmul.f32 %v7549, %v7559
        %v7587 = vmul.f32 %v7550, %v7559
        %v7588 = vmul.f32 %v7551, %v7559
        %v7589 = vmul.f32 %v7552, %v7559
        %v7590 = vmul.f32 %v7553, %v7559
        %v7591 = vmul.f32 %v7554, %v7559
        %v7592 = vsel %vm4272, %v7560, 0.0
        %7593 = vadd.xlane.f32.xlu0 %v7592
        %v7594 = vpop.xlane.xlu0 %7593
        %v7595 = vsel %vm4272, %v7561, 0.0
        %7596 = vadd.xlane.f32.xlu0 %v7595
        %v7597 = vpop.xlane.xlu0 %7596
        %v7598 = vsel %vm4272, %v7562, 0.0
        %7599 = vadd.xlane.f32.xlu0 %v7598
        %v7600 = vpop.xlane.xlu0 %7599
        %v7601 = vsel %vm4272, %v7563, 0.0
        %7602 = vadd.xlane.f32.xlu0 %v7601
        %v7603 = vpop.xlane.xlu0 %7602
        %v7604 = vsel %vm4272, %v7564, 0.0
        %7605 = vadd.xlane.f32.xlu0 %v7604
        %v7606 = vpop.xlane.xlu0 %7605
        %v7607 = vsel %vm4272, %v7565, 0.0
        %7608 = vadd.xlane.f32.xlu0 %v7607
        %v7609 = vpop.xlane.xlu0 %7608
        %v7610 = vsel %vm4272, %v7566, 0.0
        %7611 = vadd.xlane.f32.xlu0 %v7610
        %v7612 = vpop.xlane.xlu0 %7611
        %v7613 = vsel %vm4272, %v7567, 0.0
        %7614 = vadd.xlane.f32.xlu0 %v7613
        %v7615 = vpop.xlane.xlu0 %7614
        %v7616 = vsel %vm4272, %v7568, 0.0
        %7617 = vadd.xlane.f32.xlu0 %v7616
        %v7618 = vpop.xlane.xlu0 %7617
        %v7619 = vsel %vm4272, %v7569, 0.0
        %7620 = vadd.xlane.f32.xlu0 %v7619
        %v7621 = vpop.xlane.xlu0 %7620
        %v7622 = vsel %vm4272, %v7570, 0.0
        %7623 = vadd.xlane.f32.xlu0 %v7622
        %v7624 = vpop.xlane.xlu0 %7623
        %v7625 = vsel %vm4272, %v7571, 0.0
        %7626 = vadd.xlane.f32.xlu0 %v7625
        %v7627 = vpop.xlane.xlu0 %7626
        %v7628 = vsel %vm4272, %v7572, 0.0
        %7629 = vadd.xlane.f32.xlu0 %v7628
        %v7630 = vpop.xlane.xlu0 %7629
        %v7631 = vsel %vm4272, %v7573, 0.0
        %7632 = vadd.xlane.f32.xlu0 %v7631
        %v7633 = vpop.xlane.xlu0 %7632
        %v7634 = vsel %vm4272, %v7574, 0.0
        %7635 = vadd.xlane.f32.xlu0 %v7634
        %v7636 = vpop.xlane.xlu0 %7635
        %v7637 = vsel %vm4272, %v7575, 0.0
        %7638 = vadd.xlane.f32.xlu0 %v7637
        %v7639 = vpop.xlane.xlu0 %7638
        %v7640 = vsel %vm4272, %v7576, 0.0
        %7641 = vadd.xlane.f32.xlu0 %v7640
        %v7642 = vpop.xlane.xlu0 %7641
        %v7643 = vsel %vm4272, %v7577, 0.0
        %7644 = vadd.xlane.f32.xlu0 %v7643
        %v7645 = vpop.xlane.xlu0 %7644
        %v7646 = vsel %vm4272, %v7578, 0.0
        %7647 = vadd.xlane.f32.xlu0 %v7646
        %v7648 = vpop.xlane.xlu0 %7647
        %v7649 = vsel %vm4272, %v7579, 0.0
        %7650 = vadd.xlane.f32.xlu0 %v7649
        %v7651 = vpop.xlane.xlu0 %7650
        %v7652 = vsel %vm4272, %v7580, 0.0
        %7653 = vadd.xlane.f32.xlu0 %v7652
        %v7654 = vpop.xlane.xlu0 %7653
        %v7655 = vsel %vm4272, %v7581, 0.0
        %7656 = vadd.xlane.f32.xlu0 %v7655
        %v7657 = vpop.xlane.xlu0 %7656
        %v7658 = vsel %vm4272, %v7582, 0.0
        %7659 = vadd.xlane.f32.xlu0 %v7658
        %v7660 = vpop.xlane.xlu0 %7659
        %v7661 = vsel %vm4272, %v7583, 0.0
        %7662 = vadd.xlane.f32.xlu0 %v7661
        %v7663 = vpop.xlane.xlu0 %7662
        %v7664 = vsel %vm4272, %v7584, 0.0
        %7665 = vadd.xlane.f32.xlu0 %v7664
        %v7666 = vpop.xlane.xlu0 %7665
        %v7667 = vsel %vm4272, %v7585, 0.0
        %7668 = vadd.xlane.f32.xlu0 %v7667
        %v7669 = vpop.xlane.xlu0 %7668
        %v7670 = vsel %vm4272, %v7586, 0.0
        %7671 = vadd.xlane.f32.xlu0 %v7670
        %v7672 = vpop.xlane.xlu0 %7671
        %v7673 = vsel %vm4272, %v7587, 0.0
        %7674 = vadd.xlane.f32.xlu0 %v7673
        %v7675 = vpop.xlane.xlu0 %7674
        %v7676 = vsel %vm4272, %v7588, 0.0
        %7677 = vadd.xlane.f32.xlu0 %v7676
        %v7678 = vpop.xlane.xlu0 %7677
        %v7679 = vsel %vm4272, %v7589, 0.0
        %7680 = vadd.xlane.f32.xlu0 %v7679
        %v7681 = vpop.xlane.xlu0 %7680
        %v7682 = vsel %vm4272, %v7590, 0.0
        %7683 = vadd.xlane.f32.xlu0 %v7682
        %v7684 = vpop.xlane.xlu0 %7683
        %v7685 = vsel %vm4272, %v7591, 0.0
        %7686 = vadd.xlane.f32.xlu0 %v7685
        %v7687 = vpop.xlane.xlu0 %7686
        %v7688 = vadd.f32 %v7491, %v7594
        %v7689 = vadd.f32 %v7492, %v7597
        %v7690 = vadd.f32 %v7493, %v7600
        %v7691 = vadd.f32 %v7494, %v7603
        %v7692 = vadd.f32 %v7495, %v7606
        %v7693 = vadd.f32 %v7496, %v7609
        %v7694 = vadd.f32 %v7497, %v7612
        %v7695 = vadd.f32 %v7498, %v7615
        %v7696 = vadd.f32 %v7499, %v7618
        %v7697 = vadd.f32 %v7500, %v7621
        %v7698 = vadd.f32 %v7501, %v7624
        %v7699 = vadd.f32 %v7502, %v7627
        %v7700 = vadd.f32 %v7503, %v7630
        %v7701 = vadd.f32 %v7504, %v7633
        %v7702 = vadd.f32 %v7505, %v7636
        %v7703 = vadd.f32 %v7506, %v7639
        %v7704 = vadd.f32 %v7507, %v7642
        %v7705 = vadd.f32 %v7508, %v7645
        %v7706 = vadd.f32 %v7509, %v7648
        %v7707 = vadd.f32 %v7510, %v7651
        %v7708 = vadd.f32 %v7511, %v7654
        %v7709 = vadd.f32 %v7512, %v7657
        %v7710 = vadd.f32 %v7513, %v7660
        %v7711 = vadd.f32 %v7514, %v7663
        %v7712 = vadd.f32 %v7515, %v7666
        %v7713 = vadd.f32 %v7516, %v7669
        %v7714 = vadd.f32 %v7517, %v7672
        %v7715 = vadd.f32 %v7518, %v7675
        %v7716 = vadd.f32 %v7519, %v7678
        %v7717 = vadd.f32 %v7520, %v7681
        %v7718 = vadd.f32 %v7521, %v7684
        %v7719 = vadd.f32 %v7522, %v7687
        %v7720 = vld [vmem:[%s2420 + $0x3] sm:$0xff]
        %v7721 = vld [vmem:[%s2420 + $0xb] sm:$0xff]
        %v7722 = vld [vmem:[%s2420 + $0x1b] sm:$0xff]
        %v7723 = vld [vmem:[%s2420 + $0x23] sm:$0xff]
        %v7724 = vld [vmem:[%s2420 + $0x33] sm:$0xff]
        %v7725 = vld [vmem:[%s2420 + $0x3b] sm:$0xff]
        %v7726 = vld [vmem:[%s2420 + $0x4b] sm:$0xff]
        %v7727 = vld [vmem:[%s2420 + $0x53] sm:$0xff]
        %v7728 = vld [vmem:[%s2420 + $0x63] sm:$0xff]
        %v7729 = vld [vmem:[%s2420 + $0x6b] sm:$0xff]
        %v7730 = vld [vmem:[%s2420 + $0x7b] sm:$0xff]
        %v7731 = vld [vmem:[%s2420 + $0x83] sm:$0xff]
        %v7732 = vld [vmem:[%s2420 + $0x93] sm:$0xff]
        %v7733 = vld [vmem:[%s2420 + $0x9b] sm:$0xff]
        %v7734 = vld [vmem:[%s2420 + $0xab] sm:$0xff]
        %v7735 = vld [vmem:[%s2420 + $0xb3] sm:$0xff]
        %v7736 = vld [vmem:[%s2420 + $0xc3] sm:$0xff]
        %v7737 = vld [vmem:[%s2420 + $0xcb] sm:$0xff]
        %v7738 = vld [vmem:[%s2420 + $0xdb] sm:$0xff]
        %v7739 = vld [vmem:[%s2420 + $0xe3] sm:$0xff]
        %v7740 = vld [vmem:[%s2420 + $0xf3] sm:$0xff]
        %v7741 = vld [vmem:[%s2420 + $0xfb] sm:$0xff]
        %v7742 = vld [vmem:[%s2420 + $0x10b] sm:$0xff]
        %v7743 = vld [vmem:[%s2420 + $0x113] sm:$0xff]
        %v7744 = vld [vmem:[%s2420 + $0x123] sm:$0xff]
        %v7745 = vld [vmem:[%s2420 + $0x12b] sm:$0xff]
        %v7746 = vld [vmem:[%s2420 + $0x13b] sm:$0xff]
        %v7747 = vld [vmem:[%s2420 + $0x143] sm:$0xff]
        %v7748 = vld [vmem:[%s2420 + $0x153] sm:$0xff]
        %v7749 = vld [vmem:[%s2420 + $0x15b] sm:$0xff]
        %v7750 = vld [vmem:[%s2420 + $0x16b] sm:$0xff]
        %v7751 = vld [vmem:[%s2420 + $0x173] sm:$0xff]
        %v7752 = vld [vmem:[%s6 + $0x5] sm:$0x1]
        %v7753 = vlaneseq
        %v7754 = vshrl.u32 %v7753, 7
        %v7755 = vsub.s32 0, %v7754
        %v7756 = vrot.slane %v7752, %v7755
        %v7757 = vmul.f32 %v7720, %v7756
        %v7758 = vmul.f32 %v7721, %v7756
        %v7759 = vmul.f32 %v7722, %v7756
        %v7760 = vmul.f32 %v7723, %v7756
        %v7761 = vmul.f32 %v7724, %v7756
        %v7762 = vmul.f32 %v7725, %v7756
        %v7763 = vmul.f32 %v7726, %v7756
        %v7764 = vmul.f32 %v7727, %v7756
        %v7765 = vmul.f32 %v7728, %v7756
        %v7766 = vmul.f32 %v7729, %v7756
        %v7767 = vmul.f32 %v7730, %v7756
        %v7768 = vmul.f32 %v7731, %v7756
        %v7769 = vmul.f32 %v7732, %v7756
        %v7770 = vmul.f32 %v7733, %v7756
        %v7771 = vmul.f32 %v7734, %v7756
        %v7772 = vmul.f32 %v7735, %v7756
        %v7773 = vmul.f32 %v7736, %v7756
        %v7774 = vmul.f32 %v7737, %v7756
        %v7775 = vmul.f32 %v7738, %v7756
        %v7776 = vmul.f32 %v7739, %v7756
        %v7777 = vmul.f32 %v7740, %v7756
        %v7778 = vmul.f32 %v7741, %v7756
        %v7779 = vmul.f32 %v7742, %v7756
        %v7780 = vmul.f32 %v7743, %v7756
        %v7781 = vmul.f32 %v7744, %v7756
        %v7782 = vmul.f32 %v7745, %v7756
        %v7783 = vmul.f32 %v7746, %v7756
        %v7784 = vmul.f32 %v7747, %v7756
        %v7785 = vmul.f32 %v7748, %v7756
        %v7786 = vmul.f32 %v7749, %v7756
        %v7787 = vmul.f32 %v7750, %v7756
        %v7788 = vmul.f32 %v7751, %v7756
        %v7789 = vsel %vm2364, %v7757, 0.0
        %7790 = vadd.xlane.f32.xlu0 %v7789
        %v7791 = vpop.xlane.xlu0 %7790
        %v7792 = vsel %vm2364, %v7758, 0.0
        %7793 = vadd.xlane.f32.xlu0 %v7792
        %v7794 = vpop.xlane.xlu0 %7793
        %v7795 = vsel %vm2364, %v7759, 0.0
        %7796 = vadd.xlane.f32.xlu0 %v7795
        %v7797 = vpop.xlane.xlu0 %7796
        %v7798 = vsel %vm2364, %v7760, 0.0
        %7799 = vadd.xlane.f32.xlu0 %v7798
        %v7800 = vpop.xlane.xlu0 %7799
        %v7801 = vsel %vm2364, %v7761, 0.0
        %7802 = vadd.xlane.f32.xlu0 %v7801
        %v7803 = vpop.xlane.xlu0 %7802
        %v7804 = vsel %vm2364, %v7762, 0.0
        %7805 = vadd.xlane.f32.xlu0 %v7804
        %v7806 = vpop.xlane.xlu0 %7805
        %v7807 = vsel %vm2364, %v7763, 0.0
        %7808 = vadd.xlane.f32.xlu0 %v7807
        %v7809 = vpop.xlane.xlu0 %7808
        %v7810 = vsel %vm2364, %v7764, 0.0
        %7811 = vadd.xlane.f32.xlu0 %v7810
        %v7812 = vpop.xlane.xlu0 %7811
        %v7813 = vsel %vm2364, %v7765, 0.0
        %7814 = vadd.xlane.f32.xlu0 %v7813
        %v7815 = vpop.xlane.xlu0 %7814
        %v7816 = vsel %vm2364, %v7766, 0.0
        %7817 = vadd.xlane.f32.xlu0 %v7816
        %v7818 = vpop.xlane.xlu0 %7817
        %v7819 = vsel %vm2364, %v7767, 0.0
        %7820 = vadd.xlane.f32.xlu0 %v7819
        %v7821 = vpop.xlane.xlu0 %7820
        %v7822 = vsel %vm2364, %v7768, 0.0
        %7823 = vadd.xlane.f32.xlu0 %v7822
        %v7824 = vpop.xlane.xlu0 %7823
        %v7825 = vsel %vm2364, %v7769, 0.0
        %7826 = vadd.xlane.f32.xlu0 %v7825
        %v7827 = vpop.xlane.xlu0 %7826
        %v7828 = vsel %vm2364, %v7770, 0.0
        %7829 = vadd.xlane.f32.xlu0 %v7828
        %v7830 = vpop.xlane.xlu0 %7829
        %v7831 = vsel %vm2364, %v7771, 0.0
        %7832 = vadd.xlane.f32.xlu0 %v7831
        %v7833 = vpop.xlane.xlu0 %7832
        %v7834 = vsel %vm2364, %v7772, 0.0
        %7835 = vadd.xlane.f32.xlu0 %v7834
        %v7836 = vpop.xlane.xlu0 %7835
        %v7837 = vsel %vm2364, %v7773, 0.0
        %7838 = vadd.xlane.f32.xlu0 %v7837
        %v7839 = vpop.xlane.xlu0 %7838
        %v7840 = vsel %vm2364, %v7774, 0.0
        %7841 = vadd.xlane.f32.xlu0 %v7840
        %v7842 = vpop.xlane.xlu0 %7841
        %v7843 = vsel %vm2364, %v7775, 0.0
        %7844 = vadd.xlane.f32.xlu0 %v7843
        %v7845 = vpop.xlane.xlu0 %7844
        %v7846 = vsel %vm2364, %v7776, 0.0
        %7847 = vadd.xlane.f32.xlu0 %v7846
        %v7848 = vpop.xlane.xlu0 %7847
        %v7849 = vsel %vm2364, %v7777, 0.0
        %7850 = vadd.xlane.f32.xlu0 %v7849
        %v7851 = vpop.xlane.xlu0 %7850
        %v7852 = vsel %vm2364, %v7778, 0.0
        %7853 = vadd.xlane.f32.xlu0 %v7852
        %v7854 = vpop.xlane.xlu0 %7853
        %v7855 = vsel %vm2364, %v7779, 0.0
        %7856 = vadd.xlane.f32.xlu0 %v7855
        %v7857 = vpop.xlane.xlu0 %7856
        %v7858 = vsel %vm2364, %v7780, 0.0
        %7859 = vadd.xlane.f32.xlu0 %v7858
        %v7860 = vpop.xlane.xlu0 %7859
        %v7861 = vsel %vm2364, %v7781, 0.0
        %7862 = vadd.xlane.f32.xlu0 %v7861
        %v7863 = vpop.xlane.xlu0 %7862
        %v7864 = vsel %vm2364, %v7782, 0.0
        %7865 = vadd.xlane.f32.xlu0 %v7864
        %v7866 = vpop.xlane.xlu0 %7865
        %v7867 = vsel %vm2364, %v7783, 0.0
        %7868 = vadd.xlane.f32.xlu0 %v7867
        %v7869 = vpop.xlane.xlu0 %7868
        %v7870 = vsel %vm2364, %v7784, 0.0
        %7871 = vadd.xlane.f32.xlu0 %v7870
        %v7872 = vpop.xlane.xlu0 %7871
        %v7873 = vsel %vm2364, %v7785, 0.0
        %7874 = vadd.xlane.f32.xlu0 %v7873
        %v7875 = vpop.xlane.xlu0 %7874
        %v7876 = vsel %vm2364, %v7786, 0.0
        %7877 = vadd.xlane.f32.xlu0 %v7876
        %v7878 = vpop.xlane.xlu0 %7877
        %v7879 = vsel %vm2364, %v7787, 0.0
        %7880 = vadd.xlane.f32.xlu0 %v7879
        %v7881 = vpop.xlane.xlu0 %7880
        %v7882 = vsel %vm2364, %v7788, 0.0
        %7883 = vadd.xlane.f32.xlu0 %v7882
        %v7884 = vpop.xlane.xlu0 %7883
        %v7885 = vadd.f32 %v7688, %v7791
        %v7886 = vadd.f32 %v7689, %v7794
        %v7887 = vadd.f32 %v7690, %v7797
        %v7888 = vadd.f32 %v7691, %v7800
        %v7889 = vadd.f32 %v7692, %v7803
        %v7890 = vadd.f32 %v7693, %v7806
        %v7891 = vadd.f32 %v7694, %v7809
        %v7892 = vadd.f32 %v7695, %v7812
        %v7893 = vadd.f32 %v7696, %v7815
        %v7894 = vadd.f32 %v7697, %v7818
        %v7895 = vadd.f32 %v7698, %v7821
        %v7896 = vadd.f32 %v7699, %v7824
        %v7897 = vadd.f32 %v7700, %v7827
        %v7898 = vadd.f32 %v7701, %v7830
        %v7899 = vadd.f32 %v7702, %v7833
        %v7900 = vadd.f32 %v7703, %v7836
        %v7901 = vadd.f32 %v7704, %v7839
        %v7902 = vadd.f32 %v7705, %v7842
        %v7903 = vadd.f32 %v7706, %v7845
        %v7904 = vadd.f32 %v7707, %v7848
        %v7905 = vadd.f32 %v7708, %v7851
        %v7906 = vadd.f32 %v7709, %v7854
        %v7907 = vadd.f32 %v7710, %v7857
        %v7908 = vadd.f32 %v7711, %v7860
        %v7909 = vadd.f32 %v7712, %v7863
        %v7910 = vadd.f32 %v7713, %v7866
        %v7911 = vadd.f32 %v7714, %v7869
        %v7912 = vadd.f32 %v7715, %v7872
        %v7913 = vadd.f32 %v7716, %v7875
        %v7914 = vadd.f32 %v7717, %v7878
        %v7915 = vadd.f32 %v7718, %v7881
        %v7916 = vadd.f32 %v7719, %v7884
        %s7917 = scalar_lea.vmem [#allocation4], 320
        %v7918 = vld [vmem:[%s7917] sm:$0xff]
        %v7919 = vld [vmem:[%s7917 + $0x8] sm:$0xff]
        %v7920 = vld [vmem:[%s7917 + $0x20] sm:$0xff]
        %v7921 = vld [vmem:[%s7917 + $0x28] sm:$0xff]
        %v7922 = vld [vmem:[%s7917 + $0x40] sm:$0xff]
        %v7923 = vld [vmem:[%s7917 + $0x48] sm:$0xff]
        %v7924 = vld [vmem:[%s7917 + $0x60] sm:$0xff]
        %v7925 = vld [vmem:[%s7917 + $0x68] sm:$0xff]
        %v7926 = vld [vmem:[%s7917 + $0x80] sm:$0xff]
        %v7927 = vld [vmem:[%s7917 + $0x88] sm:$0xff]
        %v7928 = vld [vmem:[%s7917 + $0xa0] sm:$0xff]
        %v7929 = vld [vmem:[%s7917 + $0xa8] sm:$0xff]
        %v7930 = vld [vmem:[%s7917 + $0xc0] sm:$0xff]
        %v7931 = vld [vmem:[%s7917 + $0xc8] sm:$0xff]
        %v7932 = vld [vmem:[%s7917 + $0xe0] sm:$0xff]
        %v7933 = vld [vmem:[%s7917 + $0xe8] sm:$0xff]
        %v7934 = vld [vmem:[%s7917 + $0x100] sm:$0xff]
        %v7935 = vld [vmem:[%s7917 + $0x108] sm:$0xff]
        %v7936 = vld [vmem:[%s7917 + $0x120] sm:$0xff]
        %v7937 = vld [vmem:[%s7917 + $0x128] sm:$0xff]
        %v7938 = vld [vmem:[%s7917 + $0x140] sm:$0xff]
        %v7939 = vld [vmem:[%s7917 + $0x148] sm:$0xff]
        %v7940 = vld [vmem:[%s7917 + $0x160] sm:$0xff]
        %v7941 = vld [vmem:[%s7917 + $0x168] sm:$0xff]
        %v7942 = vld [vmem:[%s7917 + $0x180] sm:$0xff]
        %v7943 = vld [vmem:[%s7917 + $0x188] sm:$0xff]
        %v7944 = vld [vmem:[%s7917 + $0x1a0] sm:$0xff]
        %v7945 = vld [vmem:[%s7917 + $0x1a8] sm:$0xff]
        %v7946 = vld [vmem:[%s7917 + $0x1c0] sm:$0xff]
        %v7947 = vld [vmem:[%s7917 + $0x1c8] sm:$0xff]
        %v7948 = vld [vmem:[%s7917 + $0x1e0] sm:$0xff]
        %v7949 = vld [vmem:[%s7917 + $0x1e8] sm:$0xff]
        %v7950 = vld [vmem:[%s5 + $0x6] sm:$0x1]
        %v7951 = vlaneseq
        %v7952 = vshrl.u32 %v7951, 7
        %v7953 = vsub.s32 0, %v7952
        %v7954 = vrot.slane %v7950, %v7953
        %v7955 = vmul.f32 %v7918, %v7954
        %v7956 = vmul.f32 %v7919, %v7954
        %v7957 = vmul.f32 %v7920, %v7954
        %v7958 = vmul.f32 %v7921, %v7954
        %v7959 = vmul.f32 %v7922, %v7954
        %v7960 = vmul.f32 %v7923, %v7954
        %v7961 = vmul.f32 %v7924, %v7954
        %v7962 = vmul.f32 %v7925, %v7954
        %v7963 = vmul.f32 %v7926, %v7954
        %v7964 = vmul.f32 %v7927, %v7954
        %v7965 = vmul.f32 %v7928, %v7954
        %v7966 = vmul.f32 %v7929, %v7954
        %v7967 = vmul.f32 %v7930, %v7954
        %v7968 = vmul.f32 %v7931, %v7954
        %v7969 = vmul.f32 %v7932, %v7954
        %v7970 = vmul.f32 %v7933, %v7954
        %v7971 = vmul.f32 %v7934, %v7954
        %v7972 = vmul.f32 %v7935, %v7954
        %v7973 = vmul.f32 %v7936, %v7954
        %v7974 = vmul.f32 %v7937, %v7954
        %v7975 = vmul.f32 %v7938, %v7954
        %v7976 = vmul.f32 %v7939, %v7954
        %v7977 = vmul.f32 %v7940, %v7954
        %v7978 = vmul.f32 %v7941, %v7954
        %v7979 = vmul.f32 %v7942, %v7954
        %v7980 = vmul.f32 %v7943, %v7954
        %v7981 = vmul.f32 %v7944, %v7954
        %v7982 = vmul.f32 %v7945, %v7954
        %v7983 = vmul.f32 %v7946, %v7954
        %v7984 = vmul.f32 %v7947, %v7954
        %v7985 = vmul.f32 %v7948, %v7954
        %v7986 = vmul.f32 %v7949, %v7954
        %v7987 = vsel %vm4272, %v7955, 0.0
        %7988 = vadd.xlane.f32.xlu0 %v7987
        %v7989 = vpop.xlane.xlu0 %7988
        %v7990 = vsel %vm4272, %v7956, 0.0
        %7991 = vadd.xlane.f32.xlu0 %v7990
        %v7992 = vpop.xlane.xlu0 %7991
        %v7993 = vsel %vm4272, %v7957, 0.0
        %7994 = vadd.xlane.f32.xlu0 %v7993
        %v7995 = vpop.xlane.xlu0 %7994
        %v7996 = vsel %vm4272, %v7958, 0.0
        %7997 = vadd.xlane.f32.xlu0 %v7996
        %v7998 = vpop.xlane.xlu0 %7997
        %v7999 = vsel %vm4272, %v7959, 0.0
        %8000 = vadd.xlane.f32.xlu0 %v7999
        %v8001 = vpop.xlane.xlu0 %8000
        %v8002 = vsel %vm4272, %v7960, 0.0
        %8003 = vadd.xlane.f32.xlu0 %v8002
        %v8004 = vpop.xlane.xlu0 %8003
        %v8005 = vsel %vm4272, %v7961, 0.0
        %8006 = vadd.xlane.f32.xlu0 %v8005
        %v8007 = vpop.xlane.xlu0 %8006
        %v8008 = vsel %vm4272, %v7962, 0.0
        %8009 = vadd.xlane.f32.xlu0 %v8008
        %v8010 = vpop.xlane.xlu0 %8009
        %v8011 = vsel %vm4272, %v7963, 0.0
        %8012 = vadd.xlane.f32.xlu0 %v8011
        %v8013 = vpop.xlane.xlu0 %8012
        %v8014 = vsel %vm4272, %v7964, 0.0
        %8015 = vadd.xlane.f32.xlu0 %v8014
        %v8016 = vpop.xlane.xlu0 %8015
        %v8017 = vsel %vm4272, %v7965, 0.0
        %8018 = vadd.xlane.f32.xlu0 %v8017
        %v8019 = vpop.xlane.xlu0 %8018
        %v8020 = vsel %vm4272, %v7966, 0.0
        %8021 = vadd.xlane.f32.xlu0 %v8020
        %v8022 = vpop.xlane.xlu0 %8021
        %v8023 = vsel %vm4272, %v7967, 0.0
        %8024 = vadd.xlane.f32.xlu0 %v8023
        %v8025 = vpop.xlane.xlu0 %8024
        %v8026 = vsel %vm4272, %v7968, 0.0
        %8027 = vadd.xlane.f32.xlu0 %v8026
        %v8028 = vpop.xlane.xlu0 %8027
        %v8029 = vsel %vm4272, %v7969, 0.0
        %8030 = vadd.xlane.f32.xlu0 %v8029
        %v8031 = vpop.xlane.xlu0 %8030
        %v8032 = vsel %vm4272, %v7970, 0.0
        %8033 = vadd.xlane.f32.xlu0 %v8032
        %v8034 = vpop.xlane.xlu0 %8033
        %v8035 = vsel %vm4272, %v7971, 0.0
        %8036 = vadd.xlane.f32.xlu0 %v8035
        %v8037 = vpop.xlane.xlu0 %8036
        %v8038 = vsel %vm4272, %v7972, 0.0
        %8039 = vadd.xlane.f32.xlu0 %v8038
        %v8040 = vpop.xlane.xlu0 %8039
        %v8041 = vsel %vm4272, %v7973, 0.0
        %8042 = vadd.xlane.f32.xlu0 %v8041
        %v8043 = vpop.xlane.xlu0 %8042
        %v8044 = vsel %vm4272, %v7974, 0.0
        %8045 = vadd.xlane.f32.xlu0 %v8044
        %v8046 = vpop.xlane.xlu0 %8045
        %v8047 = vsel %vm4272, %v7975, 0.0
        %8048 = vadd.xlane.f32.xlu0 %v8047
        %v8049 = vpop.xlane.xlu0 %8048
        %v8050 = vsel %vm4272, %v7976, 0.0
        %8051 = vadd.xlane.f32.xlu0 %v8050
        %v8052 = vpop.xlane.xlu0 %8051
        %v8053 = vsel %vm4272, %v7977, 0.0
        %8054 = vadd.xlane.f32.xlu0 %v8053
        %v8055 = vpop.xlane.xlu0 %8054
        %v8056 = vsel %vm4272, %v7978, 0.0
        %8057 = vadd.xlane.f32.xlu0 %v8056
        %v8058 = vpop.xlane.xlu0 %8057
        %v8059 = vsel %vm4272, %v7979, 0.0
        %8060 = vadd.xlane.f32.xlu0 %v8059
        %v8061 = vpop.xlane.xlu0 %8060
        %v8062 = vsel %vm4272, %v7980, 0.0
        %8063 = vadd.xlane.f32.xlu0 %v8062
        %v8064 = vpop.xlane.xlu0 %8063
        %v8065 = vsel %vm4272, %v7981, 0.0
        %8066 = vadd.xlane.f32.xlu0 %v8065
        %v8067 = vpop.xlane.xlu0 %8066
        %v8068 = vsel %vm4272, %v7982, 0.0
        %8069 = vadd.xlane.f32.xlu0 %v8068
        %v8070 = vpop.xlane.xlu0 %8069
        %v8071 = vsel %vm4272, %v7983, 0.0
        %8072 = vadd.xlane.f32.xlu0 %v8071
        %v8073 = vpop.xlane.xlu0 %8072
        %v8074 = vsel %vm4272, %v7984, 0.0
        %8075 = vadd.xlane.f32.xlu0 %v8074
        %v8076 = vpop.xlane.xlu0 %8075
        %v8077 = vsel %vm4272, %v7985, 0.0
        %8078 = vadd.xlane.f32.xlu0 %v8077
        %v8079 = vpop.xlane.xlu0 %8078
        %v8080 = vsel %vm4272, %v7986, 0.0
        %8081 = vadd.xlane.f32.xlu0 %v8080
        %v8082 = vpop.xlane.xlu0 %8081
        %v8083 = vadd.f32 %v7885, %v7989
        %v8084 = vadd.f32 %v7886, %v7992
        %v8085 = vadd.f32 %v7887, %v7995
        %v8086 = vadd.f32 %v7888, %v7998
        %v8087 = vadd.f32 %v7889, %v8001
        %v8088 = vadd.f32 %v7890, %v8004
        %v8089 = vadd.f32 %v7891, %v8007
        %v8090 = vadd.f32 %v7892, %v8010
        %v8091 = vadd.f32 %v7893, %v8013
        %v8092 = vadd.f32 %v7894, %v8016
        %v8093 = vadd.f32 %v7895, %v8019
        %v8094 = vadd.f32 %v7896, %v8022
        %v8095 = vadd.f32 %v7897, %v8025
        %v8096 = vadd.f32 %v7898, %v8028
        %v8097 = vadd.f32 %v7899, %v8031
        %v8098 = vadd.f32 %v7900, %v8034
        %v8099 = vadd.f32 %v7901, %v8037
        %v8100 = vadd.f32 %v7902, %v8040
        %v8101 = vadd.f32 %v7903, %v8043
        %v8102 = vadd.f32 %v7904, %v8046
        %v8103 = vadd.f32 %v7905, %v8049
        %v8104 = vadd.f32 %v7906, %v8052
        %v8105 = vadd.f32 %v7907, %v8055
        %v8106 = vadd.f32 %v7908, %v8058
        %v8107 = vadd.f32 %v7909, %v8061
        %v8108 = vadd.f32 %v7910, %v8064
        %v8109 = vadd.f32 %v7911, %v8067
        %v8110 = vadd.f32 %v7912, %v8070
        %v8111 = vadd.f32 %v7913, %v8073
        %v8112 = vadd.f32 %v7914, %v8076
        %v8113 = vadd.f32 %v7915, %v8079
        %v8114 = vadd.f32 %v7916, %v8082
        %s8115 = scalar_lea.vmem [#allocation4], 192
        %v8116 = vld [vmem:[%s8115 + $0x4] sm:$0xff]
        %v8117 = vld [vmem:[%s8115 + $0xc] sm:$0xff]
        %v8118 = vld [vmem:[%s8115 + $0x24] sm:$0xff]
        %v8119 = vld [vmem:[%s8115 + $0x2c] sm:$0xff]
        %v8120 = vld [vmem:[%s8115 + $0x44] sm:$0xff]
        %v8121 = vld [vmem:[%s8115 + $0x4c] sm:$0xff]
        %v8122 = vld [vmem:[%s8115 + $0x64] sm:$0xff]
        %v8123 = vld [vmem:[%s8115 + $0x6c] sm:$0xff]
        %v8124 = vld [vmem:[%s8115 + $0x84] sm:$0xff]
        %v8125 = vld [vmem:[%s8115 + $0x8c] sm:$0xff]
        %v8126 = vld [vmem:[%s8115 + $0xa4] sm:$0xff]
        %v8127 = vld [vmem:[%s8115 + $0xac] sm:$0xff]
        %v8128 = vld [vmem:[%s8115 + $0xc4] sm:$0xff]
        %v8129 = vld [vmem:[%s8115 + $0xcc] sm:$0xff]
        %v8130 = vld [vmem:[%s8115 + $0xe4] sm:$0xff]
        %v8131 = vld [vmem:[%s8115 + $0xec] sm:$0xff]
        %v8132 = vld [vmem:[%s8115 + $0x104] sm:$0xff]
        %v8133 = vld [vmem:[%s8115 + $0x10c] sm:$0xff]
        %v8134 = vld [vmem:[%s8115 + $0x124] sm:$0xff]
        %v8135 = vld [vmem:[%s8115 + $0x12c] sm:$0xff]
        %v8136 = vld [vmem:[%s8115 + $0x144] sm:$0xff]
        %v8137 = vld [vmem:[%s8115 + $0x14c] sm:$0xff]
        %v8138 = vld [vmem:[%s8115 + $0x164] sm:$0xff]
        %v8139 = vld [vmem:[%s8115 + $0x16c] sm:$0xff]
        %v8140 = vld [vmem:[%s8115 + $0x184] sm:$0xff]
        %v8141 = vld [vmem:[%s8115 + $0x18c] sm:$0xff]
        %v8142 = vld [vmem:[%s8115 + $0x1a4] sm:$0xff]
        %v8143 = vld [vmem:[%s8115 + $0x1ac] sm:$0xff]
        %v8144 = vld [vmem:[%s8115 + $0x1c4] sm:$0xff]
        %v8145 = vld [vmem:[%s8115 + $0x1cc] sm:$0xff]
        %v8146 = vld [vmem:[%s8115 + $0x1e4] sm:$0xff]
        %v8147 = vld [vmem:[%s8115 + $0x1ec] sm:$0xff]
        %v8148 = vld [vmem:[%s7 + $0x6] sm:$0x1]
        %v8149 = vlaneseq
        %v8150 = vshrl.u32 %v8149, 7
        %v8151 = vsub.s32 0, %v8150
        %v8152 = vrot.slane %v8148, %v8151
        %v8153 = vmul.f32 %v8116, %v8152
        %v8154 = vmul.f32 %v8117, %v8152
        %v8155 = vmul.f32 %v8118, %v8152
        %v8156 = vmul.f32 %v8119, %v8152
        %v8157 = vmul.f32 %v8120, %v8152
        %v8158 = vmul.f32 %v8121, %v8152
        %v8159 = vmul.f32 %v8122, %v8152
        %v8160 = vmul.f32 %v8123, %v8152
        %v8161 = vmul.f32 %v8124, %v8152
        %v8162 = vmul.f32 %v8125, %v8152
        %v8163 = vmul.f32 %v8126, %v8152
        %v8164 = vmul.f32 %v8127, %v8152
        %v8165 = vmul.f32 %v8128, %v8152
        %v8166 = vmul.f32 %v8129, %v8152
        %v8167 = vmul.f32 %v8130, %v8152
        %v8168 = vmul.f32 %v8131, %v8152
        %v8169 = vmul.f32 %v8132, %v8152
        %v8170 = vmul.f32 %v8133, %v8152
        %v8171 = vmul.f32 %v8134, %v8152
        %v8172 = vmul.f32 %v8135, %v8152
        %v8173 = vmul.f32 %v8136, %v8152
        %v8174 = vmul.f32 %v8137, %v8152
        %v8175 = vmul.f32 %v8138, %v8152
        %v8176 = vmul.f32 %v8139, %v8152
        %v8177 = vmul.f32 %v8140, %v8152
        %v8178 = vmul.f32 %v8141, %v8152
        %v8179 = vmul.f32 %v8142, %v8152
        %v8180 = vmul.f32 %v8143, %v8152
        %v8181 = vmul.f32 %v8144, %v8152
        %v8182 = vmul.f32 %v8145, %v8152
        %v8183 = vmul.f32 %v8146, %v8152
        %v8184 = vmul.f32 %v8147, %v8152
        %v8185 = vsel %vm4272, %v8153, 0.0
        %8186 = vadd.xlane.f32.xlu0 %v8185
        %v8187 = vpop.xlane.xlu0 %8186
        %v8188 = vsel %vm4272, %v8154, 0.0
        %8189 = vadd.xlane.f32.xlu0 %v8188
        %v8190 = vpop.xlane.xlu0 %8189
        %v8191 = vsel %vm4272, %v8155, 0.0
        %8192 = vadd.xlane.f32.xlu0 %v8191
        %v8193 = vpop.xlane.xlu0 %8192
        %v8194 = vsel %vm4272, %v8156, 0.0
        %8195 = vadd.xlane.f32.xlu0 %v8194
        %v8196 = vpop.xlane.xlu0 %8195
        %v8197 = vsel %vm4272, %v8157, 0.0
        %8198 = vadd.xlane.f32.xlu0 %v8197
        %v8199 = vpop.xlane.xlu0 %8198
        %v8200 = vsel %vm4272, %v8158, 0.0
        %8201 = vadd.xlane.f32.xlu0 %v8200
        %v8202 = vpop.xlane.xlu0 %8201
        %v8203 = vsel %vm4272, %v8159, 0.0
        %8204 = vadd.xlane.f32.xlu0 %v8203
        %v8205 = vpop.xlane.xlu0 %8204
        %v8206 = vsel %vm4272, %v8160, 0.0
        %8207 = vadd.xlane.f32.xlu0 %v8206
        %v8208 = vpop.xlane.xlu0 %8207
        %v8209 = vsel %vm4272, %v8161, 0.0
        %8210 = vadd.xlane.f32.xlu0 %v8209
        %v8211 = vpop.xlane.xlu0 %8210
        %v8212 = vsel %vm4272, %v8162, 0.0
        %8213 = vadd.xlane.f32.xlu0 %v8212
        %v8214 = vpop.xlane.xlu0 %8213
        %v8215 = vsel %vm4272, %v8163, 0.0
        %8216 = vadd.xlane.f32.xlu0 %v8215
        %v8217 = vpop.xlane.xlu0 %8216
        %v8218 = vsel %vm4272, %v8164, 0.0
        %8219 = vadd.xlane.f32.xlu0 %v8218
        %v8220 = vpop.xlane.xlu0 %8219
        %v8221 = vsel %vm4272, %v8165, 0.0
        %8222 = vadd.xlane.f32.xlu0 %v8221
        %v8223 = vpop.xlane.xlu0 %8222
        %v8224 = vsel %vm4272, %v8166, 0.0
        %8225 = vadd.xlane.f32.xlu0 %v8224
        %v8226 = vpop.xlane.xlu0 %8225
        %v8227 = vsel %vm4272, %v8167, 0.0
        %8228 = vadd.xlane.f32.xlu0 %v8227
        %v8229 = vpop.xlane.xlu0 %8228
        %v8230 = vsel %vm4272, %v8168, 0.0
        %8231 = vadd.xlane.f32.xlu0 %v8230
        %v8232 = vpop.xlane.xlu0 %8231
        %v8233 = vsel %vm4272, %v8169, 0.0
        %8234 = vadd.xlane.f32.xlu0 %v8233
        %v8235 = vpop.xlane.xlu0 %8234
        %v8236 = vsel %vm4272, %v8170, 0.0
        %8237 = vadd.xlane.f32.xlu0 %v8236
        %v8238 = vpop.xlane.xlu0 %8237
        %v8239 = vsel %vm4272, %v8171, 0.0
        %8240 = vadd.xlane.f32.xlu0 %v8239
        %v8241 = vpop.xlane.xlu0 %8240
        %v8242 = vsel %vm4272, %v8172, 0.0
        %8243 = vadd.xlane.f32.xlu0 %v8242
        %v8244 = vpop.xlane.xlu0 %8243
        %v8245 = vsel %vm4272, %v8173, 0.0
        %8246 = vadd.xlane.f32.xlu0 %v8245
        %v8247 = vpop.xlane.xlu0 %8246
        %v8248 = vsel %vm4272, %v8174, 0.0
        %8249 = vadd.xlane.f32.xlu0 %v8248
        %v8250 = vpop.xlane.xlu0 %8249
        %v8251 = vsel %vm4272, %v8175, 0.0
        %8252 = vadd.xlane.f32.xlu0 %v8251
        %v8253 = vpop.xlane.xlu0 %8252
        %v8254 = vsel %vm4272, %v8176, 0.0
        %8255 = vadd.xlane.f32.xlu0 %v8254
        %v8256 = vpop.xlane.xlu0 %8255
        %v8257 = vsel %vm4272, %v8177, 0.0
        %8258 = vadd.xlane.f32.xlu0 %v8257
        %v8259 = vpop.xlane.xlu0 %8258
        %v8260 = vsel %vm4272, %v8178, 0.0
        %8261 = vadd.xlane.f32.xlu0 %v8260
        %v8262 = vpop.xlane.xlu0 %8261
        %v8263 = vsel %vm4272, %v8179, 0.0
        %8264 = vadd.xlane.f32.xlu0 %v8263
        %v8265 = vpop.xlane.xlu0 %8264
        %v8266 = vsel %vm4272, %v8180, 0.0
        %8267 = vadd.xlane.f32.xlu0 %v8266
        %v8268 = vpop.xlane.xlu0 %8267
        %v8269 = vsel %vm4272, %v8181, 0.0
        %8270 = vadd.xlane.f32.xlu0 %v8269
        %v8271 = vpop.xlane.xlu0 %8270
        %v8272 = vsel %vm4272, %v8182, 0.0
        %8273 = vadd.xlane.f32.xlu0 %v8272
        %v8274 = vpop.xlane.xlu0 %8273
        %v8275 = vsel %vm4272, %v8183, 0.0
        %8276 = vadd.xlane.f32.xlu0 %v8275
        %v8277 = vpop.xlane.xlu0 %8276
        %v8278 = vsel %vm4272, %v8184, 0.0
        %8279 = vadd.xlane.f32.xlu0 %v8278
        %v8280 = vpop.xlane.xlu0 %8279
        %v8281 = vadd.f32 %v8083, %v8187
        %v8282 = vadd.f32 %v8084, %v8190
        %v8283 = vadd.f32 %v8085, %v8193
        %v8284 = vadd.f32 %v8086, %v8196
        %v8285 = vadd.f32 %v8087, %v8199
        %v8286 = vadd.f32 %v8088, %v8202
        %v8287 = vadd.f32 %v8089, %v8205
        %v8288 = vadd.f32 %v8090, %v8208
        %v8289 = vadd.f32 %v8091, %v8211
        %v8290 = vadd.f32 %v8092, %v8214
        %v8291 = vadd.f32 %v8093, %v8217
        %v8292 = vadd.f32 %v8094, %v8220
        %v8293 = vadd.f32 %v8095, %v8223
        %v8294 = vadd.f32 %v8096, %v8226
        %v8295 = vadd.f32 %v8097, %v8229
        %v8296 = vadd.f32 %v8098, %v8232
        %v8297 = vadd.f32 %v8099, %v8235
        %v8298 = vadd.f32 %v8100, %v8238
        %v8299 = vadd.f32 %v8101, %v8241
        %v8300 = vadd.f32 %v8102, %v8244
        %v8301 = vadd.f32 %v8103, %v8247
        %v8302 = vadd.f32 %v8104, %v8250
        %v8303 = vadd.f32 %v8105, %v8253
        %v8304 = vadd.f32 %v8106, %v8256
        %v8305 = vadd.f32 %v8107, %v8259
        %v8306 = vadd.f32 %v8108, %v8262
        %v8307 = vadd.f32 %v8109, %v8265
        %v8308 = vadd.f32 %v8110, %v8268
        %v8309 = vadd.f32 %v8111, %v8271
        %v8310 = vadd.f32 %v8112, %v8274
        %v8311 = vadd.f32 %v8113, %v8277
        %v8312 = vadd.f32 %v8114, %v8280
        %s8313 = scalar_lea.vmem [#allocation3], 72
        %v8314 = vld [vmem:[%s8313 + $0x1] sm:$0xff]
        %v8315 = vld [vmem:[%s8313 + $0x9] sm:$0xff]
        %v8316 = vld [vmem:[%s8313 + $0x19] sm:$0xff]
        %v8317 = vld [vmem:[%s8313 + $0x21] sm:$0xff]
        %v8318 = vld [vmem:[%s8313 + $0x31] sm:$0xff]
        %v8319 = vld [vmem:[%s8313 + $0x39] sm:$0xff]
        %v8320 = vld [vmem:[%s8313 + $0x49] sm:$0xff]
        %v8321 = vld [vmem:[%s8313 + $0x51] sm:$0xff]
        %v8322 = vld [vmem:[%s8313 + $0x61] sm:$0xff]
        %v8323 = vld [vmem:[%s8313 + $0x69] sm:$0xff]
        %v8324 = vld [vmem:[%s8313 + $0x79] sm:$0xff]
        %v8325 = vld [vmem:[%s8313 + $0x81] sm:$0xff]
        %v8326 = vld [vmem:[%s8313 + $0x91] sm:$0xff]
        %v8327 = vld [vmem:[%s8313 + $0x99] sm:$0xff]
        %v8328 = vld [vmem:[%s8313 + $0xa9] sm:$0xff]
        %v8329 = vld [vmem:[%s8313 + $0xb1] sm:$0xff]
        %v8330 = vld [vmem:[%s8313 + $0xc1] sm:$0xff]
        %v8331 = vld [vmem:[%s8313 + $0xc9] sm:$0xff]
        %v8332 = vld [vmem:[%s8313 + $0xd9] sm:$0xff]
        %v8333 = vld [vmem:[%s8313 + $0xe1] sm:$0xff]
        %v8334 = vld [vmem:[%s8313 + $0xf1] sm:$0xff]
        %v8335 = vld [vmem:[%s8313 + $0xf9] sm:$0xff]
        %v8336 = vld [vmem:[%s8313 + $0x109] sm:$0xff]
        %v8337 = vld [vmem:[%s8313 + $0x111] sm:$0xff]
        %v8338 = vld [vmem:[%s8313 + $0x121] sm:$0xff]
        %v8339 = vld [vmem:[%s8313 + $0x129] sm:$0xff]
        %v8340 = vld [vmem:[%s8313 + $0x139] sm:$0xff]
        %v8341 = vld [vmem:[%s8313 + $0x141] sm:$0xff]
        %v8342 = vld [vmem:[%s8313 + $0x151] sm:$0xff]
        %v8343 = vld [vmem:[%s8313 + $0x159] sm:$0xff]
        %v8344 = vld [vmem:[%s8313 + $0x169] sm:$0xff]
        %v8345 = vld [vmem:[%s8313 + $0x171] sm:$0xff]
        %v8346 = vld [vmem:[%s6 + $0x6] sm:$0x1]
        %v8347 = vlaneseq
        %v8348 = vshrl.u32 %v8347, 7
        %v8349 = vsub.s32 0, %v8348
        %v8350 = vrot.slane %v8346, %v8349
        %v8351 = vmul.f32 %v8314, %v8350
        %v8352 = vmul.f32 %v8315, %v8350
        %v8353 = vmul.f32 %v8316, %v8350
        %v8354 = vmul.f32 %v8317, %v8350
        %v8355 = vmul.f32 %v8318, %v8350
        %v8356 = vmul.f32 %v8319, %v8350
        %v8357 = vmul.f32 %v8320, %v8350
        %v8358 = vmul.f32 %v8321, %v8350
        %v8359 = vmul.f32 %v8322, %v8350
        %v8360 = vmul.f32 %v8323, %v8350
        %v8361 = vmul.f32 %v8324, %v8350
        %v8362 = vmul.f32 %v8325, %v8350
        %v8363 = vmul.f32 %v8326, %v8350
        %v8364 = vmul.f32 %v8327, %v8350
        %v8365 = vmul.f32 %v8328, %v8350
        %v8366 = vmul.f32 %v8329, %v8350
        %v8367 = vmul.f32 %v8330, %v8350
        %v8368 = vmul.f32 %v8331, %v8350
        %v8369 = vmul.f32 %v8332, %v8350
        %v8370 = vmul.f32 %v8333, %v8350
        %v8371 = vmul.f32 %v8334, %v8350
        %v8372 = vmul.f32 %v8335, %v8350
        %v8373 = vmul.f32 %v8336, %v8350
        %v8374 = vmul.f32 %v8337, %v8350
        %v8375 = vmul.f32 %v8338, %v8350
        %v8376 = vmul.f32 %v8339, %v8350
        %v8377 = vmul.f32 %v8340, %v8350
        %v8378 = vmul.f32 %v8341, %v8350
        %v8379 = vmul.f32 %v8342, %v8350
        %v8380 = vmul.f32 %v8343, %v8350
        %v8381 = vmul.f32 %v8344, %v8350
        %v8382 = vmul.f32 %v8345, %v8350
        %v8383 = vsel %vm2364, %v8351, 0.0
        %8384 = vadd.xlane.f32.xlu0 %v8383
        %v8385 = vpop.xlane.xlu0 %8384
        %v8386 = vsel %vm2364, %v8352, 0.0
        %8387 = vadd.xlane.f32.xlu0 %v8386
        %v8388 = vpop.xlane.xlu0 %8387
        %v8389 = vsel %vm2364, %v8353, 0.0
        %8390 = vadd.xlane.f32.xlu0 %v8389
        %v8391 = vpop.xlane.xlu0 %8390
        %v8392 = vsel %vm2364, %v8354, 0.0
        %8393 = vadd.xlane.f32.xlu0 %v8392
        %v8394 = vpop.xlane.xlu0 %8393
        %v8395 = vsel %vm2364, %v8355, 0.0
        %8396 = vadd.xlane.f32.xlu0 %v8395
        %v8397 = vpop.xlane.xlu0 %8396
        %v8398 = vsel %vm2364, %v8356, 0.0
        %8399 = vadd.xlane.f32.xlu0 %v8398
        %v8400 = vpop.xlane.xlu0 %8399
        %v8401 = vsel %vm2364, %v8357, 0.0
        %8402 = vadd.xlane.f32.xlu0 %v8401
        %v8403 = vpop.xlane.xlu0 %8402
        %v8404 = vsel %vm2364, %v8358, 0.0
        %8405 = vadd.xlane.f32.xlu0 %v8404
        %v8406 = vpop.xlane.xlu0 %8405
        %v8407 = vsel %vm2364, %v8359, 0.0
        %8408 = vadd.xlane.f32.xlu0 %v8407
        %v8409 = vpop.xlane.xlu0 %8408
        %v8410 = vsel %vm2364, %v8360, 0.0
        %8411 = vadd.xlane.f32.xlu0 %v8410
        %v8412 = vpop.xlane.xlu0 %8411
        %v8413 = vsel %vm2364, %v8361, 0.0
        %8414 = vadd.xlane.f32.xlu0 %v8413
        %v8415 = vpop.xlane.xlu0 %8414
        %v8416 = vsel %vm2364, %v8362, 0.0
        %8417 = vadd.xlane.f32.xlu0 %v8416
        %v8418 = vpop.xlane.xlu0 %8417
        %v8419 = vsel %vm2364, %v8363, 0.0
        %8420 = vadd.xlane.f32.xlu0 %v8419
        %v8421 = vpop.xlane.xlu0 %8420
        %v8422 = vsel %vm2364, %v8364, 0.0
        %8423 = vadd.xlane.f32.xlu0 %v8422
        %v8424 = vpop.xlane.xlu0 %8423
        %v8425 = vsel %vm2364, %v8365, 0.0
        %8426 = vadd.xlane.f32.xlu0 %v8425
        %v8427 = vpop.xlane.xlu0 %8426
        %v8428 = vsel %vm2364, %v8366, 0.0
        %8429 = vadd.xlane.f32.xlu0 %v8428
        %v8430 = vpop.xlane.xlu0 %8429
        %v8431 = vsel %vm2364, %v8367, 0.0
        %8432 = vadd.xlane.f32.xlu0 %v8431
        %v8433 = vpop.xlane.xlu0 %8432
        %v8434 = vsel %vm2364, %v8368, 0.0
        %8435 = vadd.xlane.f32.xlu0 %v8434
        %v8436 = vpop.xlane.xlu0 %8435
        %v8437 = vsel %vm2364, %v8369, 0.0
        %8438 = vadd.xlane.f32.xlu0 %v8437
        %v8439 = vpop.xlane.xlu0 %8438
        %v8440 = vsel %vm2364, %v8370, 0.0
        %8441 = vadd.xlane.f32.xlu0 %v8440
        %v8442 = vpop.xlane.xlu0 %8441
        %v8443 = vsel %vm2364, %v8371, 0.0
        %8444 = vadd.xlane.f32.xlu0 %v8443
        %v8445 = vpop.xlane.xlu0 %8444
        %v8446 = vsel %vm2364, %v8372, 0.0
        %8447 = vadd.xlane.f32.xlu0 %v8446
        %v8448 = vpop.xlane.xlu0 %8447
        %v8449 = vsel %vm2364, %v8373, 0.0
        %8450 = vadd.xlane.f32.xlu0 %v8449
        %v8451 = vpop.xlane.xlu0 %8450
        %v8452 = vsel %vm2364, %v8374, 0.0
        %8453 = vadd.xlane.f32.xlu0 %v8452
        %v8454 = vpop.xlane.xlu0 %8453
        %v8455 = vsel %vm2364, %v8375, 0.0
        %8456 = vadd.xlane.f32.xlu0 %v8455
        %v8457 = vpop.xlane.xlu0 %8456
        %v8458 = vsel %vm2364, %v8376, 0.0
        %8459 = vadd.xlane.f32.xlu0 %v8458
        %v8460 = vpop.xlane.xlu0 %8459
        %v8461 = vsel %vm2364, %v8377, 0.0
        %8462 = vadd.xlane.f32.xlu0 %v8461
        %v8463 = vpop.xlane.xlu0 %8462
        %v8464 = vsel %vm2364, %v8378, 0.0
        %8465 = vadd.xlane.f32.xlu0 %v8464
        %v8466 = vpop.xlane.xlu0 %8465
        %v8467 = vsel %vm2364, %v8379, 0.0
        %8468 = vadd.xlane.f32.xlu0 %v8467
        %v8469 = vpop.xlane.xlu0 %8468
        %v8470 = vsel %vm2364, %v8380, 0.0
        %8471 = vadd.xlane.f32.xlu0 %v8470
        %v8472 = vpop.xlane.xlu0 %8471
        %v8473 = vsel %vm2364, %v8381, 0.0
        %8474 = vadd.xlane.f32.xlu0 %v8473
        %v8475 = vpop.xlane.xlu0 %8474
        %v8476 = vsel %vm2364, %v8382, 0.0
        %8477 = vadd.xlane.f32.xlu0 %v8476
        %v8478 = vpop.xlane.xlu0 %8477
        %v8479 = vadd.f32 %v8281, %v8385
        %v8480 = vadd.f32 %v8282, %v8388
        %v8481 = vadd.f32 %v8283, %v8391
        %v8482 = vadd.f32 %v8284, %v8394
        %v8483 = vadd.f32 %v8285, %v8397
        %v8484 = vadd.f32 %v8286, %v8400
        %v8485 = vadd.f32 %v8287, %v8403
        %v8486 = vadd.f32 %v8288, %v8406
        %v8487 = vadd.f32 %v8289, %v8409
        %v8488 = vadd.f32 %v8290, %v8412
        %v8489 = vadd.f32 %v8291, %v8415
        %v8490 = vadd.f32 %v8292, %v8418
        %v8491 = vadd.f32 %v8293, %v8421
        %v8492 = vadd.f32 %v8294, %v8424
        %v8493 = vadd.f32 %v8295, %v8427
        %v8494 = vadd.f32 %v8296, %v8430
        %v8495 = vadd.f32 %v8297, %v8433
        %v8496 = vadd.f32 %v8298, %v8436
        %v8497 = vadd.f32 %v8299, %v8439
        %v8498 = vadd.f32 %v8300, %v8442
        %v8499 = vadd.f32 %v8301, %v8445
        %v8500 = vadd.f32 %v8302, %v8448
        %v8501 = vadd.f32 %v8303, %v8451
        %v8502 = vadd.f32 %v8304, %v8454
        %v8503 = vadd.f32 %v8305, %v8457
        %v8504 = vadd.f32 %v8306, %v8460
        %v8505 = vadd.f32 %v8307, %v8463
        %v8506 = vadd.f32 %v8308, %v8466
        %v8507 = vadd.f32 %v8309, %v8469
        %v8508 = vadd.f32 %v8310, %v8472
        %v8509 = vadd.f32 %v8311, %v8475
        %v8510 = vadd.f32 %v8312, %v8478
        %v8511 = vld [vmem:[%s7917 + $0x5] sm:$0xff]
        %v8512 = vld [vmem:[%s7917 + $0xd] sm:$0xff]
        %v8513 = vld [vmem:[%s7917 + $0x25] sm:$0xff]
        %v8514 = vld [vmem:[%s7917 + $0x2d] sm:$0xff]
        %v8515 = vld [vmem:[%s7917 + $0x45] sm:$0xff]
        %v8516 = vld [vmem:[%s7917 + $0x4d] sm:$0xff]
        %v8517 = vld [vmem:[%s7917 + $0x65] sm:$0xff]
        %v8518 = vld [vmem:[%s7917 + $0x6d] sm:$0xff]
        %v8519 = vld [vmem:[%s7917 + $0x85] sm:$0xff]
        %v8520 = vld [vmem:[%s7917 + $0x8d] sm:$0xff]
        %v8521 = vld [vmem:[%s7917 + $0xa5] sm:$0xff]
        %v8522 = vld [vmem:[%s7917 + $0xad] sm:$0xff]
        %v8523 = vld [vmem:[%s7917 + $0xc5] sm:$0xff]
        %v8524 = vld [vmem:[%s7917 + $0xcd] sm:$0xff]
        %v8525 = vld [vmem:[%s7917 + $0xe5] sm:$0xff]
        %v8526 = vld [vmem:[%s7917 + $0xed] sm:$0xff]
        %v8527 = vld [vmem:[%s7917 + $0x105] sm:$0xff]
        %v8528 = vld [vmem:[%s7917 + $0x10d] sm:$0xff]
        %v8529 = vld [vmem:[%s7917 + $0x125] sm:$0xff]
        %v8530 = vld [vmem:[%s7917 + $0x12d] sm:$0xff]
        %v8531 = vld [vmem:[%s7917 + $0x145] sm:$0xff]
        %v8532 = vld [vmem:[%s7917 + $0x14d] sm:$0xff]
        %v8533 = vld [vmem:[%s7917 + $0x165] sm:$0xff]
        %v8534 = vld [vmem:[%s7917 + $0x16d] sm:$0xff]
        %v8535 = vld [vmem:[%s7917 + $0x185] sm:$0xff]
        %v8536 = vld [vmem:[%s7917 + $0x18d] sm:$0xff]
        %v8537 = vld [vmem:[%s7917 + $0x1a5] sm:$0xff]
        %v8538 = vld [vmem:[%s7917 + $0x1ad] sm:$0xff]
        %v8539 = vld [vmem:[%s7917 + $0x1c5] sm:$0xff]
        %v8540 = vld [vmem:[%s7917 + $0x1cd] sm:$0xff]
        %v8541 = vld [vmem:[%s7917 + $0x1e5] sm:$0xff]
        %v8542 = vld [vmem:[%s7917 + $0x1ed] sm:$0xff]
        %v8543 = vld [vmem:[%s5 + $0x7] sm:$0x1]
        %v8544 = vlaneseq
        %v8545 = vshrl.u32 %v8544, 7
        %v8546 = vsub.s32 0, %v8545
        %v8547 = vrot.slane %v8543, %v8546
        %v8548 = vmul.f32 %v8511, %v8547
        %v8549 = vmul.f32 %v8512, %v8547
        %v8550 = vmul.f32 %v8513, %v8547
        %v8551 = vmul.f32 %v8514, %v8547
        %v8552 = vmul.f32 %v8515, %v8547
        %v8553 = vmul.f32 %v8516, %v8547
        %v8554 = vmul.f32 %v8517, %v8547
        %v8555 = vmul.f32 %v8518, %v8547
        %v8556 = vmul.f32 %v8519, %v8547
        %v8557 = vmul.f32 %v8520, %v8547
        %v8558 = vmul.f32 %v8521, %v8547
        %v8559 = vmul.f32 %v8522, %v8547
        %v8560 = vmul.f32 %v8523, %v8547
        %v8561 = vmul.f32 %v8524, %v8547
        %v8562 = vmul.f32 %v8525, %v8547
        %v8563 = vmul.f32 %v8526, %v8547
        %v8564 = vmul.f32 %v8527, %v8547
        %v8565 = vmul.f32 %v8528, %v8547
        %v8566 = vmul.f32 %v8529, %v8547
        %v8567 = vmul.f32 %v8530, %v8547
        %v8568 = vmul.f32 %v8531, %v8547
        %v8569 = vmul.f32 %v8532, %v8547
        %v8570 = vmul.f32 %v8533, %v8547
        %v8571 = vmul.f32 %v8534, %v8547
        %v8572 = vmul.f32 %v8535, %v8547
        %v8573 = vmul.f32 %v8536, %v8547
        %v8574 = vmul.f32 %v8537, %v8547
        %v8575 = vmul.f32 %v8538, %v8547
        %v8576 = vmul.f32 %v8539, %v8547
        %v8577 = vmul.f32 %v8540, %v8547
        %v8578 = vmul.f32 %v8541, %v8547
        %v8579 = vmul.f32 %v8542, %v8547
        %v8580 = vsel %vm4272, %v8548, 0.0
        %8581 = vadd.xlane.f32.xlu0 %v8580
        %v8582 = vpop.xlane.xlu0 %8581
        %v8583 = vsel %vm4272, %v8549, 0.0
        %8584 = vadd.xlane.f32.xlu0 %v8583
        %v8585 = vpop.xlane.xlu0 %8584
        %v8586 = vsel %vm4272, %v8550, 0.0
        %8587 = vadd.xlane.f32.xlu0 %v8586
        %v8588 = vpop.xlane.xlu0 %8587
        %v8589 = vsel %vm4272, %v8551, 0.0
        %8590 = vadd.xlane.f32.xlu0 %v8589
        %v8591 = vpop.xlane.xlu0 %8590
        %v8592 = vsel %vm4272, %v8552, 0.0
        %8593 = vadd.xlane.f32.xlu0 %v8592
        %v8594 = vpop.xlane.xlu0 %8593
        %v8595 = vsel %vm4272, %v8553, 0.0
        %8596 = vadd.xlane.f32.xlu0 %v8595
        %v8597 = vpop.xlane.xlu0 %8596
        %v8598 = vsel %vm4272, %v8554, 0.0
        %8599 = vadd.xlane.f32.xlu0 %v8598
        %v8600 = vpop.xlane.xlu0 %8599
        %v8601 = vsel %vm4272, %v8555, 0.0
        %8602 = vadd.xlane.f32.xlu0 %v8601
        %v8603 = vpop.xlane.xlu0 %8602
        %v8604 = vsel %vm4272, %v8556, 0.0
        %8605 = vadd.xlane.f32.xlu0 %v8604
        %v8606 = vpop.xlane.xlu0 %8605
        %v8607 = vsel %vm4272, %v8557, 0.0
        %8608 = vadd.xlane.f32.xlu0 %v8607
        %v8609 = vpop.xlane.xlu0 %8608
        %v8610 = vsel %vm4272, %v8558, 0.0
        %8611 = vadd.xlane.f32.xlu0 %v8610
        %v8612 = vpop.xlane.xlu0 %8611
        %v8613 = vsel %vm4272, %v8559, 0.0
        %8614 = vadd.xlane.f32.xlu0 %v8613
        %v8615 = vpop.xlane.xlu0 %8614
        %v8616 = vsel %vm4272, %v8560, 0.0
        %8617 = vadd.xlane.f32.xlu0 %v8616
        %v8618 = vpop.xlane.xlu0 %8617
        %v8619 = vsel %vm4272, %v8561, 0.0
        %8620 = vadd.xlane.f32.xlu0 %v8619
        %v8621 = vpop.xlane.xlu0 %8620
        %v8622 = vsel %vm4272, %v8562, 0.0
        %8623 = vadd.xlane.f32.xlu0 %v8622
        %v8624 = vpop.xlane.xlu0 %8623
        %v8625 = vsel %vm4272, %v8563, 0.0
        %8626 = vadd.xlane.f32.xlu0 %v8625
        %v8627 = vpop.xlane.xlu0 %8626
        %v8628 = vsel %vm4272, %v8564, 0.0
        %8629 = vadd.xlane.f32.xlu0 %v8628
        %v8630 = vpop.xlane.xlu0 %8629
        %v8631 = vsel %vm4272, %v8565, 0.0
        %8632 = vadd.xlane.f32.xlu0 %v8631
        %v8633 = vpop.xlane.xlu0 %8632
        %v8634 = vsel %vm4272, %v8566, 0.0
        %8635 = vadd.xlane.f32.xlu0 %v8634
        %v8636 = vpop.xlane.xlu0 %8635
        %v8637 = vsel %vm4272, %v8567, 0.0
        %8638 = vadd.xlane.f32.xlu0 %v8637
        %v8639 = vpop.xlane.xlu0 %8638
        %v8640 = vsel %vm4272, %v8568, 0.0
        %8641 = vadd.xlane.f32.xlu0 %v8640
        %v8642 = vpop.xlane.xlu0 %8641
        %v8643 = vsel %vm4272, %v8569, 0.0
        %8644 = vadd.xlane.f32.xlu0 %v8643
        %v8645 = vpop.xlane.xlu0 %8644
        %v8646 = vsel %vm4272, %v8570, 0.0
        %8647 = vadd.xlane.f32.xlu0 %v8646
        %v8648 = vpop.xlane.xlu0 %8647
        %v8649 = vsel %vm4272, %v8571, 0.0
        %8650 = vadd.xlane.f32.xlu0 %v8649
        %v8651 = vpop.xlane.xlu0 %8650
        %v8652 = vsel %vm4272, %v8572, 0.0
        %8653 = vadd.xlane.f32.xlu0 %v8652
        %v8654 = vpop.xlane.xlu0 %8653
        %v8655 = vsel %vm4272, %v8573, 0.0
        %8656 = vadd.xlane.f32.xlu0 %v8655
        %v8657 = vpop.xlane.xlu0 %8656
        %v8658 = vsel %vm4272, %v8574, 0.0
        %8659 = vadd.xlane.f32.xlu0 %v8658
        %v8660 = vpop.xlane.xlu0 %8659
        %v8661 = vsel %vm4272, %v8575, 0.0
        %8662 = vadd.xlane.f32.xlu0 %v8661
        %v8663 = vpop.xlane.xlu0 %8662
        %v8664 = vsel %vm4272, %v8576, 0.0
        %8665 = vadd.xlane.f32.xlu0 %v8664
        %v8666 = vpop.xlane.xlu0 %8665
        %v8667 = vsel %vm4272, %v8577, 0.0
        %8668 = vadd.xlane.f32.xlu0 %v8667
        %v8669 = vpop.xlane.xlu0 %8668
        %v8670 = vsel %vm4272, %v8578, 0.0
        %8671 = vadd.xlane.f32.xlu0 %v8670
        %v8672 = vpop.xlane.xlu0 %8671
        %v8673 = vsel %vm4272, %v8579, 0.0
        %8674 = vadd.xlane.f32.xlu0 %v8673
        %v8675 = vpop.xlane.xlu0 %8674
        %v8676 = vadd.f32 %v8479, %v8582
        %v8677 = vadd.f32 %v8480, %v8585
        %v8678 = vadd.f32 %v8481, %v8588
        %v8679 = vadd.f32 %v8482, %v8591
        %v8680 = vadd.f32 %v8483, %v8594
        %v8681 = vadd.f32 %v8484, %v8597
        %v8682 = vadd.f32 %v8485, %v8600
        %v8683 = vadd.f32 %v8486, %v8603
        %v8684 = vadd.f32 %v8487, %v8606
        %v8685 = vadd.f32 %v8488, %v8609
        %v8686 = vadd.f32 %v8489, %v8612
        %v8687 = vadd.f32 %v8490, %v8615
        %v8688 = vadd.f32 %v8491, %v8618
        %v8689 = vadd.f32 %v8492, %v8621
        %v8690 = vadd.f32 %v8493, %v8624
        %v8691 = vadd.f32 %v8494, %v8627
        %v8692 = vadd.f32 %v8495, %v8630
        %v8693 = vadd.f32 %v8496, %v8633
        %v8694 = vadd.f32 %v8497, %v8636
        %v8695 = vadd.f32 %v8498, %v8639
        %v8696 = vadd.f32 %v8499, %v8642
        %v8697 = vadd.f32 %v8500, %v8645
        %v8698 = vadd.f32 %v8501, %v8648
        %v8699 = vadd.f32 %v8502, %v8651
        %v8700 = vadd.f32 %v8503, %v8654
        %v8701 = vadd.f32 %v8504, %v8657
        %v8702 = vadd.f32 %v8505, %v8660
        %v8703 = vadd.f32 %v8506, %v8663
        %v8704 = vadd.f32 %v8507, %v8666
        %v8705 = vadd.f32 %v8508, %v8669
        %v8706 = vadd.f32 %v8509, %v8672
        %v8707 = vadd.f32 %v8510, %v8675
        %v8708 = vld [vmem:[%s8115 + $0x5] sm:$0xff]
        %v8709 = vld [vmem:[%s8115 + $0xd] sm:$0xff]
        %v8710 = vld [vmem:[%s8115 + $0x25] sm:$0xff]
        %v8711 = vld [vmem:[%s8115 + $0x2d] sm:$0xff]
        %v8712 = vld [vmem:[%s8115 + $0x45] sm:$0xff]
        %v8713 = vld [vmem:[%s8115 + $0x4d] sm:$0xff]
        %v8714 = vld [vmem:[%s8115 + $0x65] sm:$0xff]
        %v8715 = vld [vmem:[%s8115 + $0x6d] sm:$0xff]
        %v8716 = vld [vmem:[%s8115 + $0x85] sm:$0xff]
        %v8717 = vld [vmem:[%s8115 + $0x8d] sm:$0xff]
        %v8718 = vld [vmem:[%s8115 + $0xa5] sm:$0xff]
        %v8719 = vld [vmem:[%s8115 + $0xad] sm:$0xff]
        %v8720 = vld [vmem:[%s8115 + $0xc5] sm:$0xff]
        %v8721 = vld [vmem:[%s8115 + $0xcd] sm:$0xff]
        %v8722 = vld [vmem:[%s8115 + $0xe5] sm:$0xff]
        %v8723 = vld [vmem:[%s8115 + $0xed] sm:$0xff]
        %v8724 = vld [vmem:[%s8115 + $0x105] sm:$0xff]
        %v8725 = vld [vmem:[%s8115 + $0x10d] sm:$0xff]
        %v8726 = vld [vmem:[%s8115 + $0x125] sm:$0xff]
        %v8727 = vld [vmem:[%s8115 + $0x12d] sm:$0xff]
        %v8728 = vld [vmem:[%s8115 + $0x145] sm:$0xff]
        %v8729 = vld [vmem:[%s8115 + $0x14d] sm:$0xff]
        %v8730 = vld [vmem:[%s8115 + $0x165] sm:$0xff]
        %v8731 = vld [vmem:[%s8115 + $0x16d] sm:$0xff]
        %v8732 = vld [vmem:[%s8115 + $0x185] sm:$0xff]
        %v8733 = vld [vmem:[%s8115 + $0x18d] sm:$0xff]
        %v8734 = vld [vmem:[%s8115 + $0x1a5] sm:$0xff]
        %v8735 = vld [vmem:[%s8115 + $0x1ad] sm:$0xff]
        %v8736 = vld [vmem:[%s8115 + $0x1c5] sm:$0xff]
        %v8737 = vld [vmem:[%s8115 + $0x1cd] sm:$0xff]
        %v8738 = vld [vmem:[%s8115 + $0x1e5] sm:$0xff]
        %v8739 = vld [vmem:[%s8115 + $0x1ed] sm:$0xff]
        %v8740 = vld [vmem:[%s7 + $0x7] sm:$0x1]
        %v8741 = vlaneseq
        %v8742 = vshrl.u32 %v8741, 7
        %v8743 = vsub.s32 0, %v8742
        %v8744 = vrot.slane %v8740, %v8743
        %v8745 = vmul.f32 %v8708, %v8744
        %v8746 = vmul.f32 %v8709, %v8744
        %v8747 = vmul.f32 %v8710, %v8744
        %v8748 = vmul.f32 %v8711, %v8744
        %v8749 = vmul.f32 %v8712, %v8744
        %v8750 = vmul.f32 %v8713, %v8744
        %v8751 = vmul.f32 %v8714, %v8744
        %v8752 = vmul.f32 %v8715, %v8744
        %v8753 = vmul.f32 %v8716, %v8744
        %v8754 = vmul.f32 %v8717, %v8744
        %v8755 = vmul.f32 %v8718, %v8744
        %v8756 = vmul.f32 %v8719, %v8744
        %v8757 = vmul.f32 %v8720, %v8744
        %v8758 = vmul.f32 %v8721, %v8744
        %v8759 = vmul.f32 %v8722, %v8744
        %v8760 = vmul.f32 %v8723, %v8744
        %v8761 = vmul.f32 %v8724, %v8744
        %v8762 = vmul.f32 %v8725, %v8744
        %v8763 = vmul.f32 %v8726, %v8744
        %v8764 = vmul.f32 %v8727, %v8744
        %v8765 = vmul.f32 %v8728, %v8744
        %v8766 = vmul.f32 %v8729, %v8744
        %v8767 = vmul.f32 %v8730, %v8744
        %v8768 = vmul.f32 %v8731, %v8744
        %v8769 = vmul.f32 %v8732, %v8744
        %v8770 = vmul.f32 %v8733, %v8744
        %v8771 = vmul.f32 %v8734, %v8744
        %v8772 = vmul.f32 %v8735, %v8744
        %v8773 = vmul.f32 %v8736, %v8744
        %v8774 = vmul.f32 %v8737, %v8744
        %v8775 = vmul.f32 %v8738, %v8744
        %v8776 = vmul.f32 %v8739, %v8744
        %v8777 = vsel %vm4272, %v8745, 0.0
        %8778 = vadd.xlane.f32.xlu0 %v8777
        %v8779 = vpop.xlane.xlu0 %8778
        %v8780 = vsel %vm4272, %v8746, 0.0
        %8781 = vadd.xlane.f32.xlu0 %v8780
        %v8782 = vpop.xlane.xlu0 %8781
        %v8783 = vsel %vm4272, %v8747, 0.0
        %8784 = vadd.xlane.f32.xlu0 %v8783
        %v8785 = vpop.xlane.xlu0 %8784
        %v8786 = vsel %vm4272, %v8748, 0.0
        %8787 = vadd.xlane.f32.xlu0 %v8786
        %v8788 = vpop.xlane.xlu0 %8787
        %v8789 = vsel %vm4272, %v8749, 0.0
        %8790 = vadd.xlane.f32.xlu0 %v8789
        %v8791 = vpop.xlane.xlu0 %8790
        %v8792 = vsel %vm4272, %v8750, 0.0
        %8793 = vadd.xlane.f32.xlu0 %v8792
        %v8794 = vpop.xlane.xlu0 %8793
        %v8795 = vsel %vm4272, %v8751, 0.0
        %8796 = vadd.xlane.f32.xlu0 %v8795
        %v8797 = vpop.xlane.xlu0 %8796
        %v8798 = vsel %vm4272, %v8752, 0.0
        %8799 = vadd.xlane.f32.xlu0 %v8798
        %v8800 = vpop.xlane.xlu0 %8799
        %v8801 = vsel %vm4272, %v8753, 0.0
        %8802 = vadd.xlane.f32.xlu0 %v8801
        %v8803 = vpop.xlane.xlu0 %8802
        %v8804 = vsel %vm4272, %v8754, 0.0
        %8805 = vadd.xlane.f32.xlu0 %v8804
        %v8806 = vpop.xlane.xlu0 %8805
        %v8807 = vsel %vm4272, %v8755, 0.0
        %8808 = vadd.xlane.f32.xlu0 %v8807
        %v8809 = vpop.xlane.xlu0 %8808
        %v8810 = vsel %vm4272, %v8756, 0.0
        %8811 = vadd.xlane.f32.xlu0 %v8810
        %v8812 = vpop.xlane.xlu0 %8811
        %v8813 = vsel %vm4272, %v8757, 0.0
        %8814 = vadd.xlane.f32.xlu0 %v8813
        %v8815 = vpop.xlane.xlu0 %8814
        %v8816 = vsel %vm4272, %v8758, 0.0
        %8817 = vadd.xlane.f32.xlu0 %v8816
        %v8818 = vpop.xlane.xlu0 %8817
        %v8819 = vsel %vm4272, %v8759, 0.0
        %8820 = vadd.xlane.f32.xlu0 %v8819
        %v8821 = vpop.xlane.xlu0 %8820
        %v8822 = vsel %vm4272, %v8760, 0.0
        %8823 = vadd.xlane.f32.xlu0 %v8822
        %v8824 = vpop.xlane.xlu0 %8823
        %v8825 = vsel %vm4272, %v8761, 0.0
        %8826 = vadd.xlane.f32.xlu0 %v8825
        %v8827 = vpop.xlane.xlu0 %8826
        %v8828 = vsel %vm4272, %v8762, 0.0
        %8829 = vadd.xlane.f32.xlu0 %v8828
        %v8830 = vpop.xlane.xlu0 %8829
        %v8831 = vsel %vm4272, %v8763, 0.0
        %8832 = vadd.xlane.f32.xlu0 %v8831
        %v8833 = vpop.xlane.xlu0 %8832
        %v8834 = vsel %vm4272, %v8764, 0.0
        %8835 = vadd.xlane.f32.xlu0 %v8834
        %v8836 = vpop.xlane.xlu0 %8835
        %v8837 = vsel %vm4272, %v8765, 0.0
        %8838 = vadd.xlane.f32.xlu0 %v8837
        %v8839 = vpop.xlane.xlu0 %8838
        %v8840 = vsel %vm4272, %v8766, 0.0
        %8841 = vadd.xlane.f32.xlu0 %v8840
        %v8842 = vpop.xlane.xlu0 %8841
        %v8843 = vsel %vm4272, %v8767, 0.0
        %8844 = vadd.xlane.f32.xlu0 %v8843
        %v8845 = vpop.xlane.xlu0 %8844
        %v8846 = vsel %vm4272, %v8768, 0.0
        %8847 = vadd.xlane.f32.xlu0 %v8846
        %v8848 = vpop.xlane.xlu0 %8847
        %v8849 = vsel %vm4272, %v8769, 0.0
        %8850 = vadd.xlane.f32.xlu0 %v8849
        %v8851 = vpop.xlane.xlu0 %8850
        %v8852 = vsel %vm4272, %v8770, 0.0
        %8853 = vadd.xlane.f32.xlu0 %v8852
        %v8854 = vpop.xlane.xlu0 %8853
        %v8855 = vsel %vm4272, %v8771, 0.0
        %8856 = vadd.xlane.f32.xlu0 %v8855
        %v8857 = vpop.xlane.xlu0 %8856
        %v8858 = vsel %vm4272, %v8772, 0.0
        %8859 = vadd.xlane.f32.xlu0 %v8858
        %v8860 = vpop.xlane.xlu0 %8859
        %v8861 = vsel %vm4272, %v8773, 0.0
        %8862 = vadd.xlane.f32.xlu0 %v8861
        %v8863 = vpop.xlane.xlu0 %8862
        %v8864 = vsel %vm4272, %v8774, 0.0
        %8865 = vadd.xlane.f32.xlu0 %v8864
        %v8866 = vpop.xlane.xlu0 %8865
        %v8867 = vsel %vm4272, %v8775, 0.0
        %8868 = vadd.xlane.f32.xlu0 %v8867
        %v8869 = vpop.xlane.xlu0 %8868
        %v8870 = vsel %vm4272, %v8776, 0.0
        %8871 = vadd.xlane.f32.xlu0 %v8870
        %v8872 = vpop.xlane.xlu0 %8871
        %v8873 = vadd.f32 %v8676, %v8779
        %v8874 = vadd.f32 %v8677, %v8782
        %v8875 = vadd.f32 %v8678, %v8785
        %v8876 = vadd.f32 %v8679, %v8788
        %v8877 = vadd.f32 %v8680, %v8791
        %v8878 = vadd.f32 %v8681, %v8794
        %v8879 = vadd.f32 %v8682, %v8797
        %v8880 = vadd.f32 %v8683, %v8800
        %v8881 = vadd.f32 %v8684, %v8803
        %v8882 = vadd.f32 %v8685, %v8806
        %v8883 = vadd.f32 %v8686, %v8809
        %v8884 = vadd.f32 %v8687, %v8812
        %v8885 = vadd.f32 %v8688, %v8815
        %v8886 = vadd.f32 %v8689, %v8818
        %v8887 = vadd.f32 %v8690, %v8821
        %v8888 = vadd.f32 %v8691, %v8824
        %v8889 = vadd.f32 %v8692, %v8827
        %v8890 = vadd.f32 %v8693, %v8830
        %v8891 = vadd.f32 %v8694, %v8833
        %v8892 = vadd.f32 %v8695, %v8836
        %v8893 = vadd.f32 %v8696, %v8839
        %v8894 = vadd.f32 %v8697, %v8842
        %v8895 = vadd.f32 %v8698, %v8845
        %v8896 = vadd.f32 %v8699, %v8848
        %v8897 = vadd.f32 %v8700, %v8851
        %v8898 = vadd.f32 %v8701, %v8854
        %v8899 = vadd.f32 %v8702, %v8857
        %v8900 = vadd.f32 %v8703, %v8860
        %v8901 = vadd.f32 %v8704, %v8863
        %v8902 = vadd.f32 %v8705, %v8866
        %v8903 = vadd.f32 %v8706, %v8869
        %v8904 = vadd.f32 %v8707, %v8872
        %v8905 = vld [vmem:[%s8313 + $0x2] sm:$0xff]
        %v8906 = vld [vmem:[%s8313 + $0xa] sm:$0xff]
        %v8907 = vld [vmem:[%s8313 + $0x1a] sm:$0xff]
        %v8908 = vld [vmem:[%s8313 + $0x22] sm:$0xff]
        %v8909 = vld [vmem:[%s8313 + $0x32] sm:$0xff]
        %v8910 = vld [vmem:[%s8313 + $0x3a] sm:$0xff]
        %v8911 = vld [vmem:[%s8313 + $0x4a] sm:$0xff]
        %v8912 = vld [vmem:[%s8313 + $0x52] sm:$0xff]
        %v8913 = vld [vmem:[%s8313 + $0x62] sm:$0xff]
        %v8914 = vld [vmem:[%s8313 + $0x6a] sm:$0xff]
        %v8915 = vld [vmem:[%s8313 + $0x7a] sm:$0xff]
        %v8916 = vld [vmem:[%s8313 + $0x82] sm:$0xff]
        %v8917 = vld [vmem:[%s8313 + $0x92] sm:$0xff]
        %v8918 = vld [vmem:[%s8313 + $0x9a] sm:$0xff]
        %v8919 = vld [vmem:[%s8313 + $0xaa] sm:$0xff]
        %v8920 = vld [vmem:[%s8313 + $0xb2] sm:$0xff]
        %v8921 = vld [vmem:[%s8313 + $0xc2] sm:$0xff]
        %v8922 = vld [vmem:[%s8313 + $0xca] sm:$0xff]
        %v8923 = vld [vmem:[%s8313 + $0xda] sm:$0xff]
        %v8924 = vld [vmem:[%s8313 + $0xe2] sm:$0xff]
        %v8925 = vld [vmem:[%s8313 + $0xf2] sm:$0xff]
        %v8926 = vld [vmem:[%s8313 + $0xfa] sm:$0xff]
        %v8927 = vld [vmem:[%s8313 + $0x10a] sm:$0xff]
        %v8928 = vld [vmem:[%s8313 + $0x112] sm:$0xff]
        %v8929 = vld [vmem:[%s8313 + $0x122] sm:$0xff]
        %v8930 = vld [vmem:[%s8313 + $0x12a] sm:$0xff]
        %v8931 = vld [vmem:[%s8313 + $0x13a] sm:$0xff]
        %v8932 = vld [vmem:[%s8313 + $0x142] sm:$0xff]
        %v8933 = vld [vmem:[%s8313 + $0x152] sm:$0xff]
        %v8934 = vld [vmem:[%s8313 + $0x15a] sm:$0xff]
        %v8935 = vld [vmem:[%s8313 + $0x16a] sm:$0xff]
        %v8936 = vld [vmem:[%s8313 + $0x172] sm:$0xff]
        %v8937 = vld [vmem:[%s6 + $0x7] sm:$0x1]
        %v8938 = vlaneseq
        %v8939 = vshrl.u32 %v8938, 7
        %v8940 = vsub.s32 0, %v8939
        %v8941 = vrot.slane %v8937, %v8940
        %v8942 = vmul.f32 %v8905, %v8941
        %v8943 = vmul.f32 %v8906, %v8941
        %v8944 = vmul.f32 %v8907, %v8941
        %v8945 = vmul.f32 %v8908, %v8941
        %v8946 = vmul.f32 %v8909, %v8941
        %v8947 = vmul.f32 %v8910, %v8941
        %v8948 = vmul.f32 %v8911, %v8941
        %v8949 = vmul.f32 %v8912, %v8941
        %v8950 = vmul.f32 %v8913, %v8941
        %v8951 = vmul.f32 %v8914, %v8941
        %v8952 = vmul.f32 %v8915, %v8941
        %v8953 = vmul.f32 %v8916, %v8941
        %v8954 = vmul.f32 %v8917, %v8941
        %v8955 = vmul.f32 %v8918, %v8941
        %v8956 = vmul.f32 %v8919, %v8941
        %v8957 = vmul.f32 %v8920, %v8941
        %v8958 = vmul.f32 %v8921, %v8941
        %v8959 = vmul.f32 %v8922, %v8941
        %v8960 = vmul.f32 %v8923, %v8941
        %v8961 = vmul.f32 %v8924, %v8941
        %v8962 = vmul.f32 %v8925, %v8941
        %v8963 = vmul.f32 %v8926, %v8941
        %v8964 = vmul.f32 %v8927, %v8941
        %v8965 = vmul.f32 %v8928, %v8941
        %v8966 = vmul.f32 %v8929, %v8941
        %v8967 = vmul.f32 %v8930, %v8941
        %v8968 = vmul.f32 %v8931, %v8941
        %v8969 = vmul.f32 %v8932, %v8941
        %v8970 = vmul.f32 %v8933, %v8941
        %v8971 = vmul.f32 %v8934, %v8941
        %v8972 = vmul.f32 %v8935, %v8941
        %v8973 = vmul.f32 %v8936, %v8941
        %v8974 = vsel %vm2364, %v8942, 0.0
        %8975 = vadd.xlane.f32.xlu0 %v8974
        %v8976 = vpop.xlane.xlu0 %8975
        %v8977 = vsel %vm2364, %v8943, 0.0
        %8978 = vadd.xlane.f32.xlu0 %v8977
        %v8979 = vpop.xlane.xlu0 %8978
        %v8980 = vsel %vm2364, %v8944, 0.0
        %8981 = vadd.xlane.f32.xlu0 %v8980
        %v8982 = vpop.xlane.xlu0 %8981
        %v8983 = vsel %vm2364, %v8945, 0.0
        %8984 = vadd.xlane.f32.xlu0 %v8983
        %v8985 = vpop.xlane.xlu0 %8984
        %v8986 = vsel %vm2364, %v8946, 0.0
        %8987 = vadd.xlane.f32.xlu0 %v8986
        %v8988 = vpop.xlane.xlu0 %8987
        %v8989 = vsel %vm2364, %v8947, 0.0
        %8990 = vadd.xlane.f32.xlu0 %v8989
        %v8991 = vpop.xlane.xlu0 %8990
        %v8992 = vsel %vm2364, %v8948, 0.0
        %8993 = vadd.xlane.f32.xlu0 %v8992
        %v8994 = vpop.xlane.xlu0 %8993
        %v8995 = vsel %vm2364, %v8949, 0.0
        %8996 = vadd.xlane.f32.xlu0 %v8995
        %v8997 = vpop.xlane.xlu0 %8996
        %v8998 = vsel %vm2364, %v8950, 0.0
        %8999 = vadd.xlane.f32.xlu0 %v8998
        %v9000 = vpop.xlane.xlu0 %8999
        %v9001 = vsel %vm2364, %v8951, 0.0
        %9002 = vadd.xlane.f32.xlu0 %v9001
        %v9003 = vpop.xlane.xlu0 %9002
        %v9004 = vsel %vm2364, %v8952, 0.0
        %9005 = vadd.xlane.f32.xlu0 %v9004
        %v9006 = vpop.xlane.xlu0 %9005
        %v9007 = vsel %vm2364, %v8953, 0.0
        %9008 = vadd.xlane.f32.xlu0 %v9007
        %v9009 = vpop.xlane.xlu0 %9008
        %v9010 = vsel %vm2364, %v8954, 0.0
        %9011 = vadd.xlane.f32.xlu0 %v9010
        %v9012 = vpop.xlane.xlu0 %9011
        %v9013 = vsel %vm2364, %v8955, 0.0
        %9014 = vadd.xlane.f32.xlu0 %v9013
        %v9015 = vpop.xlane.xlu0 %9014
        %v9016 = vsel %vm2364, %v8956, 0.0
        %9017 = vadd.xlane.f32.xlu0 %v9016
        %v9018 = vpop.xlane.xlu0 %9017
        %v9019 = vsel %vm2364, %v8957, 0.0
        %9020 = vadd.xlane.f32.xlu0 %v9019
        %v9021 = vpop.xlane.xlu0 %9020
        %v9022 = vsel %vm2364, %v8958, 0.0
        %9023 = vadd.xlane.f32.xlu0 %v9022
        %v9024 = vpop.xlane.xlu0 %9023
        %v9025 = vsel %vm2364, %v8959, 0.0
        %9026 = vadd.xlane.f32.xlu0 %v9025
        %v9027 = vpop.xlane.xlu0 %9026
        %v9028 = vsel %vm2364, %v8960, 0.0
        %9029 = vadd.xlane.f32.xlu0 %v9028
        %v9030 = vpop.xlane.xlu0 %9029
        %v9031 = vsel %vm2364, %v8961, 0.0
        %9032 = vadd.xlane.f32.xlu0 %v9031
        %v9033 = vpop.xlane.xlu0 %9032
        %v9034 = vsel %vm2364, %v8962, 0.0
        %9035 = vadd.xlane.f32.xlu0 %v9034
        %v9036 = vpop.xlane.xlu0 %9035
        %v9037 = vsel %vm2364, %v8963, 0.0
        %9038 = vadd.xlane.f32.xlu0 %v9037
        %v9039 = vpop.xlane.xlu0 %9038
        %v9040 = vsel %vm2364, %v8964, 0.0
        %9041 = vadd.xlane.f32.xlu0 %v9040
        %v9042 = vpop.xlane.xlu0 %9041
        %v9043 = vsel %vm2364, %v8965, 0.0
        %9044 = vadd.xlane.f32.xlu0 %v9043
        %v9045 = vpop.xlane.xlu0 %9044
        %v9046 = vsel %vm2364, %v8966, 0.0
        %9047 = vadd.xlane.f32.xlu0 %v9046
        %v9048 = vpop.xlane.xlu0 %9047
        %v9049 = vsel %vm2364, %v8967, 0.0
        %9050 = vadd.xlane.f32.xlu0 %v9049
        %v9051 = vpop.xlane.xlu0 %9050
        %v9052 = vsel %vm2364, %v8968, 0.0
        %9053 = vadd.xlane.f32.xlu0 %v9052
        %v9054 = vpop.xlane.xlu0 %9053
        %v9055 = vsel %vm2364, %v8969, 0.0
        %9056 = vadd.xlane.f32.xlu0 %v9055
        %v9057 = vpop.xlane.xlu0 %9056
        %v9058 = vsel %vm2364, %v8970, 0.0
        %9059 = vadd.xlane.f32.xlu0 %v9058
        %v9060 = vpop.xlane.xlu0 %9059
        %v9061 = vsel %vm2364, %v8971, 0.0
        %9062 = vadd.xlane.f32.xlu0 %v9061
        %v9063 = vpop.xlane.xlu0 %9062
        %v9064 = vsel %vm2364, %v8972, 0.0
        %9065 = vadd.xlane.f32.xlu0 %v9064
        %v9066 = vpop.xlane.xlu0 %9065
        %v9067 = vsel %vm2364, %v8973, 0.0
        %9068 = vadd.xlane.f32.xlu0 %v9067
        %v9069 = vpop.xlane.xlu0 %9068
        %v9070 = vadd.f32 %v8873, %v8976
        %v9071 = vadd.f32 %v8874, %v8979
        %v9072 = vadd.f32 %v8875, %v8982
        %v9073 = vadd.f32 %v8876, %v8985
        %v9074 = vadd.f32 %v8877, %v8988
        %v9075 = vadd.f32 %v8878, %v8991
        %v9076 = vadd.f32 %v8879, %v8994
        %v9077 = vadd.f32 %v8880, %v8997
        %v9078 = vadd.f32 %v8881, %v9000
        %v9079 = vadd.f32 %v8882, %v9003
        %v9080 = vadd.f32 %v8883, %v9006
        %v9081 = vadd.f32 %v8884, %v9009
        %v9082 = vadd.f32 %v8885, %v9012
        %v9083 = vadd.f32 %v8886, %v9015
        %v9084 = vadd.f32 %v8887, %v9018
        %v9085 = vadd.f32 %v8888, %v9021
        %v9086 = vadd.f32 %v8889, %v9024
        %v9087 = vadd.f32 %v8890, %v9027
        %v9088 = vadd.f32 %v8891, %v9030
        %v9089 = vadd.f32 %v8892, %v9033
        %v9090 = vadd.f32 %v8893, %v9036
        %v9091 = vadd.f32 %v8894, %v9039
        %v9092 = vadd.f32 %v8895, %v9042
        %v9093 = vadd.f32 %v8896, %v9045
        %v9094 = vadd.f32 %v8897, %v9048
        %v9095 = vadd.f32 %v8898, %v9051
        %v9096 = vadd.f32 %v8899, %v9054
        %v9097 = vadd.f32 %v8900, %v9057
        %v9098 = vadd.f32 %v8901, %v9060
        %v9099 = vadd.f32 %v8902, %v9063
        %v9100 = vadd.f32 %v8903, %v9066
        %v9101 = vadd.f32 %v8904, %v9069
        %v9102 = vld [vmem:[%s7917 + $0xa] sm:$0xff]
        %v9103 = vld [vmem:[%s7917 + $0x12] sm:$0xff]
        %v9104 = vld [vmem:[%s7917 + $0x2a] sm:$0xff]
        %v9105 = vld [vmem:[%s7917 + $0x32] sm:$0xff]
        %v9106 = vld [vmem:[%s7917 + $0x4a] sm:$0xff]
        %v9107 = vld [vmem:[%s7917 + $0x52] sm:$0xff]
        %v9108 = vld [vmem:[%s7917 + $0x6a] sm:$0xff]
        %v9109 = vld [vmem:[%s7917 + $0x72] sm:$0xff]
        %v9110 = vld [vmem:[%s7917 + $0x8a] sm:$0xff]
        %v9111 = vld [vmem:[%s7917 + $0x92] sm:$0xff]
        %v9112 = vld [vmem:[%s7917 + $0xaa] sm:$0xff]
        %v9113 = vld [vmem:[%s7917 + $0xb2] sm:$0xff]
        %v9114 = vld [vmem:[%s7917 + $0xca] sm:$0xff]
        %v9115 = vld [vmem:[%s7917 + $0xd2] sm:$0xff]
        %v9116 = vld [vmem:[%s7917 + $0xea] sm:$0xff]
        %v9117 = vld [vmem:[%s7917 + $0xf2] sm:$0xff]
        %v9118 = vld [vmem:[%s7917 + $0x10a] sm:$0xff]
        %v9119 = vld [vmem:[%s7917 + $0x112] sm:$0xff]
        %v9120 = vld [vmem:[%s7917 + $0x12a] sm:$0xff]
        %v9121 = vld [vmem:[%s7917 + $0x132] sm:$0xff]
        %v9122 = vld [vmem:[%s7917 + $0x14a] sm:$0xff]
        %v9123 = vld [vmem:[%s7917 + $0x152] sm:$0xff]
        %v9124 = vld [vmem:[%s7917 + $0x16a] sm:$0xff]
        %v9125 = vld [vmem:[%s7917 + $0x172] sm:$0xff]
        %v9126 = vld [vmem:[%s7917 + $0x18a] sm:$0xff]
        %v9127 = vld [vmem:[%s7917 + $0x192] sm:$0xff]
        %v9128 = vld [vmem:[%s7917 + $0x1aa] sm:$0xff]
        %v9129 = vld [vmem:[%s7917 + $0x1b2] sm:$0xff]
        %v9130 = vld [vmem:[%s7917 + $0x1ca] sm:$0xff]
        %v9131 = vld [vmem:[%s7917 + $0x1d2] sm:$0xff]
        %v9132 = vld [vmem:[%s7917 + $0x1ea] sm:$0xff]
        %v9133 = vld [vmem:[%s7917 + $0x1f2] sm:$0xff]
        %v9134 = vld [vmem:[%s5 + $0x8] sm:$0x1]
        %v9135 = vlaneseq
        %v9136 = vshrl.u32 %v9135, 7
        %v9137 = vsub.s32 0, %v9136
        %v9138 = vrot.slane %v9134, %v9137
        %v9139 = vmul.f32 %v9102, %v9138
        %v9140 = vmul.f32 %v9103, %v9138
        %v9141 = vmul.f32 %v9104, %v9138
        %v9142 = vmul.f32 %v9105, %v9138
        %v9143 = vmul.f32 %v9106, %v9138
        %v9144 = vmul.f32 %v9107, %v9138
        %v9145 = vmul.f32 %v9108, %v9138
        %v9146 = vmul.f32 %v9109, %v9138
        %v9147 = vmul.f32 %v9110, %v9138
        %v9148 = vmul.f32 %v9111, %v9138
        %v9149 = vmul.f32 %v9112, %v9138
        %v9150 = vmul.f32 %v9113, %v9138
        %v9151 = vmul.f32 %v9114, %v9138
        %v9152 = vmul.f32 %v9115, %v9138
        %v9153 = vmul.f32 %v9116, %v9138
        %v9154 = vmul.f32 %v9117, %v9138
        %v9155 = vmul.f32 %v9118, %v9138
        %v9156 = vmul.f32 %v9119, %v9138
        %v9157 = vmul.f32 %v9120, %v9138
        %v9158 = vmul.f32 %v9121, %v9138
        %v9159 = vmul.f32 %v9122, %v9138
        %v9160 = vmul.f32 %v9123, %v9138
        %v9161 = vmul.f32 %v9124, %v9138
        %v9162 = vmul.f32 %v9125, %v9138
        %v9163 = vmul.f32 %v9126, %v9138
        %v9164 = vmul.f32 %v9127, %v9138
        %v9165 = vmul.f32 %v9128, %v9138
        %v9166 = vmul.f32 %v9129, %v9138
        %v9167 = vmul.f32 %v9130, %v9138
        %v9168 = vmul.f32 %v9131, %v9138
        %v9169 = vmul.f32 %v9132, %v9138
        %v9170 = vmul.f32 %v9133, %v9138
        %v9171 = vsel %vm4272, %v9139, 0.0
        %9172 = vadd.xlane.f32.xlu0 %v9171
        %v9173 = vpop.xlane.xlu0 %9172
        %v9174 = vsel %vm4272, %v9140, 0.0
        %9175 = vadd.xlane.f32.xlu0 %v9174
        %v9176 = vpop.xlane.xlu0 %9175
        %v9177 = vsel %vm4272, %v9141, 0.0
        %9178 = vadd.xlane.f32.xlu0 %v9177
        %v9179 = vpop.xlane.xlu0 %9178
        %v9180 = vsel %vm4272, %v9142, 0.0
        %9181 = vadd.xlane.f32.xlu0 %v9180
        %v9182 = vpop.xlane.xlu0 %9181
        %v9183 = vsel %vm4272, %v9143, 0.0
        %9184 = vadd.xlane.f32.xlu0 %v9183
        %v9185 = vpop.xlane.xlu0 %9184
        %v9186 = vsel %vm4272, %v9144, 0.0
        %9187 = vadd.xlane.f32.xlu0 %v9186
        %v9188 = vpop.xlane.xlu0 %9187
        %v9189 = vsel %vm4272, %v9145, 0.0
        %9190 = vadd.xlane.f32.xlu0 %v9189
        %v9191 = vpop.xlane.xlu0 %9190
        %v9192 = vsel %vm4272, %v9146, 0.0
        %9193 = vadd.xlane.f32.xlu0 %v9192
        %v9194 = vpop.xlane.xlu0 %9193
        %v9195 = vsel %vm4272, %v9147, 0.0
        %9196 = vadd.xlane.f32.xlu0 %v9195
        %v9197 = vpop.xlane.xlu0 %9196
        %v9198 = vsel %vm4272, %v9148, 0.0
        %9199 = vadd.xlane.f32.xlu0 %v9198
        %v9200 = vpop.xlane.xlu0 %9199
        %v9201 = vsel %vm4272, %v9149, 0.0
        %9202 = vadd.xlane.f32.xlu0 %v9201
        %v9203 = vpop.xlane.xlu0 %9202
        %v9204 = vsel %vm4272, %v9150, 0.0
        %9205 = vadd.xlane.f32.xlu0 %v9204
        %v9206 = vpop.xlane.xlu0 %9205
        %v9207 = vsel %vm4272, %v9151, 0.0
        %9208 = vadd.xlane.f32.xlu0 %v9207
        %v9209 = vpop.xlane.xlu0 %9208
        %v9210 = vsel %vm4272, %v9152, 0.0
        %9211 = vadd.xlane.f32.xlu0 %v9210
        %v9212 = vpop.xlane.xlu0 %9211
        %v9213 = vsel %vm4272, %v9153, 0.0
        %9214 = vadd.xlane.f32.xlu0 %v9213
        %v9215 = vpop.xlane.xlu0 %9214
        %v9216 = vsel %vm4272, %v9154, 0.0
        %9217 = vadd.xlane.f32.xlu0 %v9216
        %v9218 = vpop.xlane.xlu0 %9217
        %v9219 = vsel %vm4272, %v9155, 0.0
        %9220 = vadd.xlane.f32.xlu0 %v9219
        %v9221 = vpop.xlane.xlu0 %9220
        %v9222 = vsel %vm4272, %v9156, 0.0
        %9223 = vadd.xlane.f32.xlu0 %v9222
        %v9224 = vpop.xlane.xlu0 %9223
        %v9225 = vsel %vm4272, %v9157, 0.0
        %9226 = vadd.xlane.f32.xlu0 %v9225
        %v9227 = vpop.xlane.xlu0 %9226
        %v9228 = vsel %vm4272, %v9158, 0.0
        %9229 = vadd.xlane.f32.xlu0 %v9228
        %v9230 = vpop.xlane.xlu0 %9229
        %v9231 = vsel %vm4272, %v9159, 0.0
        %9232 = vadd.xlane.f32.xlu0 %v9231
        %v9233 = vpop.xlane.xlu0 %9232
        %v9234 = vsel %vm4272, %v9160, 0.0
        %9235 = vadd.xlane.f32.xlu0 %v9234
        %v9236 = vpop.xlane.xlu0 %9235
        %v9237 = vsel %vm4272, %v9161, 0.0
        %9238 = vadd.xlane.f32.xlu0 %v9237
        %v9239 = vpop.xlane.xlu0 %9238
        %v9240 = vsel %vm4272, %v9162, 0.0
        %9241 = vadd.xlane.f32.xlu0 %v9240
        %v9242 = vpop.xlane.xlu0 %9241
        %v9243 = vsel %vm4272, %v9163, 0.0
        %9244 = vadd.xlane.f32.xlu0 %v9243
        %v9245 = vpop.xlane.xlu0 %9244
        %v9246 = vsel %vm4272, %v9164, 0.0
        %9247 = vadd.xlane.f32.xlu0 %v9246
        %v9248 = vpop.xlane.xlu0 %9247
        %v9249 = vsel %vm4272, %v9165, 0.0
        %9250 = vadd.xlane.f32.xlu0 %v9249
        %v9251 = vpop.xlane.xlu0 %9250
        %v9252 = vsel %vm4272, %v9166, 0.0
        %9253 = vadd.xlane.f32.xlu0 %v9252
        %v9254 = vpop.xlane.xlu0 %9253
        %v9255 = vsel %vm4272, %v9167, 0.0
        %9256 = vadd.xlane.f32.xlu0 %v9255
        %v9257 = vpop.xlane.xlu0 %9256
        %v9258 = vsel %vm4272, %v9168, 0.0
        %9259 = vadd.xlane.f32.xlu0 %v9258
        %v9260 = vpop.xlane.xlu0 %9259
        %v9261 = vsel %vm4272, %v9169, 0.0
        %9262 = vadd.xlane.f32.xlu0 %v9261
        %v9263 = vpop.xlane.xlu0 %9262
        %v9264 = vsel %vm4272, %v9170, 0.0
        %9265 = vadd.xlane.f32.xlu0 %v9264
        %v9266 = vpop.xlane.xlu0 %9265
        %v9267 = vadd.f32 %v9070, %v9173
        %v9268 = vadd.f32 %v9071, %v9176
        %v9269 = vadd.f32 %v9072, %v9179
        %v9270 = vadd.f32 %v9073, %v9182
        %v9271 = vadd.f32 %v9074, %v9185
        %v9272 = vadd.f32 %v9075, %v9188
        %v9273 = vadd.f32 %v9076, %v9191
        %v9274 = vadd.f32 %v9077, %v9194
        %v9275 = vadd.f32 %v9078, %v9197
        %v9276 = vadd.f32 %v9079, %v9200
        %v9277 = vadd.f32 %v9080, %v9203
        %v9278 = vadd.f32 %v9081, %v9206
        %v9279 = vadd.f32 %v9082, %v9209
        %v9280 = vadd.f32 %v9083, %v9212
        %v9281 = vadd.f32 %v9084, %v9215
        %v9282 = vadd.f32 %v9085, %v9218
        %v9283 = vadd.f32 %v9086, %v9221
        %v9284 = vadd.f32 %v9087, %v9224
        %v9285 = vadd.f32 %v9088, %v9227
        %v9286 = vadd.f32 %v9089, %v9230
        %v9287 = vadd.f32 %v9090, %v9233
        %v9288 = vadd.f32 %v9091, %v9236
        %v9289 = vadd.f32 %v9092, %v9239
        %v9290 = vadd.f32 %v9093, %v9242
        %v9291 = vadd.f32 %v9094, %v9245
        %v9292 = vadd.f32 %v9095, %v9248
        %v9293 = vadd.f32 %v9096, %v9251
        %v9294 = vadd.f32 %v9097, %v9254
        %v9295 = vadd.f32 %v9098, %v9257
        %v9296 = vadd.f32 %v9099, %v9260
        %v9297 = vadd.f32 %v9100, %v9263
        %v9298 = vadd.f32 %v9101, %v9266
        %v9299 = vld [vmem:[%s8115 + $0x6] sm:$0xff]
        %v9300 = vld [vmem:[%s8115 + $0xe] sm:$0xff]
        %v9301 = vld [vmem:[%s8115 + $0x26] sm:$0xff]
        %v9302 = vld [vmem:[%s8115 + $0x2e] sm:$0xff]
        %v9303 = vld [vmem:[%s8115 + $0x46] sm:$0xff]
        %v9304 = vld [vmem:[%s8115 + $0x4e] sm:$0xff]
        %v9305 = vld [vmem:[%s8115 + $0x66] sm:$0xff]
        %v9306 = vld [vmem:[%s8115 + $0x6e] sm:$0xff]
        %v9307 = vld [vmem:[%s8115 + $0x86] sm:$0xff]
        %v9308 = vld [vmem:[%s8115 + $0x8e] sm:$0xff]
        %v9309 = vld [vmem:[%s8115 + $0xa6] sm:$0xff]
        %v9310 = vld [vmem:[%s8115 + $0xae] sm:$0xff]
        %v9311 = vld [vmem:[%s8115 + $0xc6] sm:$0xff]
        %v9312 = vld [vmem:[%s8115 + $0xce] sm:$0xff]
        %v9313 = vld [vmem:[%s8115 + $0xe6] sm:$0xff]
        %v9314 = vld [vmem:[%s8115 + $0xee] sm:$0xff]
        %v9315 = vld [vmem:[%s8115 + $0x106] sm:$0xff]
        %v9316 = vld [vmem:[%s8115 + $0x10e] sm:$0xff]
        %v9317 = vld [vmem:[%s8115 + $0x126] sm:$0xff]
        %v9318 = vld [vmem:[%s8115 + $0x12e] sm:$0xff]
        %v9319 = vld [vmem:[%s8115 + $0x146] sm:$0xff]
        %v9320 = vld [vmem:[%s8115 + $0x14e] sm:$0xff]
        %v9321 = vld [vmem:[%s8115 + $0x166] sm:$0xff]
        %v9322 = vld [vmem:[%s8115 + $0x16e] sm:$0xff]
        %v9323 = vld [vmem:[%s8115 + $0x186] sm:$0xff]
        %v9324 = vld [vmem:[%s8115 + $0x18e] sm:$0xff]
        %v9325 = vld [vmem:[%s8115 + $0x1a6] sm:$0xff]
        %v9326 = vld [vmem:[%s8115 + $0x1ae] sm:$0xff]
        %v9327 = vld [vmem:[%s8115 + $0x1c6] sm:$0xff]
        %v9328 = vld [vmem:[%s8115 + $0x1ce] sm:$0xff]
        %v9329 = vld [vmem:[%s8115 + $0x1e6] sm:$0xff]
        %v9330 = vld [vmem:[%s8115 + $0x1ee] sm:$0xff]
        %v9331 = vld [vmem:[%s7 + $0x8] sm:$0x1]
        %v9332 = vlaneseq
        %v9333 = vshrl.u32 %v9332, 7
        %v9334 = vsub.s32 0, %v9333
        %v9335 = vrot.slane %v9331, %v9334
        %v9336 = vmul.f32 %v9299, %v9335
        %v9337 = vmul.f32 %v9300, %v9335
        %v9338 = vmul.f32 %v9301, %v9335
        %v9339 = vmul.f32 %v9302, %v9335
        %v9340 = vmul.f32 %v9303, %v9335
        %v9341 = vmul.f32 %v9304, %v9335
        %v9342 = vmul.f32 %v9305, %v9335
        %v9343 = vmul.f32 %v9306, %v9335
        %v9344 = vmul.f32 %v9307, %v9335
        %v9345 = vmul.f32 %v9308, %v9335
        %v9346 = vmul.f32 %v9309, %v9335
        %v9347 = vmul.f32 %v9310, %v9335
        %v9348 = vmul.f32 %v9311, %v9335
        %v9349 = vmul.f32 %v9312, %v9335
        %v9350 = vmul.f32 %v9313, %v9335
        %v9351 = vmul.f32 %v9314, %v9335
        %v9352 = vmul.f32 %v9315, %v9335
        %v9353 = vmul.f32 %v9316, %v9335
        %v9354 = vmul.f32 %v9317, %v9335
        %v9355 = vmul.f32 %v9318, %v9335
        %v9356 = vmul.f32 %v9319, %v9335
        %v9357 = vmul.f32 %v9320, %v9335
        %v9358 = vmul.f32 %v9321, %v9335
        %v9359 = vmul.f32 %v9322, %v9335
        %v9360 = vmul.f32 %v9323, %v9335
        %v9361 = vmul.f32 %v9324, %v9335
        %v9362 = vmul.f32 %v9325, %v9335
        %v9363 = vmul.f32 %v9326, %v9335
        %v9364 = vmul.f32 %v9327, %v9335
        %v9365 = vmul.f32 %v9328, %v9335
        %v9366 = vmul.f32 %v9329, %v9335
        %v9367 = vmul.f32 %v9330, %v9335
        %v9368 = vsel %vm4272, %v9336, 0.0
        %9369 = vadd.xlane.f32.xlu0 %v9368
        %v9370 = vpop.xlane.xlu0 %9369
        %v9371 = vsel %vm4272, %v9337, 0.0
        %9372 = vadd.xlane.f32.xlu0 %v9371
        %v9373 = vpop.xlane.xlu0 %9372
        %v9374 = vsel %vm4272, %v9338, 0.0
        %9375 = vadd.xlane.f32.xlu0 %v9374
        %v9376 = vpop.xlane.xlu0 %9375
        %v9377 = vsel %vm4272, %v9339, 0.0
        %9378 = vadd.xlane.f32.xlu0 %v9377
        %v9379 = vpop.xlane.xlu0 %9378
        %v9380 = vsel %vm4272, %v9340, 0.0
        %9381 = vadd.xlane.f32.xlu0 %v9380
        %v9382 = vpop.xlane.xlu0 %9381
        %v9383 = vsel %vm4272, %v9341, 0.0
        %9384 = vadd.xlane.f32.xlu0 %v9383
        %v9385 = vpop.xlane.xlu0 %9384
        %v9386 = vsel %vm4272, %v9342, 0.0
        %9387 = vadd.xlane.f32.xlu0 %v9386
        %v9388 = vpop.xlane.xlu0 %9387
        %v9389 = vsel %vm4272, %v9343, 0.0
        %9390 = vadd.xlane.f32.xlu0 %v9389
        %v9391 = vpop.xlane.xlu0 %9390
        %v9392 = vsel %vm4272, %v9344, 0.0
        %9393 = vadd.xlane.f32.xlu0 %v9392
        %v9394 = vpop.xlane.xlu0 %9393
        %v9395 = vsel %vm4272, %v9345, 0.0
        %9396 = vadd.xlane.f32.xlu0 %v9395
        %v9397 = vpop.xlane.xlu0 %9396
        %v9398 = vsel %vm4272, %v9346, 0.0
        %9399 = vadd.xlane.f32.xlu0 %v9398
        %v9400 = vpop.xlane.xlu0 %9399
        %v9401 = vsel %vm4272, %v9347, 0.0
        %9402 = vadd.xlane.f32.xlu0 %v9401
        %v9403 = vpop.xlane.xlu0 %9402
        %v9404 = vsel %vm4272, %v9348, 0.0
        %9405 = vadd.xlane.f32.xlu0 %v9404
        %v9406 = vpop.xlane.xlu0 %9405
        %v9407 = vsel %vm4272, %v9349, 0.0
        %9408 = vadd.xlane.f32.xlu0 %v9407
        %v9409 = vpop.xlane.xlu0 %9408
        %v9410 = vsel %vm4272, %v9350, 0.0
        %9411 = vadd.xlane.f32.xlu0 %v9410
        %v9412 = vpop.xlane.xlu0 %9411
        %v9413 = vsel %vm4272, %v9351, 0.0
        %9414 = vadd.xlane.f32.xlu0 %v9413
        %v9415 = vpop.xlane.xlu0 %9414
        %v9416 = vsel %vm4272, %v9352, 0.0
        %9417 = vadd.xlane.f32.xlu0 %v9416
        %v9418 = vpop.xlane.xlu0 %9417
        %v9419 = vsel %vm4272, %v9353, 0.0
        %9420 = vadd.xlane.f32.xlu0 %v9419
        %v9421 = vpop.xlane.xlu0 %9420
        %v9422 = vsel %vm4272, %v9354, 0.0
        %9423 = vadd.xlane.f32.xlu0 %v9422
        %v9424 = vpop.xlane.xlu0 %9423
        %v9425 = vsel %vm4272, %v9355, 0.0
        %9426 = vadd.xlane.f32.xlu0 %v9425
        %v9427 = vpop.xlane.xlu0 %9426
        %v9428 = vsel %vm4272, %v9356, 0.0
        %9429 = vadd.xlane.f32.xlu0 %v9428
        %v9430 = vpop.xlane.xlu0 %9429
        %v9431 = vsel %vm4272, %v9357, 0.0
        %9432 = vadd.xlane.f32.xlu0 %v9431
        %v9433 = vpop.xlane.xlu0 %9432
        %v9434 = vsel %vm4272, %v9358, 0.0
        %9435 = vadd.xlane.f32.xlu0 %v9434
        %v9436 = vpop.xlane.xlu0 %9435
        %v9437 = vsel %vm4272, %v9359, 0.0
        %9438 = vadd.xlane.f32.xlu0 %v9437
        %v9439 = vpop.xlane.xlu0 %9438
        %v9440 = vsel %vm4272, %v9360, 0.0
        %9441 = vadd.xlane.f32.xlu0 %v9440
        %v9442 = vpop.xlane.xlu0 %9441
        %v9443 = vsel %vm4272, %v9361, 0.0
        %9444 = vadd.xlane.f32.xlu0 %v9443
        %v9445 = vpop.xlane.xlu0 %9444
        %v9446 = vsel %vm4272, %v9362, 0.0
        %9447 = vadd.xlane.f32.xlu0 %v9446
        %v9448 = vpop.xlane.xlu0 %9447
        %v9449 = vsel %vm4272, %v9363, 0.0
        %9450 = vadd.xlane.f32.xlu0 %v9449
        %v9451 = vpop.xlane.xlu0 %9450
        %v9452 = vsel %vm4272, %v9364, 0.0
        %9453 = vadd.xlane.f32.xlu0 %v9452
        %v9454 = vpop.xlane.xlu0 %9453
        %v9455 = vsel %vm4272, %v9365, 0.0
        %9456 = vadd.xlane.f32.xlu0 %v9455
        %v9457 = vpop.xlane.xlu0 %9456
        %v9458 = vsel %vm4272, %v9366, 0.0
        %9459 = vadd.xlane.f32.xlu0 %v9458
        %v9460 = vpop.xlane.xlu0 %9459
        %v9461 = vsel %vm4272, %v9367, 0.0
        %9462 = vadd.xlane.f32.xlu0 %v9461
        %v9463 = vpop.xlane.xlu0 %9462
        %v9464 = vadd.f32 %v9267, %v9370
        %v9465 = vadd.f32 %v9268, %v9373
        %v9466 = vadd.f32 %v9269, %v9376
        %v9467 = vadd.f32 %v9270, %v9379
        %v9468 = vadd.f32 %v9271, %v9382
        %v9469 = vadd.f32 %v9272, %v9385
        %v9470 = vadd.f32 %v9273, %v9388
        %v9471 = vadd.f32 %v9274, %v9391
        %v9472 = vadd.f32 %v9275, %v9394
        %v9473 = vadd.f32 %v9276, %v9397
        %v9474 = vadd.f32 %v9277, %v9400
        %v9475 = vadd.f32 %v9278, %v9403
        %v9476 = vadd.f32 %v9279, %v9406
        %v9477 = vadd.f32 %v9280, %v9409
        %v9478 = vadd.f32 %v9281, %v9412
        %v9479 = vadd.f32 %v9282, %v9415
        %v9480 = vadd.f32 %v9283, %v9418
        %v9481 = vadd.f32 %v9284, %v9421
        %v9482 = vadd.f32 %v9285, %v9424
        %v9483 = vadd.f32 %v9286, %v9427
        %v9484 = vadd.f32 %v9287, %v9430
        %v9485 = vadd.f32 %v9288, %v9433
        %v9486 = vadd.f32 %v9289, %v9436
        %v9487 = vadd.f32 %v9290, %v9439
        %v9488 = vadd.f32 %v9291, %v9442
        %v9489 = vadd.f32 %v9292, %v9445
        %v9490 = vadd.f32 %v9293, %v9448
        %v9491 = vadd.f32 %v9294, %v9451
        %v9492 = vadd.f32 %v9295, %v9454
        %v9493 = vadd.f32 %v9296, %v9457
        %v9494 = vadd.f32 %v9297, %v9460
        %v9495 = vadd.f32 %v9298, %v9463
        %v9496 = vld [vmem:[%s8313 + $0x3] sm:$0xff]
        %v9497 = vld [vmem:[%s8313 + $0xb] sm:$0xff]
        %v9498 = vld [vmem:[%s8313 + $0x1b] sm:$0xff]
        %v9499 = vld [vmem:[%s8313 + $0x23] sm:$0xff]
        %v9500 = vld [vmem:[%s8313 + $0x33] sm:$0xff]
        %v9501 = vld [vmem:[%s8313 + $0x3b] sm:$0xff]
        %v9502 = vld [vmem:[%s8313 + $0x4b] sm:$0xff]
        %v9503 = vld [vmem:[%s8313 + $0x53] sm:$0xff]
        %v9504 = vld [vmem:[%s8313 + $0x63] sm:$0xff]
        %v9505 = vld [vmem:[%s8313 + $0x6b] sm:$0xff]
        %v9506 = vld [vmem:[%s8313 + $0x7b] sm:$0xff]
        %v9507 = vld [vmem:[%s8313 + $0x83] sm:$0xff]
        %v9508 = vld [vmem:[%s8313 + $0x93] sm:$0xff]
        %v9509 = vld [vmem:[%s8313 + $0x9b] sm:$0xff]
        %v9510 = vld [vmem:[%s8313 + $0xab] sm:$0xff]
        %v9511 = vld [vmem:[%s8313 + $0xb3] sm:$0xff]
        %v9512 = vld [vmem:[%s8313 + $0xc3] sm:$0xff]
        %v9513 = vld [vmem:[%s8313 + $0xcb] sm:$0xff]
        %v9514 = vld [vmem:[%s8313 + $0xdb] sm:$0xff]
        %v9515 = vld [vmem:[%s8313 + $0xe3] sm:$0xff]
        %v9516 = vld [vmem:[%s8313 + $0xf3] sm:$0xff]
        %v9517 = vld [vmem:[%s8313 + $0xfb] sm:$0xff]
        %v9518 = vld [vmem:[%s8313 + $0x10b] sm:$0xff]
        %v9519 = vld [vmem:[%s8313 + $0x113] sm:$0xff]
        %v9520 = vld [vmem:[%s8313 + $0x123] sm:$0xff]
        %v9521 = vld [vmem:[%s8313 + $0x12b] sm:$0xff]
        %v9522 = vld [vmem:[%s8313 + $0x13b] sm:$0xff]
        %v9523 = vld [vmem:[%s8313 + $0x143] sm:$0xff]
        %v9524 = vld [vmem:[%s8313 + $0x153] sm:$0xff]
        %v9525 = vld [vmem:[%s8313 + $0x15b] sm:$0xff]
        %v9526 = vld [vmem:[%s8313 + $0x16b] sm:$0xff]
        %v9527 = vld [vmem:[%s8313 + $0x173] sm:$0xff]
        %v9528 = vld [vmem:[%s6 + $0x8] sm:$0x1]
        %v9529 = vlaneseq
        %v9530 = vshrl.u32 %v9529, 7
        %v9531 = vsub.s32 0, %v9530
        %v9532 = vrot.slane %v9528, %v9531
        %v9533 = vmul.f32 %v9496, %v9532
        %v9534 = vmul.f32 %v9497, %v9532
        %v9535 = vmul.f32 %v9498, %v9532
        %v9536 = vmul.f32 %v9499, %v9532
        %v9537 = vmul.f32 %v9500, %v9532
        %v9538 = vmul.f32 %v9501, %v9532
        %v9539 = vmul.f32 %v9502, %v9532
        %v9540 = vmul.f32 %v9503, %v9532
        %v9541 = vmul.f32 %v9504, %v9532
        %v9542 = vmul.f32 %v9505, %v9532
        %v9543 = vmul.f32 %v9506, %v9532
        %v9544 = vmul.f32 %v9507, %v9532
        %v9545 = vmul.f32 %v9508, %v9532
        %v9546 = vmul.f32 %v9509, %v9532
        %v9547 = vmul.f32 %v9510, %v9532
        %v9548 = vmul.f32 %v9511, %v9532
        %v9549 = vmul.f32 %v9512, %v9532
        %v9550 = vmul.f32 %v9513, %v9532
        %v9551 = vmul.f32 %v9514, %v9532
        %v9552 = vmul.f32 %v9515, %v9532
        %v9553 = vmul.f32 %v9516, %v9532
        %v9554 = vmul.f32 %v9517, %v9532
        %v9555 = vmul.f32 %v9518, %v9532
        %v9556 = vmul.f32 %v9519, %v9532
        %v9557 = vmul.f32 %v9520, %v9532
        %v9558 = vmul.f32 %v9521, %v9532
        %v9559 = vmul.f32 %v9522, %v9532
        %v9560 = vmul.f32 %v9523, %v9532
        %v9561 = vmul.f32 %v9524, %v9532
        %v9562 = vmul.f32 %v9525, %v9532
        %v9563 = vmul.f32 %v9526, %v9532
        %v9564 = vmul.f32 %v9527, %v9532
        %v9565 = vsel %vm2364, %v9533, 0.0
        %9566 = vadd.xlane.f32.xlu0 %v9565
        %v9567 = vpop.xlane.xlu0 %9566
        %v9568 = vsel %vm2364, %v9534, 0.0
        %9569 = vadd.xlane.f32.xlu0 %v9568
        %v9570 = vpop.xlane.xlu0 %9569
        %v9571 = vsel %vm2364, %v9535, 0.0
        %9572 = vadd.xlane.f32.xlu0 %v9571
        %v9573 = vpop.xlane.xlu0 %9572
        %v9574 = vsel %vm2364, %v9536, 0.0
        %9575 = vadd.xlane.f32.xlu0 %v9574
        %v9576 = vpop.xlane.xlu0 %9575
        %v9577 = vsel %vm2364, %v9537, 0.0
        %9578 = vadd.xlane.f32.xlu0 %v9577
        %v9579 = vpop.xlane.xlu0 %9578
        %v9580 = vsel %vm2364, %v9538, 0.0
        %9581 = vadd.xlane.f32.xlu0 %v9580
        %v9582 = vpop.xlane.xlu0 %9581
        %v9583 = vsel %vm2364, %v9539, 0.0
        %9584 = vadd.xlane.f32.xlu0 %v9583
        %v9585 = vpop.xlane.xlu0 %9584
        %v9586 = vsel %vm2364, %v9540, 0.0
        %9587 = vadd.xlane.f32.xlu0 %v9586
        %v9588 = vpop.xlane.xlu0 %9587
        %v9589 = vsel %vm2364, %v9541, 0.0
        %9590 = vadd.xlane.f32.xlu0 %v9589
        %v9591 = vpop.xlane.xlu0 %9590
        %v9592 = vsel %vm2364, %v9542, 0.0
        %9593 = vadd.xlane.f32.xlu0 %v9592
        %v9594 = vpop.xlane.xlu0 %9593
        %v9595 = vsel %vm2364, %v9543, 0.0
        %9596 = vadd.xlane.f32.xlu0 %v9595
        %v9597 = vpop.xlane.xlu0 %9596
        %v9598 = vsel %vm2364, %v9544, 0.0
        %9599 = vadd.xlane.f32.xlu0 %v9598
        %v9600 = vpop.xlane.xlu0 %9599
        %v9601 = vsel %vm2364, %v9545, 0.0
        %9602 = vadd.xlane.f32.xlu0 %v9601
        %v9603 = vpop.xlane.xlu0 %9602
        %v9604 = vsel %vm2364, %v9546, 0.0
        %9605 = vadd.xlane.f32.xlu0 %v9604
        %v9606 = vpop.xlane.xlu0 %9605
        %v9607 = vsel %vm2364, %v9547, 0.0
        %9608 = vadd.xlane.f32.xlu0 %v9607
        %v9609 = vpop.xlane.xlu0 %9608
        %v9610 = vsel %vm2364, %v9548, 0.0
        %9611 = vadd.xlane.f32.xlu0 %v9610
        %v9612 = vpop.xlane.xlu0 %9611
        %v9613 = vsel %vm2364, %v9549, 0.0
        %9614 = vadd.xlane.f32.xlu0 %v9613
        %v9615 = vpop.xlane.xlu0 %9614
        %v9616 = vsel %vm2364, %v9550, 0.0
        %9617 = vadd.xlane.f32.xlu0 %v9616
        %v9618 = vpop.xlane.xlu0 %9617
        %v9619 = vsel %vm2364, %v9551, 0.0
        %9620 = vadd.xlane.f32.xlu0 %v9619
        %v9621 = vpop.xlane.xlu0 %9620
        %v9622 = vsel %vm2364, %v9552, 0.0
        %9623 = vadd.xlane.f32.xlu0 %v9622
        %v9624 = vpop.xlane.xlu0 %9623
        %v9625 = vsel %vm2364, %v9553, 0.0
        %9626 = vadd.xlane.f32.xlu0 %v9625
        %v9627 = vpop.xlane.xlu0 %9626
        %v9628 = vsel %vm2364, %v9554, 0.0
        %9629 = vadd.xlane.f32.xlu0 %v9628
        %v9630 = vpop.xlane.xlu0 %9629
        %v9631 = vsel %vm2364, %v9555, 0.0
        %9632 = vadd.xlane.f32.xlu0 %v9631
        %v9633 = vpop.xlane.xlu0 %9632
        %v9634 = vsel %vm2364, %v9556, 0.0
        %9635 = vadd.xlane.f32.xlu0 %v9634
        %v9636 = vpop.xlane.xlu0 %9635
        %v9637 = vsel %vm2364, %v9557, 0.0
        %9638 = vadd.xlane.f32.xlu0 %v9637
        %v9639 = vpop.xlane.xlu0 %9638
        %v9640 = vsel %vm2364, %v9558, 0.0
        %9641 = vadd.xlane.f32.xlu0 %v9640
        %v9642 = vpop.xlane.xlu0 %9641
        %v9643 = vsel %vm2364, %v9559, 0.0
        %9644 = vadd.xlane.f32.xlu0 %v9643
        %v9645 = vpop.xlane.xlu0 %9644
        %v9646 = vsel %vm2364, %v9560, 0.0
        %9647 = vadd.xlane.f32.xlu0 %v9646
        %v9648 = vpop.xlane.xlu0 %9647
        %v9649 = vsel %vm2364, %v9561, 0.0
        %9650 = vadd.xlane.f32.xlu0 %v9649
        %v9651 = vpop.xlane.xlu0 %9650
        %v9652 = vsel %vm2364, %v9562, 0.0
        %9653 = vadd.xlane.f32.xlu0 %v9652
        %v9654 = vpop.xlane.xlu0 %9653
        %v9655 = vsel %vm2364, %v9563, 0.0
        %9656 = vadd.xlane.f32.xlu0 %v9655
        %v9657 = vpop.xlane.xlu0 %9656
        %v9658 = vsel %vm2364, %v9564, 0.0
        %9659 = vadd.xlane.f32.xlu0 %v9658
        %v9660 = vpop.xlane.xlu0 %9659
        %v9661 = vadd.f32 %v9464, %v9567
        %v9662 = vadd.f32 %v9465, %v9570
        %v9663 = vadd.f32 %v9466, %v9573
        %v9664 = vadd.f32 %v9467, %v9576
        %v9665 = vadd.f32 %v9468, %v9579
        %v9666 = vadd.f32 %v9469, %v9582
        %v9667 = vadd.f32 %v9470, %v9585
        %v9668 = vadd.f32 %v9471, %v9588
        %v9669 = vadd.f32 %v9472, %v9591
        %v9670 = vadd.f32 %v9473, %v9594
        %v9671 = vadd.f32 %v9474, %v9597
        %v9672 = vadd.f32 %v9475, %v9600
        %v9673 = vadd.f32 %v9476, %v9603
        %v9674 = vadd.f32 %v9477, %v9606
        %v9675 = vadd.f32 %v9478, %v9609
        %v9676 = vadd.f32 %v9479, %v9612
        %v9677 = vadd.f32 %v9480, %v9615
        %v9678 = vadd.f32 %v9481, %v9618
        %v9679 = vadd.f32 %v9482, %v9621
        %v9680 = vadd.f32 %v9483, %v9624
        %v9681 = vadd.f32 %v9484, %v9627
        %v9682 = vadd.f32 %v9485, %v9630
        %v9683 = vadd.f32 %v9486, %v9633
        %v9684 = vadd.f32 %v9487, %v9636
        %v9685 = vadd.f32 %v9488, %v9639
        %v9686 = vadd.f32 %v9489, %v9642
        %v9687 = vadd.f32 %v9490, %v9645
        %v9688 = vadd.f32 %v9491, %v9648
        %v9689 = vadd.f32 %v9492, %v9651
        %v9690 = vadd.f32 %v9493, %v9654
        %v9691 = vadd.f32 %v9494, %v9657
        %v9692 = vadd.f32 %v9495, %v9660
        %s9693 = sld [smem:[#allocation6 + $0x9]]
        %v9694 = vstv %s9693
        %v9695 = vadd.f32 %v9661, %v9694
        %v9696 = vadd.f32 %v9662, %v9694
        %v9697 = vadd.f32 %v9663, %v9694
        %v9698 = vadd.f32 %v9664, %v9694
        %v9699 = vadd.f32 %v9665, %v9694
        %v9700 = vadd.f32 %v9666, %v9694
        %v9701 = vadd.f32 %v9667, %v9694
        %v9702 = vadd.f32 %v9668, %v9694
        %v9703 = vadd.f32 %v9669, %v9694
        %v9704 = vadd.f32 %v9670, %v9694
        %v9705 = vadd.f32 %v9671, %v9694
        %v9706 = vadd.f32 %v9672, %v9694
        %v9707 = vadd.f32 %v9673, %v9694
        %v9708 = vadd.f32 %v9674, %v9694
        %v9709 = vadd.f32 %v9675, %v9694
        %v9710 = vadd.f32 %v9676, %v9694
        %v9711 = vadd.f32 %v9677, %v9694
        %v9712 = vadd.f32 %v9678, %v9694
        %v9713 = vadd.f32 %v9679, %v9694
        %v9714 = vadd.f32 %v9680, %v9694
        %v9715 = vadd.f32 %v9681, %v9694
        %v9716 = vadd.f32 %v9682, %v9694
        %v9717 = vadd.f32 %v9683, %v9694
        %v9718 = vadd.f32 %v9684, %v9694
        %v9719 = vadd.f32 %v9685, %v9694
        %v9720 = vadd.f32 %v9686, %v9694
        %v9721 = vadd.f32 %v9687, %v9694
        %v9722 = vadd.f32 %v9688, %v9694
        %v9723 = vadd.f32 %v9689, %v9694
        %v9724 = vadd.f32 %v9690, %v9694
        %v9725 = vadd.f32 %v9691, %v9694
        %v9726 = vadd.f32 %v9692, %v9694
        %vm9727 = vcmask 139264
        %9728 = vst.msk [vmem:[#allocation5] sm:$0x1] %vm9727, 0.0
        %9729 = vst.msk [vmem:[#allocation5 + $0x11] sm:$0x1] %vm9727, 0.0
        %vm9730 = vcmask 7168
        %9731 = vst.msk [vmem:[#allocation5] sm:$0xff] %vm9730, 0.0
        %9732 = vst.msk [vmem:[#allocation5 + $0x8] sm:$0xff] %vm9730, 0.0
        %vm9733 = vcmask 1024
        %9734 = vst.msk [vmem:[#allocation5 + $0x10] sm:$0x3] %vm9733, 0.0
        %vm9735 = vcmask 146568
        %9736 = vst.msk [vmem:[#allocation5] sm:$0xff] %vm9735, 0.0
        %9737 = vst.msk [vmem:[#allocation5 + $0x8] sm:$0xff] %vm9735, 0.0
        %vm9738 = vcmask 140424
        %9739 = vst.msk [vmem:[#allocation5 + $0x10] sm:$0x3] %vm9738, 0.0
        %v9772 = vlaneseq
        %v9773 = vand.u32 %v9772, 127
        %v9774 = vadd.s32 %v9773, 4294967295
        %v9775 = vlaneseq
        %v9776 = vshrl.u32 %v9775, 7
        %v9777 = vsub.s32 %v9774, %v9776
        %v9778 = vrot.slane %v9695, %v9777
        %v9779 = vadd.s32 %v9773, 4294967287
        %v9780 = vlaneseq
        %v9781 = vshrl.u32 %v9780, 7
        %v9782 = vsub.s32 %v9779, %v9781
        %v9783 = vrot.slane %v9696, %v9782
        %vm9784 = vcmask 138312
        %v9785 = vsel %vm9784, %v9783, %v9778
        %v9786 = vlaneseq
        %v9787 = vshrl.u32 %v9786, 7
        %v9788 = vsub.s32 %v9774, %v9787
        %v9789 = vrot.slane %v9697, %v9788
        %v9790 = vlaneseq
        %v9791 = vshrl.u32 %v9790, 7
        %v9792 = vsub.s32 %v9779, %v9791
        %v9793 = vrot.slane %v9698, %v9792
        %v9794 = vsel %vm9784, %v9793, %v9789
        %v9795 = vlaneseq
        %v9796 = vshrl.u32 %v9795, 7
        %v9797 = vsub.s32 %v9774, %v9796
        %v9798 = vrot.slane %v9699, %v9797
        %v9799 = vlaneseq
        %v9800 = vshrl.u32 %v9799, 7
        %v9801 = vsub.s32 %v9779, %v9800
        %v9802 = vrot.slane %v9700, %v9801
        %v9803 = vsel %vm9784, %v9802, %v9798
        %v9804 = vlaneseq
        %v9805 = vshrl.u32 %v9804, 7
        %v9806 = vsub.s32 %v9774, %v9805
        %v9807 = vrot.slane %v9701, %v9806
        %v9808 = vlaneseq
        %v9809 = vshrl.u32 %v9808, 7
        %v9810 = vsub.s32 %v9779, %v9809
        %v9811 = vrot.slane %v9702, %v9810
        %v9812 = vsel %vm9784, %v9811, %v9807
        %v9813 = vlaneseq
        %v9814 = vshrl.u32 %v9813, 7
        %v9815 = vsub.s32 %v9774, %v9814
        %v9816 = vrot.slane %v9703, %v9815
        %v9817 = vlaneseq
        %v9818 = vshrl.u32 %v9817, 7
        %v9819 = vsub.s32 %v9779, %v9818
        %v9820 = vrot.slane %v9704, %v9819
        %v9821 = vsel %vm9784, %v9820, %v9816
        %v9822 = vlaneseq
        %v9823 = vshrl.u32 %v9822, 7
        %v9824 = vsub.s32 %v9774, %v9823
        %v9825 = vrot.slane %v9705, %v9824
        %v9826 = vlaneseq
        %v9827 = vshrl.u32 %v9826, 7
        %v9828 = vsub.s32 %v9779, %v9827
        %v9829 = vrot.slane %v9706, %v9828
        %v9830 = vsel %vm9784, %v9829, %v9825
        %v9831 = vlaneseq
        %v9832 = vshrl.u32 %v9831, 7
        %v9833 = vsub.s32 %v9774, %v9832
        %v9834 = vrot.slane %v9707, %v9833
        %v9835 = vlaneseq
        %v9836 = vshrl.u32 %v9835, 7
        %v9837 = vsub.s32 %v9779, %v9836
        %v9838 = vrot.slane %v9708, %v9837
        %v9839 = vsel %vm9784, %v9838, %v9834
        %v9840 = vlaneseq
        %v9841 = vshrl.u32 %v9840, 7
        %v9842 = vsub.s32 %v9774, %v9841
        %v9843 = vrot.slane %v9709, %v9842
        %v9844 = vlaneseq
        %v9845 = vshrl.u32 %v9844, 7
        %v9846 = vsub.s32 %v9779, %v9845
        %v9847 = vrot.slane %v9710, %v9846
        %v9848 = vsel %vm9784, %v9847, %v9843
        %v9849 = vlaneseq
        %v9850 = vshrl.u32 %v9849, 7
        %v9851 = vsub.s32 %v9774, %v9850
        %v9852 = vrot.slane %v9711, %v9851
        %v9853 = vlaneseq
        %v9854 = vshrl.u32 %v9853, 7
        %v9855 = vsub.s32 %v9779, %v9854
        %v9856 = vrot.slane %v9712, %v9855
        %v9857 = vsel %vm9784, %v9856, %v9852
        %v9858 = vlaneseq
        %v9859 = vshrl.u32 %v9858, 7
        %v9860 = vsub.s32 %v9774, %v9859
        %v9861 = vrot.slane %v9713, %v9860
        %v9862 = vlaneseq
        %v9863 = vshrl.u32 %v9862, 7
        %v9864 = vsub.s32 %v9779, %v9863
        %v9865 = vrot.slane %v9714, %v9864
        %v9866 = vsel %vm9784, %v9865, %v9861
        %v9867 = vlaneseq
        %v9868 = vshrl.u32 %v9867, 7
        %v9869 = vsub.s32 %v9774, %v9868
        %v9870 = vrot.slane %v9715, %v9869
        %v9871 = vlaneseq
        %v9872 = vshrl.u32 %v9871, 7
        %v9873 = vsub.s32 %v9779, %v9872
        %v9874 = vrot.slane %v9716, %v9873
        %v9875 = vsel %vm9784, %v9874, %v9870
        %v9876 = vlaneseq
        %v9877 = vshrl.u32 %v9876, 7
        %v9878 = vsub.s32 %v9774, %v9877
        %v9879 = vrot.slane %v9717, %v9878
        %v9880 = vlaneseq
        %v9881 = vshrl.u32 %v9880, 7
        %v9882 = vsub.s32 %v9779, %v9881
        %v9883 = vrot.slane %v9718, %v9882
        %v9884 = vsel %vm9784, %v9883, %v9879
        %v9885 = vlaneseq
        %v9886 = vshrl.u32 %v9885, 7
        %v9887 = vsub.s32 %v9774, %v9886
        %v9888 = vrot.slane %v9719, %v9887
        %v9889 = vlaneseq
        %v9890 = vshrl.u32 %v9889, 7
        %v9891 = vsub.s32 %v9779, %v9890
        %v9892 = vrot.slane %v9720, %v9891
        %v9893 = vsel %vm9784, %v9892, %v9888
        %v9894 = vlaneseq
        %v9895 = vshrl.u32 %v9894, 7
        %v9896 = vsub.s32 %v9774, %v9895
        %v9897 = vrot.slane %v9721, %v9896
        %v9898 = vlaneseq
        %v9899 = vshrl.u32 %v9898, 7
        %v9900 = vsub.s32 %v9779, %v9899
        %v9901 = vrot.slane %v9722, %v9900
        %v9902 = vsel %vm9784, %v9901, %v9897
        %v9903 = vlaneseq
        %v9904 = vshrl.u32 %v9903, 7
        %v9905 = vsub.s32 %v9774, %v9904
        %v9906 = vrot.slane %v9723, %v9905
        %v9907 = vlaneseq
        %v9908 = vshrl.u32 %v9907, 7
        %v9909 = vsub.s32 %v9779, %v9908
        %v9910 = vrot.slane %v9724, %v9909
        %v9911 = vsel %vm9784, %v9910, %v9906
        %v9912 = vlaneseq
        %v9913 = vshrl.u32 %v9912, 7
        %v9914 = vsub.s32 %v9774, %v9913
        %v9915 = vrot.slane %v9725, %v9914
        %v9916 = vlaneseq
        %v9917 = vshrl.u32 %v9916, 7
        %v9918 = vsub.s32 %v9779, %v9917
        %v9919 = vrot.slane %v9726, %v9918
        %v9920 = vsel %vm9784, %v9919, %v9915
        %vm9921 = vcmask 1041409
        %v9922 = vsel %vm9921, %v9794, %v9785
        %vm9923 = vcmask 1042434
        %v9924 = vsel %vm9923, %v9803, %v9922
        %vm9925 = vcmask 1043459
        %v9926 = vsel %vm9925, %v9812, %v9924
        %vm9927 = vcmask 1044484
        %v9928 = vsel %vm9927, %v9821, %v9926
        %vm9929 = vcmask 1045509
        %v9930 = vsel %vm9929, %v9830, %v9928
        %vm9931 = vcmask 1046534
        %v9932 = vsel %vm9931, %v9839, %v9930
        %vm9933 = vcmask 1047559
        %v9934 = vsel %vm9933, %v9848, %v9932
        %v9935 = vsel %vm9921, %v9866, %v9857
        %v9936 = vsel %vm9923, %v9875, %v9935
        %v9937 = vsel %vm9925, %v9884, %v9936
        %v9938 = vsel %vm9927, %v9893, %v9937
        %v9939 = vsel %vm9929, %v9902, %v9938
        %v9940 = vsel %vm9931, %v9911, %v9939
        %v9941 = vsel %vm9933, %v9920, %v9940
        %vm9944 = vcmask 138248
        %9945 = vst.msk [vmem:[#allocation5 + $0x1] sm:$0xff] %vm9944, %v9934
        %9946 = vst.msk [vmem:[#allocation5 + $0x9] sm:$0xff] %vm9944, %v9941
        %v9947 = vld [vmem:[#allocation5] sm:$0xff]
        %v9948 = vld [vmem:[#allocation5 + $0x8] sm:$0xff]
        %s9949 = sld [smem:[#allocation6]]
        %v9950 = vstv %s9949
        %v9951 = vmul.f32 %v9947, %v9950
        %v9952 = vmul.f32 %v9948, %v9950
        %v9953 = vadd.f32 %v9951, 0.0
        %v9954 = vadd.f32 %v9952, 0.0
        %s9955 = sld [smem:[#allocation6 + $0x1]]
        %v9956 = vstv %s9955
        %v9957 = vmul.f32 %v9947, %v9956
        %v9958 = vmul.f32 %v9948, %v9956
        %9961 = vrot.lane.b32.xlu0 %v9957, 127
        %v9962 = vpop.permute.xlu0 %9961
        %9963 = vrot.lane.b32.xlu0 %v9958, 127
        %v9964 = vpop.permute.xlu0 %9963
        %v9967 = vadd.f32 %v9953, %v9962
        %v9968 = vadd.f32 %v9954, %v9964
        %s9969 = sld [smem:[#allocation6 + $0x2]]
        %v9970 = vstv %s9969
        %v9971 = vmul.f32 %v9947, %v9970
        %v9972 = vmul.f32 %v9948, %v9970
        %9975 = vrot.lane.b32.xlu0 %v9971, 126
        %v9976 = vpop.permute.xlu0 %9975
        %9977 = vrot.lane.b32.xlu0 %v9972, 126
        %v9978 = vpop.permute.xlu0 %9977
        %v9981 = vadd.f32 %v9967, %v9976
        %v9982 = vadd.f32 %v9968, %v9978
        %v9983 = vld [vmem:[#allocation5 + $0x1] sm:$0xff]
        %v9984 = vld [vmem:[#allocation5 + $0x9] sm:$0xff]
        %s9985 = sld [smem:[#allocation6 + $0x3]]
        %v9986 = vstv %s9985
        %v9987 = vmul.f32 %v9983, %v9986
        %v9988 = vmul.f32 %v9984, %v9986
        %v9989 = vadd.f32 %v9981, %v9987
        %v9990 = vadd.f32 %v9982, %v9988
        %s9991 = sld [smem:[#allocation6 + $0x4]]
        %v9992 = vstv %s9991
        %v9993 = vmul.f32 %v9983, %v9992
        %v9994 = vmul.f32 %v9984, %v9992
        %9997 = vrot.lane.b32.xlu0 %v9993, 127
        %v9998 = vpop.permute.xlu0 %9997
        %9999 = vrot.lane.b32.xlu0 %v9994, 127
        %v10000 = vpop.permute.xlu0 %9999
        %v10003 = vadd.f32 %v9989, %v9998
        %v10004 = vadd.f32 %v9990, %v10000
        %s10005 = sld [smem:[#allocation6 + $0x5]]
        %v10006 = vstv %s10005
        %v10007 = vmul.f32 %v9983, %v10006
        %v10008 = vmul.f32 %v9984, %v10006
        %10011 = vrot.lane.b32.xlu0 %v10007, 126
        %v10012 = vpop.permute.xlu0 %10011
        %10013 = vrot.lane.b32.xlu0 %v10008, 126
        %v10014 = vpop.permute.xlu0 %10013
        %v10017 = vadd.f32 %v10003, %v10012
        %v10018 = vadd.f32 %v10004, %v10014
        %v10019 = vld [vmem:[#allocation5 + $0x2] sm:$0xff]
        %v10020 = vld [vmem:[#allocation5 + $0xa] sm:$0xff]
        %s10021 = sld [smem:[#allocation6 + $0x6]]
        %v10022 = vstv %s10021
        %v10023 = vmul.f32 %v10019, %v10022
        %v10024 = vmul.f32 %v10020, %v10022
        %v10025 = vadd.f32 %v10017, %v10023
        %v10026 = vadd.f32 %v10018, %v10024
        %s10027 = sld [smem:[#allocation6 + $0x7]]
        %v10028 = vstv %s10027
        %v10029 = vmul.f32 %v10019, %v10028
        %v10030 = vmul.f32 %v10020, %v10028
        %10033 = vrot.lane.b32.xlu0 %v10029, 127
        %v10034 = vpop.permute.xlu0 %10033
        %10035 = vrot.lane.b32.xlu0 %v10030, 127
        %v10036 = vpop.permute.xlu0 %10035
        %v10039 = vadd.f32 %v10025, %v10034
        %v10040 = vadd.f32 %v10026, %v10036
        %s10041 = sld [smem:[#allocation6 + $0x8]]
        %v10042 = vstv %s10041
        %v10043 = vmul.f32 %v10019, %v10042
        %v10044 = vmul.f32 %v10020, %v10042
        %10047 = vrot.lane.b32.xlu0 %v10043, 126
        %v10048 = vpop.permute.xlu0 %10047
        %10049 = vrot.lane.b32.xlu0 %v10044, 126
        %v10050 = vpop.permute.xlu0 %10049
        %v10053 = vadd.f32 %v10039, %v10048
        %v10054 = vadd.f32 %v10040, %v10050
        %s10055 = sld [smem:[#allocation6 + $0xa]]
        %v10056 = vstv %s10055
        %v10057 = vadd.f32 %v10053, %v10056
        %v10058 = vadd.f32 %v10054, %v10056
        %10059 = vst.msk [vmem:[%s380] sm:$0xff] %vm4272, %v10057
        %10060 = vst.msk [vmem:[%s380 + $0x8] sm:$0xff] %vm4272, %v10058
        %v10061 = vsel %vm4272, %v10057, 0.0
        %v10062 = vsel %vm4272, %v10058, 0.0
        %v10063 = vadd.f32 %v10061, %v10062
        %10064 = vadd.xlane.f32.xlu0 %v10063
        %v10065 = vpop.xlane.xlu0 %10064
        %v10066 = vrot.slane %v10065, 4
        %v10067 = vadd.f32 %v10065, %v10066
        %v10068 = vrot.slane %v10067, 2
        %v10069 = vadd.f32 %v10067, %v10068
        %v10070 = vrot.slane %v10069, 1
        %v10071 = vadd.f32 %v10069, %v10070
        %s10072 = vtos %v10071
        %v10073 = vmul.f32 %v10057, %v10057
        %v10074 = vmul.f32 %v10058, %v10058
        %v10075 = vsel %vm4272, %v10073, 0.0
        %v10076 = vsel %vm4272, %v10074, 0.0
        %v10077 = vadd.f32 %v10075, %v10076
        %10078 = vadd.xlane.f32.xlu0 %v10077
        %v10079 = vpop.xlane.xlu0 %10078
        %v10080 = vrot.slane %v10079, 4
        %v10081 = vadd.f32 %v10079, %v10080
        %v10082 = vrot.slane %v10081, 2
        %v10083 = vadd.f32 %v10081, %v10082
        %v10084 = vrot.slane %v10083, 1
        %v10085 = vadd.f32 %v10083, %v10084
        %s10086 = vtos %v10085
        %v10087 = vstv %s10072
        %v10088 = vstv %s10086
        %vm10089 = vcmask 1040384
        %v10090 = vsel %vm10089, %v10087, %v10088
        %10091 = vst [vmem:[%s384] sm:$0x3] %v10090
        %p10092 = scmp.lt.s32.totalorder %s23, 1
        %s10093 = scalar_select %p10092, %s23, 1
        %s10094 = smul.addr %s10093, 2
        %s10095 = smul.addr %s10094, 8
        %s10096 = scalar_lea.vmem %s9, %s10095
        %p10097 = scmp.lt.s32.totalorder %s23, 1
        %s10098 = scalar_select %p10097, %s23, 1
        %s10099 = smul.addr %s10098, 2
        %s10100 = scalar_lea.vmem %s10, %s10099
        // Predicated region
        $region61: #{conf_block_forward.2} parent=55 // pred_check
          %p10101 = pneg %p235
        $region62: #{conf_block_forward.2} parent=55 // pred_check_branch
          %10103 = sbr.rel (%p10101) target = $region64
        $region63: #{conf_block_forward.2} parent=55 // pred_region
          _
        $region64: #{conf_block_forward.2} parent=55 // pred_fallthru
          _
        // Predicated region
        $region65: #{conf_block_forward.2} parent=55 // pred_check
          %p10104 = pneg %p261
        $region66: #{conf_block_forward.2} parent=55 // pred_check_branch
          %10106 = sbr.rel (%p10104) target = $region68
        $region67: #{conf_block_forward.2} parent=55 // pred_region
          _
        $region68: #{conf_block_forward.2} parent=55 // pred_fallthru
          _
      $region56: #{conf_block_forward.2} parent=5 // pred_fallthru
        _
      %p10107 = scmp.le.s32.totalorder 2, %s18
      // Predicated region
      $region69: #{conf_block_forward.2} parent=5 // pred_check
        %p10108 = pneg %p10107
      $region70: #{conf_block_forward.2} parent=5 // pred_check_branch
        %10110 = sbr.rel (%p10108) target = $region72
      $region71: #{conf_block_forward.2} parent=5 // pred_region
        %s10111 = ssub.s32 %s18, 2
        // Predicated region
        $region73: #{conf_block_forward.2} parent=71 // pred_check
          %p10112 = pneg %p241
        $region74: #{conf_block_forward.2} parent=71 // pred_check_branch
          %10114 = sbr.rel (%p10112) target = $region76
        $region75: #{conf_block_forward.2} parent=71 // pred_region
          %p10115 = scmp.lt.s32.totalorder %s24, 1
          %s10116 = scalar_select %p10115, %s24, 1
          %s10117 = smul.addr %s10116, 2
          %s10118 = smul.addr %s10117, 8
          %s10119 = scalar_lea.vmem %s9, %s10118
        $region76: #{conf_block_forward.2} parent=71 // pred_fallthru
          _
        // Predicated region
        $region77: #{conf_block_forward.2} parent=71 // pred_check
          %p10120 = pneg %p267
        $region78: #{conf_block_forward.2} parent=71 // pred_check_branch
          %10122 = sbr.rel (%p10120) target = $region80
        $region79: #{conf_block_forward.2} parent=71 // pred_region
          %p10123 = scmp.lt.s32.totalorder %s24, 1
          %s10124 = scalar_select %p10123, %s24, 1
          %s10125 = smul.addr %s10124, 2
          %s10126 = scalar_lea.vmem %s10, %s10125
        $region80: #{conf_block_forward.2} parent=71 // pred_fallthru
          _
      $region72: #{conf_block_forward.2} parent=5 // pred_fallthru
        _
    $region6: #{conf_block_forward.2} parent=1 // loop_footer
      %s22 = sadd.s32 1, %s18
    $region7: #{conf_block_forward.2} parent=1 // loop_footer_branch
      %17 = sbr.rel target = $region3
    $region8: #{conf_block_forward.2} parent=1 // loop_exit
      _
    %10127 = vsyncpa [#allocation7], 1
    %s10128 = scalar_lea.sflag [#allocation7], 1
    %10129 = vsyncpa %s10128, 1

</llo_original>
